<compile_context>
chip_gen: v7x
topology: tpu7x:2x2x1
jax: 0.10.0
libtpu: 0.0.40
codegen_flags: <defaults>
</compile_context>

<pallas_src>
import functools

import jax
import jax.numpy as jnp
from jax.experimental import pallas as pl
from jax.experimental.pallas import tpu as pltpu

_F32 = jnp.float32
_BF16 = jnp.bfloat16


def _layer_norm_f32(x, w, b, eps=1e-5):
    """torch.nn.LayerNorm semantics (biased variance), computed in f32."""
    xf = x.astype(_F32)
    mu = jnp.mean(xf, axis=-1, keepdims=True)
    var = jnp.mean((xf - mu) ** 2, axis=-1, keepdims=True)
    return (xf - mu) * jax.lax.rsqrt(var + eps) * w + b


# ---------------------------------------------------------------------------
# Attention kernel:  y = x + out_proj(MHA(attn_ln(x)))
# ---------------------------------------------------------------------------
def _attn_kernel(x_full_ref, x_q_ref,
                 ln1w_ref, ln1b_ref,
                 wq_ref, bq_ref, wk_ref, wv_ref, bv_ref, wo_ref, bo_ref,
                 o_ref, *, n_head):
    x_full = x_full_ref[0]                       # (T, D)  f32
    x_q = x_q_ref[0]                             # (TQ, D) f32
    T, D = x_full.shape
    TQ = x_q.shape[0]
    dh = D // n_head

    # LayerNorm in f32 (VPU); cast to bf16 only to feed the MXU.
    h_kv = _layer_norm_f32(x_full, ln1w_ref[...], ln1b_ref[...]).astype(_BF16)
    h_q = _layer_norm_f32(x_q, ln1w_ref[...], ln1b_ref[...]).astype(_BF16)

    q = jnp.dot(h_q, wq_ref[...], preferred_element_type=_F32) + bq_ref[...]
    k = jnp.dot(h_kv, wk_ref[...], preferred_element_type=_F32)       # no bias
    v = jnp.dot(h_kv, wv_ref[...], preferred_element_type=_F32) + bv_ref[...]

    # Fold the reference's two dh**-0.25 scalings into one dh**-0.5 on q.
    q = q * (float(dh) ** -0.5)

    q3 = q.reshape(TQ, n_head, dh).astype(_BF16)
    k3 = k.reshape(T, n_head, dh).astype(_BF16)
    v3 = v.reshape(T, n_head, dh).astype(_BF16)

    # Batched over heads, contraction on the trailing dh axis: no explicit
    # transpose of k, no per-head loop, no lane-dim concatenate.
    # TODO(synk): flash-style online-softmax KV tiling for very long sequences.
    scores = jnp.einsum("qhd,khd->hqk", q3, k3,
                        preferred_element_type=_F32)         # (H, TQ, T) f32

    m = jnp.max(scores, axis=-1, keepdims=True)
    p = jnp.exp(scores - m)
    w = p * pl.reciprocal(jnp.sum(p, axis=-1, keepdims=True), approx=True)

    ctx = jnp.einsum("hqk,khd->qhd", w.astype(_BF16), v3,
                     preferred_element_type=_F32).reshape(TQ, D)

    attn = jnp.dot(ctx.astype(_BF16), wo_ref[...],
                   preferred_element_type=_F32) + bo_ref[...]
    o_ref[0] = (x_q + attn).astype(o_ref.dtype)


# ---------------------------------------------------------------------------
# MLP kernel:  y = x + (gelu(mlp_ln(x) @ w1 + b1) @ w2 + b2)
# ---------------------------------------------------------------------------
def _mlp_kernel(x_ref, ln2w_ref, ln2b_ref, w1_ref, b1_ref, w2_ref, b2_ref,
                o_ref):
    x = x_ref[0]                                 # (TT, D) f32
    h = _layer_norm_f32(x, ln2w_ref[...], ln2b_ref[...])
    m = jnp.dot(h.astype(_BF16), w1_ref[...],
                preferred_element_type=_F32) + b1_ref[...]
    m = jax.nn.gelu(m, approximate=False)        # nn.GELU() default = exact erf
    m = jnp.dot(m.astype(_BF16), w2_ref[...],
                preferred_element_type=_F32) + b2_ref[...]
    o_ref[0] = (x + m).astype(o_ref.dtype)


# ---------------------------------------------------------------------------
# Wrappers
# ---------------------------------------------------------------------------
def _const_spec(p, single_buffer):
    """Full-extent block with a constant index_map (weights / biases)."""
    kwargs = {}
    if single_buffer:
        # Constant block index across the grid -> double buffering is pure
        # VMEM waste; request a single buffer.
        kwargs["pipeline_mode"] = pl.Buffered(1)
    return pl.BlockSpec(p.shape, lambda *_, nd=p.ndim: (0,) * nd, **kwargs)


def _vmem_limit(est_bytes):
    # Clamp into a range that is valid on v5e/v6e (128 MiB) and v7x (64 MiB).
    return int(min(64 * 1024 * 1024, max(16 * 1024 * 1024, 2 * est_bytes)))


def _largest_tile(n, cap):
    t = min(n, cap)
    while n % t:
        t -= 1
    return t


def _attention_call(x, params, n_head, q_tile, single_buffer):
    B, T, D = x.shape
    n_qt = T // q_tile

    args = [
        params["ln1_w"], params["ln1_b"],
        params["wq"].astype(_BF16), params["bq"],
        params["wk"].astype(_BF16),
        params["wv"].astype(_BF16), params["bv"],
        params["wo"].astype(_BF16), params["bo"],
    ]

    x_full_spec = pl.BlockSpec((1, T, D), lambda b, qt: (b, 0, 0))
    x_q_spec = pl.BlockSpec((1, q_tile, D), lambda b, qt: (b, qt, 0))
    out_spec = pl.BlockSpec((1, q_tile, D), lambda b, qt: (b, qt, 0))
    param_specs = [_const_spec(p, single_buffer) for p in args]

    param_bytes = sum(int(p.size) * p.dtype.itemsize for p in args)
    block_bytes = (param_bytes
                   + 4 * (2 * T * D + 4 * q_tile * D)             # x / out blocks
                   + 4 * (3 * T * D + 3 * n_head * q_tile * T))   # q/k/v + scores
    flops = B * n_qt * (2 * q_tile * D * D        # q proj
                        + 4 * T * D * D           # k + v proj (per q-tile)
                        + 4 * q_tile * T * D      # scores + context
                        + 2 * q_tile * D * D)     # out proj
    transcendentals = B * n_qt * n_head * q_tile * (T + 1)
    bytes_accessed = B * n_qt * T * D * 4 + 2 * B * T * D * 4 + param_bytes

    kernel = functools.partial(_attn_kernel, n_head=n_head)
    return pl.pallas_call(
        kernel,
        out_shape=jax.ShapeDtypeStruct((B, T, D), x.dtype),
        grid_spec=pltpu.PrefetchScalarGridSpec(
            num_scalar_prefetch=0,
            grid=(B, n_qt),
            in_specs=[x_full_spec, x_q_spec] + param_specs,
            out_specs=out_spec,
        ),
        compiler_params=pltpu.CompilerParams(
            dimension_semantics=("parallel", "parallel"),
            vmem_limit_bytes=_vmem_limit(block_bytes)),
        cost_estimate=pl.CostEstimate(
            flops=int(flops),
            transcendentals=int(transcendentals),
            bytes_accessed=int(bytes_accessed)),
    )(x, x, *args)


def _mlp_call(x, params, t_tile, single_buffer):
    B, T, D = x.shape
    n_tt = T // t_tile
    n_mlp = params["w1"].shape[1]

    args = [
        params["ln2_w"], params["ln2_b"],
        params["w1"].astype(_BF16), params["b1"],
        params["w2"].astype(_BF16), params["b2"],
    ]
    x_spec = pl.BlockSpec((1, t_tile, D), lambda b, t: (b, t, 0))
    out_spec = pl.BlockSpec((1, t_tile, D), lambda b, t: (b, t, 0))
    param_specs = [_const_spec(p, single_buffer) for p in args]

    param_bytes = sum(int(p.size) * p.dtype.itemsize for p in args)
    block_bytes = param_bytes + 4 * (4 * t_tile * D + 2 * t_tile * n_mlp)
    flops = B * T * 4 * D * n_mlp
    transcendentals = B * T * n_mlp
    bytes_accessed = 2 * B * T * D * 4 + param_bytes

    return pl.pallas_call(
        _mlp_kernel,
        out_shape=jax.ShapeDtypeStruct((B, T, D), x.dtype),
        grid_spec=pltpu.PrefetchScalarGridSpec(
            num_scalar_prefetch=0,
            grid=(B, n_tt),
            in_specs=[x_spec] + param_specs,
            out_specs=out_spec,
        ),
        compiler_params=pltpu.CompilerParams(
            dimension_semantics=("parallel", "parallel"),
            vmem_limit_bytes=_vmem_limit(block_bytes)),
        cost_estimate=pl.CostEstimate(
            flops=int(flops), transcendentals=int(transcendentals),
            bytes_accessed=int(bytes_accessed)),
    )(x, *args)


def residual_attention_block(x, params, n_head, *, q_tile=None, mlp_tile=None):
    B, T, D = x.shape
    assert D % n_head == 0
    if q_tile is None:
        q_tile = _largest_tile(T, 256)
    if mlp_tile is None:
        mlp_tile = _largest_tile(T, 256)
    assert T % q_tile == 0 and T % mlp_tile == 0

    def _call(fn, *a):
        # pipeline_mode=pl.Buffered(1) single-buffers the constant-index
        # weights; fall back to default specs if this build rejects it.
        try:
            return jax.block_until_ready(fn(*a, single_buffer=True))
        except Exception:  # pragma: no cover - compatibility fallback
            return jax.block_until_ready(fn(*a, single_buffer=False))

    y = _call(_attention_call, x, params, n_head, q_tile)
    return _call(_mlp_call, y, params, mlp_tile)


# ---------------------------------------------------------------------------
# Pure-JAX reference (replicates the PyTorch module, all f32)
# ---------------------------------------------------------------------------
def reference_block(x, params, n_head):
    def ln(v, w, b):
        mu = jnp.mean(v, axis=-1, keepdims=True)
        var = jnp.mean((v - mu) ** 2, axis=-1, keepdims=True)
        return (v - mu) / jnp.sqrt(var + 1e-5) * w[0] + b[0]

    B, T, D = x.shape
    dh = D // n_head
    scale = float(dh) ** (-0.25)

    h = ln(x, params["ln1_w"], params["ln1_b"])
    q = h @ params["wq"] + params["bq"][0]
    k = h @ params["wk"]
    v = h @ params["wv"] + params["bv"][0]
    q = q.reshape(B, T, n_head, dh).transpose(0, 2, 1, 3) * scale
    k = k.reshape(B, T, n_head, dh).transpose(0, 2, 3, 1) * scale
    v = v.reshape(B, T, n_head, dh).transpose(0, 2, 1, 3)
    w = jax.nn.softmax(q @ k, axis=-1)
    wv = (w @ v).transpose(0, 2, 1, 3).reshape(B, T, D)
    x = x + (wv @ params["wo"] + params["bo"][0])

    h2 = ln(x, params["ln2_w"], params["ln2_b"])
    m = jax.nn.gelu(h2 @ params["w1"] + params["b1"][0], approximate=False)
    m = m @ params["w2"] + params["b2"][0]
    return x + m


def init_params(key, n_state):
    n_mlp = n_state * 4
    ks = jax.random.split(key, 12)
    s = 0.02
    f32 = jnp.float32
    return {
        "ln1_w": jnp.ones((1, n_state), f32),
        "ln1_b": jnp.zeros((1, n_state), f32),
        "wq": s * jax.random.normal(ks[0], (n_state, n_state), f32),
        "bq": s * jax.random.normal(ks[1], (1, n_state), f32),
        "wk": s * jax.random.normal(ks[2], (n_state, n_state), f32),
        "wv": s * jax.random.normal(ks[3], (n_state, n_state), f32),
        "bv": s * jax.random.normal(ks[4], (1, n_state), f32),
        "wo": s * jax.random.normal(ks[5], (n_state, n_state), f32),
        "bo": s * jax.random.normal(ks[6], (1, n_state), f32),
        "ln2_w": jnp.ones((1, n_state), f32),
        "ln2_b": jnp.zeros((1, n_state), f32),
        "w1": s * jax.random.normal(ks[7], (n_state, n_mlp), f32),
        "b1": s * jax.random.normal(ks[8], (1, n_mlp), f32),
        "w2": s * jax.random.normal(ks[9], (n_mlp, n_state), f32),
        "b2": s * jax.random.normal(ks[10], (1, n_state), f32),
    }


if __name__ == "__main__":
    B, T, D, H = 2, 16, 32, 4     # batch, seq, n_state, n_head

    key = jax.random.PRNGKey(0)
    kx, kp = jax.random.split(key)
    x = jax.random.normal(kx, (B, T, D), jnp.float32)
    params = init_params(kp, D)

    # Tile the sequence (2 query tiles) to exercise the (batch, seq-tile) grid.
    out = residual_attention_block(x, params, H, q_tile=8, mlp_tile=8)
    out = jax.block_until_ready(out)

    ref = jax.block_until_ready(reference_block(x, params, H))
    assert out.shape == (B, T, D)
    assert jnp.allclose(out, ref, atol=5e-3, rtol=5e-3), (
        float(jnp.max(jnp.abs(out - ref))))

    print("KERNEL_OK")
</pallas_src>

<mosaic_0001>
module attributes {stable_mosaic.version = 11 : i64} {
  func.func @_attn_kernel(%arg0: i32, %arg1: i32, %arg2: memref<1x16x32xf32, #tpu.memory_space<vmem>>, %arg3: memref<1x8x32xf32, #tpu.memory_space<vmem>>, %arg4: memref<1x32xf32, #tpu.memory_space<vmem>>, %arg5: memref<1x32xf32, #tpu.memory_space<vmem>>, %arg6: memref<32x32xbf16, #tpu.memory_space<vmem>>, %arg7: memref<1x32xf32, #tpu.memory_space<vmem>>, %arg8: memref<32x32xbf16, #tpu.memory_space<vmem>>, %arg9: memref<32x32xbf16, #tpu.memory_space<vmem>>, %arg10: memref<1x32xf32, #tpu.memory_space<vmem>>, %arg11: memref<32x32xbf16, #tpu.memory_space<vmem>>, %arg12: memref<1x32xf32, #tpu.memory_space<vmem>>, %arg13: memref<1x8x32xf32, #tpu.memory_space<vmem>>) attributes {dimension_semantics = [#tpu.dimension_semantics<parallel>, #tpu.dimension_semantics<parallel>], iteration_bounds = array<i64: 2, 2>, scalar_prefetch = 0 : i64, scratch_operands = 0 : i64, tpu.core_type = #tpu.core_type<tc>, window_params = [{transform_indices = @transform_0, window_bounds = array<i64: 1, 16, 32>}, {transform_indices = @transform_1, window_bounds = array<i64: 1, 8, 32>}, {pipeline_mode = #tpu.pipeline_mode<synchronous>, transform_indices = @transform_2, window_bounds = array<i64: 1, 32>}, {pipeline_mode = #tpu.pipeline_mode<synchronous>, transform_indices = @transform_3, window_bounds = array<i64: 1, 32>}, {pipeline_mode = #tpu.pipeline_mode<synchronous>, transform_indices = @transform_4, window_bounds = array<i64: 32, 32>}, {pipeline_mode = #tpu.pipeline_mode<synchronous>, transform_indices = @transform_5, window_bounds = array<i64: 1, 32>}, {pipeline_mode = #tpu.pipeline_mode<synchronous>, transform_indices = @transform_6, window_bounds = array<i64: 32, 32>}, {pipeline_mode = #tpu.pipeline_mode<synchronous>, transform_indices = @transform_7, window_bounds = array<i64: 32, 32>}, {pipeline_mode = #tpu.pipeline_mode<synchronous>, transform_indices = @transform_8, window_bounds = array<i64: 1, 32>}, {pipeline_mode = #tpu.pipeline_mode<synchronous>, transform_indices = @transform_9, window_bounds = array<i64: 32, 32>}, {pipeline_mode = #tpu.pipeline_mode<synchronous>, transform_indices = @transform_10, window_bounds = array<i64: 1, 32>}, {transform_indices = @transform_11, window_bounds = array<i64: 1, 8, 32>}]} {
    %c0 = arith.constant 0 : index
    %c0_0 = arith.constant 0 : index
    %c0_1 = arith.constant 0 : index
    %0 = vector.load %arg2[%c0, %c0_0, %c0_1] : memref<1x16x32xf32, #tpu.memory_space<vmem>>, vector<1x16x32xf32>
    %1 = vector.shape_cast %0 : vector<1x16x32xf32> to vector<16x32xf32>
    %c0_2 = arith.constant 0 : index
    %c0_3 = arith.constant 0 : index
    %c0_4 = arith.constant 0 : index
    %2 = vector.load %arg3[%c0_2, %c0_3, %c0_4] : memref<1x8x32xf32, #tpu.memory_space<vmem>>, vector<1x8x32xf32>
    %3 = vector.shape_cast %2 : vector<1x8x32xf32> to vector<8x32xf32>
    %c0_5 = arith.constant 0 : index
    %c0_6 = arith.constant 0 : index
    %4 = vector.load %arg4[%c0_5, %c0_6] : memref<1x32xf32, #tpu.memory_space<vmem>>, vector<1x32xf32>
    %c0_7 = arith.constant 0 : index
    %c0_8 = arith.constant 0 : index
    %5 = vector.load %arg5[%c0_7, %c0_8] : memref<1x32xf32, #tpu.memory_space<vmem>>, vector<1x32xf32>
    %cst = arith.constant dense<0.000000e+00> : vector<16xf32>
    %6 = vector.multi_reduction <add>, %1, %cst [1] : vector<16x32xf32> to vector<16xf32>
    %7 = vector.shape_cast %6 : vector<16xf32> to vector<16x1xf32>
    %cst_9 = arith.constant 3.200000e+01 : f32
    %8 = vector.broadcast %cst_9 : f32 to vector<16x1xf32>
    %9 = arith.divf %7, %8 : vector<16x1xf32>
    %10 = vector.broadcast %9 : vector<16x1xf32> to vector<16x32xf32>
    %11 = arith.subf %1, %10 : vector<16x32xf32>
    %12 = arith.mulf %11, %11 : vector<16x32xf32>
    %cst_10 = arith.constant dense<0.000000e+00> : vector<16xf32>
    %13 = vector.multi_reduction <add>, %12, %cst_10 [1] : vector<16x32xf32> to vector<16xf32>
    %14 = vector.shape_cast %13 : vector<16xf32> to vector<16x1xf32>
    %cst_11 = arith.constant 3.200000e+01 : f32
    %15 = vector.broadcast %cst_11 : f32 to vector<16x1xf32>
    %16 = arith.divf %14, %15 : vector<16x1xf32>
    %17 = vector.broadcast %9 : vector<16x1xf32> to vector<16x32xf32>
    %18 = arith.subf %1, %17 : vector<16x32xf32>
    %cst_12 = arith.constant 9.99999974E-6 : f32
    %19 = vector.broadcast %cst_12 : f32 to vector<16x1xf32>
    %20 = arith.addf %16, %19 : vector<16x1xf32>
    %21 = math.rsqrt %20 : vector<16x1xf32>
    %22 = vector.broadcast %21 : vector<16x1xf32> to vector<16x32xf32>
    %23 = arith.mulf %18, %22 : vector<16x32xf32>
    %24 = vector.broadcast %4 : vector<1x32xf32> to vector<16x32xf32>
    %25 = arith.mulf %23, %24 : vector<16x32xf32>
    %26 = vector.broadcast %5 : vector<1x32xf32> to vector<16x32xf32>
    %27 = arith.addf %25, %26 : vector<16x32xf32>
    %28 = arith.truncf %27 : vector<16x32xf32> to vector<16x32xbf16>
    %c0_13 = arith.constant 0 : index
    %c0_14 = arith.constant 0 : index
    %29 = vector.load %arg4[%c0_13, %c0_14] : memref<1x32xf32, #tpu.memory_space<vmem>>, vector<1x32xf32>
    %c0_15 = arith.constant 0 : index
    %c0_16 = arith.constant 0 : index
    %30 = vector.load %arg5[%c0_15, %c0_16] : memref<1x32xf32, #tpu.memory_space<vmem>>, vector<1x32xf32>
    %cst_17 = arith.constant dense<0.000000e+00> : vector<8xf32>
    %31 = vector.multi_reduction <add>, %3, %cst_17 [1] : vector<8x32xf32> to vector<8xf32>
    %32 = vector.shape_cast %31 : vector<8xf32> to vector<8x1xf32>
    %cst_18 = arith.constant 3.200000e+01 : f32
    %33 = vector.broadcast %cst_18 : f32 to vector<8x1xf32>
    %34 = arith.divf %32, %33 : vector<8x1xf32>
    %35 = vector.broadcast %34 : vector<8x1xf32> to vector<8x32xf32>
    %36 = arith.subf %3, %35 : vector<8x32xf32>
    %37 = arith.mulf %36, %36 : vector<8x32xf32>
    %cst_19 = arith.constant dense<0.000000e+00> : vector<8xf32>
    %38 = vector.multi_reduction <add>, %37, %cst_19 [1] : vector<8x32xf32> to vector<8xf32>
    %39 = vector.shape_cast %38 : vector<8xf32> to vector<8x1xf32>
    %cst_20 = arith.constant 3.200000e+01 : f32
    %40 = vector.broadcast %cst_20 : f32 to vector<8x1xf32>
    %41 = arith.divf %39, %40 : vector<8x1xf32>
    %42 = vector.broadcast %34 : vector<8x1xf32> to vector<8x32xf32>
    %43 = arith.subf %3, %42 : vector<8x32xf32>
    %cst_21 = arith.constant 9.99999974E-6 : f32
    %44 = vector.broadcast %cst_21 : f32 to vector<8x1xf32>
    %45 = arith.addf %41, %44 : vector<8x1xf32>
    %46 = math.rsqrt %45 : vector<8x1xf32>
    %47 = vector.broadcast %46 : vector<8x1xf32> to vector<8x32xf32>
    %48 = arith.mulf %43, %47 : vector<8x32xf32>
    %49 = vector.broadcast %29 : vector<1x32xf32> to vector<8x32xf32>
    %50 = arith.mulf %48, %49 : vector<8x32xf32>
    %51 = vector.broadcast %30 : vector<1x32xf32> to vector<8x32xf32>
    %52 = arith.addf %50, %51 : vector<8x32xf32>
    %53 = arith.truncf %52 : vector<8x32xf32> to vector<8x32xbf16>
    %c0_22 = arith.constant 0 : index
    %c0_23 = arith.constant 0 : index
    %54 = vector.load %arg6[%c0_22, %c0_23] : memref<32x32xbf16, #tpu.memory_space<vmem>>, vector<32x32xbf16>
    %cst_24 = arith.constant dense<0.000000e+00> : vector<8x32xf32>
    %55 = tpu.matmul %53, %54, %cst_24 {dimension_numbers = #tpu.dot_dimension_numbers<[1], [0], [0], [1], [0, 0, 1, 1], [], []>} : vector<8x32xbf16>, vector<32x32xbf16>, vector<8x32xf32> -> vector<8x32xf32>
    %c0_25 = arith.constant 0 : index
    %c0_26 = arith.constant 0 : index
    %56 = vector.load %arg7[%c0_25, %c0_26] : memref<1x32xf32, #tpu.memory_space<vmem>>, vector<1x32xf32>
    %57 = vector.broadcast %56 : vector<1x32xf32> to vector<8x32xf32>
    %58 = arith.addf %55, %57 : vector<8x32xf32>
    %c0_27 = arith.constant 0 : index
    %c0_28 = arith.constant 0 : index
    %59 = vector.load %arg8[%c0_27, %c0_28] : memref<32x32xbf16, #tpu.memory_space<vmem>>, vector<32x32xbf16>
    %cst_29 = arith.constant dense<0.000000e+00> : vector<16x32xf32>
    %60 = tpu.matmul %28, %59, %cst_29 {dimension_numbers = #tpu.dot_dimension_numbers<[1], [0], [0], [1], [0, 0, 1, 1], [], []>} : vector<16x32xbf16>, vector<32x32xbf16>, vector<16x32xf32> -> vector<16x32xf32>
    %c0_30 = arith.constant 0 : index
    %c0_31 = arith.constant 0 : index
    %61 = vector.load %arg9[%c0_30, %c0_31] : memref<32x32xbf16, #tpu.memory_space<vmem>>, vector<32x32xbf16>
    %cst_32 = arith.constant dense<0.000000e+00> : vector<16x32xf32>
    %62 = tpu.matmul %28, %61, %cst_32 {dimension_numbers = #tpu.dot_dimension_numbers<[1], [0], [0], [1], [0, 0, 1, 1], [], []>} : vector<16x32xbf16>, vector<32x32xbf16>, vector<16x32xf32> -> vector<16x32xf32>
    %c0_33 = arith.constant 0 : index
    %c0_34 = arith.constant 0 : index
    %63 = vector.load %arg10[%c0_33, %c0_34] : memref<1x32xf32, #tpu.memory_space<vmem>>, vector<1x32xf32>
    %64 = vector.broadcast %63 : vector<1x32xf32> to vector<16x32xf32>
    %65 = arith.addf %62, %64 : vector<16x32xf32>
    %cst_35 = arith.constant 0.353553385 : f32
    %66 = vector.broadcast %cst_35 : f32 to vector<8x32xf32>
    %67 = arith.mulf %58, %66 : vector<8x32xf32>
    %68 = vector.shape_cast %67 : vector<8x32xf32> to vector<8x4x8xf32>
    %69 = arith.truncf %68 : vector<8x4x8xf32> to vector<8x4x8xbf16>
    %70 = vector.shape_cast %60 : vector<16x32xf32> to vector<16x4x8xf32>
    %71 = arith.truncf %70 : vector<16x4x8xf32> to vector<16x4x8xbf16>
    %72 = vector.shape_cast %65 : vector<16x32xf32> to vector<16x4x8xf32>
    %73 = arith.truncf %72 : vector<16x4x8xf32> to vector<16x4x8xbf16>
    "tpu.trace_start"() <{level = 10 : i32, message = "qhd,khd->hqk"}> : () -> ()
    %cst_36 = arith.constant dense<0.000000e+00> : vector<4x8x16xf32>
    %74 = tpu.matmul %69, %71, %cst_36 {dimension_numbers = #tpu.dot_dimension_numbers<[2], [2], [0], [0], [0, 1, 0, 0, 1, 0], [1], [1]>} : vector<8x4x8xbf16>, vector<16x4x8xbf16>, vector<4x8x16xf32> -> vector<4x8x16xf32>
    "tpu.trace_stop"() : () -> ()
    %cst_37 = arith.constant dense<0xFF800000> : vector<4x8xf32>
    %75 = vector.multi_reduction <maximumf>, %74, %cst_37 [2] : vector<4x8x16xf32> to vector<4x8xf32>
    %76 = vector.shape_cast %75 : vector<4x8xf32> to vector<4x8x1xf32>
    %77 = vector.broadcast %76 : vector<4x8x1xf32> to vector<4x8x16xf32>
    %78 = arith.subf %74, %77 : vector<4x8x16xf32>
    %79 = math.exp %78 : vector<4x8x16xf32>
    %cst_38 = arith.constant dense<0.000000e+00> : vector<4x8xf32>
    %80 = vector.multi_reduction <add>, %79, %cst_38 [2] : vector<4x8x16xf32> to vector<4x8xf32>
    %81 = vector.shape_cast %80 : vector<4x8xf32> to vector<4x8x1xf32>
    %82 = tpu.reciprocal %81 {approx = true} : vector<4x8x1xf32> -> vector<4x8x1xf32>
    %83 = vector.broadcast %82 : vector<4x8x1xf32> to vector<4x8x16xf32>
    %84 = arith.mulf %79, %83 : vector<4x8x16xf32>
    %85 = arith.truncf %84 : vector<4x8x16xf32> to vector<4x8x16xbf16>
    "tpu.trace_start"() <{level = 10 : i32, message = "hqk,khd->qhd"}> : () -> ()
    %cst_39 = arith.constant dense<0.000000e+00> : vector<4x8x8xf32>
    %86 = tpu.matmul %73, %85, %cst_39 {dimension_numbers = #tpu.dot_dimension_numbers<[0], [2], [2], [1], [0, 1, 0, 2, 1, 1], [1], [0]>} : vector<16x4x8xbf16>, vector<4x8x16xbf16>, vector<4x8x8xf32> -> vector<4x8x8xf32>
    %87 = tpu.transpose %86, [2, 0, 1] : vector<4x8x8xf32> -> vector<8x4x8xf32>
    "tpu.trace_stop"() : () -> ()
    %88 = vector.shape_cast %87 : vector<8x4x8xf32> to vector<8x32xf32>
    %89 = arith.truncf %88 : vector<8x32xf32> to vector<8x32xbf16>
    %c0_40 = arith.constant 0 : index
    %c0_41 = arith.constant 0 : index
    %90 = vector.load %arg11[%c0_40, %c0_41] : memref<32x32xbf16, #tpu.memory_space<vmem>>, vector<32x32xbf16>
    %cst_42 = arith.constant dense<0.000000e+00> : vector<8x32xf32>
    %91 = tpu.matmul %89, %90, %cst_42 {dimension_numbers = #tpu.dot_dimension_numbers<[1], [0], [0], [1], [0, 0, 1, 1], [], []>} : vector<8x32xbf16>, vector<32x32xbf16>, vector<8x32xf32> -> vector<8x32xf32>
    %c0_43 = arith.constant 0 : index
    %c0_44 = arith.constant 0 : index
    %92 = vector.load %arg12[%c0_43, %c0_44] : memref<1x32xf32, #tpu.memory_space<vmem>>, vector<1x32xf32>
    %93 = vector.broadcast %92 : vector<1x32xf32> to vector<8x32xf32>
    %94 = arith.addf %91, %93 : vector<8x32xf32>
    %95 = arith.addf %3, %94 : vector<8x32xf32>
    %c0_45 = arith.constant 0 : index
    %c0_46 = arith.constant 0 : index
    %c0_47 = arith.constant 0 : index
    %96 = vector.load %arg13[%c0_45, %c0_46, %c0_47] : memref<1x8x32xf32, #tpu.memory_space<vmem>>, vector<1x8x32xf32>
    %97 = vector.shape_cast %96 : vector<1x8x32xf32> to vector<8x32xf32>
    %98 = vector.shape_cast %95 : vector<8x32xf32> to vector<1x8x32xf32>
    tpu.vector_store %arg13[%c0_45, %c0_46, %c0_47], %98 {strides = array<i32>} : memref<1x8x32xf32, #tpu.memory_space<vmem>>, vector<1x8x32xf32>,
    return
  }
  func.func @transform_0(%arg0: i32, %arg1: i32) -> (i32, i32, i32) {
    %c0_i32 = arith.constant 0 : i32
    %c0_i32_0 = arith.constant 0 : i32
    %c0_i32_1 = arith.constant 0 : i32
    return %arg0, %c0_i32, %c0_i32_0 : i32, i32, i32
  }
  func.func @transform_1(%arg0: i32, %arg1: i32) -> (i32, i32, i32) {
    %c0_i32 = arith.constant 0 : i32
    %c0_i32_0 = arith.constant 0 : i32
    return %arg0, %arg1, %c0_i32 : i32, i32, i32
  }
  func.func @transform_2(%arg0: i32, %arg1: i32) -> (i32, i32) {
    %c0_i32 = arith.constant 0 : i32
    %c0_i32_0 = arith.constant 0 : i32
    %c0_i32_1 = arith.constant 0 : i32
    return %c0_i32, %c0_i32_0 : i32, i32
  }
  func.func @transform_3(%arg0: i32, %arg1: i32) -> (i32, i32) {
    %c0_i32 = arith.constant 0 : i32
    %c0_i32_0 = arith.constant 0 : i32
    %c0_i32_1 = arith.constant 0 : i32
    return %c0_i32, %c0_i32_0 : i32, i32
  }
  func.func @transform_4(%arg0: i32, %arg1: i32) -> (i32, i32) {
    %c0_i32 = arith.constant 0 : i32
    %c0_i32_0 = arith.constant 0 : i32
    %c0_i32_1 = arith.constant 0 : i32
    return %c0_i32, %c0_i32_0 : i32, i32
  }
  func.func @transform_5(%arg0: i32, %arg1: i32) -> (i32, i32) {
    %c0_i32 = arith.constant 0 : i32
    %c0_i32_0 = arith.constant 0 : i32
    %c0_i32_1 = arith.constant 0 : i32
    return %c0_i32, %c0_i32_0 : i32, i32
  }
  func.func @transform_6(%arg0: i32, %arg1: i32) -> (i32, i32) {
    %c0_i32 = arith.constant 0 : i32
    %c0_i32_0 = arith.constant 0 : i32
    %c0_i32_1 = arith.constant 0 : i32
    return %c0_i32, %c0_i32_0 : i32, i32
  }
  func.func @transform_7(%arg0: i32, %arg1: i32) -> (i32, i32) {
    %c0_i32 = arith.constant 0 : i32
    %c0_i32_0 = arith.constant 0 : i32
    %c0_i32_1 = arith.constant 0 : i32
    return %c0_i32, %c0_i32_0 : i32, i32
  }
  func.func @transform_8(%arg0: i32, %arg1: i32) -> (i32, i32) {
    %c0_i32 = arith.constant 0 : i32
    %c0_i32_0 = arith.constant 0 : i32
    %c0_i32_1 = arith.constant 0 : i32
    return %c0_i32, %c0_i32_0 : i32, i32
  }
  func.func @transform_9(%arg0: i32, %arg1: i32) -> (i32, i32) {
    %c0_i32 = arith.constant 0 : i32
    %c0_i32_0 = arith.constant 0 : i32
    %c0_i32_1 = arith.constant 0 : i32
    return %c0_i32, %c0_i32_0 : i32, i32
  }
  func.func @transform_10(%arg0: i32, %arg1: i32) -> (i32, i32) {
    %c0_i32 = arith.constant 0 : i32
    %c0_i32_0 = arith.constant 0 : i32
    %c0_i32_1 = arith.constant 0 : i32
    return %c0_i32, %c0_i32_0 : i32, i32
  }
  func.func @transform_11(%arg0: i32, %arg1: i32) -> (i32, i32, i32) {
    %c0_i32 = arith.constant 0 : i32
    %c0_i32_0 = arith.constant 0 : i32
    return %arg0, %arg1, %c0_i32 : i32, i32, i32
  }
}

module attributes {stable_mosaic.version = 11 : i64} {
  func.func @_attn_kernel(%arg0: i32, %arg1: i32, %arg2: memref<1x16x32xf32, #tpu.memory_space<vmem>>, %arg3: memref<1x8x32xf32, #tpu.memory_space<vmem>>, %arg4: memref<1x32xf32, #tpu.memory_space<vmem>>, %arg5: memref<1x32xf32, #tpu.memory_space<vmem>>, %arg6: memref<32x32xbf16, #tpu.memory_space<vmem>>, %arg7: memref<1x32xf32, #tpu.memory_space<vmem>>, %arg8: memref<32x32xbf16, #tpu.memory_space<vmem>>, %arg9: memref<32x32xbf16, #tpu.memory_space<vmem>>, %arg10: memref<1x32xf32, #tpu.memory_space<vmem>>, %arg11: memref<32x32xbf16, #tpu.memory_space<vmem>>, %arg12: memref<1x32xf32, #tpu.memory_space<vmem>>, %arg13: memref<1x8x32xf32, #tpu.memory_space<vmem>>) attributes {dimension_semantics = [#tpu.dimension_semantics<parallel>, #tpu.dimension_semantics<parallel>], iteration_bounds = array<i64: 2, 2>, scalar_prefetch = 0 : i64, scratch_operands = 0 : i64, tpu.core_type = #tpu.core_type<tc>, window_params = [{transform_indices = @transform_0, window_bounds = array<i64: 1, 16, 32>}, {transform_indices = @transform_1, window_bounds = array<i64: 1, 8, 32>}, {pipeline_mode = #tpu.pipeline_mode<synchronous>, transform_indices = @transform_2, window_bounds = array<i64: 1, 32>}, {pipeline_mode = #tpu.pipeline_mode<synchronous>, transform_indices = @transform_3, window_bounds = array<i64: 1, 32>}, {pipeline_mode = #tpu.pipeline_mode<synchronous>, transform_indices = @transform_4, window_bounds = array<i64: 32, 32>}, {pipeline_mode = #tpu.pipeline_mode<synchronous>, transform_indices = @transform_5, window_bounds = array<i64: 1, 32>}, {pipeline_mode = #tpu.pipeline_mode<synchronous>, transform_indices = @transform_6, window_bounds = array<i64: 32, 32>}, {pipeline_mode = #tpu.pipeline_mode<synchronous>, transform_indices = @transform_7, window_bounds = array<i64: 32, 32>}, {pipeline_mode = #tpu.pipeline_mode<synchronous>, transform_indices = @transform_8, window_bounds = array<i64: 1, 32>}, {pipeline_mode = #tpu.pipeline_mode<synchronous>, transform_indices = @transform_9, window_bounds = array<i64: 32, 32>}, {pipeline_mode = #tpu.pipeline_mode<synchronous>, transform_indices = @transform_10, window_bounds = array<i64: 1, 32>}, {transform_indices = @transform_11, window_bounds = array<i64: 1, 8, 32>}]} {
    %c0 = arith.constant 0 : index
    %c0_0 = arith.constant 0 : index
    %c0_1 = arith.constant 0 : index
    %0 = vector.load %arg2[%c0, %c0_0, %c0_1] : memref<1x16x32xf32, #tpu.memory_space<vmem>>, vector<1x16x32xf32>
    %1 = vector.shape_cast %0 : vector<1x16x32xf32> to vector<16x32xf32>
    %c0_2 = arith.constant 0 : index
    %c0_3 = arith.constant 0 : index
    %c0_4 = arith.constant 0 : index
    %2 = vector.load %arg3[%c0_2, %c0_3, %c0_4] : memref<1x8x32xf32, #tpu.memory_space<vmem>>, vector<1x8x32xf32>
    %3 = vector.shape_cast %2 : vector<1x8x32xf32> to vector<8x32xf32>
    %c0_5 = arith.constant 0 : index
    %c0_6 = arith.constant 0 : index
    %4 = vector.load %arg4[%c0_5, %c0_6] : memref<1x32xf32, #tpu.memory_space<vmem>>, vector<1x32xf32>
    %c0_7 = arith.constant 0 : index
    %c0_8 = arith.constant 0 : index
    %5 = vector.load %arg5[%c0_7, %c0_8] : memref<1x32xf32, #tpu.memory_space<vmem>>, vector<1x32xf32>
    %cst = arith.constant dense<0.000000e+00> : vector<16xf32>
    %6 = vector.multi_reduction <add>, %1, %cst [1] : vector<16x32xf32> to vector<16xf32>
    %7 = vector.shape_cast %6 : vector<16xf32> to vector<16x1xf32>
    %cst_9 = arith.constant 3.200000e+01 : f32
    %8 = vector.broadcast %cst_9 : f32 to vector<16x1xf32>
    %9 = arith.divf %7, %8 : vector<16x1xf32>
    %10 = vector.broadcast %9 : vector<16x1xf32> to vector<16x32xf32>
    %11 = arith.subf %1, %10 : vector<16x32xf32>
    %12 = arith.mulf %11, %11 : vector<16x32xf32>
    %cst_10 = arith.constant dense<0.000000e+00> : vector<16xf32>
    %13 = vector.multi_reduction <add>, %12, %cst_10 [1] : vector<16x32xf32> to vector<16xf32>
    %14 = vector.shape_cast %13 : vector<16xf32> to vector<16x1xf32>
    %cst_11 = arith.constant 3.200000e+01 : f32
    %15 = vector.broadcast %cst_11 : f32 to vector<16x1xf32>
    %16 = arith.divf %14, %15 : vector<16x1xf32>
    %17 = vector.broadcast %9 : vector<16x1xf32> to vector<16x32xf32>
    %18 = arith.subf %1, %17 : vector<16x32xf32>
    %cst_12 = arith.constant 9.99999974E-6 : f32
    %19 = vector.broadcast %cst_12 : f32 to vector<16x1xf32>
    %20 = arith.addf %16, %19 : vector<16x1xf32>
    %21 = math.rsqrt %20 : vector<16x1xf32>
    %22 = vector.broadcast %21 : vector<16x1xf32> to vector<16x32xf32>
    %23 = arith.mulf %18, %22 : vector<16x32xf32>
    %24 = vector.broadcast %4 : vector<1x32xf32> to vector<16x32xf32>
    %25 = arith.mulf %23, %24 : vector<16x32xf32>
    %26 = vector.broadcast %5 : vector<1x32xf32> to vector<16x32xf32>
    %27 = arith.addf %25, %26 : vector<16x32xf32>
    %28 = arith.truncf %27 : vector<16x32xf32> to vector<16x32xbf16>
    %c0_13 = arith.constant 0 : index
    %c0_14 = arith.constant 0 : index
    %29 = vector.load %arg4[%c0_13, %c0_14] : memref<1x32xf32, #tpu.memory_space<vmem>>, vector<1x32xf32>
    %c0_15 = arith.constant 0 : index
    %c0_16 = arith.constant 0 : index
    %30 = vector.load %arg5[%c0_15, %c0_16] : memref<1x32xf32, #tpu.memory_space<vmem>>, vector<1x32xf32>
    %cst_17 = arith.constant dense<0.000000e+00> : vector<8xf32>
    %31 = vector.multi_reduction <add>, %3, %cst_17 [1] : vector<8x32xf32> to vector<8xf32>
    %32 = vector.shape_cast %31 : vector<8xf32> to vector<8x1xf32>
    %cst_18 = arith.constant 3.200000e+01 : f32
    %33 = vector.broadcast %cst_18 : f32 to vector<8x1xf32>
    %34 = arith.divf %32, %33 : vector<8x1xf32>
    %35 = vector.broadcast %34 : vector<8x1xf32> to vector<8x32xf32>
    %36 = arith.subf %3, %35 : vector<8x32xf32>
    %37 = arith.mulf %36, %36 : vector<8x32xf32>
    %cst_19 = arith.constant dense<0.000000e+00> : vector<8xf32>
    %38 = vector.multi_reduction <add>, %37, %cst_19 [1] : vector<8x32xf32> to vector<8xf32>
    %39 = vector.shape_cast %38 : vector<8xf32> to vector<8x1xf32>
    %cst_20 = arith.constant 3.200000e+01 : f32
    %40 = vector.broadcast %cst_20 : f32 to vector<8x1xf32>
    %41 = arith.divf %39, %40 : vector<8x1xf32>
    %42 = vector.broadcast %34 : vector<8x1xf32> to vector<8x32xf32>
    %43 = arith.subf %3, %42 : vector<8x32xf32>
    %cst_21 = arith.constant 9.99999974E-6 : f32
    %44 = vector.broadcast %cst_21 : f32 to vector<8x1xf32>
    %45 = arith.addf %41, %44 : vector<8x1xf32>
    %46 = math.rsqrt %45 : vector<8x1xf32>
    %47 = vector.broadcast %46 : vector<8x1xf32> to vector<8x32xf32>
    %48 = arith.mulf %43, %47 : vector<8x32xf32>
    %49 = vector.broadcast %29 : vector<1x32xf32> to vector<8x32xf32>
    %50 = arith.mulf %48, %49 : vector<8x32xf32>
    %51 = vector.broadcast %30 : vector<1x32xf32> to vector<8x32xf32>
    %52 = arith.addf %50, %51 : vector<8x32xf32>
    %53 = arith.truncf %52 : vector<8x32xf32> to vector<8x32xbf16>
    %c0_22 = arith.constant 0 : index
    %c0_23 = arith.constant 0 : index
    %54 = vector.load %arg6[%c0_22, %c0_23] : memref<32x32xbf16, #tpu.memory_space<vmem>>, vector<32x32xbf16>
    %cst_24 = arith.constant dense<0.000000e+00> : vector<8x32xf32>
    %55 = tpu.matmul %53, %54, %cst_24 {dimension_numbers = #tpu.dot_dimension_numbers<[1], [0], [0], [1], [0, 0, 1, 1], [], []>} : vector<8x32xbf16>, vector<32x32xbf16>, vector<8x32xf32> -> vector<8x32xf32>
    %c0_25 = arith.constant 0 : index
    %c0_26 = arith.constant 0 : index
    %56 = vector.load %arg7[%c0_25, %c0_26] : memref<1x32xf32, #tpu.memory_space<vmem>>, vector<1x32xf32>
    %57 = vector.broadcast %56 : vector<1x32xf32> to vector<8x32xf32>
    %58 = arith.addf %55, %57 : vector<8x32xf32>
    %c0_27 = arith.constant 0 : index
    %c0_28 = arith.constant 0 : index
    %59 = vector.load %arg8[%c0_27, %c0_28] : memref<32x32xbf16, #tpu.memory_space<vmem>>, vector<32x32xbf16>
    %cst_29 = arith.constant dense<0.000000e+00> : vector<16x32xf32>
    %60 = tpu.matmul %28, %59, %cst_29 {dimension_numbers = #tpu.dot_dimension_numbers<[1], [0], [0], [1], [0, 0, 1, 1], [], []>} : vector<16x32xbf16>, vector<32x32xbf16>, vector<16x32xf32> -> vector<16x32xf32>
    %c0_30 = arith.constant 0 : index
    %c0_31 = arith.constant 0 : index
    %61 = vector.load %arg9[%c0_30, %c0_31] : memref<32x32xbf16, #tpu.memory_space<vmem>>, vector<32x32xbf16>
    %cst_32 = arith.constant dense<0.000000e+00> : vector<16x32xf32>
    %62 = tpu.matmul %28, %61, %cst_32 {dimension_numbers = #tpu.dot_dimension_numbers<[1], [0], [0], [1], [0, 0, 1, 1], [], []>} : vector<16x32xbf16>, vector<32x32xbf16>, vector<16x32xf32> -> vector<16x32xf32>
    %c0_33 = arith.constant 0 : index
    %c0_34 = arith.constant 0 : index
    %63 = vector.load %arg10[%c0_33, %c0_34] : memref<1x32xf32, #tpu.memory_space<vmem>>, vector<1x32xf32>
    %64 = vector.broadcast %63 : vector<1x32xf32> to vector<16x32xf32>
    %65 = arith.addf %62, %64 : vector<16x32xf32>
    %cst_35 = arith.constant 0.353553385 : f32
    %66 = vector.broadcast %cst_35 : f32 to vector<8x32xf32>
    %67 = arith.mulf %58, %66 : vector<8x32xf32>
    %68 = vector.shape_cast %67 : vector<8x32xf32> to vector<8x4x8xf32>
    %69 = arith.truncf %68 : vector<8x4x8xf32> to vector<8x4x8xbf16>
    %70 = vector.shape_cast %60 : vector<16x32xf32> to vector<16x4x8xf32>
    %71 = arith.truncf %70 : vector<16x4x8xf32> to vector<16x4x8xbf16>
    %72 = vector.shape_cast %65 : vector<16x32xf32> to vector<16x4x8xf32>
    %73 = arith.truncf %72 : vector<16x4x8xf32> to vector<16x4x8xbf16>
    "tpu.trace_start"() <{level = 10 : i32, message = "qhd,khd->hqk"}> : () -> ()
    %cst_36 = arith.constant dense<0.000000e+00> : vector<4x8x16xf32>
    %74 = tpu.matmul %69, %71, %cst_36 {dimension_numbers = #tpu.dot_dimension_numbers<[2], [2], [0], [0], [0, 1, 0, 0, 1, 0], [1], [1]>} : vector<8x4x8xbf16>, vector<16x4x8xbf16>, vector<4x8x16xf32> -> vector<4x8x16xf32>
    "tpu.trace_stop"() : () -> ()
    %cst_37 = arith.constant dense<0xFF800000> : vector<4x8xf32>
    %75 = vector.multi_reduction <maximumf>, %74, %cst_37 [2] : vector<4x8x16xf32> to vector<4x8xf32>
    %76 = vector.shape_cast %75 : vector<4x8xf32> to vector<4x8x1xf32>
    %77 = vector.broadcast %76 : vector<4x8x1xf32> to vector<4x8x16xf32>
    %78 = arith.subf %74, %77 : vector<4x8x16xf32>
    %79 = math.exp %78 : vector<4x8x16xf32>
    %cst_38 = arith.constant dense<0.000000e+00> : vector<4x8xf32>
    %80 = vector.multi_reduction <add>, %79, %cst_38 [2] : vector<4x8x16xf32> to vector<4x8xf32>
    %81 = vector.shape_cast %80 : vector<4x8xf32> to vector<4x8x1xf32>
    %82 = tpu.reciprocal %81 {approx = true} : vector<4x8x1xf32> -> vector<4x8x1xf32>
    %83 = vector.broadcast %82 : vector<4x8x1xf32> to vector<4x8x16xf32>
    %84 = arith.mulf %79, %83 : vector<4x8x16xf32>
    %85 = arith.truncf %84 : vector<4x8x16xf32> to vector<4x8x16xbf16>
    "tpu.trace_start"() <{level = 10 : i32, message = "hqk,khd->qhd"}> : () -> ()
    %cst_39 = arith.constant dense<0.000000e+00> : vector<4x8x8xf32>
    %86 = tpu.matmul %73, %85, %cst_39 {dimension_numbers = #tpu.dot_dimension_numbers<[0], [2], [2], [1], [0, 1, 0, 2, 1, 1], [1], [0]>} : vector<16x4x8xbf16>, vector<4x8x16xbf16>, vector<4x8x8xf32> -> vector<4x8x8xf32>
    %87 = tpu.transpose %86, [2, 0, 1] : vector<4x8x8xf32> -> vector<8x4x8xf32>
    "tpu.trace_stop"() : () -> ()
    %88 = vector.shape_cast %87 : vector<8x4x8xf32> to vector<8x32xf32>
    %89 = arith.truncf %88 : vector<8x32xf32> to vector<8x32xbf16>
    %c0_40 = arith.constant 0 : index
    %c0_41 = arith.constant 0 : index
    %90 = vector.load %arg11[%c0_40, %c0_41] : memref<32x32xbf16, #tpu.memory_space<vmem>>, vector<32x32xbf16>
    %cst_42 = arith.constant dense<0.000000e+00> : vector<8x32xf32>
    %91 = tpu.matmul %89, %90, %cst_42 {dimension_numbers = #tpu.dot_dimension_numbers<[1], [0], [0], [1], [0, 0, 1, 1], [], []>} : vector<8x32xbf16>, vector<32x32xbf16>, vector<8x32xf32> -> vector<8x32xf32>
    %c0_43 = arith.constant 0 : index
    %c0_44 = arith.constant 0 : index
    %92 = vector.load %arg12[%c0_43, %c0_44] : memref<1x32xf32, #tpu.memory_space<vmem>>, vector<1x32xf32>
    %93 = vector.broadcast %92 : vector<1x32xf32> to vector<8x32xf32>
    %94 = arith.addf %91, %93 : vector<8x32xf32>
    %95 = arith.addf %3, %94 : vector<8x32xf32>
    %c0_45 = arith.constant 0 : index
    %c0_46 = arith.constant 0 : index
    %c0_47 = arith.constant 0 : index
    %96 = vector.load %arg13[%c0_45, %c0_46, %c0_47] : memref<1x8x32xf32, #tpu.memory_space<vmem>>, vector<1x8x32xf32>
    %97 = vector.shape_cast %96 : vector<1x8x32xf32> to vector<8x32xf32>
    %98 = vector.shape_cast %95 : vector<8x32xf32> to vector<1x8x32xf32>
    tpu.vector_store %arg13[%c0_45, %c0_46, %c0_47], %98 {strides = array<i32>} : memref<1x8x32xf32, #tpu.memory_space<vmem>>, vector<1x8x32xf32>,
    return
  }
  func.func @transform_0(%arg0: i32, %arg1: i32) -> (i32, i32, i32) {
    %c0_i32 = arith.constant 0 : i32
    %c0_i32_0 = arith.constant 0 : i32
    %c0_i32_1 = arith.constant 0 : i32
    return %arg0, %c0_i32, %c0_i32_0 : i32, i32, i32
  }
  func.func @transform_1(%arg0: i32, %arg1: i32) -> (i32, i32, i32) {
    %c0_i32 = arith.constant 0 : i32
    %c0_i32_0 = arith.constant 0 : i32
    return %arg0, %arg1, %c0_i32 : i32, i32, i32
  }
  func.func @transform_2(%arg0: i32, %arg1: i32) -> (i32, i32) {
    %c0_i32 = arith.constant 0 : i32
    %c0_i32_0 = arith.constant 0 : i32
    %c0_i32_1 = arith.constant 0 : i32
    return %c0_i32, %c0_i32_0 : i32, i32
  }
  func.func @transform_3(%arg0: i32, %arg1: i32) -> (i32, i32) {
    %c0_i32 = arith.constant 0 : i32
    %c0_i32_0 = arith.constant 0 : i32
    %c0_i32_1 = arith.constant 0 : i32
    return %c0_i32, %c0_i32_0 : i32, i32
  }
  func.func @transform_4(%arg0: i32, %arg1: i32) -> (i32, i32) {
    %c0_i32 = arith.constant 0 : i32
    %c0_i32_0 = arith.constant 0 : i32
    %c0_i32_1 = arith.constant 0 : i32
    return %c0_i32, %c0_i32_0 : i32, i32
  }
  func.func @transform_5(%arg0: i32, %arg1: i32) -> (i32, i32) {
    %c0_i32 = arith.constant 0 : i32
    %c0_i32_0 = arith.constant 0 : i32
    %c0_i32_1 = arith.constant 0 : i32
    return %c0_i32, %c0_i32_0 : i32, i32
  }
  func.func @transform_6(%arg0: i32, %arg1: i32) -> (i32, i32) {
    %c0_i32 = arith.constant 0 : i32
    %c0_i32_0 = arith.constant 0 : i32
    %c0_i32_1 = arith.constant 0 : i32
    return %c0_i32, %c0_i32_0 : i32, i32
  }
  func.func @transform_7(%arg0: i32, %arg1: i32) -> (i32, i32) {
    %c0_i32 = arith.constant 0 : i32
    %c0_i32_0 = arith.constant 0 : i32
    %c0_i32_1 = arith.constant 0 : i32
    return %c0_i32, %c0_i32_0 : i32, i32
  }
  func.func @transform_8(%arg0: i32, %arg1: i32) -> (i32, i32) {
    %c0_i32 = arith.constant 0 : i32
    %c0_i32_0 = arith.constant 0 : i32
    %c0_i32_1 = arith.constant 0 : i32
    return %c0_i32, %c0_i32_0 : i32, i32
  }
  func.func @transform_9(%arg0: i32, %arg1: i32) -> (i32, i32) {
    %c0_i32 = arith.constant 0 : i32
    %c0_i32_0 = arith.constant 0 : i32
    %c0_i32_1 = arith.constant 0 : i32
    return %c0_i32, %c0_i32_0 : i32, i32
  }
  func.func @transform_10(%arg0: i32, %arg1: i32) -> (i32, i32) {
    %c0_i32 = arith.constant 0 : i32
    %c0_i32_0 = arith.constant 0 : i32
    %c0_i32_1 = arith.constant 0 : i32
    return %c0_i32, %c0_i32_0 : i32, i32
  }
  func.func @transform_11(%arg0: i32, %arg1: i32) -> (i32, i32, i32) {
    %c0_i32 = arith.constant 0 : i32
    %c0_i32_0 = arith.constant 0 : i32
    return %arg0, %arg1, %c0_i32 : i32, i32, i32
  }
}

</mosaic_0001>

<llo_original>
// kernel: tpu_custom_call.1
$region0: #{tpu_custom_call.1}
  #allocation0 [shape = 'u32[]', space=smem, size = 0x4, offset = 0x4, fixed_abs, tag = 'smem constant byte address 0x4 - core index']
  #allocation1 [shape = 'u32[144,128]{1,0:T(1,128)}', space=vmem, size = 0x12000, scoped, tag = 'internal scratch']
  %s0 = inlined_call_operand.hbm [shape: f32[2,16,32], index: 0, kind: input, shape index: {}]
  %s1 = inlined_call_operand.hbm [shape: f32[2,16,32], index: 1, kind: input, shape index: {}]
  %s2 = inlined_call_operand.vmem [shape: f32[1,32], index: 2, kind: input, shape index: {}]
  %s3 = inlined_call_operand.vmem [shape: f32[1,32], index: 3, kind: input, shape index: {}]
  %s4 = inlined_call_operand.hbm [shape: bf16[32,32], index: 4, kind: input, shape index: {}]
  %s5 = inlined_call_operand.hbm [shape: f32[1,32], index: 5, kind: input, shape index: {}]
  %s6 = inlined_call_operand.vmem [shape: bf16[32,32], index: 6, kind: input, shape index: {}]
  %s7 = inlined_call_operand.hbm [shape: bf16[32,32], index: 7, kind: input, shape index: {}]
  %s8 = inlined_call_operand.hbm [shape: f32[1,32], index: 8, kind: input, shape index: {}]
  %s9 = inlined_call_operand.vmem [shape: bf16[32,32], index: 9, kind: input, shape index: {}]
  %s10 = inlined_call_operand.vmem [shape: f32[1,32], index: 10, kind: input, shape index: {}]
  %s11 = inlined_call_operand.hbm [shape: f32[2,16,32], index: 11, kind: output, shape index: {}]
  %s12 = sld [smem:[#allocation0]]
  $region101: #{tpu_custom_call.1} parent=0
    _
  %s14 = ssub.s32 1, %s12
  %s15 = scalar_select 0, %s14, %s12
  $region1: #{tpu_custom_call.1} parent=0
    #allocation2 [shape = 'u8[16384]{0}', space=vmem, size = 0x4000, scoped, tag = 'input window, operand 0']
    #allocation3 [shape = 's32[2]{0}', space=sflag, size = 0x8, scoped, tag = 'scoped memory for tpu_custom_call.1']
    #allocation4 [shape = 's32[2]{0}', space=sflag, size = 0x8, scoped, tag = 'scoped memory for tpu_custom_call.1']
    #allocation5 [shape = 'u8[8192]{0}', space=vmem, size = 0x2000, scoped, tag = 'input window, operand 1']
    #allocation6 [shape = 's32[2]{0}', space=sflag, size = 0x8, scoped, tag = 'scoped memory for tpu_custom_call.1']
    #allocation7 [shape = 'u8[8192]{0}', space=vmem, size = 0x2000, scoped, tag = 'input window, operand 4, single buffered']
    #allocation8 [shape = 'u8[512]{0}', space=vmem, size = 0x400, scoped, tag = 'input window, operand 5, single buffered']
    #allocation9 [shape = 's32[1]{0}', space=sflag, size = 0x4, scoped, tag = 'scoped memory for tpu_custom_call.1']
    #allocation10 [shape = 'u8[8192]{0}', space=vmem, size = 0x2000, scoped, tag = 'input window, operand 7, single buffered']
    #allocation11 [shape = 'u8[512]{0}', space=vmem, size = 0x400, scoped, tag = 'input window, operand 8, single buffered']
    #allocation12 [shape = 's32[1]{0}', space=sflag, size = 0x4, scoped, tag = 'scoped memory for tpu_custom_call.1']
    #allocation13 [shape = 'u8[8192]{0}', space=vmem, size = 0x2000, scoped, tag = 'output window, operand 0']
    %16 = vsyncpa [#allocation3], 0
    %s17 = scalar_lea.sflag [#allocation3], 1
    %18 = vsyncpa %s17, 0
    %19 = vsyncpa [#allocation6], 0
    %s20 = scalar_lea.sflag [#allocation6], 1
    %21 = vsyncpa %s20, 0
    %22 = vsyncpa [#allocation9], 0
    %23 = vsyncpa [#allocation12], 0
    %24 = vsyncpa [#allocation4], 0
    %s25 = scalar_lea.sflag [#allocation4], 1
    %26 = vsyncpa %s25, 0
    loop: start=0, step=1, limit=6
    $region2: #{tpu_custom_call.1} parent=1 // loop_pre_header
      _
    $region3: #{tpu_custom_call.1} parent=1 // loop_header
      %s28 = sphi 0, %s32
      %p29 = scmp.ge.s32.totalorder %s28, 6
      %s35 = sphi 0, %s47
      %s36 = sphi 0, %s43
      %s37 = sphi 0, %s35
      %s38 = sphi 0, %s36
      %s39 = sphi 0, %s37
      %s40 = sphi 0, %s38
      %s50 = sphi 0, %s52
      %s53 = sphi 0, %s50
      %s54 = sphi 0, %s53
      %s70 = sphi 0, %s54
      %s78 = sphi 0, %s80
      %s81 = sphi 0, %s78
      %s82 = sphi 0, %s81
      %s98 = sphi 0, %s82
      %s102 = sphi 0, %s102
      %s104 = sphi 0, %s102
      %s105 = sphi 0, %s104
      %s119 = sphi 0, %s105
      %s123 = sphi 0, %s123
      %s125 = sphi 0, %s123
      %s126 = sphi 0, %s125
      %s140 = sphi 0, %s126
      %s144 = sphi 0, %s144
      %s146 = sphi 0, %s144
      %s147 = sphi 0, %s146
      %s161 = sphi 0, %s147
      %s165 = sphi 0, %s165
      %s167 = sphi 0, %s165
      %s168 = sphi 0, %s167
      %s182 = sphi 0, %s168
      %s186 = sphi 0, %s186
      %s188 = sphi 0, %s186
      %s189 = sphi 0, %s188
      %s203 = sphi 0, %s189
      %s207 = sphi 0, %s207
      %s209 = sphi 0, %s207
      %s210 = sphi 0, %s209
      %s224 = sphi 0, %s210
      %s228 = sphi 0, %s228
      %s230 = sphi 0, %s228
      %s231 = sphi 0, %s230
      %s245 = sphi 0, %s231
      %s249 = sphi 0, %s249
      %s251 = sphi 0, %s249
      %s252 = sphi 0, %s251
      %s266 = sphi 0, %s252
      %s270 = sphi 0, %s270
      %s272 = sphi 0, %s270
      %s273 = sphi 0, %s272
      %s287 = sphi 0, %s273
      %s295 = sphi 0, %s297
      %s298 = sphi 0, %s295
      %s299 = sphi 0, %s298
      %s315 = sphi 0, %s299
    $region4: #{tpu_custom_call.1} parent=1 // loop_header_branch
      %31 = sbr.rel (%p29) target = $region8
    $region5: #{tpu_custom_call.1} parent=1 // loop_body
      %s33 = ssub.s32 %s28, 1
      %s34 = ssub.s32 %s28, 2
      %s41 = sadd.s32 1, %s36
      %p42 = scmp.ge.s32.totalorder %s41, 2
      %s43 = scalar_select %p42, 0, %s41
      %s44 = sadd.s32 1, %s35
      %s45 = scalar_select %p42, %s44, %s35
      %p46 = scmp.ge.s32.totalorder %s45, 2
      %s47 = scalar_select %p46, 0, %s45
      %s48 = ssub.s32 %s35, %s47
      %p49 = scmp.eq.s32.totalorder %s48, 0
      %s51 = sadd.s32 %s50, 1
      %s52 = scalar_select %p49, %s50, %s51
      %p55 = pneg %p49
      %p56 = scmp.eq.s32.totalorder %s28, 3
      %p57 = por %p55, %p56
      %p58 = scmp.ne.s32.totalorder %s50, %s53
      %p59 = scmp.eq.s32.totalorder %s28, 0
      %p60 = por %p58, %p59
      %p61 = scmp.ne.s32.totalorder %s50, %s53
      %p62 = scmp.eq.s32.totalorder %s33, 3
      %p63 = por %p61, %p62
      %p64 = scmp.ne.s32.totalorder %s53, %s54
      %p65 = scmp.eq.s32.totalorder %s33, 0
      %p66 = por %p64, %p65
      %p67 = scmp.ne.s32.totalorder %s53, %s54
      %p68 = scmp.eq.s32.totalorder %s34, 3
      %p69 = por %p67, %p68
      %p71 = scmp.ne.s32.totalorder %s54, %s70
      %p72 = scmp.eq.s32.totalorder %s34, 0
      %p73 = por %p71, %p72
      %s74 = ssub.s32 %s35, %s47
      %s75 = ssub.s32 %s36, %s43
      %s76 = sor.u32 %s74, %s75
      %p77 = scmp.eq.s32.totalorder %s76, 0
      %s79 = sadd.s32 %s78, 1
      %s80 = scalar_select %p77, %s78, %s79
      %p83 = pneg %p77
      %p84 = scmp.eq.s32.totalorder %s28, 3
      %p85 = por %p83, %p84
      %p86 = scmp.ne.s32.totalorder %s78, %s81
      %p87 = scmp.eq.s32.totalorder %s28, 0
      %p88 = por %p86, %p87
      %p89 = scmp.ne.s32.totalorder %s78, %s81
      %p90 = scmp.eq.s32.totalorder %s33, 3
      %p91 = por %p89, %p90
      %p92 = scmp.ne.s32.totalorder %s81, %s82
      %p93 = scmp.eq.s32.totalorder %s33, 0
      %p94 = por %p92, %p93
      %p95 = scmp.ne.s32.totalorder %s81, %s82
      %p96 = scmp.eq.s32.totalorder %s34, 3
      %p97 = por %p95, %p96
      %p99 = scmp.ne.s32.totalorder %s82, %s98
      %p100 = scmp.eq.s32.totalorder %s34, 0
      %p101 = por %p99, %p100
      %s103 = sadd.s32 %s102, 1
      %p106 = scmp.eq.s32.totalorder %s28, 3
      %p107 = scmp.ne.s32.totalorder %s102, %s104
      %p108 = scmp.eq.s32.totalorder %s28, 0
      %p109 = por %p107, %p108
      %p110 = scmp.ne.s32.totalorder %s102, %s104
      %p111 = scmp.eq.s32.totalorder %s33, 3
      %p112 = por %p110, %p111
      %p113 = scmp.ne.s32.totalorder %s104, %s105
      %p114 = scmp.eq.s32.totalorder %s33, 0
      %p115 = por %p113, %p114
      %p116 = scmp.ne.s32.totalorder %s104, %s105
      %p117 = scmp.eq.s32.totalorder %s34, 3
      %p118 = por %p116, %p117
      %p120 = scmp.ne.s32.totalorder %s105, %s119
      %p121 = scmp.eq.s32.totalorder %s34, 0
      %p122 = por %p120, %p121
      %s124 = sadd.s32 %s123, 1
      %p127 = scmp.eq.s32.totalorder %s28, 3
      %p128 = scmp.ne.s32.totalorder %s123, %s125
      %p129 = scmp.eq.s32.totalorder %s28, 0
      %p130 = por %p128, %p129
      %p131 = scmp.ne.s32.totalorder %s123, %s125
      %p132 = scmp.eq.s32.totalorder %s33, 3
      %p133 = por %p131, %p132
      %p134 = scmp.ne.s32.totalorder %s125, %s126
      %p135 = scmp.eq.s32.totalorder %s33, 0
      %p136 = por %p134, %p135
      %p137 = scmp.ne.s32.totalorder %s125, %s126
      %p138 = scmp.eq.s32.totalorder %s34, 3
      %p139 = por %p137, %p138
      %p141 = scmp.ne.s32.totalorder %s126, %s140
      %p142 = scmp.eq.s32.totalorder %s34, 0
      %p143 = por %p141, %p142
      %s145 = sadd.s32 %s144, 1
      %p148 = scmp.eq.s32.totalorder %s28, 3
      %p149 = scmp.ne.s32.totalorder %s144, %s146
      %p150 = scmp.eq.s32.totalorder %s28, 0
      %p151 = por %p149, %p150
      %p152 = scmp.ne.s32.totalorder %s144, %s146
      %p153 = scmp.eq.s32.totalorder %s33, 3
      %p154 = por %p152, %p153
      %p155 = scmp.ne.s32.totalorder %s146, %s147
      %p156 = scmp.eq.s32.totalorder %s33, 0
      %p157 = por %p155, %p156
      %p158 = scmp.ne.s32.totalorder %s146, %s147
      %p159 = scmp.eq.s32.totalorder %s34, 3
      %p160 = por %p158, %p159
      %p162 = scmp.ne.s32.totalorder %s147, %s161
      %p163 = scmp.eq.s32.totalorder %s34, 0
      %p164 = por %p162, %p163
      %s166 = sadd.s32 %s165, 1
      %p169 = scmp.eq.s32.totalorder %s28, 3
      %p170 = scmp.ne.s32.totalorder %s165, %s167
      %p171 = scmp.eq.s32.totalorder %s28, 0
      %p172 = por %p170, %p171
      %p173 = scmp.ne.s32.totalorder %s165, %s167
      %p174 = scmp.eq.s32.totalorder %s33, 3
      %p175 = por %p173, %p174
      %p176 = scmp.ne.s32.totalorder %s167, %s168
      %p177 = scmp.eq.s32.totalorder %s33, 0
      %p178 = por %p176, %p177
      %p179 = scmp.ne.s32.totalorder %s167, %s168
      %p180 = scmp.eq.s32.totalorder %s34, 3
      %p181 = por %p179, %p180
      %p183 = scmp.ne.s32.totalorder %s168, %s182
      %p184 = scmp.eq.s32.totalorder %s34, 0
      %p185 = por %p183, %p184
      %s187 = sadd.s32 %s186, 1
      %p190 = scmp.eq.s32.totalorder %s28, 3
      %p191 = scmp.ne.s32.totalorder %s186, %s188
      %p192 = scmp.eq.s32.totalorder %s28, 0
      %p193 = por %p191, %p192
      %p194 = scmp.ne.s32.totalorder %s186, %s188
      %p195 = scmp.eq.s32.totalorder %s33, 3
      %p196 = por %p194, %p195
      %p197 = scmp.ne.s32.totalorder %s188, %s189
      %p198 = scmp.eq.s32.totalorder %s33, 0
      %p199 = por %p197, %p198
      %p200 = scmp.ne.s32.totalorder %s188, %s189
      %p201 = scmp.eq.s32.totalorder %s34, 3
      %p202 = por %p200, %p201
      %p204 = scmp.ne.s32.totalorder %s189, %s203
      %p205 = scmp.eq.s32.totalorder %s34, 0
      %p206 = por %p204, %p205
      %s208 = sadd.s32 %s207, 1
      %p211 = scmp.eq.s32.totalorder %s28, 3
      %p212 = scmp.ne.s32.totalorder %s207, %s209
      %p213 = scmp.eq.s32.totalorder %s28, 0
      %p214 = por %p212, %p213
      %p215 = scmp.ne.s32.totalorder %s207, %s209
      %p216 = scmp.eq.s32.totalorder %s33, 3
      %p217 = por %p215, %p216
      %p218 = scmp.ne.s32.totalorder %s209, %s210
      %p219 = scmp.eq.s32.totalorder %s33, 0
      %p220 = por %p218, %p219
      %p221 = scmp.ne.s32.totalorder %s209, %s210
      %p222 = scmp.eq.s32.totalorder %s34, 3
      %p223 = por %p221, %p222
      %p225 = scmp.ne.s32.totalorder %s210, %s224
      %p226 = scmp.eq.s32.totalorder %s34, 0
      %p227 = por %p225, %p226
      %s229 = sadd.s32 %s228, 1
      %p232 = scmp.eq.s32.totalorder %s28, 3
      %p233 = scmp.ne.s32.totalorder %s228, %s230
      %p234 = scmp.eq.s32.totalorder %s28, 0
      %p235 = por %p233, %p234
      %p236 = scmp.ne.s32.totalorder %s228, %s230
      %p237 = scmp.eq.s32.totalorder %s33, 3
      %p238 = por %p236, %p237
      %p239 = scmp.ne.s32.totalorder %s230, %s231
      %p240 = scmp.eq.s32.totalorder %s33, 0
      %p241 = por %p239, %p240
      %p242 = scmp.ne.s32.totalorder %s230, %s231
      %p243 = scmp.eq.s32.totalorder %s34, 3
      %p244 = por %p242, %p243
      %p246 = scmp.ne.s32.totalorder %s231, %s245
      %p247 = scmp.eq.s32.totalorder %s34, 0
      %p248 = por %p246, %p247
      %s250 = sadd.s32 %s249, 1
      %p253 = scmp.eq.s32.totalorder %s28, 3
      %p254 = scmp.ne.s32.totalorder %s249, %s251
      %p255 = scmp.eq.s32.totalorder %s28, 0
      %p256 = por %p254, %p255
      %p257 = scmp.ne.s32.totalorder %s249, %s251
      %p258 = scmp.eq.s32.totalorder %s33, 3
      %p259 = por %p257, %p258
      %p260 = scmp.ne.s32.totalorder %s251, %s252
      %p261 = scmp.eq.s32.totalorder %s33, 0
      %p262 = por %p260, %p261
      %p263 = scmp.ne.s32.totalorder %s251, %s252
      %p264 = scmp.eq.s32.totalorder %s34, 3
      %p265 = por %p263, %p264
      %p267 = scmp.ne.s32.totalorder %s252, %s266
      %p268 = scmp.eq.s32.totalorder %s34, 0
      %p269 = por %p267, %p268
      %s271 = sadd.s32 %s270, 1
      %p274 = scmp.eq.s32.totalorder %s28, 3
      %p275 = scmp.ne.s32.totalorder %s270, %s272
      %p276 = scmp.eq.s32.totalorder %s28, 0
      %p277 = por %p275, %p276
      %p278 = scmp.ne.s32.totalorder %s270, %s272
      %p279 = scmp.eq.s32.totalorder %s33, 3
      %p280 = por %p278, %p279
      %p281 = scmp.ne.s32.totalorder %s272, %s273
      %p282 = scmp.eq.s32.totalorder %s33, 0
      %p283 = por %p281, %p282
      %p284 = scmp.ne.s32.totalorder %s272, %s273
      %p285 = scmp.eq.s32.totalorder %s34, 3
      %p286 = por %p284, %p285
      %p288 = scmp.ne.s32.totalorder %s273, %s287
      %p289 = scmp.eq.s32.totalorder %s34, 0
      %p290 = por %p288, %p289
      %s291 = ssub.s32 %s35, %s47
      %s292 = ssub.s32 %s36, %s43
      %s293 = sor.u32 %s291, %s292
      %p294 = scmp.eq.s32.totalorder %s293, 0
      %s296 = sadd.s32 %s295, 1
      %s297 = scalar_select %p294, %s295, %s296
      %p300 = pneg %p294
      %p301 = scmp.eq.s32.totalorder %s28, 3
      %p302 = por %p300, %p301
      %p303 = scmp.ne.s32.totalorder %s295, %s298
      %p304 = scmp.eq.s32.totalorder %s28, 0
      %p305 = por %p303, %p304
      %p306 = scmp.ne.s32.totalorder %s295, %s298
      %p307 = scmp.eq.s32.totalorder %s33, 3
      %p308 = por %p306, %p307
      %p309 = scmp.ne.s32.totalorder %s298, %s299
      %p310 = scmp.eq.s32.totalorder %s33, 0
      %p311 = por %p309, %p310
      %p312 = scmp.ne.s32.totalorder %s298, %s299
      %p313 = scmp.eq.s32.totalorder %s34, 3
      %p314 = por %p312, %p313
      %p316 = scmp.ne.s32.totalorder %s299, %s315
      %p317 = scmp.eq.s32.totalorder %s34, 0
      %p318 = por %p316, %p317
      %p319 = scmp.le.s32.totalorder 1, %s28
      %p320 = scmp.lt.s32.totalorder %s28, 5
      %p321 = pnand %p319, %p320
      %p322 = pneg %p321
      // Predicated region
      $region9: #{tpu_custom_call.1} parent=5 // pred_check
        _
      $region10: #{tpu_custom_call.1} parent=5 // pred_check_branch
        %324 = sbr.rel (%p321) target = $region12
      $region11: #{tpu_custom_call.1} parent=5 // pred_region
        %s325 = ssub.s32 %s28, 1
        // Predicated region
        $region13: #{tpu_custom_call.1} parent=11 // pred_check
          %p326 = pneg %p115
        $region14: #{tpu_custom_call.1} parent=11 // pred_check_branch
          %328 = sbr.rel (%p326) target = $region16
        $region15: #{tpu_custom_call.1} parent=11 // pred_region
          _
        $region16: #{tpu_custom_call.1} parent=11 // pred_fallthru
          _
        // Predicated region
        $region17: #{tpu_custom_call.1} parent=11 // pred_check
          %p329 = pneg %p136
        $region18: #{tpu_custom_call.1} parent=11 // pred_check_branch
          %331 = sbr.rel (%p329) target = $region20
        $region19: #{tpu_custom_call.1} parent=11 // pred_region
          _
        $region20: #{tpu_custom_call.1} parent=11 // pred_fallthru
          _
        // Predicated region
        $region21: #{tpu_custom_call.1} parent=11 // pred_check
          %p332 = pneg %p157
        $region22: #{tpu_custom_call.1} parent=11 // pred_check_branch
          %334 = sbr.rel (%p332) target = $region24
        $region23: #{tpu_custom_call.1} parent=11 // pred_region
          %s336 = ssub.s32 256, 256
          %337 = vsyncadd [#allocation6], %s336
          %s338 = sshll.u32 [#allocation7], 4
          %s339 = int_to_ptr.vmem [resolvable:$true] %s338
          %344 = dma.hbm_to_vmem [thread:$0]  %s4, 256, %s339, [#allocation6], 64, 64, 4
        $region24: #{tpu_custom_call.1} parent=11 // pred_fallthru
          _
        // Predicated region
        $region25: #{tpu_custom_call.1} parent=11 // pred_check
          %p345 = pneg %p178
        $region26: #{tpu_custom_call.1} parent=11 // pred_check_branch
          %347 = sbr.rel (%p345) target = $region28
        $region27: #{tpu_custom_call.1} parent=11 // pred_region
          %s349 = ssub.s32 16, 16
          %350 = vsyncadd [#allocation9], %s349
          %s352 = sshll.u32 [#allocation8], 4
          %s353 = int_to_ptr.vmem [resolvable:$true] %s352
          %355 = dma.hbm_to_vmem [thread:$0]  %s5, 16, %s353, [#allocation9]
        $region28: #{tpu_custom_call.1} parent=11 // pred_fallthru
          _
        // Predicated region
        $region29: #{tpu_custom_call.1} parent=11 // pred_check
          %p356 = pneg %p199
        $region30: #{tpu_custom_call.1} parent=11 // pred_check_branch
          %358 = sbr.rel (%p356) target = $region32
        $region31: #{tpu_custom_call.1} parent=11 // pred_region
          _
        $region32: #{tpu_custom_call.1} parent=11 // pred_fallthru
          _
        // Predicated region
        $region33: #{tpu_custom_call.1} parent=11 // pred_check
          %p359 = pneg %p220
        $region34: #{tpu_custom_call.1} parent=11 // pred_check_branch
          %361 = sbr.rel (%p359) target = $region36
        $region35: #{tpu_custom_call.1} parent=11 // pred_region
          %s363 = ssub.s32 256, 256
          %364 = vsyncadd [#allocation9], %s363
          %s365 = sshll.u32 [#allocation10], 4
          %s366 = int_to_ptr.vmem [resolvable:$true] %s365
          %371 = dma.hbm_to_vmem [thread:$0]  %s7, 256, %s366, [#allocation9], 64, 64, 4
        $region36: #{tpu_custom_call.1} parent=11 // pred_fallthru
          _
        // Predicated region
        $region37: #{tpu_custom_call.1} parent=11 // pred_check
          %p372 = pneg %p241
        $region38: #{tpu_custom_call.1} parent=11 // pred_check_branch
          %374 = sbr.rel (%p372) target = $region40
        $region39: #{tpu_custom_call.1} parent=11 // pred_region
          %s376 = ssub.s32 16, 16
          %377 = vsyncadd [#allocation12], %s376
          %s379 = sshll.u32 [#allocation11], 4
          %s380 = int_to_ptr.vmem [resolvable:$true] %s379
          %382 = dma.hbm_to_vmem [thread:$0]  %s8, 16, %s380, [#allocation12]
        $region40: #{tpu_custom_call.1} parent=11 // pred_fallthru
          _
        // Predicated region
        $region41: #{tpu_custom_call.1} parent=11 // pred_check
          %p383 = pneg %p262
        $region42: #{tpu_custom_call.1} parent=11 // pred_check_branch
          %385 = sbr.rel (%p383) target = $region44
        $region43: #{tpu_custom_call.1} parent=11 // pred_region
          _
        $region44: #{tpu_custom_call.1} parent=11 // pred_fallthru
          _
        // Predicated region
        $region45: #{tpu_custom_call.1} parent=11 // pred_check
          %p386 = pneg %p283
        $region46: #{tpu_custom_call.1} parent=11 // pred_check_branch
          %388 = sbr.rel (%p386) target = $region48
        $region47: #{tpu_custom_call.1} parent=11 // pred_region
          _
        $region48: #{tpu_custom_call.1} parent=11 // pred_fallthru
          _
      $region12: #{tpu_custom_call.1} parent=5 // pred_fallthru
        _
      %p389 = scmp.lt.s32.totalorder %s28, 4
      // Predicated region
      $region49: #{tpu_custom_call.1} parent=5 // pred_check
        %p390 = pneg %p389
      $region50: #{tpu_custom_call.1} parent=5 // pred_check_branch
        %392 = sbr.rel (%p390) target = $region52
      $region51: #{tpu_custom_call.1} parent=5 // pred_region
        // Predicated region
        $region53: #{tpu_custom_call.1} parent=51 // pred_check
          %p393 = pneg %p60
        $region54: #{tpu_custom_call.1} parent=51 // pred_check_branch
          %395 = sbr.rel (%p393) target = $region56
        $region55: #{tpu_custom_call.1} parent=51 // pred_region
          %s396 = sand.u32 %s50, 1
          %s397 = scalar_lea.sflag [#allocation3], %s396
          %s398 = sand.u32 %s50, 1
          %s399 = smul.addr %s398, 16
          %s400 = scalar_lea.vmem [#allocation2], %s399
          %s402 = ssub.s32 256, 256
          %403 = vsyncadd %s397, %s402
          %s404 = smul.addr %s35, 2
          %s405 = smul.addr %s404, 128
          %s406 = scalar_lea.hbm %s0, %s405
          %s407 = sshll.u32 %s400, 4
          %s408 = int_to_ptr.vmem [resolvable:$true] %s407
          %413 = dma.hbm_to_vmem [thread:$0]  %s406, 256, %s408, %s397, 128, 128, 8
        $region56: #{tpu_custom_call.1} parent=51 // pred_fallthru
          _
        // Predicated region
        $region57: #{tpu_custom_call.1} parent=51 // pred_check
          %p414 = pneg %p88
        $region58: #{tpu_custom_call.1} parent=51 // pred_check_branch
          %416 = sbr.rel (%p414) target = $region60
        $region59: #{tpu_custom_call.1} parent=51 // pred_region
          %s417 = sand.u32 %s28, 1
          %s418 = scalar_lea.sflag [#allocation6], %s417
          %s419 = sand.u32 %s78, 1
          %s420 = smul.addr %s419, 8
          %s421 = scalar_lea.vmem [#allocation5], %s420
          %s423 = ssub.s32 128, 128
          %424 = vsyncadd %s418, %s423
          %s425 = smul.addr %s35, 2
          %s426 = sadd.s32 %s36, %s425
          %s427 = smul.addr %s426, 128
          %s428 = scalar_lea.hbm %s1, %s427
          %s430 = sshll.u32 %s421, 4
          %s431 = int_to_ptr.vmem [resolvable:$true] %s430
          %433 = dma.hbm_to_vmem [thread:$0]  %s428, 128, %s431, %s418
        $region60: #{tpu_custom_call.1} parent=51 // pred_fallthru
          _
      $region52: #{tpu_custom_call.1} parent=5 // pred_fallthru
        _
      %p434 = scmp.le.s32.totalorder 1, %s28
      %p435 = scmp.lt.s32.totalorder %s28, 5
      %p436 = pnand %p434, %p435
      %p437 = pneg %p436
      // Predicated region
      $region61: #{tpu_custom_call.1} parent=5 // pred_check
        _
      $region62: #{tpu_custom_call.1} parent=5 // pred_check_branch
        %439 = sbr.rel (%p436) target = $region64
      $region63: #{tpu_custom_call.1} parent=5 // pred_region
        %s440 = ssub.s32 %s28, 1
        %s441 = sand.u32 %s53, 1
        %s442 = scalar_lea.sflag [#allocation3], %s441
        %s443 = sand.u32 %s53, 1
        %s444 = smul.addr %s443, 16
        %s445 = scalar_lea.vmem [#allocation2], %s444
        // Predicated region
        $region65: #{tpu_custom_call.1} parent=63 // pred_check
          %p446 = pneg %p66
        $region66: #{tpu_custom_call.1} parent=63 // pred_check_branch
          %448 = sbr.rel (%p446) target = $region68
        $region67: #{tpu_custom_call.1} parent=63 // pred_region
          %449 = dma.done %s442, 256
        $region68: #{tpu_custom_call.1} parent=63 // pred_fallthru
          _
        %s450 = sand.u32 %s33, 1
        %s451 = scalar_lea.sflag [#allocation6], %s450
        %s452 = sand.u32 %s81, 1
        %s453 = smul.addr %s452, 8
        %s454 = scalar_lea.vmem [#allocation5], %s453
        // Predicated region
        $region69: #{tpu_custom_call.1} parent=63 // pred_check
          %p455 = pneg %p94
        $region70: #{tpu_custom_call.1} parent=63 // pred_check_branch
          %457 = sbr.rel (%p455) target = $region72
        $region71: #{tpu_custom_call.1} parent=63 // pred_region
          %458 = dma.done %s451, 128
        $region72: #{tpu_custom_call.1} parent=63 // pred_fallthru
          _
        // Predicated region
        $region73: #{tpu_custom_call.1} parent=63 // pred_check
          %p459 = pneg %p157
        $region74: #{tpu_custom_call.1} parent=63 // pred_check_branch
          %461 = sbr.rel (%p459) target = $region76
        $region75: #{tpu_custom_call.1} parent=63 // pred_region
          %462 = dma.done [#allocation6], 256
        $region76: #{tpu_custom_call.1} parent=63 // pred_fallthru
          _
        // Predicated region
        $region77: #{tpu_custom_call.1} parent=63 // pred_check
          %p463 = pneg %p178
        $region78: #{tpu_custom_call.1} parent=63 // pred_check_branch
          %465 = sbr.rel (%p463) target = $region80
        $region79: #{tpu_custom_call.1} parent=63 // pred_region
          %466 = dma.done [#allocation9], 16
        $region80: #{tpu_custom_call.1} parent=63 // pred_fallthru
          _
        // Predicated region
        $region81: #{tpu_custom_call.1} parent=63 // pred_check
          %p467 = pneg %p220
        $region82: #{tpu_custom_call.1} parent=63 // pred_check_branch
          %469 = sbr.rel (%p467) target = $region84
        $region83: #{tpu_custom_call.1} parent=63 // pred_region
          %470 = dma.done [#allocation9], 256
        $region84: #{tpu_custom_call.1} parent=63 // pred_fallthru
          _
        // Predicated region
        $region85: #{tpu_custom_call.1} parent=63 // pred_check
          %p471 = pneg %p241
        $region86: #{tpu_custom_call.1} parent=63 // pred_check_branch
          %473 = sbr.rel (%p471) target = $region88
        $region87: #{tpu_custom_call.1} parent=63 // pred_region
          %474 = dma.done [#allocation12], 16
        $region88: #{tpu_custom_call.1} parent=63 // pred_fallthru
          _
        %s475 = sand.u32 %s53, 1
        %s476 = scalar_lea.sflag [#allocation3], %s475
        %s477 = sand.u32 %s53, 1
        %s478 = smul.addr %s477, 16
        %s479 = scalar_lea.vmem [#allocation2], %s478
        %p480 = pneg %p66
        %p481 = pneg %p63
        %s482 = sand.u32 %s33, 1
        %s483 = scalar_lea.sflag [#allocation6], %s482
        %s484 = sand.u32 %s81, 1
        %s485 = smul.addr %s484, 8
        %s486 = scalar_lea.vmem [#allocation5], %s485
        %p487 = pneg %p94
        %p488 = pneg %p91
        %p489 = pneg %p115
        %p490 = pneg %p112
        %p491 = pneg %p136
        %p492 = pneg %p133
        %p493 = pneg %p157
        %p494 = pneg %p154
        %p495 = pneg %p178
        %p496 = pneg %p175
        %p497 = pneg %p199
        %p498 = pneg %p196
        %p499 = pneg %p220
        %p500 = pneg %p217
        %p501 = pneg %p241
        %p502 = pneg %p238
        %p503 = pneg %p262
        %p504 = pneg %p259
        %p505 = pneg %p283
        %p506 = pneg %p280
        %p507 = pneg %p311
        %p508 = pneg %p308
        %s509 = sand.u32 %s298, 1
        %s510 = scalar_lea.sflag [#allocation4], %s509
        %s511 = sand.u32 %s298, 1
        %s512 = smul.addr %s511, 8
        %s513 = scalar_lea.vmem [#allocation13], %s512
        %v515 = vld [vmem:[%s445] sm:$0xff]
        %v516 = vld [vmem:[%s445 + $0x8] sm:$0xff]
        %v517 = vld [vmem:[%s454] sm:$0xff]
        %v518 = vld [vmem:[%s2] sm:$0x1]
        %v519 = vld [vmem:[%s3] sm:$0x1]
        %vm520 = vcmask 261120
        %v521 = vsel %vm520, %v515, 0.0
        %522 = vadd.xlane.f32.xlu0 %v521
        %v523 = vpop.xlane.xlu0 %522
        %v524 = vsel %vm520, %v516, 0.0
        %525 = vadd.xlane.f32.xlu0 %v524
        %v526 = vpop.xlane.xlu0 %525
        %v527 = vrcp.pop 32.0
        %v528 = vmul.f32 %v523, %v527
        %v529 = vmul.f32 %v526, %v527
        %v530 = vsub.f32 %v515, %v528
        %v531 = vsub.f32 %v516, %v529
        %v532 = vmul.f32 %v530, %v530
        %v533 = vmul.f32 %v531, %v531
        %v534 = vsel %vm520, %v532, 0.0
        %535 = vadd.xlane.f32.xlu0 %v534
        %v536 = vpop.xlane.xlu0 %535
        %v537 = vsel %vm520, %v533, 0.0
        %538 = vadd.xlane.f32.xlu0 %v537
        %v539 = vpop.xlane.xlu0 %538
        %v540 = vmul.f32 %v536, %v527
        %v541 = vmul.f32 %v539, %v527
        %v542 = vadd.f32 %v540, 1e-05
        %v543 = vadd.f32 %v541, 1e-05
        %v544 = vrsqrt.pop %v542
        %v545 = vrsqrt.pop %v543
        %v546 = vmul.f32 %v530, %v544
        %v547 = vmul.f32 %v531, %v545
        %v549 = vlaneseq
        %v550 = vshrl.u32 %v549, 7
        %v551 = vsub.s32 0, %v550
        %v552 = vrot.slane %v518, %v551
        %v554 = vmul.f32 %v546, %v552
        %v555 = vmul.f32 %v547, %v552
        %v557 = vlaneseq
        %v558 = vshrl.u32 %v557, 7
        %v559 = vsub.s32 0, %v558
        %v560 = vrot.slane %v519, %v559
        %v562 = vadd.f32 %v554, %v560
        %v563 = vadd.f32 %v555, %v560
        %v564 = vpack.c.bf16 %v563, %v562
        %v565 = vsel %vm520, %v517, 0.0
        %566 = vadd.xlane.f32.xlu0 %v565
        %v567 = vpop.xlane.xlu0 %566
        %v568 = vmul.f32 %v567, %v527
        %v569 = vsub.f32 %v517, %v568
        %v570 = vmul.f32 %v569, %v569
        %v571 = vsel %vm520, %v570, 0.0
        %572 = vadd.xlane.f32.xlu0 %v571
        %v573 = vpop.xlane.xlu0 %572
        %v574 = vmul.f32 %v573, %v527
        %v575 = vadd.f32 %v574, 1e-05
        %v576 = vrsqrt.pop %v575
        %v577 = vmul.f32 %v569, %v576
        %v578 = vmul.f32 %v577, %v552
        %v579 = vadd.f32 %v578, %v560
        %v580 = vpack.c.bf16 %v579, %v579
        %v581 = vld [vmem:[#allocation7] sm:$0xf]
        %v582 = vld [vmem:[#allocation7 + $0x4] sm:$0xf]
        %v583 = vld [vmem:[#allocation7 + $0x8] sm:$0xf]
        %v584 = vld [vmem:[#allocation7 + $0xc] sm:$0xf]
        %v585 = vld [vmem:[#allocation8] sm:$0x1]
        %v587 = vlaneseq
        %v588 = vshrl.u32 %v587, 7
        %v589 = vsub.s32 0, %v588
        %v590 = vrot.slane %v585, %v589
        %v596 = vunpack.c.l.b16 %v581
        %v597 = vunpack.c.l.b16 %v582
        %v598 = vunpack.c.l.b16 %v583
        %v599 = vunpack.c.l.b16 %v584
        %v600 = vpack.c.b16 %v597, %v596
        %v601 = vpack.c.b16 %v599, %v598
        %v605 = vsel %vm520, %v580, 0
        %607 = vmatprep.subr.bf16.mxu0 0
        %608 = vmatpush1.bf16.msra.mxu0 %v600
        %609 = vmatprep.subr.bf16.mxu0 0
        %610 = vmatpush1.bf16.msra.mxu0 %v601
        %611 = vmatprep.subr.bf16.mxu0 0
        %612 = vmatpush1.bf16.msra.mxu0 0
        %613 = vmatprep.subr.bf16.mxu0 0
        %614 = vmatpush1.bf16.msra.mxu0 0
        %615 = vmatprep.subr.bf16.mxu0 0
        %616 = vmatpush1.bf16.msra.mxu0 0
        %617 = vmatprep.subr.bf16.mxu0 0
        %618 = vmatpush1.bf16.msra.mxu0 0
        %619 = vmatprep.subr.bf16.mxu0 0
        %620 = vmatpush1.bf16.msra.mxu0 0
        %621 = vmatprep.subr.bf16.mxu0 0
        %622 = vmatpush1.bf16.msra.mxu0 0
        %623 = vmatprep.subr.bf16.mxu0 0
        %624 = vmatpush1.bf16.msra.mxu0 0
        %625 = vmatprep.subr.bf16.mxu0 0
        %626 = vmatpush1.bf16.msra.mxu0 0
        %627 = vmatprep.subr.bf16.mxu0 0
        %628 = vmatpush1.bf16.msra.mxu0 0
        %629 = vmatprep.subr.bf16.mxu0 0
        %630 = vmatpush1.bf16.msra.mxu0 0
        %631 = vmatprep.subr.bf16.mxu0 0
        %632 = vmatpush1.bf16.msra.mxu0 0
        %633 = vmatprep.subr.bf16.mxu0 0
        %634 = vmatpush1.bf16.msra.mxu0 0
        %635 = vmatprep.subr.bf16.mxu0 0
        %636 = vmatpush1.bf16.msra.mxu0 0
        %637 = vmatprep.subr.bf16.mxu0 0
        %638 = vmatpush1.bf16.msra.mxu0 0
        %639 = vmatprep.mubr.bf16.mxu0 0
        %640 = vmatmul.mubr.bf16.gmra.mrb[0].mxu0 %v605
        %v641 = vpop.f32.mrb[0].mxu0
        %v642 = vadd.f32 %v590, %v641
        %v643 = vpop.f32.mrb[0].mxu0
        %v644 = vpop.f32.mrb[0].mxu0
        %v645 = vpop.f32.mrb[0].mxu0
        %646 = vdwg.mxu0
        %v647 = vld [vmem:[%s6] sm:$0xf]
        %v648 = vld [vmem:[%s6 + $0x4] sm:$0xf]
        %v649 = vld [vmem:[%s6 + $0x8] sm:$0xf]
        %v650 = vld [vmem:[%s6 + $0xc] sm:$0xf]
        %v655 = vunpack.c.l.b16 %v647
        %v656 = vunpack.c.l.b16 %v648
        %v657 = vunpack.c.l.b16 %v649
        %v658 = vunpack.c.l.b16 %v650
        %v659 = vpack.c.b16 %v656, %v655
        %v660 = vpack.c.b16 %v658, %v657
        %v664 = vsel %vm520, %v564, 0
        %666 = vmatprep.subr.bf16.mxu0 0
        %667 = vmatpush1.bf16.msra.mxu0 %v659
        %668 = vmatprep.subr.bf16.mxu0 0
        %669 = vmatpush1.bf16.msra.mxu0 %v660
        %670 = vmatprep.subr.bf16.mxu0 0
        %671 = vmatpush1.bf16.msra.mxu0 0
        %672 = vmatprep.subr.bf16.mxu0 0
        %673 = vmatpush1.bf16.msra.mxu0 0
        %674 = vmatprep.subr.bf16.mxu0 0
        %675 = vmatpush1.bf16.msra.mxu0 0
        %676 = vmatprep.subr.bf16.mxu0 0
        %677 = vmatpush1.bf16.msra.mxu0 0
        %678 = vmatprep.subr.bf16.mxu0 0
        %679 = vmatpush1.bf16.msra.mxu0 0
        %680 = vmatprep.subr.bf16.mxu0 0
        %681 = vmatpush1.bf16.msra.mxu0 0
        %682 = vmatprep.subr.bf16.mxu0 0
        %683 = vmatpush1.bf16.msra.mxu0 0
        %684 = vmatprep.subr.bf16.mxu0 0
        %685 = vmatpush1.bf16.msra.mxu0 0
        %686 = vmatprep.subr.bf16.mxu0 0
        %687 = vmatpush1.bf16.msra.mxu0 0
        %688 = vmatprep.subr.bf16.mxu0 0
        %689 = vmatpush1.bf16.msra.mxu0 0
        %690 = vmatprep.subr.bf16.mxu0 0
        %691 = vmatpush1.bf16.msra.mxu0 0
        %692 = vmatprep.subr.bf16.mxu0 0
        %693 = vmatpush1.bf16.msra.mxu0 0
        %694 = vmatprep.subr.bf16.mxu0 0
        %695 = vmatpush1.bf16.msra.mxu0 0
        %696 = vmatprep.subr.bf16.mxu0 0
        %697 = vmatpush1.bf16.msra.mxu0 0
        %698 = vmatprep.mubr.bf16.mxu0 0
        %699 = vmatmul.mubr.bf16.gmra.mrb[0].mxu0 %v664
        %v700 = vpop.f32.mrb[0].mxu0
        %v701 = vadd.f32 0.0, %v700
        %v702 = vpop.f32.mrb[0].mxu0
        %v703 = vpop.f32.mrb[0].mxu0
        %v704 = vadd.f32 0.0, %v703
        %v705 = vpop.f32.mrb[0].mxu0
        %706 = vdwg.mxu0
        %v707 = vld [vmem:[#allocation10] sm:$0xf]
        %v708 = vld [vmem:[#allocation10 + $0x4] sm:$0xf]
        %v709 = vld [vmem:[#allocation10 + $0x8] sm:$0xf]
        %v710 = vld [vmem:[#allocation10 + $0xc] sm:$0xf]
        %v711 = vld [vmem:[#allocation11] sm:$0x1]
        %v713 = vlaneseq
        %v714 = vshrl.u32 %v713, 7
        %v715 = vsub.s32 0, %v714
        %v716 = vrot.slane %v711, %v715
        %v722 = vunpack.c.l.b16 %v707
        %v723 = vunpack.c.l.b16 %v708
        %v724 = vunpack.c.l.b16 %v709
        %v725 = vunpack.c.l.b16 %v710
        %v726 = vpack.c.b16 %v723, %v722
        %v727 = vpack.c.b16 %v725, %v724
        %730 = vmatprep.subr.bf16.mxu0 0
        %731 = vmatpush1.bf16.msra.mxu0 %v726
        %732 = vmatprep.subr.bf16.mxu0 0
        %733 = vmatpush1.bf16.msra.mxu0 %v727
        %734 = vmatprep.subr.bf16.mxu0 0
        %735 = vmatpush1.bf16.msra.mxu0 0
        %736 = vmatprep.subr.bf16.mxu0 0
        %737 = vmatpush1.bf16.msra.mxu0 0
        %738 = vmatprep.subr.bf16.mxu0 0
        %739 = vmatpush1.bf16.msra.mxu0 0
        %740 = vmatprep.subr.bf16.mxu0 0
        %741 = vmatpush1.bf16.msra.mxu0 0
        %742 = vmatprep.subr.bf16.mxu0 0
        %743 = vmatpush1.bf16.msra.mxu0 0
        %744 = vmatprep.subr.bf16.mxu0 0
        %745 = vmatpush1.bf16.msra.mxu0 0
        %746 = vmatprep.subr.bf16.mxu0 0
        %747 = vmatpush1.bf16.msra.mxu0 0
        %748 = vmatprep.subr.bf16.mxu0 0
        %749 = vmatpush1.bf16.msra.mxu0 0
        %750 = vmatprep.subr.bf16.mxu0 0
        %751 = vmatpush1.bf16.msra.mxu0 0
        %752 = vmatprep.subr.bf16.mxu0 0
        %753 = vmatpush1.bf16.msra.mxu0 0
        %754 = vmatprep.subr.bf16.mxu0 0
        %755 = vmatpush1.bf16.msra.mxu0 0
        %756 = vmatprep.subr.bf16.mxu0 0
        %757 = vmatpush1.bf16.msra.mxu0 0
        %758 = vmatprep.subr.bf16.mxu0 0
        %759 = vmatpush1.bf16.msra.mxu0 0
        %760 = vmatprep.subr.bf16.mxu0 0
        %761 = vmatpush1.bf16.msra.mxu0 0
        %762 = vmatprep.mubr.bf16.mxu0 0
        %763 = vmatmul.mubr.bf16.gmra.mrb[0].mxu0 %v664
        %v764 = vpop.f32.mrb[0].mxu0
        %v765 = vadd.f32 %v716, %v764
        %v766 = vpop.f32.mrb[0].mxu0
        %v767 = vpop.f32.mrb[0].mxu0
        %v768 = vadd.f32 %v716, %v767
        %v769 = vpop.f32.mrb[0].mxu0
        %770 = vdwg.mxu0
        %v771 = vmul.f32 %v642, 0.35355338
        %773 = vrot.lane.b32.xlu0 %v771, 120
        %v774 = vpop.permute.xlu0 %773
        %776 = vrot.lane.b32.xlu0 %v771, 112
        %v777 = vpop.permute.xlu0 %776
        %779 = vrot.lane.b32.xlu0 %v771, 104
        %v780 = vpop.permute.xlu0 %779
        %v782 = vcombine.low %v771, %v777
        %v783 = vcombine.high %v771, %v777
        %v785 = vunpack.c.l.s4 1983009808
        %v786 = vunpack.c.0.s8 %v785
        %v787 = vlaneseq
        %v788 = vshrl.u32 %v787, 7
        %v789 = vsub.s32 %v786, %v788
        %v790 = vrot.slane %v782, %v789
        %v792 = vunpack.c.l.s4 1983009808
        %v793 = vunpack.c.0.s8 %v792
        %v794 = vlaneseq
        %v795 = vshrl.u32 %v794, 7
        %v796 = vsub.s32 %v793, %v795
        %v797 = vrot.slane %v783, %v796
        %v798 = vcombine.low %v774, %v780
        %v799 = vcombine.high %v774, %v780
        %v801 = vunpack.c.l.s4 1983009808
        %v802 = vunpack.c.0.s8 %v801
        %v803 = vlaneseq
        %v804 = vshrl.u32 %v803, 7
        %v805 = vsub.s32 %v802, %v804
        %v806 = vrot.slane %v798, %v805
        %v808 = vunpack.c.l.s4 1983009808
        %v809 = vunpack.c.0.s8 %v808
        %v810 = vlaneseq
        %v811 = vshrl.u32 %v810, 7
        %v812 = vsub.s32 %v809, %v811
        %v813 = vrot.slane %v799, %v812
        %v814 = vcombine.low %v790, %v806
        %v815 = vcombine.high %v790, %v806
        %v817 = vunpack.c.l.s4 1934713408
        %v818 = vunpack.c.0.s8 %v817
        %v819 = vlaneseq
        %v820 = vshrl.u32 %v819, 7
        %v821 = vsub.s32 %v818, %v820
        %v822 = vrot.slane %v814, %v821
        %v824 = vunpack.c.l.s4 1934713408
        %v825 = vunpack.c.0.s8 %v824
        %v826 = vlaneseq
        %v827 = vshrl.u32 %v826, 7
        %v828 = vsub.s32 %v825, %v827
        %v829 = vrot.slane %v815, %v828
        %v830 = vcombine.low %v797, %v813
        %v831 = vcombine.high %v797, %v813
        %v833 = vunpack.c.l.s4 1934713408
        %v834 = vunpack.c.0.s8 %v833
        %v835 = vlaneseq
        %v836 = vshrl.u32 %v835, 7
        %v837 = vsub.s32 %v834, %v836
        %v838 = vrot.slane %v830, %v837
        %v840 = vunpack.c.l.s4 1934713408
        %v841 = vunpack.c.0.s8 %v840
        %v842 = vlaneseq
        %v843 = vshrl.u32 %v842, 7
        %v844 = vsub.s32 %v841, %v843
        %v845 = vrot.slane %v831, %v844
        %v846 = vcombine.high %v822, 0.0
        %v847 = vcombine.high %v829, 0.0
        %v848 = vcombine.high %v838, 0.0
        %v849 = vcombine.high %v845, 0.0
        %v850 = vpack.c.bf16 %v822, %v822
        %v851 = vpack.c.bf16 %v846, %v846
        %v852 = vpack.c.bf16 %v829, %v829
        %v853 = vpack.c.bf16 %v847, %v847
        %v854 = vpack.c.bf16 %v838, %v838
        %v855 = vpack.c.bf16 %v848, %v848
        %v856 = vpack.c.bf16 %v845, %v845
        %v857 = vpack.c.bf16 %v849, %v849
        %860 = vrot.lane.b32.xlu0 %v701, 120
        %v861 = vpop.permute.xlu0 %860
        %862 = vrot.lane.b32.xlu0 %v704, 120
        %v863 = vpop.permute.xlu0 %862
        %866 = vrot.lane.b32.xlu0 %v701, 112
        %v867 = vpop.permute.xlu0 %866
        %868 = vrot.lane.b32.xlu0 %v704, 112
        %v869 = vpop.permute.xlu0 %868
        %872 = vrot.lane.b32.xlu0 %v701, 104
        %v873 = vpop.permute.xlu0 %872
        %874 = vrot.lane.b32.xlu0 %v704, 104
        %v875 = vpop.permute.xlu0 %874
        %v878 = vcombine.low %v701, %v867
        %v879 = vcombine.high %v701, %v867
        %v881 = vunpack.c.l.s4 1983009808
        %v882 = vunpack.c.0.s8 %v881
        %v883 = vlaneseq
        %v884 = vshrl.u32 %v883, 7
        %v885 = vsub.s32 %v882, %v884
        %v886 = vrot.slane %v878, %v885
        %v888 = vunpack.c.l.s4 1983009808
        %v889 = vunpack.c.0.s8 %v888
        %v890 = vlaneseq
        %v891 = vshrl.u32 %v890, 7
        %v892 = vsub.s32 %v889, %v891
        %v893 = vrot.slane %v879, %v892
        %v894 = vcombine.low %v861, %v873
        %v895 = vcombine.high %v861, %v873
        %v897 = vunpack.c.l.s4 1983009808
        %v898 = vunpack.c.0.s8 %v897
        %v899 = vlaneseq
        %v900 = vshrl.u32 %v899, 7
        %v901 = vsub.s32 %v898, %v900
        %v902 = vrot.slane %v894, %v901
        %v904 = vunpack.c.l.s4 1983009808
        %v905 = vunpack.c.0.s8 %v904
        %v906 = vlaneseq
        %v907 = vshrl.u32 %v906, 7
        %v908 = vsub.s32 %v905, %v907
        %v909 = vrot.slane %v895, %v908
        %v910 = vcombine.low %v886, %v902
        %v911 = vcombine.high %v886, %v902
        %v913 = vunpack.c.l.s4 1934713408
        %v914 = vunpack.c.0.s8 %v913
        %v915 = vlaneseq
        %v916 = vshrl.u32 %v915, 7
        %v917 = vsub.s32 %v914, %v916
        %v918 = vrot.slane %v910, %v917
        %v920 = vunpack.c.l.s4 1934713408
        %v921 = vunpack.c.0.s8 %v920
        %v922 = vlaneseq
        %v923 = vshrl.u32 %v922, 7
        %v924 = vsub.s32 %v921, %v923
        %v925 = vrot.slane %v911, %v924
        %v926 = vcombine.low %v893, %v909
        %v927 = vcombine.high %v893, %v909
        %v929 = vunpack.c.l.s4 1934713408
        %v930 = vunpack.c.0.s8 %v929
        %v931 = vlaneseq
        %v932 = vshrl.u32 %v931, 7
        %v933 = vsub.s32 %v930, %v932
        %v934 = vrot.slane %v926, %v933
        %v936 = vunpack.c.l.s4 1934713408
        %v937 = vunpack.c.0.s8 %v936
        %v938 = vlaneseq
        %v939 = vshrl.u32 %v938, 7
        %v940 = vsub.s32 %v937, %v939
        %v941 = vrot.slane %v927, %v940
        %v942 = vcombine.high %v918, 0.0
        %v943 = vcombine.high %v925, 0.0
        %v944 = vcombine.high %v934, 0.0
        %v945 = vcombine.high %v941, 0.0
        %v946 = vcombine.low %v704, %v869
        %v947 = vcombine.high %v704, %v869
        %v949 = vunpack.c.l.s4 1983009808
        %v950 = vunpack.c.0.s8 %v949
        %v951 = vlaneseq
        %v952 = vshrl.u32 %v951, 7
        %v953 = vsub.s32 %v950, %v952
        %v954 = vrot.slane %v946, %v953
        %v956 = vunpack.c.l.s4 1983009808
        %v957 = vunpack.c.0.s8 %v956
        %v958 = vlaneseq
        %v959 = vshrl.u32 %v958, 7
        %v960 = vsub.s32 %v957, %v959
        %v961 = vrot.slane %v947, %v960
        %v962 = vcombine.low %v863, %v875
        %v963 = vcombine.high %v863, %v875
        %v965 = vunpack.c.l.s4 1983009808
        %v966 = vunpack.c.0.s8 %v965
        %v967 = vlaneseq
        %v968 = vshrl.u32 %v967, 7
        %v969 = vsub.s32 %v966, %v968
        %v970 = vrot.slane %v962, %v969
        %v972 = vunpack.c.l.s4 1983009808
        %v973 = vunpack.c.0.s8 %v972
        %v974 = vlaneseq
        %v975 = vshrl.u32 %v974, 7
        %v976 = vsub.s32 %v973, %v975
        %v977 = vrot.slane %v963, %v976
        %v978 = vcombine.low %v954, %v970
        %v979 = vcombine.high %v954, %v970
        %v981 = vunpack.c.l.s4 1934713408
        %v982 = vunpack.c.0.s8 %v981
        %v983 = vlaneseq
        %v984 = vshrl.u32 %v983, 7
        %v985 = vsub.s32 %v982, %v984
        %v986 = vrot.slane %v978, %v985
        %v988 = vunpack.c.l.s4 1934713408
        %v989 = vunpack.c.0.s8 %v988
        %v990 = vlaneseq
        %v991 = vshrl.u32 %v990, 7
        %v992 = vsub.s32 %v989, %v991
        %v993 = vrot.slane %v979, %v992
        %v994 = vcombine.low %v961, %v977
        %v995 = vcombine.high %v961, %v977
        %v997 = vunpack.c.l.s4 1934713408
        %v998 = vunpack.c.0.s8 %v997
        %v999 = vlaneseq
        %v1000 = vshrl.u32 %v999, 7
        %v1001 = vsub.s32 %v998, %v1000
        %v1002 = vrot.slane %v994, %v1001
        %v1004 = vunpack.c.l.s4 1934713408
        %v1005 = vunpack.c.0.s8 %v1004
        %v1006 = vlaneseq
        %v1007 = vshrl.u32 %v1006, 7
        %v1008 = vsub.s32 %v1005, %v1007
        %v1009 = vrot.slane %v995, %v1008
        %v1010 = vcombine.high %v986, 0.0
        %v1011 = vcombine.high %v993, 0.0
        %v1012 = vcombine.high %v1002, 0.0
        %v1013 = vcombine.high %v1009, 0.0
        %v1014 = vpack.c.bf16 %v918, %v918
        %v1015 = vpack.c.bf16 %v942, %v942
        %v1016 = vpack.c.bf16 %v925, %v925
        %v1017 = vpack.c.bf16 %v943, %v943
        %v1018 = vpack.c.bf16 %v934, %v934
        %v1019 = vpack.c.bf16 %v944, %v944
        %v1020 = vpack.c.bf16 %v941, %v941
        %v1021 = vpack.c.bf16 %v945, %v945
        %v1022 = vpack.c.bf16 %v986, %v986
        %v1023 = vpack.c.bf16 %v1010, %v1010
        %v1024 = vpack.c.bf16 %v993, %v993
        %v1025 = vpack.c.bf16 %v1011, %v1011
        %v1026 = vpack.c.bf16 %v1002, %v1002
        %v1027 = vpack.c.bf16 %v1012, %v1012
        %v1028 = vpack.c.bf16 %v1009, %v1009
        %v1029 = vpack.c.bf16 %v1013, %v1013
        %1032 = vrot.lane.b32.xlu0 %v765, 120
        %v1033 = vpop.permute.xlu0 %1032
        %1034 = vrot.lane.b32.xlu0 %v768, 120
        %v1035 = vpop.permute.xlu0 %1034
        %1038 = vrot.lane.b32.xlu0 %v765, 112
        %v1039 = vpop.permute.xlu0 %1038
        %1040 = vrot.lane.b32.xlu0 %v768, 112
        %v1041 = vpop.permute.xlu0 %1040
        %1044 = vrot.lane.b32.xlu0 %v765, 104
        %v1045 = vpop.permute.xlu0 %1044
        %1046 = vrot.lane.b32.xlu0 %v768, 104
        %v1047 = vpop.permute.xlu0 %1046
        %v1050 = vcombine.low %v765, %v1039
        %v1051 = vcombine.high %v765, %v1039
        %v1053 = vunpack.c.l.s4 1983009808
        %v1054 = vunpack.c.0.s8 %v1053
        %v1055 = vlaneseq
        %v1056 = vshrl.u32 %v1055, 7
        %v1057 = vsub.s32 %v1054, %v1056
        %v1058 = vrot.slane %v1050, %v1057
        %v1060 = vunpack.c.l.s4 1983009808
        %v1061 = vunpack.c.0.s8 %v1060
        %v1062 = vlaneseq
        %v1063 = vshrl.u32 %v1062, 7
        %v1064 = vsub.s32 %v1061, %v1063
        %v1065 = vrot.slane %v1051, %v1064
        %v1066 = vcombine.low %v1033, %v1045
        %v1067 = vcombine.high %v1033, %v1045
        %v1069 = vunpack.c.l.s4 1983009808
        %v1070 = vunpack.c.0.s8 %v1069
        %v1071 = vlaneseq
        %v1072 = vshrl.u32 %v1071, 7
        %v1073 = vsub.s32 %v1070, %v1072
        %v1074 = vrot.slane %v1066, %v1073
        %v1076 = vunpack.c.l.s4 1983009808
        %v1077 = vunpack.c.0.s8 %v1076
        %v1078 = vlaneseq
        %v1079 = vshrl.u32 %v1078, 7
        %v1080 = vsub.s32 %v1077, %v1079
        %v1081 = vrot.slane %v1067, %v1080
        %v1082 = vcombine.low %v1058, %v1074
        %v1083 = vcombine.high %v1058, %v1074
        %v1085 = vunpack.c.l.s4 1934713408
        %v1086 = vunpack.c.0.s8 %v1085
        %v1087 = vlaneseq
        %v1088 = vshrl.u32 %v1087, 7
        %v1089 = vsub.s32 %v1086, %v1088
        %v1090 = vrot.slane %v1082, %v1089
        %v1092 = vunpack.c.l.s4 1934713408
        %v1093 = vunpack.c.0.s8 %v1092
        %v1094 = vlaneseq
        %v1095 = vshrl.u32 %v1094, 7
        %v1096 = vsub.s32 %v1093, %v1095
        %v1097 = vrot.slane %v1083, %v1096
        %v1098 = vcombine.low %v1065, %v1081
        %v1099 = vcombine.high %v1065, %v1081
        %v1101 = vunpack.c.l.s4 1934713408
        %v1102 = vunpack.c.0.s8 %v1101
        %v1103 = vlaneseq
        %v1104 = vshrl.u32 %v1103, 7
        %v1105 = vsub.s32 %v1102, %v1104
        %v1106 = vrot.slane %v1098, %v1105
        %v1108 = vunpack.c.l.s4 1934713408
        %v1109 = vunpack.c.0.s8 %v1108
        %v1110 = vlaneseq
        %v1111 = vshrl.u32 %v1110, 7
        %v1112 = vsub.s32 %v1109, %v1111
        %v1113 = vrot.slane %v1099, %v1112
        %v1114 = vcombine.high %v1090, 0.0
        %v1115 = vcombine.high %v1097, 0.0
        %v1116 = vcombine.high %v1106, 0.0
        %v1117 = vcombine.high %v1113, 0.0
        %v1118 = vcombine.low %v768, %v1041
        %v1119 = vcombine.high %v768, %v1041
        %v1121 = vunpack.c.l.s4 1983009808
        %v1122 = vunpack.c.0.s8 %v1121
        %v1123 = vlaneseq
        %v1124 = vshrl.u32 %v1123, 7
        %v1125 = vsub.s32 %v1122, %v1124
        %v1126 = vrot.slane %v1118, %v1125
        %v1128 = vunpack.c.l.s4 1983009808
        %v1129 = vunpack.c.0.s8 %v1128
        %v1130 = vlaneseq
        %v1131 = vshrl.u32 %v1130, 7
        %v1132 = vsub.s32 %v1129, %v1131
        %v1133 = vrot.slane %v1119, %v1132
        %v1134 = vcombine.low %v1035, %v1047
        %v1135 = vcombine.high %v1035, %v1047
        %v1137 = vunpack.c.l.s4 1983009808
        %v1138 = vunpack.c.0.s8 %v1137
        %v1139 = vlaneseq
        %v1140 = vshrl.u32 %v1139, 7
        %v1141 = vsub.s32 %v1138, %v1140
        %v1142 = vrot.slane %v1134, %v1141
        %v1144 = vunpack.c.l.s4 1983009808
        %v1145 = vunpack.c.0.s8 %v1144
        %v1146 = vlaneseq
        %v1147 = vshrl.u32 %v1146, 7
        %v1148 = vsub.s32 %v1145, %v1147
        %v1149 = vrot.slane %v1135, %v1148
        %v1150 = vcombine.low %v1126, %v1142
        %v1151 = vcombine.high %v1126, %v1142
        %v1153 = vunpack.c.l.s4 1934713408
        %v1154 = vunpack.c.0.s8 %v1153
        %v1155 = vlaneseq
        %v1156 = vshrl.u32 %v1155, 7
        %v1157 = vsub.s32 %v1154, %v1156
        %v1158 = vrot.slane %v1150, %v1157
        %v1160 = vunpack.c.l.s4 1934713408
        %v1161 = vunpack.c.0.s8 %v1160
        %v1162 = vlaneseq
        %v1163 = vshrl.u32 %v1162, 7
        %v1164 = vsub.s32 %v1161, %v1163
        %v1165 = vrot.slane %v1151, %v1164
        %v1166 = vcombine.low %v1133, %v1149
        %v1167 = vcombine.high %v1133, %v1149
        %v1169 = vunpack.c.l.s4 1934713408
        %v1170 = vunpack.c.0.s8 %v1169
        %v1171 = vlaneseq
        %v1172 = vshrl.u32 %v1171, 7
        %v1173 = vsub.s32 %v1170, %v1172
        %v1174 = vrot.slane %v1166, %v1173
        %v1176 = vunpack.c.l.s4 1934713408
        %v1177 = vunpack.c.0.s8 %v1176
        %v1178 = vlaneseq
        %v1179 = vshrl.u32 %v1178, 7
        %v1180 = vsub.s32 %v1177, %v1179
        %v1181 = vrot.slane %v1167, %v1180
        %v1182 = vcombine.high %v1158, 0.0
        %v1183 = vcombine.high %v1165, 0.0
        %v1184 = vcombine.high %v1174, 0.0
        %v1185 = vcombine.high %v1181, 0.0
        %v1186 = vpack.c.bf16 %v1090, %v1090
        %v1187 = vpack.c.bf16 %v1114, %v1114
        %v1188 = vpack.c.bf16 %v1097, %v1097
        %v1189 = vpack.c.bf16 %v1115, %v1115
        %v1190 = vpack.c.bf16 %v1106, %v1106
        %v1191 = vpack.c.bf16 %v1116, %v1116
        %v1192 = vpack.c.bf16 %v1113, %v1113
        %v1193 = vpack.c.bf16 %v1117, %v1117
        %v1194 = vpack.c.bf16 %v1158, %v1158
        %v1195 = vpack.c.bf16 %v1182, %v1182
        %v1196 = vpack.c.bf16 %v1165, %v1165
        %v1197 = vpack.c.bf16 %v1183, %v1183
        %v1198 = vpack.c.bf16 %v1174, %v1174
        %v1199 = vpack.c.bf16 %v1184, %v1184
        %v1200 = vpack.c.bf16 %v1181, %v1181
        %v1201 = vpack.c.bf16 %v1185, %v1185
        %v1202 = vcombine.low %v850, %v854
        %v1204 = vunpack.c.l.s4 1983009808
        %v1205 = vunpack.c.0.s8 %v1204
        %v1206 = vlaneseq
        %v1207 = vshrl.u32 %v1206, 7
        %v1208 = vsub.s32 %v1205, %v1207
        %v1209 = vrot.slane %v1202, %v1208
        %v1210 = vcombine.low %v852, %v856
        %v1212 = vunpack.c.l.s4 1983009808
        %v1213 = vunpack.c.0.s8 %v1212
        %v1214 = vlaneseq
        %v1215 = vshrl.u32 %v1214, 7
        %v1216 = vsub.s32 %v1213, %v1215
        %v1217 = vrot.slane %v1210, %v1216
        %v1218 = vcombine.low %v1209, %v1217
        %v1220 = vunpack.c.l.s4 1934713408
        %v1221 = vunpack.c.0.s8 %v1220
        %v1222 = vlaneseq
        %v1223 = vshrl.u32 %v1222, 7
        %v1224 = vsub.s32 %v1221, %v1223
        %v1225 = vrot.slane %v1218, %v1224
        %v1226 = vcombine.high %v1225, 0
        %v1227 = vcombine.low %v851, %v855
        %v1229 = vunpack.c.l.s4 1983009808
        %v1230 = vunpack.c.0.s8 %v1229
        %v1231 = vlaneseq
        %v1232 = vshrl.u32 %v1231, 7
        %v1233 = vsub.s32 %v1230, %v1232
        %v1234 = vrot.slane %v1227, %v1233
        %v1235 = vcombine.low %v853, %v857
        %v1237 = vunpack.c.l.s4 1983009808
        %v1238 = vunpack.c.0.s8 %v1237
        %v1239 = vlaneseq
        %v1240 = vshrl.u32 %v1239, 7
        %v1241 = vsub.s32 %v1238, %v1240
        %v1242 = vrot.slane %v1235, %v1241
        %v1243 = vcombine.low %v1234, %v1242
        %v1245 = vunpack.c.l.s4 1934713408
        %v1246 = vunpack.c.0.s8 %v1245
        %v1247 = vlaneseq
        %v1248 = vshrl.u32 %v1247, 7
        %v1249 = vsub.s32 %v1246, %v1248
        %v1250 = vrot.slane %v1243, %v1249
        %v1251 = vcombine.high %v1250, 0
        %v1254 = vpack.i.b16 %v1250, %v1225
        %v1255 = vshrl.u32 %v1225, 16
        %v1256 = vshrl.u32 %v1250, 16
        %v1257 = vpack.i.b16 %v1256, %v1255
        %v1260 = vpack.i.b16 %v1251, %v1226
        %v1261 = vshrl.u32 %v1226, 16
        %v1262 = vshrl.u32 %v1251, 16
        %v1263 = vpack.i.b16 %v1262, %v1261
        %1264 = vxpose.xlu0.c.b16.start [1/8] %v1014, 128
        %1265 = vxpose.xlu0.c.b16.cont [2/8] 0, 128
        %1266 = vxpose.xlu0.c.b16.cont [3/8] 0, 128
        %1267 = vxpose.xlu0.c.b16.cont [4/8] 0, 128
        %1268 = vxpose.xlu0.c.b16.cont [5/8] 0, 128
        %1269 = vxpose.xlu0.c.b16.cont [6/8] 0, 128
        %1270 = vxpose.xlu0.c.b16.cont [7/8] 0, 128
        %1271 = vxpose.xlu0.c.b16.end [8/8] 0, 128
        %v1272 = vpop.trf.xlu0
        %v1273 = vpop.trf.xlu0
        %v1274 = vpop.trf.xlu0
        %v1275 = vpop.trf.xlu0
        %v1276 = vpop.trf.xlu0
        %v1277 = vpop.trf.xlu0
        %v1278 = vpop.trf.xlu0
        %v1279 = vpop.trf.xlu0
        %1280 = vxpose.xlu0.c.b16.start [1/8] %v1015, 128
        %1281 = vxpose.xlu0.c.b16.cont [2/8] 0, 128
        %1282 = vxpose.xlu0.c.b16.cont [3/8] 0, 128
        %1283 = vxpose.xlu0.c.b16.cont [4/8] 0, 128
        %1284 = vxpose.xlu0.c.b16.cont [5/8] 0, 128
        %1285 = vxpose.xlu0.c.b16.cont [6/8] 0, 128
        %1286 = vxpose.xlu0.c.b16.cont [7/8] 0, 128
        %1287 = vxpose.xlu0.c.b16.end [8/8] 0, 128
        %v1288 = vpop.trf.xlu0
        %v1289 = vpop.trf.xlu0
        %v1290 = vpop.trf.xlu0
        %v1291 = vpop.trf.xlu0
        %v1292 = vpop.trf.xlu0
        %v1293 = vpop.trf.xlu0
        %v1294 = vpop.trf.xlu0
        %v1295 = vpop.trf.xlu0
        %1296 = vxpose.xlu0.c.b16.start [1/8] %v1016, 128
        %1297 = vxpose.xlu0.c.b16.cont [2/8] 0, 128
        %1298 = vxpose.xlu0.c.b16.cont [3/8] 0, 128
        %1299 = vxpose.xlu0.c.b16.cont [4/8] 0, 128
        %1300 = vxpose.xlu0.c.b16.cont [5/8] 0, 128
        %1301 = vxpose.xlu0.c.b16.cont [6/8] 0, 128
        %1302 = vxpose.xlu0.c.b16.cont [7/8] 0, 128
        %1303 = vxpose.xlu0.c.b16.end [8/8] 0, 128
        %v1304 = vpop.trf.xlu0
        %v1305 = vpop.trf.xlu0
        %v1306 = vpop.trf.xlu0
        %v1307 = vpop.trf.xlu0
        %v1308 = vpop.trf.xlu0
        %v1309 = vpop.trf.xlu0
        %v1310 = vpop.trf.xlu0
        %v1311 = vpop.trf.xlu0
        %1312 = vxpose.xlu0.c.b16.start [1/8] %v1017, 128
        %1313 = vxpose.xlu0.c.b16.cont [2/8] 0, 128
        %1314 = vxpose.xlu0.c.b16.cont [3/8] 0, 128
        %1315 = vxpose.xlu0.c.b16.cont [4/8] 0, 128
        %1316 = vxpose.xlu0.c.b16.cont [5/8] 0, 128
        %1317 = vxpose.xlu0.c.b16.cont [6/8] 0, 128
        %1318 = vxpose.xlu0.c.b16.cont [7/8] 0, 128
        %1319 = vxpose.xlu0.c.b16.end [8/8] 0, 128
        %v1320 = vpop.trf.xlu0
        %v1321 = vpop.trf.xlu0
        %v1322 = vpop.trf.xlu0
        %v1323 = vpop.trf.xlu0
        %v1324 = vpop.trf.xlu0
        %v1325 = vpop.trf.xlu0
        %v1326 = vpop.trf.xlu0
        %v1327 = vpop.trf.xlu0
        %1328 = vxpose.xlu0.c.b16.start [1/8] %v1018, 128
        %1329 = vxpose.xlu0.c.b16.cont [2/8] 0, 128
        %1330 = vxpose.xlu0.c.b16.cont [3/8] 0, 128
        %1331 = vxpose.xlu0.c.b16.cont [4/8] 0, 128
        %1332 = vxpose.xlu0.c.b16.cont [5/8] 0, 128
        %1333 = vxpose.xlu0.c.b16.cont [6/8] 0, 128
        %1334 = vxpose.xlu0.c.b16.cont [7/8] 0, 128
        %1335 = vxpose.xlu0.c.b16.end [8/8] 0, 128
        %v1336 = vpop.trf.xlu0
        %v1337 = vpop.trf.xlu0
        %v1338 = vpop.trf.xlu0
        %v1339 = vpop.trf.xlu0
        %v1340 = vpop.trf.xlu0
        %v1341 = vpop.trf.xlu0
        %v1342 = vpop.trf.xlu0
        %v1343 = vpop.trf.xlu0
        %1344 = vxpose.xlu0.c.b16.start [1/8] %v1019, 128
        %1345 = vxpose.xlu0.c.b16.cont [2/8] 0, 128
        %1346 = vxpose.xlu0.c.b16.cont [3/8] 0, 128
        %1347 = vxpose.xlu0.c.b16.cont [4/8] 0, 128
        %1348 = vxpose.xlu0.c.b16.cont [5/8] 0, 128
        %1349 = vxpose.xlu0.c.b16.cont [6/8] 0, 128
        %1350 = vxpose.xlu0.c.b16.cont [7/8] 0, 128
        %1351 = vxpose.xlu0.c.b16.end [8/8] 0, 128
        %v1352 = vpop.trf.xlu0
        %v1353 = vpop.trf.xlu0
        %v1354 = vpop.trf.xlu0
        %v1355 = vpop.trf.xlu0
        %v1356 = vpop.trf.xlu0
        %v1357 = vpop.trf.xlu0
        %v1358 = vpop.trf.xlu0
        %v1359 = vpop.trf.xlu0
        %1360 = vxpose.xlu0.c.b16.start [1/8] %v1020, 128
        %1361 = vxpose.xlu0.c.b16.cont [2/8] 0, 128
        %1362 = vxpose.xlu0.c.b16.cont [3/8] 0, 128
        %1363 = vxpose.xlu0.c.b16.cont [4/8] 0, 128
        %1364 = vxpose.xlu0.c.b16.cont [5/8] 0, 128
        %1365 = vxpose.xlu0.c.b16.cont [6/8] 0, 128
        %1366 = vxpose.xlu0.c.b16.cont [7/8] 0, 128
        %1367 = vxpose.xlu0.c.b16.end [8/8] 0, 128
        %v1368 = vpop.trf.xlu0
        %v1369 = vpop.trf.xlu0
        %v1370 = vpop.trf.xlu0
        %v1371 = vpop.trf.xlu0
        %v1372 = vpop.trf.xlu0
        %v1373 = vpop.trf.xlu0
        %v1374 = vpop.trf.xlu0
        %v1375 = vpop.trf.xlu0
        %1376 = vxpose.xlu0.c.b16.start [1/8] %v1021, 128
        %1377 = vxpose.xlu0.c.b16.cont [2/8] 0, 128
        %1378 = vxpose.xlu0.c.b16.cont [3/8] 0, 128
        %1379 = vxpose.xlu0.c.b16.cont [4/8] 0, 128
        %1380 = vxpose.xlu0.c.b16.cont [5/8] 0, 128
        %1381 = vxpose.xlu0.c.b16.cont [6/8] 0, 128
        %1382 = vxpose.xlu0.c.b16.cont [7/8] 0, 128
        %1383 = vxpose.xlu0.c.b16.end [8/8] 0, 128
        %v1384 = vpop.trf.xlu0
        %v1385 = vpop.trf.xlu0
        %v1386 = vpop.trf.xlu0
        %v1387 = vpop.trf.xlu0
        %v1388 = vpop.trf.xlu0
        %v1389 = vpop.trf.xlu0
        %v1390 = vpop.trf.xlu0
        %v1391 = vpop.trf.xlu0
        %1392 = vxpose.xlu0.c.b16.start [1/8] %v1022, 128
        %1393 = vxpose.xlu0.c.b16.cont [2/8] 0, 128
        %1394 = vxpose.xlu0.c.b16.cont [3/8] 0, 128
        %1395 = vxpose.xlu0.c.b16.cont [4/8] 0, 128
        %1396 = vxpose.xlu0.c.b16.cont [5/8] 0, 128
        %1397 = vxpose.xlu0.c.b16.cont [6/8] 0, 128
        %1398 = vxpose.xlu0.c.b16.cont [7/8] 0, 128
        %1399 = vxpose.xlu0.c.b16.end [8/8] 0, 128
        %v1400 = vpop.trf.xlu0
        %v1401 = vpop.trf.xlu0
        %v1402 = vpop.trf.xlu0
        %v1403 = vpop.trf.xlu0
        %v1404 = vpop.trf.xlu0
        %v1405 = vpop.trf.xlu0
        %v1406 = vpop.trf.xlu0
        %v1407 = vpop.trf.xlu0
        %1408 = vxpose.xlu0.c.b16.start [1/8] %v1023, 128
        %1409 = vxpose.xlu0.c.b16.cont [2/8] 0, 128
        %1410 = vxpose.xlu0.c.b16.cont [3/8] 0, 128
        %1411 = vxpose.xlu0.c.b16.cont [4/8] 0, 128
        %1412 = vxpose.xlu0.c.b16.cont [5/8] 0, 128
        %1413 = vxpose.xlu0.c.b16.cont [6/8] 0, 128
        %1414 = vxpose.xlu0.c.b16.cont [7/8] 0, 128
        %1415 = vxpose.xlu0.c.b16.end [8/8] 0, 128
        %v1416 = vpop.trf.xlu0
        %v1417 = vpop.trf.xlu0
        %v1418 = vpop.trf.xlu0
        %v1419 = vpop.trf.xlu0
        %v1420 = vpop.trf.xlu0
        %v1421 = vpop.trf.xlu0
        %v1422 = vpop.trf.xlu0
        %v1423 = vpop.trf.xlu0
        %1424 = vxpose.xlu0.c.b16.start [1/8] %v1024, 128
        %1425 = vxpose.xlu0.c.b16.cont [2/8] 0, 128
        %1426 = vxpose.xlu0.c.b16.cont [3/8] 0, 128
        %1427 = vxpose.xlu0.c.b16.cont [4/8] 0, 128
        %1428 = vxpose.xlu0.c.b16.cont [5/8] 0, 128
        %1429 = vxpose.xlu0.c.b16.cont [6/8] 0, 128
        %1430 = vxpose.xlu0.c.b16.cont [7/8] 0, 128
        %1431 = vxpose.xlu0.c.b16.end [8/8] 0, 128
        %v1432 = vpop.trf.xlu0
        %v1433 = vpop.trf.xlu0
        %v1434 = vpop.trf.xlu0
        %v1435 = vpop.trf.xlu0
        %v1436 = vpop.trf.xlu0
        %v1437 = vpop.trf.xlu0
        %v1438 = vpop.trf.xlu0
        %v1439 = vpop.trf.xlu0
        %1440 = vxpose.xlu0.c.b16.start [1/8] %v1025, 128
        %1441 = vxpose.xlu0.c.b16.cont [2/8] 0, 128
        %1442 = vxpose.xlu0.c.b16.cont [3/8] 0, 128
        %1443 = vxpose.xlu0.c.b16.cont [4/8] 0, 128
        %1444 = vxpose.xlu0.c.b16.cont [5/8] 0, 128
        %1445 = vxpose.xlu0.c.b16.cont [6/8] 0, 128
        %1446 = vxpose.xlu0.c.b16.cont [7/8] 0, 128
        %1447 = vxpose.xlu0.c.b16.end [8/8] 0, 128
        %v1448 = vpop.trf.xlu0
        %v1449 = vpop.trf.xlu0
        %v1450 = vpop.trf.xlu0
        %v1451 = vpop.trf.xlu0
        %v1452 = vpop.trf.xlu0
        %v1453 = vpop.trf.xlu0
        %v1454 = vpop.trf.xlu0
        %v1455 = vpop.trf.xlu0
        %1456 = vxpose.xlu0.c.b16.start [1/8] %v1026, 128
        %1457 = vxpose.xlu0.c.b16.cont [2/8] 0, 128
        %1458 = vxpose.xlu0.c.b16.cont [3/8] 0, 128
        %1459 = vxpose.xlu0.c.b16.cont [4/8] 0, 128
        %1460 = vxpose.xlu0.c.b16.cont [5/8] 0, 128
        %1461 = vxpose.xlu0.c.b16.cont [6/8] 0, 128
        %1462 = vxpose.xlu0.c.b16.cont [7/8] 0, 128
        %1463 = vxpose.xlu0.c.b16.end [8/8] 0, 128
        %v1464 = vpop.trf.xlu0
        %v1465 = vpop.trf.xlu0
        %v1466 = vpop.trf.xlu0
        %v1467 = vpop.trf.xlu0
        %v1468 = vpop.trf.xlu0
        %v1469 = vpop.trf.xlu0
        %v1470 = vpop.trf.xlu0
        %v1471 = vpop.trf.xlu0
        %1472 = vxpose.xlu0.c.b16.start [1/8] %v1027, 128
        %1473 = vxpose.xlu0.c.b16.cont [2/8] 0, 128
        %1474 = vxpose.xlu0.c.b16.cont [3/8] 0, 128
        %1475 = vxpose.xlu0.c.b16.cont [4/8] 0, 128
        %1476 = vxpose.xlu0.c.b16.cont [5/8] 0, 128
        %1477 = vxpose.xlu0.c.b16.cont [6/8] 0, 128
        %1478 = vxpose.xlu0.c.b16.cont [7/8] 0, 128
        %1479 = vxpose.xlu0.c.b16.end [8/8] 0, 128
        %v1480 = vpop.trf.xlu0
        %v1481 = vpop.trf.xlu0
        %v1482 = vpop.trf.xlu0
        %v1483 = vpop.trf.xlu0
        %v1484 = vpop.trf.xlu0
        %v1485 = vpop.trf.xlu0
        %v1486 = vpop.trf.xlu0
        %v1487 = vpop.trf.xlu0
        %1488 = vxpose.xlu0.c.b16.start [1/8] %v1028, 128
        %1489 = vxpose.xlu0.c.b16.cont [2/8] 0, 128
        %1490 = vxpose.xlu0.c.b16.cont [3/8] 0, 128
        %1491 = vxpose.xlu0.c.b16.cont [4/8] 0, 128
        %1492 = vxpose.xlu0.c.b16.cont [5/8] 0, 128
        %1493 = vxpose.xlu0.c.b16.cont [6/8] 0, 128
        %1494 = vxpose.xlu0.c.b16.cont [7/8] 0, 128
        %1495 = vxpose.xlu0.c.b16.end [8/8] 0, 128
        %v1496 = vpop.trf.xlu0
        %v1497 = vpop.trf.xlu0
        %v1498 = vpop.trf.xlu0
        %v1499 = vpop.trf.xlu0
        %v1500 = vpop.trf.xlu0
        %v1501 = vpop.trf.xlu0
        %v1502 = vpop.trf.xlu0
        %v1503 = vpop.trf.xlu0
        %1504 = vxpose.xlu0.c.b16.start [1/8] %v1029, 128
        %1505 = vxpose.xlu0.c.b16.cont [2/8] 0, 128
        %1506 = vxpose.xlu0.c.b16.cont [3/8] 0, 128
        %1507 = vxpose.xlu0.c.b16.cont [4/8] 0, 128
        %1508 = vxpose.xlu0.c.b16.cont [5/8] 0, 128
        %1509 = vxpose.xlu0.c.b16.cont [6/8] 0, 128
        %1510 = vxpose.xlu0.c.b16.cont [7/8] 0, 128
        %1511 = vxpose.xlu0.c.b16.end [8/8] 0, 128
        %v1512 = vpop.trf.xlu0
        %v1513 = vpop.trf.xlu0
        %v1514 = vpop.trf.xlu0
        %v1515 = vpop.trf.xlu0
        %v1516 = vpop.trf.xlu0
        %v1517 = vpop.trf.xlu0
        %v1518 = vpop.trf.xlu0
        %v1519 = vpop.trf.xlu0
        %v1520 = vcombine.low %v1272, %v1336
        %v1522 = vunpack.c.l.s4 1983009808
        %v1523 = vunpack.c.0.s8 %v1522
        %v1524 = vlaneseq
        %v1525 = vshrl.u32 %v1524, 7
        %v1526 = vsub.s32 %v1523, %v1525
        %v1527 = vrot.slane %v1520, %v1526
        %v1528 = vcombine.low %v1304, %v1368
        %v1530 = vunpack.c.l.s4 1983009808
        %v1531 = vunpack.c.0.s8 %v1530
        %v1532 = vlaneseq
        %v1533 = vshrl.u32 %v1532, 7
        %v1534 = vsub.s32 %v1531, %v1533
        %v1535 = vrot.slane %v1528, %v1534
        %v1536 = vcombine.low %v1400, %v1464
        %v1538 = vunpack.c.l.s4 1983009808
        %v1539 = vunpack.c.0.s8 %v1538
        %v1540 = vlaneseq
        %v1541 = vshrl.u32 %v1540, 7
        %v1542 = vsub.s32 %v1539, %v1541
        %v1543 = vrot.slane %v1536, %v1542
        %v1544 = vcombine.low %v1432, %v1496
        %v1546 = vunpack.c.l.s4 1983009808
        %v1547 = vunpack.c.0.s8 %v1546
        %v1548 = vlaneseq
        %v1549 = vshrl.u32 %v1548, 7
        %v1550 = vsub.s32 %v1547, %v1549
        %v1551 = vrot.slane %v1544, %v1550
        %v1552 = vcombine.low %v1527, %v1535
        %v1553 = vcombine.high %v1527, %v1535
        %v1555 = vunpack.c.l.s4 1934713408
        %v1556 = vunpack.c.0.s8 %v1555
        %v1557 = vlaneseq
        %v1558 = vshrl.u32 %v1557, 7
        %v1559 = vsub.s32 %v1556, %v1558
        %v1560 = vrot.slane %v1552, %v1559
        %v1562 = vunpack.c.l.s4 1934713408
        %v1563 = vunpack.c.0.s8 %v1562
        %v1564 = vlaneseq
        %v1565 = vshrl.u32 %v1564, 7
        %v1566 = vsub.s32 %v1563, %v1565
        %v1567 = vrot.slane %v1553, %v1566
        %v1568 = vcombine.low %v1543, %v1551
        %v1569 = vcombine.high %v1543, %v1551
        %v1571 = vunpack.c.l.s4 1934713408
        %v1572 = vunpack.c.0.s8 %v1571
        %v1573 = vlaneseq
        %v1574 = vshrl.u32 %v1573, 7
        %v1575 = vsub.s32 %v1572, %v1574
        %v1576 = vrot.slane %v1568, %v1575
        %v1578 = vunpack.c.l.s4 1934713408
        %v1579 = vunpack.c.0.s8 %v1578
        %v1580 = vlaneseq
        %v1581 = vshrl.u32 %v1580, 7
        %v1582 = vsub.s32 %v1579, %v1581
        %v1583 = vrot.slane %v1569, %v1582
        %v1584 = vcombine.low %v1560, %v1576
        %v1585 = vcombine.high %v1560, %v1576
        %v1586 = vcombine.low %v1567, %v1583
        %v1587 = vcombine.high %v1567, %v1583
        %v1588 = vcombine.low %v1288, %v1352
        %v1590 = vunpack.c.l.s4 1983009808
        %v1591 = vunpack.c.0.s8 %v1590
        %v1592 = vlaneseq
        %v1593 = vshrl.u32 %v1592, 7
        %v1594 = vsub.s32 %v1591, %v1593
        %v1595 = vrot.slane %v1588, %v1594
        %v1596 = vcombine.low %v1320, %v1384
        %v1598 = vunpack.c.l.s4 1983009808
        %v1599 = vunpack.c.0.s8 %v1598
        %v1600 = vlaneseq
        %v1601 = vshrl.u32 %v1600, 7
        %v1602 = vsub.s32 %v1599, %v1601
        %v1603 = vrot.slane %v1596, %v1602
        %v1604 = vcombine.low %v1416, %v1480
        %v1606 = vunpack.c.l.s4 1983009808
        %v1607 = vunpack.c.0.s8 %v1606
        %v1608 = vlaneseq
        %v1609 = vshrl.u32 %v1608, 7
        %v1610 = vsub.s32 %v1607, %v1609
        %v1611 = vrot.slane %v1604, %v1610
        %v1612 = vcombine.low %v1448, %v1512
        %v1614 = vunpack.c.l.s4 1983009808
        %v1615 = vunpack.c.0.s8 %v1614
        %v1616 = vlaneseq
        %v1617 = vshrl.u32 %v1616, 7
        %v1618 = vsub.s32 %v1615, %v1617
        %v1619 = vrot.slane %v1612, %v1618
        %v1620 = vcombine.low %v1595, %v1603
        %v1621 = vcombine.high %v1595, %v1603
        %v1623 = vunpack.c.l.s4 1934713408
        %v1624 = vunpack.c.0.s8 %v1623
        %v1625 = vlaneseq
        %v1626 = vshrl.u32 %v1625, 7
        %v1627 = vsub.s32 %v1624, %v1626
        %v1628 = vrot.slane %v1620, %v1627
        %v1630 = vunpack.c.l.s4 1934713408
        %v1631 = vunpack.c.0.s8 %v1630
        %v1632 = vlaneseq
        %v1633 = vshrl.u32 %v1632, 7
        %v1634 = vsub.s32 %v1631, %v1633
        %v1635 = vrot.slane %v1621, %v1634
        %v1636 = vcombine.low %v1611, %v1619
        %v1637 = vcombine.high %v1611, %v1619
        %v1639 = vunpack.c.l.s4 1934713408
        %v1640 = vunpack.c.0.s8 %v1639
        %v1641 = vlaneseq
        %v1642 = vshrl.u32 %v1641, 7
        %v1643 = vsub.s32 %v1640, %v1642
        %v1644 = vrot.slane %v1636, %v1643
        %v1646 = vunpack.c.l.s4 1934713408
        %v1647 = vunpack.c.0.s8 %v1646
        %v1648 = vlaneseq
        %v1649 = vshrl.u32 %v1648, 7
        %v1650 = vsub.s32 %v1647, %v1649
        %v1651 = vrot.slane %v1637, %v1650
        %v1652 = vcombine.low %v1628, %v1644
        %v1653 = vcombine.high %v1628, %v1644
        %v1654 = vcombine.low %v1635, %v1651
        %v1655 = vcombine.high %v1635, %v1651
        %v1658 = vpack.i.b16 %v1652, %v1584
        %v1660 = vshrl.u32 %v1584, 16
        %v1661 = vshrl.u32 %v1652, 16
        %v1662 = vpack.i.b16 %v1661, %v1660
        %v1666 = vpack.i.b16 %v1653, %v1585
        %v1668 = vshrl.u32 %v1585, 16
        %v1669 = vshrl.u32 %v1653, 16
        %v1670 = vpack.i.b16 %v1669, %v1668
        %v1674 = vpack.i.b16 %v1654, %v1586
        %v1676 = vshrl.u32 %v1586, 16
        %v1677 = vshrl.u32 %v1654, 16
        %v1678 = vpack.i.b16 %v1677, %v1676
        %v1682 = vpack.i.b16 %v1655, %v1587
        %v1684 = vshrl.u32 %v1587, 16
        %v1685 = vshrl.u32 %v1655, 16
        %v1686 = vpack.i.b16 %v1685, %v1684
        %1688 = vxpose.xlu0.c.b16.start [1/8] %v1658, 128
        %1689 = vxpose.xlu0.c.b16.cont [2/8] 0, 128
        %1690 = vxpose.xlu0.c.b16.cont [3/8] 0, 128
        %1691 = vxpose.xlu0.c.b16.cont [4/8] 0, 128
        %1692 = vxpose.xlu0.c.b16.cont [5/8] 0, 128
        %1693 = vxpose.xlu0.c.b16.cont [6/8] 0, 128
        %1694 = vxpose.xlu0.c.b16.cont [7/8] 0, 128
        %1695 = vxpose.xlu0.c.b16.end [8/8] 0, 128
        %v1696 = vpop.trf.xlu0
        %v1697 = vpop.trf.xlu0
        %v1698 = vpop.trf.xlu0
        %v1699 = vpop.trf.xlu0
        %v1700 = vpop.trf.xlu0
        %v1701 = vpop.trf.xlu0
        %v1702 = vpop.trf.xlu0
        %v1703 = vpop.trf.xlu0
        %1704 = vxpose.xlu0.c.b16.start [1/8] %v1662, 128
        %1705 = vxpose.xlu0.c.b16.cont [2/8] 0, 128
        %1706 = vxpose.xlu0.c.b16.cont [3/8] 0, 128
        %1707 = vxpose.xlu0.c.b16.cont [4/8] 0, 128
        %1708 = vxpose.xlu0.c.b16.cont [5/8] 0, 128
        %1709 = vxpose.xlu0.c.b16.cont [6/8] 0, 128
        %1710 = vxpose.xlu0.c.b16.cont [7/8] 0, 128
        %1711 = vxpose.xlu0.c.b16.end [8/8] 0, 128
        %v1712 = vpop.trf.xlu0
        %v1713 = vpop.trf.xlu0
        %v1714 = vpop.trf.xlu0
        %v1715 = vpop.trf.xlu0
        %v1716 = vpop.trf.xlu0
        %v1717 = vpop.trf.xlu0
        %v1718 = vpop.trf.xlu0
        %v1719 = vpop.trf.xlu0
        %1720 = vxpose.xlu0.c.b16.start [1/8] %v1666, 128
        %1721 = vxpose.xlu0.c.b16.cont [2/8] 0, 128
        %1722 = vxpose.xlu0.c.b16.cont [3/8] 0, 128
        %1723 = vxpose.xlu0.c.b16.cont [4/8] 0, 128
        %1724 = vxpose.xlu0.c.b16.cont [5/8] 0, 128
        %1725 = vxpose.xlu0.c.b16.cont [6/8] 0, 128
        %1726 = vxpose.xlu0.c.b16.cont [7/8] 0, 128
        %1727 = vxpose.xlu0.c.b16.end [8/8] 0, 128
        %v1728 = vpop.trf.xlu0
        %v1729 = vpop.trf.xlu0
        %v1730 = vpop.trf.xlu0
        %v1731 = vpop.trf.xlu0
        %v1732 = vpop.trf.xlu0
        %v1733 = vpop.trf.xlu0
        %v1734 = vpop.trf.xlu0
        %v1735 = vpop.trf.xlu0
        %1736 = vxpose.xlu0.c.b16.start [1/8] %v1670, 128
        %1737 = vxpose.xlu0.c.b16.cont [2/8] 0, 128
        %1738 = vxpose.xlu0.c.b16.cont [3/8] 0, 128
        %1739 = vxpose.xlu0.c.b16.cont [4/8] 0, 128
        %1740 = vxpose.xlu0.c.b16.cont [5/8] 0, 128
        %1741 = vxpose.xlu0.c.b16.cont [6/8] 0, 128
        %1742 = vxpose.xlu0.c.b16.cont [7/8] 0, 128
        %1743 = vxpose.xlu0.c.b16.end [8/8] 0, 128
        %v1744 = vpop.trf.xlu0
        %v1745 = vpop.trf.xlu0
        %v1746 = vpop.trf.xlu0
        %v1747 = vpop.trf.xlu0
        %v1748 = vpop.trf.xlu0
        %v1749 = vpop.trf.xlu0
        %v1750 = vpop.trf.xlu0
        %v1751 = vpop.trf.xlu0
        %1752 = vxpose.xlu0.c.b16.start [1/8] %v1674, 128
        %1753 = vxpose.xlu0.c.b16.cont [2/8] 0, 128
        %1754 = vxpose.xlu0.c.b16.cont [3/8] 0, 128
        %1755 = vxpose.xlu0.c.b16.cont [4/8] 0, 128
        %1756 = vxpose.xlu0.c.b16.cont [5/8] 0, 128
        %1757 = vxpose.xlu0.c.b16.cont [6/8] 0, 128
        %1758 = vxpose.xlu0.c.b16.cont [7/8] 0, 128
        %1759 = vxpose.xlu0.c.b16.end [8/8] 0, 128
        %v1760 = vpop.trf.xlu0
        %v1761 = vpop.trf.xlu0
        %v1762 = vpop.trf.xlu0
        %v1763 = vpop.trf.xlu0
        %v1764 = vpop.trf.xlu0
        %v1765 = vpop.trf.xlu0
        %v1766 = vpop.trf.xlu0
        %v1767 = vpop.trf.xlu0
        %1768 = vxpose.xlu0.c.b16.start [1/8] %v1678, 128
        %1769 = vxpose.xlu0.c.b16.cont [2/8] 0, 128
        %1770 = vxpose.xlu0.c.b16.cont [3/8] 0, 128
        %1771 = vxpose.xlu0.c.b16.cont [4/8] 0, 128
        %1772 = vxpose.xlu0.c.b16.cont [5/8] 0, 128
        %1773 = vxpose.xlu0.c.b16.cont [6/8] 0, 128
        %1774 = vxpose.xlu0.c.b16.cont [7/8] 0, 128
        %1775 = vxpose.xlu0.c.b16.end [8/8] 0, 128
        %v1776 = vpop.trf.xlu0
        %v1777 = vpop.trf.xlu0
        %v1778 = vpop.trf.xlu0
        %v1779 = vpop.trf.xlu0
        %v1780 = vpop.trf.xlu0
        %v1781 = vpop.trf.xlu0
        %v1782 = vpop.trf.xlu0
        %v1783 = vpop.trf.xlu0
        %1784 = vxpose.xlu0.c.b16.start [1/8] %v1682, 128
        %1785 = vxpose.xlu0.c.b16.cont [2/8] 0, 128
        %1786 = vxpose.xlu0.c.b16.cont [3/8] 0, 128
        %1787 = vxpose.xlu0.c.b16.cont [4/8] 0, 128
        %1788 = vxpose.xlu0.c.b16.cont [5/8] 0, 128
        %1789 = vxpose.xlu0.c.b16.cont [6/8] 0, 128
        %1790 = vxpose.xlu0.c.b16.cont [7/8] 0, 128
        %1791 = vxpose.xlu0.c.b16.end [8/8] 0, 128
        %v1792 = vpop.trf.xlu0
        %v1793 = vpop.trf.xlu0
        %v1794 = vpop.trf.xlu0
        %v1795 = vpop.trf.xlu0
        %v1796 = vpop.trf.xlu0
        %v1797 = vpop.trf.xlu0
        %v1798 = vpop.trf.xlu0
        %v1799 = vpop.trf.xlu0
        %1800 = vxpose.xlu0.c.b16.start [1/8] %v1686, 128
        %1801 = vxpose.xlu0.c.b16.cont [2/8] 0, 128
        %1802 = vxpose.xlu0.c.b16.cont [3/8] 0, 128
        %1803 = vxpose.xlu0.c.b16.cont [4/8] 0, 128
        %1804 = vxpose.xlu0.c.b16.cont [5/8] 0, 128
        %1805 = vxpose.xlu0.c.b16.cont [6/8] 0, 128
        %1806 = vxpose.xlu0.c.b16.cont [7/8] 0, 128
        %1807 = vxpose.xlu0.c.b16.end [8/8] 0, 128
        %v1808 = vpop.trf.xlu0
        %v1809 = vpop.trf.xlu0
        %v1810 = vpop.trf.xlu0
        %v1811 = vpop.trf.xlu0
        %v1812 = vpop.trf.xlu0
        %v1813 = vpop.trf.xlu0
        %v1814 = vpop.trf.xlu0
        %v1815 = vpop.trf.xlu0
        %v1816 = vcombine.low %v1696, %v1760
        %v1818 = vunpack.c.l.s4 1983009808
        %v1819 = vunpack.c.0.s8 %v1818
        %v1820 = vlaneseq
        %v1821 = vshrl.u32 %v1820, 7
        %v1822 = vsub.s32 %v1819, %v1821
        %v1823 = vrot.slane %v1816, %v1822
        %v1824 = vcombine.low %v1728, %v1792
        %v1826 = vunpack.c.l.s4 1983009808
        %v1827 = vunpack.c.0.s8 %v1826
        %v1828 = vlaneseq
        %v1829 = vshrl.u32 %v1828, 7
        %v1830 = vsub.s32 %v1827, %v1829
        %v1831 = vrot.slane %v1824, %v1830
        %v1832 = vcombine.low %v1823, %v1831
        %v1834 = vunpack.c.l.s4 1934713408
        %v1835 = vunpack.c.0.s8 %v1834
        %v1836 = vlaneseq
        %v1837 = vshrl.u32 %v1836, 7
        %v1838 = vsub.s32 %v1835, %v1837
        %v1839 = vrot.slane %v1832, %v1838
        %v1840 = vcombine.high %v1839, 0
        %v1841 = vcombine.low %v1712, %v1776
        %v1843 = vunpack.c.l.s4 1983009808
        %v1844 = vunpack.c.0.s8 %v1843
        %v1845 = vlaneseq
        %v1846 = vshrl.u32 %v1845, 7
        %v1847 = vsub.s32 %v1844, %v1846
        %v1848 = vrot.slane %v1841, %v1847
        %v1849 = vcombine.low %v1744, %v1808
        %v1851 = vunpack.c.l.s4 1983009808
        %v1852 = vunpack.c.0.s8 %v1851
        %v1853 = vlaneseq
        %v1854 = vshrl.u32 %v1853, 7
        %v1855 = vsub.s32 %v1852, %v1854
        %v1856 = vrot.slane %v1849, %v1855
        %v1857 = vcombine.low %v1848, %v1856
        %v1859 = vunpack.c.l.s4 1934713408
        %v1860 = vunpack.c.0.s8 %v1859
        %v1861 = vlaneseq
        %v1862 = vshrl.u32 %v1861, 7
        %v1863 = vsub.s32 %v1860, %v1862
        %v1864 = vrot.slane %v1857, %v1863
        %v1865 = vcombine.high %v1864, 0
        %v1868 = vpack.i.b16 %v1864, %v1839
        %v1869 = vshrl.u32 %v1839, 16
        %v1870 = vshrl.u32 %v1864, 16
        %v1871 = vpack.i.b16 %v1870, %v1869
        %v1874 = vpack.i.b16 %v1865, %v1840
        %v1875 = vshrl.u32 %v1840, 16
        %v1876 = vshrl.u32 %v1865, 16
        %v1877 = vpack.i.b16 %v1876, %v1875
        %vm1878 = vcmask 64512
        %v1880 = vsel %vm1878, %v1254, 0
        %vm1882 = vcmask 1043456
        %v1884 = vsel %vm1882, %v1868, 0
        %1886 = vmatprep.subr.bf16.mxu0 0
        %1887 = vmatpush1.bf16.msra.mxu0 %v1884
        %1888 = vmatprep.subr.bf16.mxu0 0
        %1889 = vmatpush1.bf16.msra.mxu0 0
        %1890 = vmatprep.subr.bf16.mxu0 0
        %1891 = vmatpush1.bf16.msra.mxu0 0
        %1892 = vmatprep.subr.bf16.mxu0 0
        %1893 = vmatpush1.bf16.msra.mxu0 0
        %1894 = vmatprep.subr.bf16.mxu0 0
        %1895 = vmatpush1.bf16.msra.mxu0 0
        %1896 = vmatprep.subr.bf16.mxu0 0
        %1897 = vmatpush1.bf16.msra.mxu0 0
        %1898 = vmatprep.subr.bf16.mxu0 0
        %1899 = vmatpush1.bf16.msra.mxu0 0
        %1900 = vmatprep.subr.bf16.mxu0 0
        %1901 = vmatpush1.bf16.msra.mxu0 0
        %1902 = vmatprep.subr.bf16.mxu0 0
        %1903 = vmatpush1.bf16.msra.mxu0 0
        %1904 = vmatprep.subr.bf16.mxu0 0
        %1905 = vmatpush1.bf16.msra.mxu0 0
        %1906 = vmatprep.subr.bf16.mxu0 0
        %1907 = vmatpush1.bf16.msra.mxu0 0
        %1908 = vmatprep.subr.bf16.mxu0 0
        %1909 = vmatpush1.bf16.msra.mxu0 0
        %1910 = vmatprep.subr.bf16.mxu0 0
        %1911 = vmatpush1.bf16.msra.mxu0 0
        %1912 = vmatprep.subr.bf16.mxu0 0
        %1913 = vmatpush1.bf16.msra.mxu0 0
        %1914 = vmatprep.subr.bf16.mxu0 0
        %1915 = vmatpush1.bf16.msra.mxu0 0
        %1916 = vmatprep.subr.bf16.mxu0 0
        %1917 = vmatpush1.bf16.msra.mxu0 0
        %1918 = vmatprep.mubr.bf16.mxu0 0
        %1919 = vmatmul.mubr.bf16.gmra.mrb[0].mxu0 %v1880
        %v1920 = vpop.f32.mrb[0].mxu0
        %v1921 = vadd.f32 0.0, %v1920
        %v1922 = vpop.f32.mrb[0].mxu0
        %v1923 = vpop.f32.mrb[0].mxu0
        %v1924 = vpop.f32.mrb[0].mxu0
        %1925 = vdwg.mxu0
        %v1927 = vsel %vm1878, %v1257, 0
        %v1930 = vsel %vm1882, %v1871, 0
        %1932 = vmatprep.subr.bf16.mxu0 0
        %1933 = vmatpush1.bf16.msra.mxu0 %v1930
        %1934 = vmatprep.subr.bf16.mxu0 0
        %1935 = vmatpush1.bf16.msra.mxu0 0
        %1936 = vmatprep.subr.bf16.mxu0 0
        %1937 = vmatpush1.bf16.msra.mxu0 0
        %1938 = vmatprep.subr.bf16.mxu0 0
        %1939 = vmatpush1.bf16.msra.mxu0 0
        %1940 = vmatprep.subr.bf16.mxu0 0
        %1941 = vmatpush1.bf16.msra.mxu0 0
        %1942 = vmatprep.subr.bf16.mxu0 0
        %1943 = vmatpush1.bf16.msra.mxu0 0
        %1944 = vmatprep.subr.bf16.mxu0 0
        %1945 = vmatpush1.bf16.msra.mxu0 0
        %1946 = vmatprep.subr.bf16.mxu0 0
        %1947 = vmatpush1.bf16.msra.mxu0 0
        %1948 = vmatprep.subr.bf16.mxu0 0
        %1949 = vmatpush1.bf16.msra.mxu0 0
        %1950 = vmatprep.subr.bf16.mxu0 0
        %1951 = vmatpush1.bf16.msra.mxu0 0
        %1952 = vmatprep.subr.bf16.mxu0 0
        %1953 = vmatpush1.bf16.msra.mxu0 0
        %1954 = vmatprep.subr.bf16.mxu0 0
        %1955 = vmatpush1.bf16.msra.mxu0 0
        %1956 = vmatprep.subr.bf16.mxu0 0
        %1957 = vmatpush1.bf16.msra.mxu0 0
        %1958 = vmatprep.subr.bf16.mxu0 0
        %1959 = vmatpush1.bf16.msra.mxu0 0
        %1960 = vmatprep.subr.bf16.mxu0 0
        %1961 = vmatpush1.bf16.msra.mxu0 0
        %1962 = vmatprep.subr.bf16.mxu0 0
        %1963 = vmatpush1.bf16.msra.mxu0 0
        %1964 = vmatprep.mubr.bf16.mxu0 0
        %1965 = vmatmul.mubr.bf16.gmra.mrb[0].mxu0 %v1927
        %v1966 = vpop.f32.mrb[0].mxu0
        %v1967 = vadd.f32 0.0, %v1966
        %v1968 = vpop.f32.mrb[0].mxu0
        %v1969 = vpop.f32.mrb[0].mxu0
        %v1970 = vpop.f32.mrb[0].mxu0
        %1971 = vdwg.mxu0
        %v1973 = vsel %vm1878, %v1260, 0
        %v1976 = vsel %vm1882, %v1874, 0
        %1978 = vmatprep.subr.bf16.mxu0 0
        %1979 = vmatpush1.bf16.msra.mxu0 %v1976
        %1980 = vmatprep.subr.bf16.mxu0 0
        %1981 = vmatpush1.bf16.msra.mxu0 0
        %1982 = vmatprep.subr.bf16.mxu0 0
        %1983 = vmatpush1.bf16.msra.mxu0 0
        %1984 = vmatprep.subr.bf16.mxu0 0
        %1985 = vmatpush1.bf16.msra.mxu0 0
        %1986 = vmatprep.subr.bf16.mxu0 0
        %1987 = vmatpush1.bf16.msra.mxu0 0
        %1988 = vmatprep.subr.bf16.mxu0 0
        %1989 = vmatpush1.bf16.msra.mxu0 0
        %1990 = vmatprep.subr.bf16.mxu0 0
        %1991 = vmatpush1.bf16.msra.mxu0 0
        %1992 = vmatprep.subr.bf16.mxu0 0
        %1993 = vmatpush1.bf16.msra.mxu0 0
        %1994 = vmatprep.subr.bf16.mxu0 0
        %1995 = vmatpush1.bf16.msra.mxu0 0
        %1996 = vmatprep.subr.bf16.mxu0 0
        %1997 = vmatpush1.bf16.msra.mxu0 0
        %1998 = vmatprep.subr.bf16.mxu0 0
        %1999 = vmatpush1.bf16.msra.mxu0 0
        %2000 = vmatprep.subr.bf16.mxu0 0
        %2001 = vmatpush1.bf16.msra.mxu0 0
        %2002 = vmatprep.subr.bf16.mxu0 0
        %2003 = vmatpush1.bf16.msra.mxu0 0
        %2004 = vmatprep.subr.bf16.mxu0 0
        %2005 = vmatpush1.bf16.msra.mxu0 0
        %2006 = vmatprep.subr.bf16.mxu0 0
        %2007 = vmatpush1.bf16.msra.mxu0 0
        %2008 = vmatprep.subr.bf16.mxu0 0
        %2009 = vmatpush1.bf16.msra.mxu0 0
        %2010 = vmatprep.mubr.bf16.mxu0 0
        %2011 = vmatmul.mubr.bf16.gmra.mrb[0].mxu0 %v1973
        %v2012 = vpop.f32.mrb[0].mxu0
        %v2013 = vadd.f32 0.0, %v2012
        %v2014 = vpop.f32.mrb[0].mxu0
        %v2015 = vpop.f32.mrb[0].mxu0
        %v2016 = vpop.f32.mrb[0].mxu0
        %2017 = vdwg.mxu0
        %v2019 = vsel %vm1878, %v1263, 0
        %v2022 = vsel %vm1882, %v1877, 0
        %2024 = vmatprep.subr.bf16.mxu0 0
        %2025 = vmatpush1.bf16.msra.mxu0 %v2022
        %2026 = vmatprep.subr.bf16.mxu0 0
        %2027 = vmatpush1.bf16.msra.mxu0 0
        %2028 = vmatprep.subr.bf16.mxu0 0
        %2029 = vmatpush1.bf16.msra.mxu0 0
        %2030 = vmatprep.subr.bf16.mxu0 0
        %2031 = vmatpush1.bf16.msra.mxu0 0
        %2032 = vmatprep.subr.bf16.mxu0 0
        %2033 = vmatpush1.bf16.msra.mxu0 0
        %2034 = vmatprep.subr.bf16.mxu0 0
        %2035 = vmatpush1.bf16.msra.mxu0 0
        %2036 = vmatprep.subr.bf16.mxu0 0
        %2037 = vmatpush1.bf16.msra.mxu0 0
        %2038 = vmatprep.subr.bf16.mxu0 0
        %2039 = vmatpush1.bf16.msra.mxu0 0
        %2040 = vmatprep.subr.bf16.mxu0 0
        %2041 = vmatpush1.bf16.msra.mxu0 0
        %2042 = vmatprep.subr.bf16.mxu0 0
        %2043 = vmatpush1.bf16.msra.mxu0 0
        %2044 = vmatprep.subr.bf16.mxu0 0
        %2045 = vmatpush1.bf16.msra.mxu0 0
        %2046 = vmatprep.subr.bf16.mxu0 0
        %2047 = vmatpush1.bf16.msra.mxu0 0
        %2048 = vmatprep.subr.bf16.mxu0 0
        %2049 = vmatpush1.bf16.msra.mxu0 0
        %2050 = vmatprep.subr.bf16.mxu0 0
        %2051 = vmatpush1.bf16.msra.mxu0 0
        %2052 = vmatprep.subr.bf16.mxu0 0
        %2053 = vmatpush1.bf16.msra.mxu0 0
        %2054 = vmatprep.subr.bf16.mxu0 0
        %2055 = vmatpush1.bf16.msra.mxu0 0
        %2056 = vmatprep.mubr.bf16.mxu0 0
        %2057 = vmatmul.mubr.bf16.gmra.mrb[0].mxu0 %v2019
        %v2058 = vpop.f32.mrb[0].mxu0
        %v2059 = vadd.f32 0.0, %v2058
        %v2060 = vpop.f32.mrb[0].mxu0
        %v2061 = vpop.f32.mrb[0].mxu0
        %v2062 = vpop.f32.mrb[0].mxu0
        %2063 = vdwg.mxu0
        %vm2064 = vcmask 130048
        %v2065 = vsel %vm2064, %v1921, -inf
        %2066 = vmax.xlane.f32.xlu0 %v2065
        %v2067 = vpop.xlane.xlu0 %2066
        %v2068 = vsel %vm2064, %v1967, -inf
        %2069 = vmax.xlane.f32.xlu0 %v2068
        %v2070 = vpop.xlane.xlu0 %2069
        %v2071 = vsel %vm2064, %v2013, -inf
        %2072 = vmax.xlane.f32.xlu0 %v2071
        %v2073 = vpop.xlane.xlu0 %2072
        %v2074 = vsel %vm2064, %v2059, -inf
        %2075 = vmax.xlane.f32.xlu0 %v2074
        %v2076 = vpop.xlane.xlu0 %2075
        %v2077 = vsub.f32 %v1921, %v2067
        %v2078 = vsub.f32 %v1967, %v2070
        %v2079 = vsub.f32 %v2013, %v2073
        %v2080 = vsub.f32 %v2059, %v2076
        %v2081 = vmul.f32 %v2077, 1.442695
        %v2082 = vpow.pop %v2081
        %v2083 = vmul.f32 %v2078, 1.442695
        %v2084 = vpow.pop %v2083
        %v2085 = vmul.f32 %v2079, 1.442695
        %v2086 = vpow.pop %v2085
        %v2087 = vmul.f32 %v2080, 1.442695
        %v2088 = vpow.pop %v2087
        %v2089 = vsel %vm2064, %v2082, 0.0
        %2090 = vadd.xlane.f32.xlu0 %v2089
        %v2091 = vpop.xlane.xlu0 %2090
        %v2092 = vsel %vm2064, %v2084, 0.0
        %2093 = vadd.xlane.f32.xlu0 %v2092
        %v2094 = vpop.xlane.xlu0 %2093
        %v2095 = vsel %vm2064, %v2086, 0.0
        %2096 = vadd.xlane.f32.xlu0 %v2095
        %v2097 = vpop.xlane.xlu0 %2096
        %v2098 = vsel %vm2064, %v2088, 0.0
        %2099 = vadd.xlane.f32.xlu0 %v2098
        %v2100 = vpop.xlane.xlu0 %2099
        %v2101 = vrcp.pop %v2091
        %v2102 = vrcp.pop %v2094
        %v2103 = vrcp.pop %v2097
        %v2104 = vrcp.pop %v2100
        %v2105 = vmul.f32 %v2082, %v2101
        %v2106 = vmul.f32 %v2084, %v2102
        %v2107 = vmul.f32 %v2086, %v2103
        %v2108 = vmul.f32 %v2088, %v2104
        %v2109 = vpack.c.bf16 %v2105, %v2105
        %v2110 = vpack.c.bf16 %v2106, %v2106
        %v2111 = vpack.c.bf16 %v2107, %v2107
        %v2112 = vpack.c.bf16 %v2108, %v2108
        %2113 = vxpose.xlu0.c.b16.start [1/8] %v1186, 128
        %2114 = vxpose.xlu0.c.b16.cont [2/8] 0, 128
        %2115 = vxpose.xlu0.c.b16.cont [3/8] 0, 128
        %2116 = vxpose.xlu0.c.b16.cont [4/8] 0, 128
        %2117 = vxpose.xlu0.c.b16.cont [5/8] 0, 128
        %2118 = vxpose.xlu0.c.b16.cont [6/8] 0, 128
        %2119 = vxpose.xlu0.c.b16.cont [7/8] 0, 128
        %2120 = vxpose.xlu0.c.b16.end [8/8] 0, 128
        %v2121 = vpop.trf.xlu0
        %v2122 = vpop.trf.xlu0
        %v2123 = vpop.trf.xlu0
        %v2124 = vpop.trf.xlu0
        %v2125 = vpop.trf.xlu0
        %v2126 = vpop.trf.xlu0
        %v2127 = vpop.trf.xlu0
        %v2128 = vpop.trf.xlu0
        %2129 = vxpose.xlu0.c.b16.start [1/8] %v1187, 128
        %2130 = vxpose.xlu0.c.b16.cont [2/8] 0, 128
        %2131 = vxpose.xlu0.c.b16.cont [3/8] 0, 128
        %2132 = vxpose.xlu0.c.b16.cont [4/8] 0, 128
        %2133 = vxpose.xlu0.c.b16.cont [5/8] 0, 128
        %2134 = vxpose.xlu0.c.b16.cont [6/8] 0, 128
        %2135 = vxpose.xlu0.c.b16.cont [7/8] 0, 128
        %2136 = vxpose.xlu0.c.b16.end [8/8] 0, 128
        %v2137 = vpop.trf.xlu0
        %v2138 = vpop.trf.xlu0
        %v2139 = vpop.trf.xlu0
        %v2140 = vpop.trf.xlu0
        %v2141 = vpop.trf.xlu0
        %v2142 = vpop.trf.xlu0
        %v2143 = vpop.trf.xlu0
        %v2144 = vpop.trf.xlu0
        %2145 = vxpose.xlu0.c.b16.start [1/8] %v1188, 128
        %2146 = vxpose.xlu0.c.b16.cont [2/8] 0, 128
        %2147 = vxpose.xlu0.c.b16.cont [3/8] 0, 128
        %2148 = vxpose.xlu0.c.b16.cont [4/8] 0, 128
        %2149 = vxpose.xlu0.c.b16.cont [5/8] 0, 128
        %2150 = vxpose.xlu0.c.b16.cont [6/8] 0, 128
        %2151 = vxpose.xlu0.c.b16.cont [7/8] 0, 128
        %2152 = vxpose.xlu0.c.b16.end [8/8] 0, 128
        %v2153 = vpop.trf.xlu0
        %v2154 = vpop.trf.xlu0
        %v2155 = vpop.trf.xlu0
        %v2156 = vpop.trf.xlu0
        %v2157 = vpop.trf.xlu0
        %v2158 = vpop.trf.xlu0
        %v2159 = vpop.trf.xlu0
        %v2160 = vpop.trf.xlu0
        %2161 = vxpose.xlu0.c.b16.start [1/8] %v1189, 128
        %2162 = vxpose.xlu0.c.b16.cont [2/8] 0, 128
        %2163 = vxpose.xlu0.c.b16.cont [3/8] 0, 128
        %2164 = vxpose.xlu0.c.b16.cont [4/8] 0, 128
        %2165 = vxpose.xlu0.c.b16.cont [5/8] 0, 128
        %2166 = vxpose.xlu0.c.b16.cont [6/8] 0, 128
        %2167 = vxpose.xlu0.c.b16.cont [7/8] 0, 128
        %2168 = vxpose.xlu0.c.b16.end [8/8] 0, 128
        %v2169 = vpop.trf.xlu0
        %v2170 = vpop.trf.xlu0
        %v2171 = vpop.trf.xlu0
        %v2172 = vpop.trf.xlu0
        %v2173 = vpop.trf.xlu0
        %v2174 = vpop.trf.xlu0
        %v2175 = vpop.trf.xlu0
        %v2176 = vpop.trf.xlu0
        %2177 = vxpose.xlu0.c.b16.start [1/8] %v1190, 128
        %2178 = vxpose.xlu0.c.b16.cont [2/8] 0, 128
        %2179 = vxpose.xlu0.c.b16.cont [3/8] 0, 128
        %2180 = vxpose.xlu0.c.b16.cont [4/8] 0, 128
        %2181 = vxpose.xlu0.c.b16.cont [5/8] 0, 128
        %2182 = vxpose.xlu0.c.b16.cont [6/8] 0, 128
        %2183 = vxpose.xlu0.c.b16.cont [7/8] 0, 128
        %2184 = vxpose.xlu0.c.b16.end [8/8] 0, 128
        %v2185 = vpop.trf.xlu0
        %v2186 = vpop.trf.xlu0
        %v2187 = vpop.trf.xlu0
        %v2188 = vpop.trf.xlu0
        %v2189 = vpop.trf.xlu0
        %v2190 = vpop.trf.xlu0
        %v2191 = vpop.trf.xlu0
        %v2192 = vpop.trf.xlu0
        %2193 = vxpose.xlu0.c.b16.start [1/8] %v1191, 128
        %2194 = vxpose.xlu0.c.b16.cont [2/8] 0, 128
        %2195 = vxpose.xlu0.c.b16.cont [3/8] 0, 128
        %2196 = vxpose.xlu0.c.b16.cont [4/8] 0, 128
        %2197 = vxpose.xlu0.c.b16.cont [5/8] 0, 128
        %2198 = vxpose.xlu0.c.b16.cont [6/8] 0, 128
        %2199 = vxpose.xlu0.c.b16.cont [7/8] 0, 128
        %2200 = vxpose.xlu0.c.b16.end [8/8] 0, 128
        %v2201 = vpop.trf.xlu0
        %v2202 = vpop.trf.xlu0
        %v2203 = vpop.trf.xlu0
        %v2204 = vpop.trf.xlu0
        %v2205 = vpop.trf.xlu0
        %v2206 = vpop.trf.xlu0
        %v2207 = vpop.trf.xlu0
        %v2208 = vpop.trf.xlu0
        %2209 = vxpose.xlu0.c.b16.start [1/8] %v1192, 128
        %2210 = vxpose.xlu0.c.b16.cont [2/8] 0, 128
        %2211 = vxpose.xlu0.c.b16.cont [3/8] 0, 128
        %2212 = vxpose.xlu0.c.b16.cont [4/8] 0, 128
        %2213 = vxpose.xlu0.c.b16.cont [5/8] 0, 128
        %2214 = vxpose.xlu0.c.b16.cont [6/8] 0, 128
        %2215 = vxpose.xlu0.c.b16.cont [7/8] 0, 128
        %2216 = vxpose.xlu0.c.b16.end [8/8] 0, 128
        %v2217 = vpop.trf.xlu0
        %v2218 = vpop.trf.xlu0
        %v2219 = vpop.trf.xlu0
        %v2220 = vpop.trf.xlu0
        %v2221 = vpop.trf.xlu0
        %v2222 = vpop.trf.xlu0
        %v2223 = vpop.trf.xlu0
        %v2224 = vpop.trf.xlu0
        %2225 = vxpose.xlu0.c.b16.start [1/8] %v1193, 128
        %2226 = vxpose.xlu0.c.b16.cont [2/8] 0, 128
        %2227 = vxpose.xlu0.c.b16.cont [3/8] 0, 128
        %2228 = vxpose.xlu0.c.b16.cont [4/8] 0, 128
        %2229 = vxpose.xlu0.c.b16.cont [5/8] 0, 128
        %2230 = vxpose.xlu0.c.b16.cont [6/8] 0, 128
        %2231 = vxpose.xlu0.c.b16.cont [7/8] 0, 128
        %2232 = vxpose.xlu0.c.b16.end [8/8] 0, 128
        %v2233 = vpop.trf.xlu0
        %v2234 = vpop.trf.xlu0
        %v2235 = vpop.trf.xlu0
        %v2236 = vpop.trf.xlu0
        %v2237 = vpop.trf.xlu0
        %v2238 = vpop.trf.xlu0
        %v2239 = vpop.trf.xlu0
        %v2240 = vpop.trf.xlu0
        %2241 = vxpose.xlu0.c.b16.start [1/8] %v1194, 128
        %2242 = vxpose.xlu0.c.b16.cont [2/8] 0, 128
        %2243 = vxpose.xlu0.c.b16.cont [3/8] 0, 128
        %2244 = vxpose.xlu0.c.b16.cont [4/8] 0, 128
        %2245 = vxpose.xlu0.c.b16.cont [5/8] 0, 128
        %2246 = vxpose.xlu0.c.b16.cont [6/8] 0, 128
        %2247 = vxpose.xlu0.c.b16.cont [7/8] 0, 128
        %2248 = vxpose.xlu0.c.b16.end [8/8] 0, 128
        %v2249 = vpop.trf.xlu0
        %v2250 = vpop.trf.xlu0
        %v2251 = vpop.trf.xlu0
        %v2252 = vpop.trf.xlu0
        %v2253 = vpop.trf.xlu0
        %v2254 = vpop.trf.xlu0
        %v2255 = vpop.trf.xlu0
        %v2256 = vpop.trf.xlu0
        %2257 = vxpose.xlu0.c.b16.start [1/8] %v1195, 128
        %2258 = vxpose.xlu0.c.b16.cont [2/8] 0, 128
        %2259 = vxpose.xlu0.c.b16.cont [3/8] 0, 128
        %2260 = vxpose.xlu0.c.b16.cont [4/8] 0, 128
        %2261 = vxpose.xlu0.c.b16.cont [5/8] 0, 128
        %2262 = vxpose.xlu0.c.b16.cont [6/8] 0, 128
        %2263 = vxpose.xlu0.c.b16.cont [7/8] 0, 128
        %2264 = vxpose.xlu0.c.b16.end [8/8] 0, 128
        %v2265 = vpop.trf.xlu0
        %v2266 = vpop.trf.xlu0
        %v2267 = vpop.trf.xlu0
        %v2268 = vpop.trf.xlu0
        %v2269 = vpop.trf.xlu0
        %v2270 = vpop.trf.xlu0
        %v2271 = vpop.trf.xlu0
        %v2272 = vpop.trf.xlu0
        %2273 = vxpose.xlu0.c.b16.start [1/8] %v1196, 128
        %2274 = vxpose.xlu0.c.b16.cont [2/8] 0, 128
        %2275 = vxpose.xlu0.c.b16.cont [3/8] 0, 128
        %2276 = vxpose.xlu0.c.b16.cont [4/8] 0, 128
        %2277 = vxpose.xlu0.c.b16.cont [5/8] 0, 128
        %2278 = vxpose.xlu0.c.b16.cont [6/8] 0, 128
        %2279 = vxpose.xlu0.c.b16.cont [7/8] 0, 128
        %2280 = vxpose.xlu0.c.b16.end [8/8] 0, 128
        %v2281 = vpop.trf.xlu0
        %v2282 = vpop.trf.xlu0
        %v2283 = vpop.trf.xlu0
        %v2284 = vpop.trf.xlu0
        %v2285 = vpop.trf.xlu0
        %v2286 = vpop.trf.xlu0
        %v2287 = vpop.trf.xlu0
        %v2288 = vpop.trf.xlu0
        %2289 = vxpose.xlu0.c.b16.start [1/8] %v1197, 128
        %2290 = vxpose.xlu0.c.b16.cont [2/8] 0, 128
        %2291 = vxpose.xlu0.c.b16.cont [3/8] 0, 128
        %2292 = vxpose.xlu0.c.b16.cont [4/8] 0, 128
        %2293 = vxpose.xlu0.c.b16.cont [5/8] 0, 128
        %2294 = vxpose.xlu0.c.b16.cont [6/8] 0, 128
        %2295 = vxpose.xlu0.c.b16.cont [7/8] 0, 128
        %2296 = vxpose.xlu0.c.b16.end [8/8] 0, 128
        %v2297 = vpop.trf.xlu0
        %v2298 = vpop.trf.xlu0
        %v2299 = vpop.trf.xlu0
        %v2300 = vpop.trf.xlu0
        %v2301 = vpop.trf.xlu0
        %v2302 = vpop.trf.xlu0
        %v2303 = vpop.trf.xlu0
        %v2304 = vpop.trf.xlu0
        %2305 = vxpose.xlu0.c.b16.start [1/8] %v1198, 128
        %2306 = vxpose.xlu0.c.b16.cont [2/8] 0, 128
        %2307 = vxpose.xlu0.c.b16.cont [3/8] 0, 128
        %2308 = vxpose.xlu0.c.b16.cont [4/8] 0, 128
        %2309 = vxpose.xlu0.c.b16.cont [5/8] 0, 128
        %2310 = vxpose.xlu0.c.b16.cont [6/8] 0, 128
        %2311 = vxpose.xlu0.c.b16.cont [7/8] 0, 128
        %2312 = vxpose.xlu0.c.b16.end [8/8] 0, 128
        %v2313 = vpop.trf.xlu0
        %v2314 = vpop.trf.xlu0
        %v2315 = vpop.trf.xlu0
        %v2316 = vpop.trf.xlu0
        %v2317 = vpop.trf.xlu0
        %v2318 = vpop.trf.xlu0
        %v2319 = vpop.trf.xlu0
        %v2320 = vpop.trf.xlu0
        %2321 = vxpose.xlu0.c.b16.start [1/8] %v1199, 128
        %2322 = vxpose.xlu0.c.b16.cont [2/8] 0, 128
        %2323 = vxpose.xlu0.c.b16.cont [3/8] 0, 128
        %2324 = vxpose.xlu0.c.b16.cont [4/8] 0, 128
        %2325 = vxpose.xlu0.c.b16.cont [5/8] 0, 128
        %2326 = vxpose.xlu0.c.b16.cont [6/8] 0, 128
        %2327 = vxpose.xlu0.c.b16.cont [7/8] 0, 128
        %2328 = vxpose.xlu0.c.b16.end [8/8] 0, 128
        %v2329 = vpop.trf.xlu0
        %v2330 = vpop.trf.xlu0
        %v2331 = vpop.trf.xlu0
        %v2332 = vpop.trf.xlu0
        %v2333 = vpop.trf.xlu0
        %v2334 = vpop.trf.xlu0
        %v2335 = vpop.trf.xlu0
        %v2336 = vpop.trf.xlu0
        %2337 = vxpose.xlu0.c.b16.start [1/8] %v1200, 128
        %2338 = vxpose.xlu0.c.b16.cont [2/8] 0, 128
        %2339 = vxpose.xlu0.c.b16.cont [3/8] 0, 128
        %2340 = vxpose.xlu0.c.b16.cont [4/8] 0, 128
        %2341 = vxpose.xlu0.c.b16.cont [5/8] 0, 128
        %2342 = vxpose.xlu0.c.b16.cont [6/8] 0, 128
        %2343 = vxpose.xlu0.c.b16.cont [7/8] 0, 128
        %2344 = vxpose.xlu0.c.b16.end [8/8] 0, 128
        %v2345 = vpop.trf.xlu0
        %v2346 = vpop.trf.xlu0
        %v2347 = vpop.trf.xlu0
        %v2348 = vpop.trf.xlu0
        %v2349 = vpop.trf.xlu0
        %v2350 = vpop.trf.xlu0
        %v2351 = vpop.trf.xlu0
        %v2352 = vpop.trf.xlu0
        %2353 = vxpose.xlu0.c.b16.start [1/8] %v1201, 128
        %2354 = vxpose.xlu0.c.b16.cont [2/8] 0, 128
        %2355 = vxpose.xlu0.c.b16.cont [3/8] 0, 128
        %2356 = vxpose.xlu0.c.b16.cont [4/8] 0, 128
        %2357 = vxpose.xlu0.c.b16.cont [5/8] 0, 128
        %2358 = vxpose.xlu0.c.b16.cont [6/8] 0, 128
        %2359 = vxpose.xlu0.c.b16.cont [7/8] 0, 128
        %2360 = vxpose.xlu0.c.b16.end [8/8] 0, 128
        %v2361 = vpop.trf.xlu0
        %v2362 = vpop.trf.xlu0
        %v2363 = vpop.trf.xlu0
        %v2364 = vpop.trf.xlu0
        %v2365 = vpop.trf.xlu0
        %v2366 = vpop.trf.xlu0
        %v2367 = vpop.trf.xlu0
        %v2368 = vpop.trf.xlu0
        %v2369 = vcombine.low %v2121, %v2185
        %v2371 = vunpack.c.l.s4 1983009808
        %v2372 = vunpack.c.0.s8 %v2371
        %v2373 = vlaneseq
        %v2374 = vshrl.u32 %v2373, 7
        %v2375 = vsub.s32 %v2372, %v2374
        %v2376 = vrot.slane %v2369, %v2375
        %v2377 = vcombine.low %v2153, %v2217
        %v2379 = vunpack.c.l.s4 1983009808
        %v2380 = vunpack.c.0.s8 %v2379
        %v2381 = vlaneseq
        %v2382 = vshrl.u32 %v2381, 7
        %v2383 = vsub.s32 %v2380, %v2382
        %v2384 = vrot.slane %v2377, %v2383
        %v2385 = vcombine.low %v2249, %v2313
        %v2387 = vunpack.c.l.s4 1983009808
        %v2388 = vunpack.c.0.s8 %v2387
        %v2389 = vlaneseq
        %v2390 = vshrl.u32 %v2389, 7
        %v2391 = vsub.s32 %v2388, %v2390
        %v2392 = vrot.slane %v2385, %v2391
        %v2393 = vcombine.low %v2281, %v2345
        %v2395 = vunpack.c.l.s4 1983009808
        %v2396 = vunpack.c.0.s8 %v2395
        %v2397 = vlaneseq
        %v2398 = vshrl.u32 %v2397, 7
        %v2399 = vsub.s32 %v2396, %v2398
        %v2400 = vrot.slane %v2393, %v2399
        %v2401 = vcombine.low %v2376, %v2384
        %v2402 = vcombine.high %v2376, %v2384
        %v2404 = vunpack.c.l.s4 1934713408
        %v2405 = vunpack.c.0.s8 %v2404
        %v2406 = vlaneseq
        %v2407 = vshrl.u32 %v2406, 7
        %v2408 = vsub.s32 %v2405, %v2407
        %v2409 = vrot.slane %v2401, %v2408
        %v2411 = vunpack.c.l.s4 1934713408
        %v2412 = vunpack.c.0.s8 %v2411
        %v2413 = vlaneseq
        %v2414 = vshrl.u32 %v2413, 7
        %v2415 = vsub.s32 %v2412, %v2414
        %v2416 = vrot.slane %v2402, %v2415
        %v2417 = vcombine.low %v2392, %v2400
        %v2418 = vcombine.high %v2392, %v2400
        %v2420 = vunpack.c.l.s4 1934713408
        %v2421 = vunpack.c.0.s8 %v2420
        %v2422 = vlaneseq
        %v2423 = vshrl.u32 %v2422, 7
        %v2424 = vsub.s32 %v2421, %v2423
        %v2425 = vrot.slane %v2417, %v2424
        %v2427 = vunpack.c.l.s4 1934713408
        %v2428 = vunpack.c.0.s8 %v2427
        %v2429 = vlaneseq
        %v2430 = vshrl.u32 %v2429, 7
        %v2431 = vsub.s32 %v2428, %v2430
        %v2432 = vrot.slane %v2418, %v2431
        %v2433 = vcombine.low %v2409, %v2425
        %v2434 = vcombine.high %v2409, %v2425
        %v2435 = vcombine.low %v2416, %v2432
        %v2436 = vcombine.high %v2416, %v2432
        %v2437 = vcombine.low %v2137, %v2201
        %v2439 = vunpack.c.l.s4 1983009808
        %v2440 = vunpack.c.0.s8 %v2439
        %v2441 = vlaneseq
        %v2442 = vshrl.u32 %v2441, 7
        %v2443 = vsub.s32 %v2440, %v2442
        %v2444 = vrot.slane %v2437, %v2443
        %v2445 = vcombine.low %v2169, %v2233
        %v2447 = vunpack.c.l.s4 1983009808
        %v2448 = vunpack.c.0.s8 %v2447
        %v2449 = vlaneseq
        %v2450 = vshrl.u32 %v2449, 7
        %v2451 = vsub.s32 %v2448, %v2450
        %v2452 = vrot.slane %v2445, %v2451
        %v2453 = vcombine.low %v2265, %v2329
        %v2455 = vunpack.c.l.s4 1983009808
        %v2456 = vunpack.c.0.s8 %v2455
        %v2457 = vlaneseq
        %v2458 = vshrl.u32 %v2457, 7
        %v2459 = vsub.s32 %v2456, %v2458
        %v2460 = vrot.slane %v2453, %v2459
        %v2461 = vcombine.low %v2297, %v2361
        %v2463 = vunpack.c.l.s4 1983009808
        %v2464 = vunpack.c.0.s8 %v2463
        %v2465 = vlaneseq
        %v2466 = vshrl.u32 %v2465, 7
        %v2467 = vsub.s32 %v2464, %v2466
        %v2468 = vrot.slane %v2461, %v2467
        %v2469 = vcombine.low %v2444, %v2452
        %v2470 = vcombine.high %v2444, %v2452
        %v2472 = vunpack.c.l.s4 1934713408
        %v2473 = vunpack.c.0.s8 %v2472
        %v2474 = vlaneseq
        %v2475 = vshrl.u32 %v2474, 7
        %v2476 = vsub.s32 %v2473, %v2475
        %v2477 = vrot.slane %v2469, %v2476
        %v2479 = vunpack.c.l.s4 1934713408
        %v2480 = vunpack.c.0.s8 %v2479
        %v2481 = vlaneseq
        %v2482 = vshrl.u32 %v2481, 7
        %v2483 = vsub.s32 %v2480, %v2482
        %v2484 = vrot.slane %v2470, %v2483
        %v2485 = vcombine.low %v2460, %v2468
        %v2486 = vcombine.high %v2460, %v2468
        %v2488 = vunpack.c.l.s4 1934713408
        %v2489 = vunpack.c.0.s8 %v2488
        %v2490 = vlaneseq
        %v2491 = vshrl.u32 %v2490, 7
        %v2492 = vsub.s32 %v2489, %v2491
        %v2493 = vrot.slane %v2485, %v2492
        %v2495 = vunpack.c.l.s4 1934713408
        %v2496 = vunpack.c.0.s8 %v2495
        %v2497 = vlaneseq
        %v2498 = vshrl.u32 %v2497, 7
        %v2499 = vsub.s32 %v2496, %v2498
        %v2500 = vrot.slane %v2486, %v2499
        %v2501 = vcombine.low %v2477, %v2493
        %v2502 = vcombine.high %v2477, %v2493
        %v2503 = vcombine.low %v2484, %v2500
        %v2504 = vcombine.high %v2484, %v2500
        %v2507 = vpack.i.b16 %v2501, %v2433
        %v2509 = vshrl.u32 %v2433, 16
        %v2510 = vshrl.u32 %v2501, 16
        %v2511 = vpack.i.b16 %v2510, %v2509
        %v2515 = vpack.i.b16 %v2502, %v2434
        %v2517 = vshrl.u32 %v2434, 16
        %v2518 = vshrl.u32 %v2502, 16
        %v2519 = vpack.i.b16 %v2518, %v2517
        %v2523 = vpack.i.b16 %v2503, %v2435
        %v2525 = vshrl.u32 %v2435, 16
        %v2526 = vshrl.u32 %v2503, 16
        %v2527 = vpack.i.b16 %v2526, %v2525
        %v2531 = vpack.i.b16 %v2504, %v2436
        %v2533 = vshrl.u32 %v2436, 16
        %v2534 = vshrl.u32 %v2504, 16
        %v2535 = vpack.i.b16 %v2534, %v2533
        %2537 = vxpose.xlu0.c.b16.start [1/8] %v2507, 128
        %2538 = vxpose.xlu0.c.b16.cont [2/8] 0, 128
        %2539 = vxpose.xlu0.c.b16.cont [3/8] 0, 128
        %2540 = vxpose.xlu0.c.b16.cont [4/8] 0, 128
        %2541 = vxpose.xlu0.c.b16.cont [5/8] 0, 128
        %2542 = vxpose.xlu0.c.b16.cont [6/8] 0, 128
        %2543 = vxpose.xlu0.c.b16.cont [7/8] 0, 128
        %2544 = vxpose.xlu0.c.b16.end [8/8] 0, 128
        %v2545 = vpop.trf.xlu0
        %v2546 = vpop.trf.xlu0
        %v2547 = vpop.trf.xlu0
        %v2548 = vpop.trf.xlu0
        %v2549 = vpop.trf.xlu0
        %v2550 = vpop.trf.xlu0
        %v2551 = vpop.trf.xlu0
        %v2552 = vpop.trf.xlu0
        %2553 = vxpose.xlu0.c.b16.start [1/8] %v2511, 128
        %2554 = vxpose.xlu0.c.b16.cont [2/8] 0, 128
        %2555 = vxpose.xlu0.c.b16.cont [3/8] 0, 128
        %2556 = vxpose.xlu0.c.b16.cont [4/8] 0, 128
        %2557 = vxpose.xlu0.c.b16.cont [5/8] 0, 128
        %2558 = vxpose.xlu0.c.b16.cont [6/8] 0, 128
        %2559 = vxpose.xlu0.c.b16.cont [7/8] 0, 128
        %2560 = vxpose.xlu0.c.b16.end [8/8] 0, 128
        %v2561 = vpop.trf.xlu0
        %v2562 = vpop.trf.xlu0
        %v2563 = vpop.trf.xlu0
        %v2564 = vpop.trf.xlu0
        %v2565 = vpop.trf.xlu0
        %v2566 = vpop.trf.xlu0
        %v2567 = vpop.trf.xlu0
        %v2568 = vpop.trf.xlu0
        %2569 = vxpose.xlu0.c.b16.start [1/8] %v2515, 128
        %2570 = vxpose.xlu0.c.b16.cont [2/8] 0, 128
        %2571 = vxpose.xlu0.c.b16.cont [3/8] 0, 128
        %2572 = vxpose.xlu0.c.b16.cont [4/8] 0, 128
        %2573 = vxpose.xlu0.c.b16.cont [5/8] 0, 128
        %2574 = vxpose.xlu0.c.b16.cont [6/8] 0, 128
        %2575 = vxpose.xlu0.c.b16.cont [7/8] 0, 128
        %2576 = vxpose.xlu0.c.b16.end [8/8] 0, 128
        %v2577 = vpop.trf.xlu0
        %v2578 = vpop.trf.xlu0
        %v2579 = vpop.trf.xlu0
        %v2580 = vpop.trf.xlu0
        %v2581 = vpop.trf.xlu0
        %v2582 = vpop.trf.xlu0
        %v2583 = vpop.trf.xlu0
        %v2584 = vpop.trf.xlu0
        %2585 = vxpose.xlu0.c.b16.start [1/8] %v2519, 128
        %2586 = vxpose.xlu0.c.b16.cont [2/8] 0, 128
        %2587 = vxpose.xlu0.c.b16.cont [3/8] 0, 128
        %2588 = vxpose.xlu0.c.b16.cont [4/8] 0, 128
        %2589 = vxpose.xlu0.c.b16.cont [5/8] 0, 128
        %2590 = vxpose.xlu0.c.b16.cont [6/8] 0, 128
        %2591 = vxpose.xlu0.c.b16.cont [7/8] 0, 128
        %2592 = vxpose.xlu0.c.b16.end [8/8] 0, 128
        %v2593 = vpop.trf.xlu0
        %v2594 = vpop.trf.xlu0
        %v2595 = vpop.trf.xlu0
        %v2596 = vpop.trf.xlu0
        %v2597 = vpop.trf.xlu0
        %v2598 = vpop.trf.xlu0
        %v2599 = vpop.trf.xlu0
        %v2600 = vpop.trf.xlu0
        %2601 = vxpose.xlu0.c.b16.start [1/8] %v2523, 128
        %2602 = vxpose.xlu0.c.b16.cont [2/8] 0, 128
        %2603 = vxpose.xlu0.c.b16.cont [3/8] 0, 128
        %2604 = vxpose.xlu0.c.b16.cont [4/8] 0, 128
        %2605 = vxpose.xlu0.c.b16.cont [5/8] 0, 128
        %2606 = vxpose.xlu0.c.b16.cont [6/8] 0, 128
        %2607 = vxpose.xlu0.c.b16.cont [7/8] 0, 128
        %2608 = vxpose.xlu0.c.b16.end [8/8] 0, 128
        %v2609 = vpop.trf.xlu0
        %v2610 = vpop.trf.xlu0
        %v2611 = vpop.trf.xlu0
        %v2612 = vpop.trf.xlu0
        %v2613 = vpop.trf.xlu0
        %v2614 = vpop.trf.xlu0
        %v2615 = vpop.trf.xlu0
        %v2616 = vpop.trf.xlu0
        %2617 = vxpose.xlu0.c.b16.start [1/8] %v2527, 128
        %2618 = vxpose.xlu0.c.b16.cont [2/8] 0, 128
        %2619 = vxpose.xlu0.c.b16.cont [3/8] 0, 128
        %2620 = vxpose.xlu0.c.b16.cont [4/8] 0, 128
        %2621 = vxpose.xlu0.c.b16.cont [5/8] 0, 128
        %2622 = vxpose.xlu0.c.b16.cont [6/8] 0, 128
        %2623 = vxpose.xlu0.c.b16.cont [7/8] 0, 128
        %2624 = vxpose.xlu0.c.b16.end [8/8] 0, 128
        %v2625 = vpop.trf.xlu0
        %v2626 = vpop.trf.xlu0
        %v2627 = vpop.trf.xlu0
        %v2628 = vpop.trf.xlu0
        %v2629 = vpop.trf.xlu0
        %v2630 = vpop.trf.xlu0
        %v2631 = vpop.trf.xlu0
        %v2632 = vpop.trf.xlu0
        %2633 = vxpose.xlu0.c.b16.start [1/8] %v2531, 128
        %2634 = vxpose.xlu0.c.b16.cont [2/8] 0, 128
        %2635 = vxpose.xlu0.c.b16.cont [3/8] 0, 128
        %2636 = vxpose.xlu0.c.b16.cont [4/8] 0, 128
        %2637 = vxpose.xlu0.c.b16.cont [5/8] 0, 128
        %2638 = vxpose.xlu0.c.b16.cont [6/8] 0, 128
        %2639 = vxpose.xlu0.c.b16.cont [7/8] 0, 128
        %2640 = vxpose.xlu0.c.b16.end [8/8] 0, 128
        %v2641 = vpop.trf.xlu0
        %v2642 = vpop.trf.xlu0
        %v2643 = vpop.trf.xlu0
        %v2644 = vpop.trf.xlu0
        %v2645 = vpop.trf.xlu0
        %v2646 = vpop.trf.xlu0
        %v2647 = vpop.trf.xlu0
        %v2648 = vpop.trf.xlu0
        %2649 = vxpose.xlu0.c.b16.start [1/8] %v2535, 128
        %2650 = vxpose.xlu0.c.b16.cont [2/8] 0, 128
        %2651 = vxpose.xlu0.c.b16.cont [3/8] 0, 128
        %2652 = vxpose.xlu0.c.b16.cont [4/8] 0, 128
        %2653 = vxpose.xlu0.c.b16.cont [5/8] 0, 128
        %2654 = vxpose.xlu0.c.b16.cont [6/8] 0, 128
        %2655 = vxpose.xlu0.c.b16.cont [7/8] 0, 128
        %2656 = vxpose.xlu0.c.b16.end [8/8] 0, 128
        %v2657 = vpop.trf.xlu0
        %v2658 = vpop.trf.xlu0
        %v2659 = vpop.trf.xlu0
        %v2660 = vpop.trf.xlu0
        %v2661 = vpop.trf.xlu0
        %v2662 = vpop.trf.xlu0
        %v2663 = vpop.trf.xlu0
        %v2664 = vpop.trf.xlu0
        %v2665 = vcombine.low %v2545, %v2609
        %v2667 = vunpack.c.l.s4 1983009808
        %v2668 = vunpack.c.0.s8 %v2667
        %v2669 = vlaneseq
        %v2670 = vshrl.u32 %v2669, 7
        %v2671 = vsub.s32 %v2668, %v2670
        %v2672 = vrot.slane %v2665, %v2671
        %v2673 = vcombine.low %v2577, %v2641
        %v2675 = vunpack.c.l.s4 1983009808
        %v2676 = vunpack.c.0.s8 %v2675
        %v2677 = vlaneseq
        %v2678 = vshrl.u32 %v2677, 7
        %v2679 = vsub.s32 %v2676, %v2678
        %v2680 = vrot.slane %v2673, %v2679
        %v2681 = vcombine.low %v2672, %v2680
        %v2683 = vunpack.c.l.s4 1934713408
        %v2684 = vunpack.c.0.s8 %v2683
        %v2685 = vlaneseq
        %v2686 = vshrl.u32 %v2685, 7
        %v2687 = vsub.s32 %v2684, %v2686
        %v2688 = vrot.slane %v2681, %v2687
        %v2689 = vcombine.high %v2688, 0
        %v2690 = vcombine.low %v2561, %v2625
        %v2692 = vunpack.c.l.s4 1983009808
        %v2693 = vunpack.c.0.s8 %v2692
        %v2694 = vlaneseq
        %v2695 = vshrl.u32 %v2694, 7
        %v2696 = vsub.s32 %v2693, %v2695
        %v2697 = vrot.slane %v2690, %v2696
        %v2698 = vcombine.low %v2593, %v2657
        %v2700 = vunpack.c.l.s4 1983009808
        %v2701 = vunpack.c.0.s8 %v2700
        %v2702 = vlaneseq
        %v2703 = vshrl.u32 %v2702, 7
        %v2704 = vsub.s32 %v2701, %v2703
        %v2705 = vrot.slane %v2698, %v2704
        %v2706 = vcombine.low %v2697, %v2705
        %v2708 = vunpack.c.l.s4 1934713408
        %v2709 = vunpack.c.0.s8 %v2708
        %v2710 = vlaneseq
        %v2711 = vshrl.u32 %v2710, 7
        %v2712 = vsub.s32 %v2709, %v2711
        %v2713 = vrot.slane %v2706, %v2712
        %v2714 = vcombine.high %v2713, 0
        %v2717 = vpack.i.b16 %v2713, %v2688
        %v2718 = vshrl.u32 %v2688, 16
        %v2719 = vshrl.u32 %v2713, 16
        %v2720 = vpack.i.b16 %v2719, %v2718
        %v2723 = vpack.i.b16 %v2714, %v2689
        %v2724 = vshrl.u32 %v2689, 16
        %v2725 = vshrl.u32 %v2714, 16
        %v2726 = vpack.i.b16 %v2725, %v2724
        %v2728 = vsel %vm2064, %v2717, 0
        %v2731 = vsel %vm2064, %v2109, 0
        %2733 = vmatprep.subr.bf16.mxu0 0
        %2734 = vmatpush1.bf16.xpose.msra.mxu0 %v2731
        %2735 = vmatprep.subr.bf16.mxu0 0
        %2736 = vmatpush1.bf16.xpose.msra.mxu0 0
        %2737 = vmatprep.subr.bf16.mxu0 0
        %2738 = vmatpush1.bf16.xpose.msra.mxu0 0
        %2739 = vmatprep.subr.bf16.mxu0 0
        %2740 = vmatpush1.bf16.xpose.msra.mxu0 0
        %2741 = vmatprep.subr.bf16.mxu0 0
        %2742 = vmatpush1.bf16.xpose.msra.mxu0 0
        %2743 = vmatprep.subr.bf16.mxu0 0
        %2744 = vmatpush1.bf16.xpose.msra.mxu0 0
        %2745 = vmatprep.subr.bf16.mxu0 0
        %2746 = vmatpush1.bf16.xpose.msra.mxu0 0
        %2747 = vmatprep.subr.bf16.mxu0 0
        %2748 = vmatpush1.bf16.xpose.msra.mxu0 0
        %2749 = vmatprep.subr.bf16.mxu0 0
        %2750 = vmatpush1.bf16.xpose.msra.mxu0 0
        %2751 = vmatprep.subr.bf16.mxu0 0
        %2752 = vmatpush1.bf16.xpose.msra.mxu0 0
        %2753 = vmatprep.subr.bf16.mxu0 0
        %2754 = vmatpush1.bf16.xpose.msra.mxu0 0
        %2755 = vmatprep.subr.bf16.mxu0 0
        %2756 = vmatpush1.bf16.xpose.msra.mxu0 0
        %2757 = vmatprep.subr.bf16.mxu0 0
        %2758 = vmatpush1.bf16.xpose.msra.mxu0 0
        %2759 = vmatprep.subr.bf16.mxu0 0
        %2760 = vmatpush1.bf16.xpose.msra.mxu0 0
        %2761 = vmatprep.subr.bf16.mxu0 0
        %2762 = vmatpush1.bf16.xpose.msra.mxu0 0
        %2763 = vmatprep.subr.bf16.mxu0 0
        %2764 = vmatpush1.bf16.xpose.msra.mxu0 0
        %2765 = vmatprep.mubr.bf16.mxu0 0
        %2766 = vmatmul.mubr.bf16.gmra.mrb[0].mxu0 %v2728
        %v2767 = vpop.f32.mrb[0].mxu0
        %v2768 = vadd.f32 0.0, %v2767
        %v2769 = vpop.f32.mrb[0].mxu0
        %v2770 = vpop.f32.mrb[0].mxu0
        %v2771 = vpop.f32.mrb[0].mxu0
        %2772 = vdwg.mxu0
        %v2774 = vsel %vm2064, %v2720, 0
        %v2777 = vsel %vm2064, %v2110, 0
        %2779 = vmatprep.subr.bf16.mxu0 0
        %2780 = vmatpush1.bf16.xpose.msra.mxu0 %v2777
        %2781 = vmatprep.subr.bf16.mxu0 0
        %2782 = vmatpush1.bf16.xpose.msra.mxu0 0
        %2783 = vmatprep.subr.bf16.mxu0 0
        %2784 = vmatpush1.bf16.xpose.msra.mxu0 0
        %2785 = vmatprep.subr.bf16.mxu0 0
        %2786 = vmatpush1.bf16.xpose.msra.mxu0 0
        %2787 = vmatprep.subr.bf16.mxu0 0
        %2788 = vmatpush1.bf16.xpose.msra.mxu0 0
        %2789 = vmatprep.subr.bf16.mxu0 0
        %2790 = vmatpush1.bf16.xpose.msra.mxu0 0
        %2791 = vmatprep.subr.bf16.mxu0 0
        %2792 = vmatpush1.bf16.xpose.msra.mxu0 0
        %2793 = vmatprep.subr.bf16.mxu0 0
        %2794 = vmatpush1.bf16.xpose.msra.mxu0 0
        %2795 = vmatprep.subr.bf16.mxu0 0
        %2796 = vmatpush1.bf16.xpose.msra.mxu0 0
        %2797 = vmatprep.subr.bf16.mxu0 0
        %2798 = vmatpush1.bf16.xpose.msra.mxu0 0
        %2799 = vmatprep.subr.bf16.mxu0 0
        %2800 = vmatpush1.bf16.xpose.msra.mxu0 0
        %2801 = vmatprep.subr.bf16.mxu0 0
        %2802 = vmatpush1.bf16.xpose.msra.mxu0 0
        %2803 = vmatprep.subr.bf16.mxu0 0
        %2804 = vmatpush1.bf16.xpose.msra.mxu0 0
        %2805 = vmatprep.subr.bf16.mxu0 0
        %2806 = vmatpush1.bf16.xpose.msra.mxu0 0
        %2807 = vmatprep.subr.bf16.mxu0 0
        %2808 = vmatpush1.bf16.xpose.msra.mxu0 0
        %2809 = vmatprep.subr.bf16.mxu0 0
        %2810 = vmatpush1.bf16.xpose.msra.mxu0 0
        %2811 = vmatprep.mubr.bf16.mxu0 0
        %2812 = vmatmul.mubr.bf16.gmra.mrb[0].mxu0 %v2774
        %v2813 = vpop.f32.mrb[0].mxu0
        %v2814 = vadd.f32 0.0, %v2813
        %v2815 = vpop.f32.mrb[0].mxu0
        %v2816 = vpop.f32.mrb[0].mxu0
        %v2817 = vpop.f32.mrb[0].mxu0
        %2818 = vdwg.mxu0
        %v2820 = vsel %vm2064, %v2723, 0
        %v2823 = vsel %vm2064, %v2111, 0
        %2825 = vmatprep.subr.bf16.mxu0 0
        %2826 = vmatpush1.bf16.xpose.msra.mxu0 %v2823
        %2827 = vmatprep.subr.bf16.mxu0 0
        %2828 = vmatpush1.bf16.xpose.msra.mxu0 0
        %2829 = vmatprep.subr.bf16.mxu0 0
        %2830 = vmatpush1.bf16.xpose.msra.mxu0 0
        %2831 = vmatprep.subr.bf16.mxu0 0
        %2832 = vmatpush1.bf16.xpose.msra.mxu0 0
        %2833 = vmatprep.subr.bf16.mxu0 0
        %2834 = vmatpush1.bf16.xpose.msra.mxu0 0
        %2835 = vmatprep.subr.bf16.mxu0 0
        %2836 = vmatpush1.bf16.xpose.msra.mxu0 0
        %2837 = vmatprep.subr.bf16.mxu0 0
        %2838 = vmatpush1.bf16.xpose.msra.mxu0 0
        %2839 = vmatprep.subr.bf16.mxu0 0
        %2840 = vmatpush1.bf16.xpose.msra.mxu0 0
        %2841 = vmatprep.subr.bf16.mxu0 0
        %2842 = vmatpush1.bf16.xpose.msra.mxu0 0
        %2843 = vmatprep.subr.bf16.mxu0 0
        %2844 = vmatpush1.bf16.xpose.msra.mxu0 0
        %2845 = vmatprep.subr.bf16.mxu0 0
        %2846 = vmatpush1.bf16.xpose.msra.mxu0 0
        %2847 = vmatprep.subr.bf16.mxu0 0
        %2848 = vmatpush1.bf16.xpose.msra.mxu0 0
        %2849 = vmatprep.subr.bf16.mxu0 0
        %2850 = vmatpush1.bf16.xpose.msra.mxu0 0
        %2851 = vmatprep.subr.bf16.mxu0 0
        %2852 = vmatpush1.bf16.xpose.msra.mxu0 0
        %2853 = vmatprep.subr.bf16.mxu0 0
        %2854 = vmatpush1.bf16.xpose.msra.mxu0 0
        %2855 = vmatprep.subr.bf16.mxu0 0
        %2856 = vmatpush1.bf16.xpose.msra.mxu0 0
        %2857 = vmatprep.mubr.bf16.mxu0 0
        %2858 = vmatmul.mubr.bf16.gmra.mrb[0].mxu0 %v2820
        %v2859 = vpop.f32.mrb[0].mxu0
        %v2860 = vadd.f32 0.0, %v2859
        %v2861 = vpop.f32.mrb[0].mxu0
        %v2862 = vpop.f32.mrb[0].mxu0
        %v2863 = vpop.f32.mrb[0].mxu0
        %2864 = vdwg.mxu0
        %v2866 = vsel %vm2064, %v2726, 0
        %v2869 = vsel %vm2064, %v2112, 0
        %2871 = vmatprep.subr.bf16.mxu0 0
        %2872 = vmatpush1.bf16.xpose.msra.mxu0 %v2869
        %2873 = vmatprep.subr.bf16.mxu0 0
        %2874 = vmatpush1.bf16.xpose.msra.mxu0 0
        %2875 = vmatprep.subr.bf16.mxu0 0
        %2876 = vmatpush1.bf16.xpose.msra.mxu0 0
        %2877 = vmatprep.subr.bf16.mxu0 0
        %2878 = vmatpush1.bf16.xpose.msra.mxu0 0
        %2879 = vmatprep.subr.bf16.mxu0 0
        %2880 = vmatpush1.bf16.xpose.msra.mxu0 0
        %2881 = vmatprep.subr.bf16.mxu0 0
        %2882 = vmatpush1.bf16.xpose.msra.mxu0 0
        %2883 = vmatprep.subr.bf16.mxu0 0
        %2884 = vmatpush1.bf16.xpose.msra.mxu0 0
        %2885 = vmatprep.subr.bf16.mxu0 0
        %2886 = vmatpush1.bf16.xpose.msra.mxu0 0
        %2887 = vmatprep.subr.bf16.mxu0 0
        %2888 = vmatpush1.bf16.xpose.msra.mxu0 0
        %2889 = vmatprep.subr.bf16.mxu0 0
        %2890 = vmatpush1.bf16.xpose.msra.mxu0 0
        %2891 = vmatprep.subr.bf16.mxu0 0
        %2892 = vmatpush1.bf16.xpose.msra.mxu0 0
        %2893 = vmatprep.subr.bf16.mxu0 0
        %2894 = vmatpush1.bf16.xpose.msra.mxu0 0
        %2895 = vmatprep.subr.bf16.mxu0 0
        %2896 = vmatpush1.bf16.xpose.msra.mxu0 0
        %2897 = vmatprep.subr.bf16.mxu0 0
        %2898 = vmatpush1.bf16.xpose.msra.mxu0 0
        %2899 = vmatprep.subr.bf16.mxu0 0
        %2900 = vmatpush1.bf16.xpose.msra.mxu0 0
        %2901 = vmatprep.subr.bf16.mxu0 0
        %2902 = vmatpush1.bf16.xpose.msra.mxu0 0
        %2903 = vmatprep.mubr.bf16.mxu0 0
        %2904 = vmatmul.mubr.bf16.gmra.mrb[0].mxu0 %v2866
        %v2905 = vpop.f32.mrb[0].mxu0
        %v2906 = vadd.f32 0.0, %v2905
        %v2907 = vpop.f32.mrb[0].mxu0
        %v2908 = vpop.f32.mrb[0].mxu0
        %v2909 = vpop.f32.mrb[0].mxu0
        %2910 = vdwg.mxu0
        %2911 = vxpose.xlu0.b32.start [1/16] %v2768, 128
        %2912 = vxpose.xlu0.b32.cont [2/16] 0.0, 128
        %2913 = vxpose.xlu0.b32.cont [3/16] 0.0, 128
        %2914 = vxpose.xlu0.b32.cont [4/16] 0.0, 128
        %2915 = vxpose.xlu0.b32.cont [5/16] 0.0, 128
        %2916 = vxpose.xlu0.b32.cont [6/16] 0.0, 128
        %2917 = vxpose.xlu0.b32.cont [7/16] 0.0, 128
        %2918 = vxpose.xlu0.b32.cont [8/16] 0.0, 128
        %2919 = vxpose.xlu0.b32.cont [9/16] 0.0, 128
        %2920 = vxpose.xlu0.b32.cont [10/16] 0.0, 128
        %2921 = vxpose.xlu0.b32.cont [11/16] 0.0, 128
        %2922 = vxpose.xlu0.b32.cont [12/16] 0.0, 128
        %2923 = vxpose.xlu0.b32.cont [13/16] 0.0, 128
        %2924 = vxpose.xlu0.b32.cont [14/16] 0.0, 128
        %2925 = vxpose.xlu0.b32.cont [15/16] 0.0, 128
        %2926 = vxpose.xlu0.b32.end [16/16] 0.0, 128
        %v2927 = vpop.trf.xlu0
        %v2928 = vpop.trf.xlu0
        %v2929 = vpop.trf.xlu0
        %v2930 = vpop.trf.xlu0
        %v2931 = vpop.trf.xlu0
        %v2932 = vpop.trf.xlu0
        %v2933 = vpop.trf.xlu0
        %v2934 = vpop.trf.xlu0
        %v2935 = vpop.trf.xlu0
        %v2936 = vpop.trf.xlu0
        %v2937 = vpop.trf.xlu0
        %v2938 = vpop.trf.xlu0
        %v2939 = vpop.trf.xlu0
        %v2940 = vpop.trf.xlu0
        %v2941 = vpop.trf.xlu0
        %v2942 = vpop.trf.xlu0
        %2943 = vxpose.xlu0.b32.start [1/16] %v2814, 128
        %2944 = vxpose.xlu0.b32.cont [2/16] 0.0, 128
        %2945 = vxpose.xlu0.b32.cont [3/16] 0.0, 128
        %2946 = vxpose.xlu0.b32.cont [4/16] 0.0, 128
        %2947 = vxpose.xlu0.b32.cont [5/16] 0.0, 128
        %2948 = vxpose.xlu0.b32.cont [6/16] 0.0, 128
        %2949 = vxpose.xlu0.b32.cont [7/16] 0.0, 128
        %2950 = vxpose.xlu0.b32.cont [8/16] 0.0, 128
        %2951 = vxpose.xlu0.b32.cont [9/16] 0.0, 128
        %2952 = vxpose.xlu0.b32.cont [10/16] 0.0, 128
        %2953 = vxpose.xlu0.b32.cont [11/16] 0.0, 128
        %2954 = vxpose.xlu0.b32.cont [12/16] 0.0, 128
        %2955 = vxpose.xlu0.b32.cont [13/16] 0.0, 128
        %2956 = vxpose.xlu0.b32.cont [14/16] 0.0, 128
        %2957 = vxpose.xlu0.b32.cont [15/16] 0.0, 128
        %2958 = vxpose.xlu0.b32.end [16/16] 0.0, 128
        %v2959 = vpop.trf.xlu0
        %v2960 = vpop.trf.xlu0
        %v2961 = vpop.trf.xlu0
        %v2962 = vpop.trf.xlu0
        %v2963 = vpop.trf.xlu0
        %v2964 = vpop.trf.xlu0
        %v2965 = vpop.trf.xlu0
        %v2966 = vpop.trf.xlu0
        %v2967 = vpop.trf.xlu0
        %v2968 = vpop.trf.xlu0
        %v2969 = vpop.trf.xlu0
        %v2970 = vpop.trf.xlu0
        %v2971 = vpop.trf.xlu0
        %v2972 = vpop.trf.xlu0
        %v2973 = vpop.trf.xlu0
        %v2974 = vpop.trf.xlu0
        %2975 = vxpose.xlu0.b32.start [1/16] %v2860, 128
        %2976 = vxpose.xlu0.b32.cont [2/16] 0.0, 128
        %2977 = vxpose.xlu0.b32.cont [3/16] 0.0, 128
        %2978 = vxpose.xlu0.b32.cont [4/16] 0.0, 128
        %2979 = vxpose.xlu0.b32.cont [5/16] 0.0, 128
        %2980 = vxpose.xlu0.b32.cont [6/16] 0.0, 128
        %2981 = vxpose.xlu0.b32.cont [7/16] 0.0, 128
        %2982 = vxpose.xlu0.b32.cont [8/16] 0.0, 128
        %2983 = vxpose.xlu0.b32.cont [9/16] 0.0, 128
        %2984 = vxpose.xlu0.b32.cont [10/16] 0.0, 128
        %2985 = vxpose.xlu0.b32.cont [11/16] 0.0, 128
        %2986 = vxpose.xlu0.b32.cont [12/16] 0.0, 128
        %2987 = vxpose.xlu0.b32.cont [13/16] 0.0, 128
        %2988 = vxpose.xlu0.b32.cont [14/16] 0.0, 128
        %2989 = vxpose.xlu0.b32.cont [15/16] 0.0, 128
        %2990 = vxpose.xlu0.b32.end [16/16] 0.0, 128
        %v2991 = vpop.trf.xlu0
        %v2992 = vpop.trf.xlu0
        %v2993 = vpop.trf.xlu0
        %v2994 = vpop.trf.xlu0
        %v2995 = vpop.trf.xlu0
        %v2996 = vpop.trf.xlu0
        %v2997 = vpop.trf.xlu0
        %v2998 = vpop.trf.xlu0
        %v2999 = vpop.trf.xlu0
        %v3000 = vpop.trf.xlu0
        %v3001 = vpop.trf.xlu0
        %v3002 = vpop.trf.xlu0
        %v3003 = vpop.trf.xlu0
        %v3004 = vpop.trf.xlu0
        %v3005 = vpop.trf.xlu0
        %v3006 = vpop.trf.xlu0
        %3007 = vxpose.xlu0.b32.start [1/16] %v2906, 128
        %3008 = vxpose.xlu0.b32.cont [2/16] 0.0, 128
        %3009 = vxpose.xlu0.b32.cont [3/16] 0.0, 128
        %3010 = vxpose.xlu0.b32.cont [4/16] 0.0, 128
        %3011 = vxpose.xlu0.b32.cont [5/16] 0.0, 128
        %3012 = vxpose.xlu0.b32.cont [6/16] 0.0, 128
        %3013 = vxpose.xlu0.b32.cont [7/16] 0.0, 128
        %3014 = vxpose.xlu0.b32.cont [8/16] 0.0, 128
        %3015 = vxpose.xlu0.b32.cont [9/16] 0.0, 128
        %3016 = vxpose.xlu0.b32.cont [10/16] 0.0, 128
        %3017 = vxpose.xlu0.b32.cont [11/16] 0.0, 128
        %3018 = vxpose.xlu0.b32.cont [12/16] 0.0, 128
        %3019 = vxpose.xlu0.b32.cont [13/16] 0.0, 128
        %3020 = vxpose.xlu0.b32.cont [14/16] 0.0, 128
        %3021 = vxpose.xlu0.b32.cont [15/16] 0.0, 128
        %3022 = vxpose.xlu0.b32.end [16/16] 0.0, 128
        %v3023 = vpop.trf.xlu0
        %v3024 = vpop.trf.xlu0
        %v3025 = vpop.trf.xlu0
        %v3026 = vpop.trf.xlu0
        %v3027 = vpop.trf.xlu0
        %v3028 = vpop.trf.xlu0
        %v3029 = vpop.trf.xlu0
        %v3030 = vpop.trf.xlu0
        %v3031 = vpop.trf.xlu0
        %v3032 = vpop.trf.xlu0
        %v3033 = vpop.trf.xlu0
        %v3034 = vpop.trf.xlu0
        %v3035 = vpop.trf.xlu0
        %v3036 = vpop.trf.xlu0
        %v3037 = vpop.trf.xlu0
        %v3038 = vpop.trf.xlu0
        %v3039 = vcombine.low %v2927, %v2991
        %v3040 = vcombine.high %v2927, %v2991
        %v3042 = vunpack.c.l.s4 1983009808
        %v3043 = vunpack.c.0.s8 %v3042
        %v3044 = vlaneseq
        %v3045 = vshrl.u32 %v3044, 7
        %v3046 = vsub.s32 %v3043, %v3045
        %v3047 = vrot.slane %v3039, %v3046
        %v3049 = vunpack.c.l.s4 1983009808
        %v3050 = vunpack.c.0.s8 %v3049
        %v3051 = vlaneseq
        %v3052 = vshrl.u32 %v3051, 7
        %v3053 = vsub.s32 %v3050, %v3052
        %v3054 = vrot.slane %v3040, %v3053
        %v3055 = vcombine.low %v2959, %v3023
        %v3056 = vcombine.high %v2959, %v3023
        %v3058 = vunpack.c.l.s4 1983009808
        %v3059 = vunpack.c.0.s8 %v3058
        %v3060 = vlaneseq
        %v3061 = vshrl.u32 %v3060, 7
        %v3062 = vsub.s32 %v3059, %v3061
        %v3063 = vrot.slane %v3055, %v3062
        %v3065 = vunpack.c.l.s4 1983009808
        %v3066 = vunpack.c.0.s8 %v3065
        %v3067 = vlaneseq
        %v3068 = vshrl.u32 %v3067, 7
        %v3069 = vsub.s32 %v3066, %v3068
        %v3070 = vrot.slane %v3056, %v3069
        %v3071 = vcombine.low %v3047, %v3063
        %v3072 = vcombine.high %v3047, %v3063
        %v3074 = vunpack.c.l.s4 1934713408
        %v3075 = vunpack.c.0.s8 %v3074
        %v3076 = vlaneseq
        %v3077 = vshrl.u32 %v3076, 7
        %v3078 = vsub.s32 %v3075, %v3077
        %v3079 = vrot.slane %v3071, %v3078
        %v3081 = vunpack.c.l.s4 1934713408
        %v3082 = vunpack.c.0.s8 %v3081
        %v3083 = vlaneseq
        %v3084 = vshrl.u32 %v3083, 7
        %v3085 = vsub.s32 %v3082, %v3084
        %v3086 = vrot.slane %v3072, %v3085
        %v3087 = vcombine.low %v3054, %v3070
        %v3088 = vcombine.high %v3054, %v3070
        %v3090 = vunpack.c.l.s4 1934713408
        %v3091 = vunpack.c.0.s8 %v3090
        %v3092 = vlaneseq
        %v3093 = vshrl.u32 %v3092, 7
        %v3094 = vsub.s32 %v3091, %v3093
        %v3095 = vrot.slane %v3087, %v3094
        %v3097 = vunpack.c.l.s4 1934713408
        %v3098 = vunpack.c.0.s8 %v3097
        %v3099 = vlaneseq
        %v3100 = vshrl.u32 %v3099, 7
        %v3101 = vsub.s32 %v3098, %v3100
        %v3102 = vrot.slane %v3088, %v3101
        %v3103 = vcombine.high %v3079, 0.0
        %v3104 = vcombine.high %v3086, 0.0
        %v3105 = vcombine.high %v3095, 0.0
        %v3106 = vcombine.high %v3102, 0.0
        %v3107 = vcombine.low %v3079, %v3086
        %v3109 = vunpack.c.l.s4 1983009808
        %v3110 = vunpack.c.0.s8 %v3109
        %v3111 = vlaneseq
        %v3112 = vshrl.u32 %v3111, 7
        %v3113 = vsub.s32 %v3110, %v3112
        %v3114 = vrot.slane %v3107, %v3113
        %v3115 = vcombine.low %v3103, %v3104
        %v3117 = vunpack.c.l.s4 1983009808
        %v3118 = vunpack.c.0.s8 %v3117
        %v3119 = vlaneseq
        %v3120 = vshrl.u32 %v3119, 7
        %v3121 = vsub.s32 %v3118, %v3120
        %v3122 = vrot.slane %v3115, %v3121
        %v3123 = vcombine.low %v3095, %v3102
        %v3125 = vunpack.c.l.s4 1983009808
        %v3126 = vunpack.c.0.s8 %v3125
        %v3127 = vlaneseq
        %v3128 = vshrl.u32 %v3127, 7
        %v3129 = vsub.s32 %v3126, %v3128
        %v3130 = vrot.slane %v3123, %v3129
        %v3131 = vcombine.low %v3105, %v3106
        %v3133 = vunpack.c.l.s4 1983009808
        %v3134 = vunpack.c.0.s8 %v3133
        %v3135 = vlaneseq
        %v3136 = vshrl.u32 %v3135, 7
        %v3137 = vsub.s32 %v3134, %v3136
        %v3138 = vrot.slane %v3131, %v3137
        %v3139 = vcombine.low %v3114, %v3122
        %v3140 = vcombine.high %v3114, %v3122
        %v3142 = vunpack.c.l.s4 1934713408
        %v3143 = vunpack.c.0.s8 %v3142
        %v3144 = vlaneseq
        %v3145 = vshrl.u32 %v3144, 7
        %v3146 = vsub.s32 %v3143, %v3145
        %v3147 = vrot.slane %v3139, %v3146
        %v3149 = vunpack.c.l.s4 1934713408
        %v3150 = vunpack.c.0.s8 %v3149
        %v3151 = vlaneseq
        %v3152 = vshrl.u32 %v3151, 7
        %v3153 = vsub.s32 %v3150, %v3152
        %v3154 = vrot.slane %v3140, %v3153
        %v3155 = vcombine.low %v3130, %v3138
        %v3156 = vcombine.high %v3130, %v3138
        %v3158 = vunpack.c.l.s4 1934713408
        %v3159 = vunpack.c.0.s8 %v3158
        %v3160 = vlaneseq
        %v3161 = vshrl.u32 %v3160, 7
        %v3162 = vsub.s32 %v3159, %v3161
        %v3163 = vrot.slane %v3155, %v3162
        %v3165 = vunpack.c.l.s4 1934713408
        %v3166 = vunpack.c.0.s8 %v3165
        %v3167 = vlaneseq
        %v3168 = vshrl.u32 %v3167, 7
        %v3169 = vsub.s32 %v3166, %v3168
        %v3170 = vrot.slane %v3156, %v3169
        %v3171 = vcombine.low %v3147, %v3163
        %v3172 = vcombine.high %v3147, %v3163
        %v3173 = vcombine.low %v3154, %v3170
        %v3174 = vcombine.high %v3154, %v3170
        %3176 = vrot.lane.b32.xlu0 %v3172, 8
        %v3177 = vpop.permute.xlu0 %3176
        %3180 = vrot.lane.b32.xlu0 %v3173, 16
        %v3181 = vpop.permute.xlu0 %3180
        %3184 = vrot.lane.b32.xlu0 %v3174, 24
        %v3185 = vpop.permute.xlu0 %3184
        %v3187 = vsel %vm1878, %v3171, %v3177
        %v3188 = vsel %vm2064, %v3187, %v3181
        %vm3189 = vcmask 195584
        %v3190 = vsel %vm3189, %v3188, %v3185
        %v3191 = vpack.c.bf16 %v3190, %v3190
        %v3192 = vld [vmem:[%s9] sm:$0xf]
        %v3193 = vld [vmem:[%s9 + $0x4] sm:$0xf]
        %v3194 = vld [vmem:[%s9 + $0x8] sm:$0xf]
        %v3195 = vld [vmem:[%s9 + $0xc] sm:$0xf]
        %v3196 = vld [vmem:[%s10] sm:$0x1]
        %v3198 = vlaneseq
        %v3199 = vshrl.u32 %v3198, 7
        %v3200 = vsub.s32 0, %v3199
        %v3201 = vrot.slane %v3196, %v3200
        %v3207 = vunpack.c.l.b16 %v3192
        %v3208 = vunpack.c.l.b16 %v3193
        %v3209 = vunpack.c.l.b16 %v3194
        %v3210 = vunpack.c.l.b16 %v3195
        %v3211 = vpack.c.b16 %v3208, %v3207
        %v3212 = vpack.c.b16 %v3210, %v3209
        %v3216 = vsel %vm520, %v3191, 0
        %3218 = vmatprep.subr.bf16.mxu0 0
        %3219 = vmatpush1.bf16.msra.mxu0 %v3211
        %3220 = vmatprep.subr.bf16.mxu0 0
        %3221 = vmatpush1.bf16.msra.mxu0 %v3212
        %3222 = vmatprep.subr.bf16.mxu0 0
        %3223 = vmatpush1.bf16.msra.mxu0 0
        %3224 = vmatprep.subr.bf16.mxu0 0
        %3225 = vmatpush1.bf16.msra.mxu0 0
        %3226 = vmatprep.subr.bf16.mxu0 0
        %3227 = vmatpush1.bf16.msra.mxu0 0
        %3228 = vmatprep.subr.bf16.mxu0 0
        %3229 = vmatpush1.bf16.msra.mxu0 0
        %3230 = vmatprep.subr.bf16.mxu0 0
        %3231 = vmatpush1.bf16.msra.mxu0 0
        %3232 = vmatprep.subr.bf16.mxu0 0
        %3233 = vmatpush1.bf16.msra.mxu0 0
        %3234 = vmatprep.subr.bf16.mxu0 0
        %3235 = vmatpush1.bf16.msra.mxu0 0
        %3236 = vmatprep.subr.bf16.mxu0 0
        %3237 = vmatpush1.bf16.msra.mxu0 0
        %3238 = vmatprep.subr.bf16.mxu0 0
        %3239 = vmatpush1.bf16.msra.mxu0 0
        %3240 = vmatprep.subr.bf16.mxu0 0
        %3241 = vmatpush1.bf16.msra.mxu0 0
        %3242 = vmatprep.subr.bf16.mxu0 0
        %3243 = vmatpush1.bf16.msra.mxu0 0
        %3244 = vmatprep.subr.bf16.mxu0 0
        %3245 = vmatpush1.bf16.msra.mxu0 0
        %3246 = vmatprep.subr.bf16.mxu0 0
        %3247 = vmatpush1.bf16.msra.mxu0 0
        %3248 = vmatprep.subr.bf16.mxu0 0
        %3249 = vmatpush1.bf16.msra.mxu0 0
        %3250 = vmatprep.mubr.bf16.mxu0 0
        %3251 = vmatmul.mubr.bf16.gmra.mrb[0].mxu0 %v3216
        %v3252 = vpop.f32.mrb[0].mxu0
        %v3253 = vadd.f32 %v3201, %v3252
        %v3254 = vpop.f32.mrb[0].mxu0
        %v3255 = vpop.f32.mrb[0].mxu0
        %v3256 = vpop.f32.mrb[0].mxu0
        %3257 = vdwg.mxu0
        %v3258 = vadd.f32 %v517, %v3253
        %3259 = vst.msk [vmem:[%s513] sm:$0xff] %vm520, %v3258
        %s3260 = sand.u32 %s298, 1
        %s3261 = scalar_lea.sflag [#allocation4], %s3260
        %s3262 = sand.u32 %s298, 1
        %s3263 = smul.addr %s3262, 8
        %s3264 = scalar_lea.vmem [#allocation13], %s3263
        // Predicated region
        $region89: #{tpu_custom_call.1} parent=63 // pred_check
          %p3265 = pneg %p308
        $region90: #{tpu_custom_call.1} parent=63 // pred_check_branch
          %3267 = sbr.rel (%p3265) target = $region92
        $region91: #{tpu_custom_call.1} parent=63 // pred_region
          %s3269 = ssub.s32 128, 128
          %3270 = vsyncadd %s3261, %s3269
          %s3271 = smul.addr %s37, 2
          %s3272 = sadd.s32 %s38, %s3271
          %s3273 = smul.addr %s3272, 128
          %s3274 = scalar_lea.hbm %s11, %s3273
          %s3276 = sshll.u32 %s3264, 4
          %s3277 = int_to_ptr.vmem [resolvable:$true] %s3276
          %3279 = dma.vmem_to_hbm [thread:$0]  %s3277, 128, %s3274, %s3261
        $region92: #{tpu_custom_call.1} parent=63 // pred_fallthru
          _
      $region64: #{tpu_custom_call.1} parent=5 // pred_fallthru
        _
      %p3280 = scmp.le.s32.totalorder 2, %s28
      // Predicated region
      $region93: #{tpu_custom_call.1} parent=5 // pred_check
        %p3281 = pneg %p3280
      $region94: #{tpu_custom_call.1} parent=5 // pred_check_branch
        %3283 = sbr.rel (%p3281) target = $region96
      $region95: #{tpu_custom_call.1} parent=5 // pred_region
        %s3284 = ssub.s32 %s28, 2
        // Predicated region
        $region97: #{tpu_custom_call.1} parent=95 // pred_check
          %p3285 = pneg %p314
        $region98: #{tpu_custom_call.1} parent=95 // pred_check_branch
          %3287 = sbr.rel (%p3285) target = $region100
        $region99: #{tpu_custom_call.1} parent=95 // pred_region
          %s3288 = sand.u32 %s299, 1
          %s3289 = scalar_lea.sflag [#allocation4], %s3288
          %s3290 = sand.u32 %s299, 1
          %s3291 = smul.addr %s3290, 8
          %s3292 = scalar_lea.vmem [#allocation13], %s3291
          %3293 = dma.done %s3289, 128
        $region100: #{tpu_custom_call.1} parent=95 // pred_fallthru
          _
      $region96: #{tpu_custom_call.1} parent=5 // pred_fallthru
        _
    $region6: #{tpu_custom_call.1} parent=1 // loop_footer
      %s32 = sadd.s32 1, %s28
    $region7: #{tpu_custom_call.1} parent=1 // loop_footer_branch
      %27 = sbr.rel target = $region3
    $region8: #{tpu_custom_call.1} parent=1 // loop_exit
      _
    %3294 = vsyncpa [#allocation3], 1
    %s3295 = scalar_lea.sflag [#allocation3], 1
    %3296 = vsyncpa %s3295, 1
    %3297 = vsyncpa [#allocation6], 1
    %s3298 = scalar_lea.sflag [#allocation6], 1
    %3299 = vsyncpa %s3298, 1
    %3300 = vsyncpa [#allocation9], 1
    %3301 = vsyncpa [#allocation12], 1
    %3302 = vsyncpa [#allocation4], 1
    %s3303 = scalar_lea.sflag [#allocation4], 1
    %3304 = vsyncpa %s3303, 1

// kernel: tpu_custom_call.1
$region0: #{tpu_custom_call.1}
  #allocation0 [shape = 'u32[]', space=smem, size = 0x4, offset = 0x4, fixed_abs, tag = 'smem constant byte address 0x4 - core index']
  #allocation1 [shape = 'u32[144,128]{1,0:T(1,128)}', space=vmem, size = 0x12000, scoped, tag = 'internal scratch']
  %s0 = inlined_call_operand.hbm [shape: f32[2,16,32], index: 0, kind: input, shape index: {}]
  %s1 = inlined_call_operand.hbm [shape: f32[2,16,32], index: 1, kind: input, shape index: {}]
  %s2 = inlined_call_operand.vmem [shape: f32[1,32], index: 2, kind: input, shape index: {}]
  %s3 = inlined_call_operand.vmem [shape: f32[1,32], index: 3, kind: input, shape index: {}]
  %s4 = inlined_call_operand.hbm [shape: bf16[32,32], index: 4, kind: input, shape index: {}]
  %s5 = inlined_call_operand.hbm [shape: f32[1,32], index: 5, kind: input, shape index: {}]
  %s6 = inlined_call_operand.vmem [shape: bf16[32,32], index: 6, kind: input, shape index: {}]
  %s7 = inlined_call_operand.hbm [shape: bf16[32,32], index: 7, kind: input, shape index: {}]
  %s8 = inlined_call_operand.hbm [shape: f32[1,32], index: 8, kind: input, shape index: {}]
  %s9 = inlined_call_operand.vmem [shape: bf16[32,32], index: 9, kind: input, shape index: {}]
  %s10 = inlined_call_operand.vmem [shape: f32[1,32], index: 10, kind: input, shape index: {}]
  %s11 = inlined_call_operand.hbm [shape: f32[2,16,32], index: 11, kind: output, shape index: {}]
  %s12 = sld [smem:[#allocation0]]
  $region101: #{tpu_custom_call.1} parent=0
    _
  %s14 = ssub.s32 1, %s12
  %s15 = scalar_select 0, %s14, %s12
  $region1: #{tpu_custom_call.1} parent=0
    #allocation2 [shape = 'u8[16384]{0}', space=vmem, size = 0x4000, scoped, tag = 'input window, operand 0']
    #allocation3 [shape = 's32[2]{0}', space=sflag, size = 0x8, scoped, tag = 'scoped memory for tpu_custom_call.1']
    #allocation4 [shape = 's32[2]{0}', space=sflag, size = 0x8, scoped, tag = 'scoped memory for tpu_custom_call.1']
    #allocation5 [shape = 'u8[8192]{0}', space=vmem, size = 0x2000, scoped, tag = 'input window, operand 1']
    #allocation6 [shape = 's32[2]{0}', space=sflag, size = 0x8, scoped, tag = 'scoped memory for tpu_custom_call.1']
    #allocation7 [shape = 'u8[8192]{0}', space=vmem, size = 0x2000, scoped, tag = 'input window, operand 4, single buffered']
    #allocation8 [shape = 'u8[512]{0}', space=vmem, size = 0x400, scoped, tag = 'input window, operand 5, single buffered']
    #allocation9 [shape = 's32[1]{0}', space=sflag, size = 0x4, scoped, tag = 'scoped memory for tpu_custom_call.1']
    #allocation10 [shape = 'u8[8192]{0}', space=vmem, size = 0x2000, scoped, tag = 'input window, operand 7, single buffered']
    #allocation11 [shape = 'u8[512]{0}', space=vmem, size = 0x400, scoped, tag = 'input window, operand 8, single buffered']
    #allocation12 [shape = 's32[1]{0}', space=sflag, size = 0x4, scoped, tag = 'scoped memory for tpu_custom_call.1']
    #allocation13 [shape = 'u8[8192]{0}', space=vmem, size = 0x2000, scoped, tag = 'output window, operand 0']
    %16 = vsyncpa [#allocation3], 0
    %s17 = scalar_lea.sflag [#allocation3], 1
    %18 = vsyncpa %s17, 0
    %19 = vsyncpa [#allocation6], 0
    %s20 = scalar_lea.sflag [#allocation6], 1
    %21 = vsyncpa %s20, 0
    %22 = vsyncpa [#allocation9], 0
    %23 = vsyncpa [#allocation12], 0
    %24 = vsyncpa [#allocation4], 0
    %s25 = scalar_lea.sflag [#allocation4], 1
    %26 = vsyncpa %s25, 0
    loop: start=0, step=1, limit=6
    $region2: #{tpu_custom_call.1} parent=1 // loop_pre_header
      _
    $region3: #{tpu_custom_call.1} parent=1 // loop_header
      %s28 = sphi 0, %s32
      %p29 = scmp.ge.s32.totalorder %s28, 6
      %s35 = sphi 0, %s47
      %s36 = sphi 0, %s43
      %s37 = sphi 0, %s35
      %s38 = sphi 0, %s36
      %s39 = sphi 0, %s37
      %s40 = sphi 0, %s38
      %s50 = sphi 0, %s52
      %s53 = sphi 0, %s50
      %s54 = sphi 0, %s53
      %s70 = sphi 0, %s54
      %s78 = sphi 0, %s80
      %s81 = sphi 0, %s78
      %s82 = sphi 0, %s81
      %s98 = sphi 0, %s82
      %s102 = sphi 0, %s102
      %s104 = sphi 0, %s102
      %s105 = sphi 0, %s104
      %s119 = sphi 0, %s105
      %s123 = sphi 0, %s123
      %s125 = sphi 0, %s123
      %s126 = sphi 0, %s125
      %s140 = sphi 0, %s126
      %s144 = sphi 0, %s144
      %s146 = sphi 0, %s144
      %s147 = sphi 0, %s146
      %s161 = sphi 0, %s147
      %s165 = sphi 0, %s165
      %s167 = sphi 0, %s165
      %s168 = sphi 0, %s167
      %s182 = sphi 0, %s168
      %s186 = sphi 0, %s186
      %s188 = sphi 0, %s186
      %s189 = sphi 0, %s188
      %s203 = sphi 0, %s189
      %s207 = sphi 0, %s207
      %s209 = sphi 0, %s207
      %s210 = sphi 0, %s209
      %s224 = sphi 0, %s210
      %s228 = sphi 0, %s228
      %s230 = sphi 0, %s228
      %s231 = sphi 0, %s230
      %s245 = sphi 0, %s231
      %s249 = sphi 0, %s249
      %s251 = sphi 0, %s249
      %s252 = sphi 0, %s251
      %s266 = sphi 0, %s252
      %s270 = sphi 0, %s270
      %s272 = sphi 0, %s270
      %s273 = sphi 0, %s272
      %s287 = sphi 0, %s273
      %s295 = sphi 0, %s297
      %s298 = sphi 0, %s295
      %s299 = sphi 0, %s298
      %s315 = sphi 0, %s299
    $region4: #{tpu_custom_call.1} parent=1 // loop_header_branch
      %31 = sbr.rel (%p29) target = $region8
    $region5: #{tpu_custom_call.1} parent=1 // loop_body
      %s33 = ssub.s32 %s28, 1
      %s34 = ssub.s32 %s28, 2
      %s41 = sadd.s32 1, %s36
      %p42 = scmp.ge.s32.totalorder %s41, 2
      %s43 = scalar_select %p42, 0, %s41
      %s44 = sadd.s32 1, %s35
      %s45 = scalar_select %p42, %s44, %s35
      %p46 = scmp.ge.s32.totalorder %s45, 2
      %s47 = scalar_select %p46, 0, %s45
      %s48 = ssub.s32 %s35, %s47
      %p49 = scmp.eq.s32.totalorder %s48, 0
      %s51 = sadd.s32 %s50, 1
      %s52 = scalar_select %p49, %s50, %s51
      %p55 = pneg %p49
      %p56 = scmp.eq.s32.totalorder %s28, 3
      %p57 = por %p55, %p56
      %p58 = scmp.ne.s32.totalorder %s50, %s53
      %p59 = scmp.eq.s32.totalorder %s28, 0
      %p60 = por %p58, %p59
      %p61 = scmp.ne.s32.totalorder %s50, %s53
      %p62 = scmp.eq.s32.totalorder %s33, 3
      %p63 = por %p61, %p62
      %p64 = scmp.ne.s32.totalorder %s53, %s54
      %p65 = scmp.eq.s32.totalorder %s33, 0
      %p66 = por %p64, %p65
      %p67 = scmp.ne.s32.totalorder %s53, %s54
      %p68 = scmp.eq.s32.totalorder %s34, 3
      %p69 = por %p67, %p68
      %p71 = scmp.ne.s32.totalorder %s54, %s70
      %p72 = scmp.eq.s32.totalorder %s34, 0
      %p73 = por %p71, %p72
      %s74 = ssub.s32 %s35, %s47
      %s75 = ssub.s32 %s36, %s43
      %s76 = sor.u32 %s74, %s75
      %p77 = scmp.eq.s32.totalorder %s76, 0
      %s79 = sadd.s32 %s78, 1
      %s80 = scalar_select %p77, %s78, %s79
      %p83 = pneg %p77
      %p84 = scmp.eq.s32.totalorder %s28, 3
      %p85 = por %p83, %p84
      %p86 = scmp.ne.s32.totalorder %s78, %s81
      %p87 = scmp.eq.s32.totalorder %s28, 0
      %p88 = por %p86, %p87
      %p89 = scmp.ne.s32.totalorder %s78, %s81
      %p90 = scmp.eq.s32.totalorder %s33, 3
      %p91 = por %p89, %p90
      %p92 = scmp.ne.s32.totalorder %s81, %s82
      %p93 = scmp.eq.s32.totalorder %s33, 0
      %p94 = por %p92, %p93
      %p95 = scmp.ne.s32.totalorder %s81, %s82
      %p96 = scmp.eq.s32.totalorder %s34, 3
      %p97 = por %p95, %p96
      %p99 = scmp.ne.s32.totalorder %s82, %s98
      %p100 = scmp.eq.s32.totalorder %s34, 0
      %p101 = por %p99, %p100
      %s103 = sadd.s32 %s102, 1
      %p106 = scmp.eq.s32.totalorder %s28, 3
      %p107 = scmp.ne.s32.totalorder %s102, %s104
      %p108 = scmp.eq.s32.totalorder %s28, 0
      %p109 = por %p107, %p108
      %p110 = scmp.ne.s32.totalorder %s102, %s104
      %p111 = scmp.eq.s32.totalorder %s33, 3
      %p112 = por %p110, %p111
      %p113 = scmp.ne.s32.totalorder %s104, %s105
      %p114 = scmp.eq.s32.totalorder %s33, 0
      %p115 = por %p113, %p114
      %p116 = scmp.ne.s32.totalorder %s104, %s105
      %p117 = scmp.eq.s32.totalorder %s34, 3
      %p118 = por %p116, %p117
      %p120 = scmp.ne.s32.totalorder %s105, %s119
      %p121 = scmp.eq.s32.totalorder %s34, 0
      %p122 = por %p120, %p121
      %s124 = sadd.s32 %s123, 1
      %p127 = scmp.eq.s32.totalorder %s28, 3
      %p128 = scmp.ne.s32.totalorder %s123, %s125
      %p129 = scmp.eq.s32.totalorder %s28, 0
      %p130 = por %p128, %p129
      %p131 = scmp.ne.s32.totalorder %s123, %s125
      %p132 = scmp.eq.s32.totalorder %s33, 3
      %p133 = por %p131, %p132
      %p134 = scmp.ne.s32.totalorder %s125, %s126
      %p135 = scmp.eq.s32.totalorder %s33, 0
      %p136 = por %p134, %p135
      %p137 = scmp.ne.s32.totalorder %s125, %s126
      %p138 = scmp.eq.s32.totalorder %s34, 3
      %p139 = por %p137, %p138
      %p141 = scmp.ne.s32.totalorder %s126, %s140
      %p142 = scmp.eq.s32.totalorder %s34, 0
      %p143 = por %p141, %p142
      %s145 = sadd.s32 %s144, 1
      %p148 = scmp.eq.s32.totalorder %s28, 3
      %p149 = scmp.ne.s32.totalorder %s144, %s146
      %p150 = scmp.eq.s32.totalorder %s28, 0
      %p151 = por %p149, %p150
      %p152 = scmp.ne.s32.totalorder %s144, %s146
      %p153 = scmp.eq.s32.totalorder %s33, 3
      %p154 = por %p152, %p153
      %p155 = scmp.ne.s32.totalorder %s146, %s147
      %p156 = scmp.eq.s32.totalorder %s33, 0
      %p157 = por %p155, %p156
      %p158 = scmp.ne.s32.totalorder %s146, %s147
      %p159 = scmp.eq.s32.totalorder %s34, 3
      %p160 = por %p158, %p159
      %p162 = scmp.ne.s32.totalorder %s147, %s161
      %p163 = scmp.eq.s32.totalorder %s34, 0
      %p164 = por %p162, %p163
      %s166 = sadd.s32 %s165, 1
      %p169 = scmp.eq.s32.totalorder %s28, 3
      %p170 = scmp.ne.s32.totalorder %s165, %s167
      %p171 = scmp.eq.s32.totalorder %s28, 0
      %p172 = por %p170, %p171
      %p173 = scmp.ne.s32.totalorder %s165, %s167
      %p174 = scmp.eq.s32.totalorder %s33, 3
      %p175 = por %p173, %p174
      %p176 = scmp.ne.s32.totalorder %s167, %s168
      %p177 = scmp.eq.s32.totalorder %s33, 0
      %p178 = por %p176, %p177
      %p179 = scmp.ne.s32.totalorder %s167, %s168
      %p180 = scmp.eq.s32.totalorder %s34, 3
      %p181 = por %p179, %p180
      %p183 = scmp.ne.s32.totalorder %s168, %s182
      %p184 = scmp.eq.s32.totalorder %s34, 0
      %p185 = por %p183, %p184
      %s187 = sadd.s32 %s186, 1
      %p190 = scmp.eq.s32.totalorder %s28, 3
      %p191 = scmp.ne.s32.totalorder %s186, %s188
      %p192 = scmp.eq.s32.totalorder %s28, 0
      %p193 = por %p191, %p192
      %p194 = scmp.ne.s32.totalorder %s186, %s188
      %p195 = scmp.eq.s32.totalorder %s33, 3
      %p196 = por %p194, %p195
      %p197 = scmp.ne.s32.totalorder %s188, %s189
      %p198 = scmp.eq.s32.totalorder %s33, 0
      %p199 = por %p197, %p198
      %p200 = scmp.ne.s32.totalorder %s188, %s189
      %p201 = scmp.eq.s32.totalorder %s34, 3
      %p202 = por %p200, %p201
      %p204 = scmp.ne.s32.totalorder %s189, %s203
      %p205 = scmp.eq.s32.totalorder %s34, 0
      %p206 = por %p204, %p205
      %s208 = sadd.s32 %s207, 1
      %p211 = scmp.eq.s32.totalorder %s28, 3
      %p212 = scmp.ne.s32.totalorder %s207, %s209
      %p213 = scmp.eq.s32.totalorder %s28, 0
      %p214 = por %p212, %p213
      %p215 = scmp.ne.s32.totalorder %s207, %s209
      %p216 = scmp.eq.s32.totalorder %s33, 3
      %p217 = por %p215, %p216
      %p218 = scmp.ne.s32.totalorder %s209, %s210
      %p219 = scmp.eq.s32.totalorder %s33, 0
      %p220 = por %p218, %p219
      %p221 = scmp.ne.s32.totalorder %s209, %s210
      %p222 = scmp.eq.s32.totalorder %s34, 3
      %p223 = por %p221, %p222
      %p225 = scmp.ne.s32.totalorder %s210, %s224
      %p226 = scmp.eq.s32.totalorder %s34, 0
      %p227 = por %p225, %p226
      %s229 = sadd.s32 %s228, 1
      %p232 = scmp.eq.s32.totalorder %s28, 3
      %p233 = scmp.ne.s32.totalorder %s228, %s230
      %p234 = scmp.eq.s32.totalorder %s28, 0
      %p235 = por %p233, %p234
      %p236 = scmp.ne.s32.totalorder %s228, %s230
      %p237 = scmp.eq.s32.totalorder %s33, 3
      %p238 = por %p236, %p237
      %p239 = scmp.ne.s32.totalorder %s230, %s231
      %p240 = scmp.eq.s32.totalorder %s33, 0
      %p241 = por %p239, %p240
      %p242 = scmp.ne.s32.totalorder %s230, %s231
      %p243 = scmp.eq.s32.totalorder %s34, 3
      %p244 = por %p242, %p243
      %p246 = scmp.ne.s32.totalorder %s231, %s245
      %p247 = scmp.eq.s32.totalorder %s34, 0
      %p248 = por %p246, %p247
      %s250 = sadd.s32 %s249, 1
      %p253 = scmp.eq.s32.totalorder %s28, 3
      %p254 = scmp.ne.s32.totalorder %s249, %s251
      %p255 = scmp.eq.s32.totalorder %s28, 0
      %p256 = por %p254, %p255
      %p257 = scmp.ne.s32.totalorder %s249, %s251
      %p258 = scmp.eq.s32.totalorder %s33, 3
      %p259 = por %p257, %p258
      %p260 = scmp.ne.s32.totalorder %s251, %s252
      %p261 = scmp.eq.s32.totalorder %s33, 0
      %p262 = por %p260, %p261
      %p263 = scmp.ne.s32.totalorder %s251, %s252
      %p264 = scmp.eq.s32.totalorder %s34, 3
      %p265 = por %p263, %p264
      %p267 = scmp.ne.s32.totalorder %s252, %s266
      %p268 = scmp.eq.s32.totalorder %s34, 0
      %p269 = por %p267, %p268
      %s271 = sadd.s32 %s270, 1
      %p274 = scmp.eq.s32.totalorder %s28, 3
      %p275 = scmp.ne.s32.totalorder %s270, %s272
      %p276 = scmp.eq.s32.totalorder %s28, 0
      %p277 = por %p275, %p276
      %p278 = scmp.ne.s32.totalorder %s270, %s272
      %p279 = scmp.eq.s32.totalorder %s33, 3
      %p280 = por %p278, %p279
      %p281 = scmp.ne.s32.totalorder %s272, %s273
      %p282 = scmp.eq.s32.totalorder %s33, 0
      %p283 = por %p281, %p282
      %p284 = scmp.ne.s32.totalorder %s272, %s273
      %p285 = scmp.eq.s32.totalorder %s34, 3
      %p286 = por %p284, %p285
      %p288 = scmp.ne.s32.totalorder %s273, %s287
      %p289 = scmp.eq.s32.totalorder %s34, 0
      %p290 = por %p288, %p289
      %s291 = ssub.s32 %s35, %s47
      %s292 = ssub.s32 %s36, %s43
      %s293 = sor.u32 %s291, %s292
      %p294 = scmp.eq.s32.totalorder %s293, 0
      %s296 = sadd.s32 %s295, 1
      %s297 = scalar_select %p294, %s295, %s296
      %p300 = pneg %p294
      %p301 = scmp.eq.s32.totalorder %s28, 3
      %p302 = por %p300, %p301
      %p303 = scmp.ne.s32.totalorder %s295, %s298
      %p304 = scmp.eq.s32.totalorder %s28, 0
      %p305 = por %p303, %p304
      %p306 = scmp.ne.s32.totalorder %s295, %s298
      %p307 = scmp.eq.s32.totalorder %s33, 3
      %p308 = por %p306, %p307
      %p309 = scmp.ne.s32.totalorder %s298, %s299
      %p310 = scmp.eq.s32.totalorder %s33, 0
      %p311 = por %p309, %p310
      %p312 = scmp.ne.s32.totalorder %s298, %s299
      %p313 = scmp.eq.s32.totalorder %s34, 3
      %p314 = por %p312, %p313
      %p316 = scmp.ne.s32.totalorder %s299, %s315
      %p317 = scmp.eq.s32.totalorder %s34, 0
      %p318 = por %p316, %p317
      %p319 = scmp.le.s32.totalorder 1, %s28
      %p320 = scmp.lt.s32.totalorder %s28, 5
      %p321 = pnand %p319, %p320
      %p322 = pneg %p321
      // Predicated region
      $region9: #{tpu_custom_call.1} parent=5 // pred_check
        _
      $region10: #{tpu_custom_call.1} parent=5 // pred_check_branch
        %324 = sbr.rel (%p321) target = $region12
      $region11: #{tpu_custom_call.1} parent=5 // pred_region
        %s325 = ssub.s32 %s28, 1
        // Predicated region
        $region13: #{tpu_custom_call.1} parent=11 // pred_check
          %p326 = pneg %p115
        $region14: #{tpu_custom_call.1} parent=11 // pred_check_branch
          %328 = sbr.rel (%p326) target = $region16
        $region15: #{tpu_custom_call.1} parent=11 // pred_region
          _
        $region16: #{tpu_custom_call.1} parent=11 // pred_fallthru
          _
        // Predicated region
        $region17: #{tpu_custom_call.1} parent=11 // pred_check
          %p329 = pneg %p136
        $region18: #{tpu_custom_call.1} parent=11 // pred_check_branch
          %331 = sbr.rel (%p329) target = $region20
        $region19: #{tpu_custom_call.1} parent=11 // pred_region
          _
        $region20: #{tpu_custom_call.1} parent=11 // pred_fallthru
          _
        // Predicated region
        $region21: #{tpu_custom_call.1} parent=11 // pred_check
          %p332 = pneg %p157
        $region22: #{tpu_custom_call.1} parent=11 // pred_check_branch
          %334 = sbr.rel (%p332) target = $region24
        $region23: #{tpu_custom_call.1} parent=11 // pred_region
          %s336 = ssub.s32 256, 256
          %337 = vsyncadd [#allocation6], %s336
          %s338 = sshll.u32 [#allocation7], 4
          %s339 = int_to_ptr.vmem [resolvable:$true] %s338
          %344 = dma.hbm_to_vmem [thread:$0]  %s4, 256, %s339, [#allocation6], 64, 64, 4
        $region24: #{tpu_custom_call.1} parent=11 // pred_fallthru
          _
        // Predicated region
        $region25: #{tpu_custom_call.1} parent=11 // pred_check
          %p345 = pneg %p178
        $region26: #{tpu_custom_call.1} parent=11 // pred_check_branch
          %347 = sbr.rel (%p345) target = $region28
        $region27: #{tpu_custom_call.1} parent=11 // pred_region
          %s349 = ssub.s32 16, 16
          %350 = vsyncadd [#allocation9], %s349
          %s352 = sshll.u32 [#allocation8], 4
          %s353 = int_to_ptr.vmem [resolvable:$true] %s352
          %355 = dma.hbm_to_vmem [thread:$0]  %s5, 16, %s353, [#allocation9]
        $region28: #{tpu_custom_call.1} parent=11 // pred_fallthru
          _
        // Predicated region
        $region29: #{tpu_custom_call.1} parent=11 // pred_check
          %p356 = pneg %p199
        $region30: #{tpu_custom_call.1} parent=11 // pred_check_branch
          %358 = sbr.rel (%p356) target = $region32
        $region31: #{tpu_custom_call.1} parent=11 // pred_region
          _
        $region32: #{tpu_custom_call.1} parent=11 // pred_fallthru
          _
        // Predicated region
        $region33: #{tpu_custom_call.1} parent=11 // pred_check
          %p359 = pneg %p220
        $region34: #{tpu_custom_call.1} parent=11 // pred_check_branch
          %361 = sbr.rel (%p359) target = $region36
        $region35: #{tpu_custom_call.1} parent=11 // pred_region
          %s363 = ssub.s32 256, 256
          %364 = vsyncadd [#allocation9], %s363
          %s365 = sshll.u32 [#allocation10], 4
          %s366 = int_to_ptr.vmem [resolvable:$true] %s365
          %371 = dma.hbm_to_vmem [thread:$0]  %s7, 256, %s366, [#allocation9], 64, 64, 4
        $region36: #{tpu_custom_call.1} parent=11 // pred_fallthru
          _
        // Predicated region
        $region37: #{tpu_custom_call.1} parent=11 // pred_check
          %p372 = pneg %p241
        $region38: #{tpu_custom_call.1} parent=11 // pred_check_branch
          %374 = sbr.rel (%p372) target = $region40
        $region39: #{tpu_custom_call.1} parent=11 // pred_region
          %s376 = ssub.s32 16, 16
          %377 = vsyncadd [#allocation12], %s376
          %s379 = sshll.u32 [#allocation11], 4
          %s380 = int_to_ptr.vmem [resolvable:$true] %s379
          %382 = dma.hbm_to_vmem [thread:$0]  %s8, 16, %s380, [#allocation12]
        $region40: #{tpu_custom_call.1} parent=11 // pred_fallthru
          _
        // Predicated region
        $region41: #{tpu_custom_call.1} parent=11 // pred_check
          %p383 = pneg %p262
        $region42: #{tpu_custom_call.1} parent=11 // pred_check_branch
          %385 = sbr.rel (%p383) target = $region44
        $region43: #{tpu_custom_call.1} parent=11 // pred_region
          _
        $region44: #{tpu_custom_call.1} parent=11 // pred_fallthru
          _
        // Predicated region
        $region45: #{tpu_custom_call.1} parent=11 // pred_check
          %p386 = pneg %p283
        $region46: #{tpu_custom_call.1} parent=11 // pred_check_branch
          %388 = sbr.rel (%p386) target = $region48
        $region47: #{tpu_custom_call.1} parent=11 // pred_region
          _
        $region48: #{tpu_custom_call.1} parent=11 // pred_fallthru
          _
      $region12: #{tpu_custom_call.1} parent=5 // pred_fallthru
        _
      %p389 = scmp.lt.s32.totalorder %s28, 4
      // Predicated region
      $region49: #{tpu_custom_call.1} parent=5 // pred_check
        %p390 = pneg %p389
      $region50: #{tpu_custom_call.1} parent=5 // pred_check_branch
        %392 = sbr.rel (%p390) target = $region52
      $region51: #{tpu_custom_call.1} parent=5 // pred_region
        // Predicated region
        $region53: #{tpu_custom_call.1} parent=51 // pred_check
          %p393 = pneg %p60
        $region54: #{tpu_custom_call.1} parent=51 // pred_check_branch
          %395 = sbr.rel (%p393) target = $region56
        $region55: #{tpu_custom_call.1} parent=51 // pred_region
          %s396 = sand.u32 %s50, 1
          %s397 = scalar_lea.sflag [#allocation3], %s396
          %s398 = sand.u32 %s50, 1
          %s399 = smul.addr %s398, 16
          %s400 = scalar_lea.vmem [#allocation2], %s399
          %s402 = ssub.s32 256, 256
          %403 = vsyncadd %s397, %s402
          %s404 = smul.addr %s35, 2
          %s405 = smul.addr %s404, 128
          %s406 = scalar_lea.hbm %s0, %s405
          %s407 = sshll.u32 %s400, 4
          %s408 = int_to_ptr.vmem [resolvable:$true] %s407
          %413 = dma.hbm_to_vmem [thread:$0]  %s406, 256, %s408, %s397, 128, 128, 8
        $region56: #{tpu_custom_call.1} parent=51 // pred_fallthru
          _
        // Predicated region
        $region57: #{tpu_custom_call.1} parent=51 // pred_check
          %p414 = pneg %p88
        $region58: #{tpu_custom_call.1} parent=51 // pred_check_branch
          %416 = sbr.rel (%p414) target = $region60
        $region59: #{tpu_custom_call.1} parent=51 // pred_region
          %s417 = sand.u32 %s28, 1
          %s418 = scalar_lea.sflag [#allocation6], %s417
          %s419 = sand.u32 %s78, 1
          %s420 = smul.addr %s419, 8
          %s421 = scalar_lea.vmem [#allocation5], %s420
          %s423 = ssub.s32 128, 128
          %424 = vsyncadd %s418, %s423
          %s425 = smul.addr %s35, 2
          %s426 = sadd.s32 %s36, %s425
          %s427 = smul.addr %s426, 128
          %s428 = scalar_lea.hbm %s1, %s427
          %s430 = sshll.u32 %s421, 4
          %s431 = int_to_ptr.vmem [resolvable:$true] %s430
          %433 = dma.hbm_to_vmem [thread:$0]  %s428, 128, %s431, %s418
        $region60: #{tpu_custom_call.1} parent=51 // pred_fallthru
          _
      $region52: #{tpu_custom_call.1} parent=5 // pred_fallthru
        _
      %p434 = scmp.le.s32.totalorder 1, %s28
      %p435 = scmp.lt.s32.totalorder %s28, 5
      %p436 = pnand %p434, %p435
      %p437 = pneg %p436
      // Predicated region
      $region61: #{tpu_custom_call.1} parent=5 // pred_check
        _
      $region62: #{tpu_custom_call.1} parent=5 // pred_check_branch
        %439 = sbr.rel (%p436) target = $region64
      $region63: #{tpu_custom_call.1} parent=5 // pred_region
        %s440 = ssub.s32 %s28, 1
        %s441 = sand.u32 %s53, 1
        %s442 = scalar_lea.sflag [#allocation3], %s441
        %s443 = sand.u32 %s53, 1
        %s444 = smul.addr %s443, 16
        %s445 = scalar_lea.vmem [#allocation2], %s444
        // Predicated region
        $region65: #{tpu_custom_call.1} parent=63 // pred_check
          %p446 = pneg %p66
        $region66: #{tpu_custom_call.1} parent=63 // pred_check_branch
          %448 = sbr.rel (%p446) target = $region68
        $region67: #{tpu_custom_call.1} parent=63 // pred_region
          %449 = dma.done %s442, 256
        $region68: #{tpu_custom_call.1} parent=63 // pred_fallthru
          _
        %s450 = sand.u32 %s33, 1
        %s451 = scalar_lea.sflag [#allocation6], %s450
        %s452 = sand.u32 %s81, 1
        %s453 = smul.addr %s452, 8
        %s454 = scalar_lea.vmem [#allocation5], %s453
        // Predicated region
        $region69: #{tpu_custom_call.1} parent=63 // pred_check
          %p455 = pneg %p94
        $region70: #{tpu_custom_call.1} parent=63 // pred_check_branch
          %457 = sbr.rel (%p455) target = $region72
        $region71: #{tpu_custom_call.1} parent=63 // pred_region
          %458 = dma.done %s451, 128
        $region72: #{tpu_custom_call.1} parent=63 // pred_fallthru
          _
        // Predicated region
        $region73: #{tpu_custom_call.1} parent=63 // pred_check
          %p459 = pneg %p157
        $region74: #{tpu_custom_call.1} parent=63 // pred_check_branch
          %461 = sbr.rel (%p459) target = $region76
        $region75: #{tpu_custom_call.1} parent=63 // pred_region
          %462 = dma.done [#allocation6], 256
        $region76: #{tpu_custom_call.1} parent=63 // pred_fallthru
          _
        // Predicated region
        $region77: #{tpu_custom_call.1} parent=63 // pred_check
          %p463 = pneg %p178
        $region78: #{tpu_custom_call.1} parent=63 // pred_check_branch
          %465 = sbr.rel (%p463) target = $region80
        $region79: #{tpu_custom_call.1} parent=63 // pred_region
          %466 = dma.done [#allocation9], 16
        $region80: #{tpu_custom_call.1} parent=63 // pred_fallthru
          _
        // Predicated region
        $region81: #{tpu_custom_call.1} parent=63 // pred_check
          %p467 = pneg %p220
        $region82: #{tpu_custom_call.1} parent=63 // pred_check_branch
          %469 = sbr.rel (%p467) target = $region84
        $region83: #{tpu_custom_call.1} parent=63 // pred_region
          %470 = dma.done [#allocation9], 256
        $region84: #{tpu_custom_call.1} parent=63 // pred_fallthru
          _
        // Predicated region
        $region85: #{tpu_custom_call.1} parent=63 // pred_check
          %p471 = pneg %p241
        $region86: #{tpu_custom_call.1} parent=63 // pred_check_branch
          %473 = sbr.rel (%p471) target = $region88
        $region87: #{tpu_custom_call.1} parent=63 // pred_region
          %474 = dma.done [#allocation12], 16
        $region88: #{tpu_custom_call.1} parent=63 // pred_fallthru
          _
        %s475 = sand.u32 %s53, 1
        %s476 = scalar_lea.sflag [#allocation3], %s475
        %s477 = sand.u32 %s53, 1
        %s478 = smul.addr %s477, 16
        %s479 = scalar_lea.vmem [#allocation2], %s478
        %p480 = pneg %p66
        %p481 = pneg %p63
        %s482 = sand.u32 %s33, 1
        %s483 = scalar_lea.sflag [#allocation6], %s482
        %s484 = sand.u32 %s81, 1
        %s485 = smul.addr %s484, 8
        %s486 = scalar_lea.vmem [#allocation5], %s485
        %p487 = pneg %p94
        %p488 = pneg %p91
        %p489 = pneg %p115
        %p490 = pneg %p112
        %p491 = pneg %p136
        %p492 = pneg %p133
        %p493 = pneg %p157
        %p494 = pneg %p154
        %p495 = pneg %p178
        %p496 = pneg %p175
        %p497 = pneg %p199
        %p498 = pneg %p196
        %p499 = pneg %p220
        %p500 = pneg %p217
        %p501 = pneg %p241
        %p502 = pneg %p238
        %p503 = pneg %p262
        %p504 = pneg %p259
        %p505 = pneg %p283
        %p506 = pneg %p280
        %p507 = pneg %p311
        %p508 = pneg %p308
        %s509 = sand.u32 %s298, 1
        %s510 = scalar_lea.sflag [#allocation4], %s509
        %s511 = sand.u32 %s298, 1
        %s512 = smul.addr %s511, 8
        %s513 = scalar_lea.vmem [#allocation13], %s512
        %v515 = vld [vmem:[%s445] sm:$0xff]
        %v516 = vld [vmem:[%s445 + $0x8] sm:$0xff]
        %v517 = vld [vmem:[%s454] sm:$0xff]
        %v518 = vld [vmem:[%s2] sm:$0x1]
        %v519 = vld [vmem:[%s3] sm:$0x1]
        %vm520 = vcmask 261120
        %v521 = vsel %vm520, %v515, 0.0
        %522 = vadd.xlane.f32.xlu0 %v521
        %v523 = vpop.xlane.xlu0 %522
        %v524 = vsel %vm520, %v516, 0.0
        %525 = vadd.xlane.f32.xlu0 %v524
        %v526 = vpop.xlane.xlu0 %525
        %v527 = vrcp.pop 32.0
        %v528 = vmul.f32 %v523, %v527
        %v529 = vmul.f32 %v526, %v527
        %v530 = vsub.f32 %v515, %v528
        %v531 = vsub.f32 %v516, %v529
        %v532 = vmul.f32 %v530, %v530
        %v533 = vmul.f32 %v531, %v531
        %v534 = vsel %vm520, %v532, 0.0
        %535 = vadd.xlane.f32.xlu0 %v534
        %v536 = vpop.xlane.xlu0 %535
        %v537 = vsel %vm520, %v533, 0.0
        %538 = vadd.xlane.f32.xlu0 %v537
        %v539 = vpop.xlane.xlu0 %538
        %v540 = vmul.f32 %v536, %v527
        %v541 = vmul.f32 %v539, %v527
        %v542 = vadd.f32 %v540, 1e-05
        %v543 = vadd.f32 %v541, 1e-05
        %v544 = vrsqrt.pop %v542
        %v545 = vrsqrt.pop %v543
        %v546 = vmul.f32 %v530, %v544
        %v547 = vmul.f32 %v531, %v545
        %v549 = vlaneseq
        %v550 = vshrl.u32 %v549, 7
        %v551 = vsub.s32 0, %v550
        %v552 = vrot.slane %v518, %v551
        %v554 = vmul.f32 %v546, %v552
        %v555 = vmul.f32 %v547, %v552
        %v557 = vlaneseq
        %v558 = vshrl.u32 %v557, 7
        %v559 = vsub.s32 0, %v558
        %v560 = vrot.slane %v519, %v559
        %v562 = vadd.f32 %v554, %v560
        %v563 = vadd.f32 %v555, %v560
        %v564 = vpack.c.bf16 %v563, %v562
        %v565 = vsel %vm520, %v517, 0.0
        %566 = vadd.xlane.f32.xlu0 %v565
        %v567 = vpop.xlane.xlu0 %566
        %v568 = vmul.f32 %v567, %v527
        %v569 = vsub.f32 %v517, %v568
        %v570 = vmul.f32 %v569, %v569
        %v571 = vsel %vm520, %v570, 0.0
        %572 = vadd.xlane.f32.xlu0 %v571
        %v573 = vpop.xlane.xlu0 %572
        %v574 = vmul.f32 %v573, %v527
        %v575 = vadd.f32 %v574, 1e-05
        %v576 = vrsqrt.pop %v575
        %v577 = vmul.f32 %v569, %v576
        %v578 = vmul.f32 %v577, %v552
        %v579 = vadd.f32 %v578, %v560
        %v580 = vpack.c.bf16 %v579, %v579
        %v581 = vld [vmem:[#allocation7] sm:$0xf]
        %v582 = vld [vmem:[#allocation7 + $0x4] sm:$0xf]
        %v583 = vld [vmem:[#allocation7 + $0x8] sm:$0xf]
        %v584 = vld [vmem:[#allocation7 + $0xc] sm:$0xf]
        %v585 = vld [vmem:[#allocation8] sm:$0x1]
        %v587 = vlaneseq
        %v588 = vshrl.u32 %v587, 7
        %v589 = vsub.s32 0, %v588
        %v590 = vrot.slane %v585, %v589
        %v596 = vunpack.c.l.b16 %v581
        %v597 = vunpack.c.l.b16 %v582
        %v598 = vunpack.c.l.b16 %v583
        %v599 = vunpack.c.l.b16 %v584
        %v600 = vpack.c.b16 %v597, %v596
        %v601 = vpack.c.b16 %v599, %v598
        %v605 = vsel %vm520, %v580, 0
        %607 = vmatprep.subr.bf16.mxu0 0
        %608 = vmatpush1.bf16.msra.mxu0 %v600
        %609 = vmatprep.subr.bf16.mxu0 0
        %610 = vmatpush1.bf16.msra.mxu0 %v601
        %611 = vmatprep.subr.bf16.mxu0 0
        %612 = vmatpush1.bf16.msra.mxu0 0
        %613 = vmatprep.subr.bf16.mxu0 0
        %614 = vmatpush1.bf16.msra.mxu0 0
        %615 = vmatprep.subr.bf16.mxu0 0
        %616 = vmatpush1.bf16.msra.mxu0 0
        %617 = vmatprep.subr.bf16.mxu0 0
        %618 = vmatpush1.bf16.msra.mxu0 0
        %619 = vmatprep.subr.bf16.mxu0 0
        %620 = vmatpush1.bf16.msra.mxu0 0
        %621 = vmatprep.subr.bf16.mxu0 0
        %622 = vmatpush1.bf16.msra.mxu0 0
        %623 = vmatprep.subr.bf16.mxu0 0
        %624 = vmatpush1.bf16.msra.mxu0 0
        %625 = vmatprep.subr.bf16.mxu0 0
        %626 = vmatpush1.bf16.msra.mxu0 0
        %627 = vmatprep.subr.bf16.mxu0 0
        %628 = vmatpush1.bf16.msra.mxu0 0
        %629 = vmatprep.subr.bf16.mxu0 0
        %630 = vmatpush1.bf16.msra.mxu0 0
        %631 = vmatprep.subr.bf16.mxu0 0
        %632 = vmatpush1.bf16.msra.mxu0 0
        %633 = vmatprep.subr.bf16.mxu0 0
        %634 = vmatpush1.bf16.msra.mxu0 0
        %635 = vmatprep.subr.bf16.mxu0 0
        %636 = vmatpush1.bf16.msra.mxu0 0
        %637 = vmatprep.subr.bf16.mxu0 0
        %638 = vmatpush1.bf16.msra.mxu0 0
        %639 = vmatprep.mubr.bf16.mxu0 0
        %640 = vmatmul.mubr.bf16.gmra.mrb[0].mxu0 %v605
        %v641 = vpop.f32.mrb[0].mxu0
        %v642 = vadd.f32 %v590, %v641
        %v643 = vpop.f32.mrb[0].mxu0
        %v644 = vpop.f32.mrb[0].mxu0
        %v645 = vpop.f32.mrb[0].mxu0
        %646 = vdwg.mxu0
        %v647 = vld [vmem:[%s6] sm:$0xf]
        %v648 = vld [vmem:[%s6 + $0x4] sm:$0xf]
        %v649 = vld [vmem:[%s6 + $0x8] sm:$0xf]
        %v650 = vld [vmem:[%s6 + $0xc] sm:$0xf]
        %v655 = vunpack.c.l.b16 %v647
        %v656 = vunpack.c.l.b16 %v648
        %v657 = vunpack.c.l.b16 %v649
        %v658 = vunpack.c.l.b16 %v650
        %v659 = vpack.c.b16 %v656, %v655
        %v660 = vpack.c.b16 %v658, %v657
        %v664 = vsel %vm520, %v564, 0
        %666 = vmatprep.subr.bf16.mxu0 0
        %667 = vmatpush1.bf16.msra.mxu0 %v659
        %668 = vmatprep.subr.bf16.mxu0 0
        %669 = vmatpush1.bf16.msra.mxu0 %v660
        %670 = vmatprep.subr.bf16.mxu0 0
        %671 = vmatpush1.bf16.msra.mxu0 0
        %672 = vmatprep.subr.bf16.mxu0 0
        %673 = vmatpush1.bf16.msra.mxu0 0
        %674 = vmatprep.subr.bf16.mxu0 0
        %675 = vmatpush1.bf16.msra.mxu0 0
        %676 = vmatprep.subr.bf16.mxu0 0
        %677 = vmatpush1.bf16.msra.mxu0 0
        %678 = vmatprep.subr.bf16.mxu0 0
        %679 = vmatpush1.bf16.msra.mxu0 0
        %680 = vmatprep.subr.bf16.mxu0 0
        %681 = vmatpush1.bf16.msra.mxu0 0
        %682 = vmatprep.subr.bf16.mxu0 0
        %683 = vmatpush1.bf16.msra.mxu0 0
        %684 = vmatprep.subr.bf16.mxu0 0
        %685 = vmatpush1.bf16.msra.mxu0 0
        %686 = vmatprep.subr.bf16.mxu0 0
        %687 = vmatpush1.bf16.msra.mxu0 0
        %688 = vmatprep.subr.bf16.mxu0 0
        %689 = vmatpush1.bf16.msra.mxu0 0
        %690 = vmatprep.subr.bf16.mxu0 0
        %691 = vmatpush1.bf16.msra.mxu0 0
        %692 = vmatprep.subr.bf16.mxu0 0
        %693 = vmatpush1.bf16.msra.mxu0 0
        %694 = vmatprep.subr.bf16.mxu0 0
        %695 = vmatpush1.bf16.msra.mxu0 0
        %696 = vmatprep.subr.bf16.mxu0 0
        %697 = vmatpush1.bf16.msra.mxu0 0
        %698 = vmatprep.mubr.bf16.mxu0 0
        %699 = vmatmul.mubr.bf16.gmra.mrb[0].mxu0 %v664
        %v700 = vpop.f32.mrb[0].mxu0
        %v701 = vadd.f32 0.0, %v700
        %v702 = vpop.f32.mrb[0].mxu0
        %v703 = vpop.f32.mrb[0].mxu0
        %v704 = vadd.f32 0.0, %v703
        %v705 = vpop.f32.mrb[0].mxu0
        %706 = vdwg.mxu0
        %v707 = vld [vmem:[#allocation10] sm:$0xf]
        %v708 = vld [vmem:[#allocation10 + $0x4] sm:$0xf]
        %v709 = vld [vmem:[#allocation10 + $0x8] sm:$0xf]
        %v710 = vld [vmem:[#allocation10 + $0xc] sm:$0xf]
        %v711 = vld [vmem:[#allocation11] sm:$0x1]
        %v713 = vlaneseq
        %v714 = vshrl.u32 %v713, 7
        %v715 = vsub.s32 0, %v714
        %v716 = vrot.slane %v711, %v715
        %v722 = vunpack.c.l.b16 %v707
        %v723 = vunpack.c.l.b16 %v708
        %v724 = vunpack.c.l.b16 %v709
        %v725 = vunpack.c.l.b16 %v710
        %v726 = vpack.c.b16 %v723, %v722
        %v727 = vpack.c.b16 %v725, %v724
        %730 = vmatprep.subr.bf16.mxu0 0
        %731 = vmatpush1.bf16.msra.mxu0 %v726
        %732 = vmatprep.subr.bf16.mxu0 0
        %733 = vmatpush1.bf16.msra.mxu0 %v727
        %734 = vmatprep.subr.bf16.mxu0 0
        %735 = vmatpush1.bf16.msra.mxu0 0
        %736 = vmatprep.subr.bf16.mxu0 0
        %737 = vmatpush1.bf16.msra.mxu0 0
        %738 = vmatprep.subr.bf16.mxu0 0
        %739 = vmatpush1.bf16.msra.mxu0 0
        %740 = vmatprep.subr.bf16.mxu0 0
        %741 = vmatpush1.bf16.msra.mxu0 0
        %742 = vmatprep.subr.bf16.mxu0 0
        %743 = vmatpush1.bf16.msra.mxu0 0
        %744 = vmatprep.subr.bf16.mxu0 0
        %745 = vmatpush1.bf16.msra.mxu0 0
        %746 = vmatprep.subr.bf16.mxu0 0
        %747 = vmatpush1.bf16.msra.mxu0 0
        %748 = vmatprep.subr.bf16.mxu0 0
        %749 = vmatpush1.bf16.msra.mxu0 0
        %750 = vmatprep.subr.bf16.mxu0 0
        %751 = vmatpush1.bf16.msra.mxu0 0
        %752 = vmatprep.subr.bf16.mxu0 0
        %753 = vmatpush1.bf16.msra.mxu0 0
        %754 = vmatprep.subr.bf16.mxu0 0
        %755 = vmatpush1.bf16.msra.mxu0 0
        %756 = vmatprep.subr.bf16.mxu0 0
        %757 = vmatpush1.bf16.msra.mxu0 0
        %758 = vmatprep.subr.bf16.mxu0 0
        %759 = vmatpush1.bf16.msra.mxu0 0
        %760 = vmatprep.subr.bf16.mxu0 0
        %761 = vmatpush1.bf16.msra.mxu0 0
        %762 = vmatprep.mubr.bf16.mxu0 0
        %763 = vmatmul.mubr.bf16.gmra.mrb[0].mxu0 %v664
        %v764 = vpop.f32.mrb[0].mxu0
        %v765 = vadd.f32 %v716, %v764
        %v766 = vpop.f32.mrb[0].mxu0
        %v767 = vpop.f32.mrb[0].mxu0
        %v768 = vadd.f32 %v716, %v767
        %v769 = vpop.f32.mrb[0].mxu0
        %770 = vdwg.mxu0
        %v771 = vmul.f32 %v642, 0.35355338
        %773 = vrot.lane.b32.xlu0 %v771, 120
        %v774 = vpop.permute.xlu0 %773
        %776 = vrot.lane.b32.xlu0 %v771, 112
        %v777 = vpop.permute.xlu0 %776
        %779 = vrot.lane.b32.xlu0 %v771, 104
        %v780 = vpop.permute.xlu0 %779
        %v782 = vcombine.low %v771, %v777
        %v783 = vcombine.high %v771, %v777
        %v785 = vunpack.c.l.s4 1983009808
        %v786 = vunpack.c.0.s8 %v785
        %v787 = vlaneseq
        %v788 = vshrl.u32 %v787, 7
        %v789 = vsub.s32 %v786, %v788
        %v790 = vrot.slane %v782, %v789
        %v792 = vunpack.c.l.s4 1983009808
        %v793 = vunpack.c.0.s8 %v792
        %v794 = vlaneseq
        %v795 = vshrl.u32 %v794, 7
        %v796 = vsub.s32 %v793, %v795
        %v797 = vrot.slane %v783, %v796
        %v798 = vcombine.low %v774, %v780
        %v799 = vcombine.high %v774, %v780
        %v801 = vunpack.c.l.s4 1983009808
        %v802 = vunpack.c.0.s8 %v801
        %v803 = vlaneseq
        %v804 = vshrl.u32 %v803, 7
        %v805 = vsub.s32 %v802, %v804
        %v806 = vrot.slane %v798, %v805
        %v808 = vunpack.c.l.s4 1983009808
        %v809 = vunpack.c.0.s8 %v808
        %v810 = vlaneseq
        %v811 = vshrl.u32 %v810, 7
        %v812 = vsub.s32 %v809, %v811
        %v813 = vrot.slane %v799, %v812
        %v814 = vcombine.low %v790, %v806
        %v815 = vcombine.high %v790, %v806
        %v817 = vunpack.c.l.s4 1934713408
        %v818 = vunpack.c.0.s8 %v817
        %v819 = vlaneseq
        %v820 = vshrl.u32 %v819, 7
        %v821 = vsub.s32 %v818, %v820
        %v822 = vrot.slane %v814, %v821
        %v824 = vunpack.c.l.s4 1934713408
        %v825 = vunpack.c.0.s8 %v824
        %v826 = vlaneseq
        %v827 = vshrl.u32 %v826, 7
        %v828 = vsub.s32 %v825, %v827
        %v829 = vrot.slane %v815, %v828
        %v830 = vcombine.low %v797, %v813
        %v831 = vcombine.high %v797, %v813
        %v833 = vunpack.c.l.s4 1934713408
        %v834 = vunpack.c.0.s8 %v833
        %v835 = vlaneseq
        %v836 = vshrl.u32 %v835, 7
        %v837 = vsub.s32 %v834, %v836
        %v838 = vrot.slane %v830, %v837
        %v840 = vunpack.c.l.s4 1934713408
        %v841 = vunpack.c.0.s8 %v840
        %v842 = vlaneseq
        %v843 = vshrl.u32 %v842, 7
        %v844 = vsub.s32 %v841, %v843
        %v845 = vrot.slane %v831, %v844
        %v846 = vcombine.high %v822, 0.0
        %v847 = vcombine.high %v829, 0.0
        %v848 = vcombine.high %v838, 0.0
        %v849 = vcombine.high %v845, 0.0
        %v850 = vpack.c.bf16 %v822, %v822
        %v851 = vpack.c.bf16 %v846, %v846
        %v852 = vpack.c.bf16 %v829, %v829
        %v853 = vpack.c.bf16 %v847, %v847
        %v854 = vpack.c.bf16 %v838, %v838
        %v855 = vpack.c.bf16 %v848, %v848
        %v856 = vpack.c.bf16 %v845, %v845
        %v857 = vpack.c.bf16 %v849, %v849
        %860 = vrot.lane.b32.xlu0 %v701, 120
        %v861 = vpop.permute.xlu0 %860
        %862 = vrot.lane.b32.xlu0 %v704, 120
        %v863 = vpop.permute.xlu0 %862
        %866 = vrot.lane.b32.xlu0 %v701, 112
        %v867 = vpop.permute.xlu0 %866
        %868 = vrot.lane.b32.xlu0 %v704, 112
        %v869 = vpop.permute.xlu0 %868
        %872 = vrot.lane.b32.xlu0 %v701, 104
        %v873 = vpop.permute.xlu0 %872
        %874 = vrot.lane.b32.xlu0 %v704, 104
        %v875 = vpop.permute.xlu0 %874
        %v878 = vcombine.low %v701, %v867
        %v879 = vcombine.high %v701, %v867
        %v881 = vunpack.c.l.s4 1983009808
        %v882 = vunpack.c.0.s8 %v881
        %v883 = vlaneseq
        %v884 = vshrl.u32 %v883, 7
        %v885 = vsub.s32 %v882, %v884
        %v886 = vrot.slane %v878, %v885
        %v888 = vunpack.c.l.s4 1983009808
        %v889 = vunpack.c.0.s8 %v888
        %v890 = vlaneseq
        %v891 = vshrl.u32 %v890, 7
        %v892 = vsub.s32 %v889, %v891
        %v893 = vrot.slane %v879, %v892
        %v894 = vcombine.low %v861, %v873
        %v895 = vcombine.high %v861, %v873
        %v897 = vunpack.c.l.s4 1983009808
        %v898 = vunpack.c.0.s8 %v897
        %v899 = vlaneseq
        %v900 = vshrl.u32 %v899, 7
        %v901 = vsub.s32 %v898, %v900
        %v902 = vrot.slane %v894, %v901
        %v904 = vunpack.c.l.s4 1983009808
        %v905 = vunpack.c.0.s8 %v904
        %v906 = vlaneseq
        %v907 = vshrl.u32 %v906, 7
        %v908 = vsub.s32 %v905, %v907
        %v909 = vrot.slane %v895, %v908
        %v910 = vcombine.low %v886, %v902
        %v911 = vcombine.high %v886, %v902
        %v913 = vunpack.c.l.s4 1934713408
        %v914 = vunpack.c.0.s8 %v913
        %v915 = vlaneseq
        %v916 = vshrl.u32 %v915, 7
        %v917 = vsub.s32 %v914, %v916
        %v918 = vrot.slane %v910, %v917
        %v920 = vunpack.c.l.s4 1934713408
        %v921 = vunpack.c.0.s8 %v920
        %v922 = vlaneseq
        %v923 = vshrl.u32 %v922, 7
        %v924 = vsub.s32 %v921, %v923
        %v925 = vrot.slane %v911, %v924
        %v926 = vcombine.low %v893, %v909
        %v927 = vcombine.high %v893, %v909
        %v929 = vunpack.c.l.s4 1934713408
        %v930 = vunpack.c.0.s8 %v929
        %v931 = vlaneseq
        %v932 = vshrl.u32 %v931, 7
        %v933 = vsub.s32 %v930, %v932
        %v934 = vrot.slane %v926, %v933
        %v936 = vunpack.c.l.s4 1934713408
        %v937 = vunpack.c.0.s8 %v936
        %v938 = vlaneseq
        %v939 = vshrl.u32 %v938, 7
        %v940 = vsub.s32 %v937, %v939
        %v941 = vrot.slane %v927, %v940
        %v942 = vcombine.high %v918, 0.0
        %v943 = vcombine.high %v925, 0.0
        %v944 = vcombine.high %v934, 0.0
        %v945 = vcombine.high %v941, 0.0
        %v946 = vcombine.low %v704, %v869
        %v947 = vcombine.high %v704, %v869
        %v949 = vunpack.c.l.s4 1983009808
        %v950 = vunpack.c.0.s8 %v949
        %v951 = vlaneseq
        %v952 = vshrl.u32 %v951, 7
        %v953 = vsub.s32 %v950, %v952
        %v954 = vrot.slane %v946, %v953
        %v956 = vunpack.c.l.s4 1983009808
        %v957 = vunpack.c.0.s8 %v956
        %v958 = vlaneseq
        %v959 = vshrl.u32 %v958, 7
        %v960 = vsub.s32 %v957, %v959
        %v961 = vrot.slane %v947, %v960
        %v962 = vcombine.low %v863, %v875
        %v963 = vcombine.high %v863, %v875
        %v965 = vunpack.c.l.s4 1983009808
        %v966 = vunpack.c.0.s8 %v965
        %v967 = vlaneseq
        %v968 = vshrl.u32 %v967, 7
        %v969 = vsub.s32 %v966, %v968
        %v970 = vrot.slane %v962, %v969
        %v972 = vunpack.c.l.s4 1983009808
        %v973 = vunpack.c.0.s8 %v972
        %v974 = vlaneseq
        %v975 = vshrl.u32 %v974, 7
        %v976 = vsub.s32 %v973, %v975
        %v977 = vrot.slane %v963, %v976
        %v978 = vcombine.low %v954, %v970
        %v979 = vcombine.high %v954, %v970
        %v981 = vunpack.c.l.s4 1934713408
        %v982 = vunpack.c.0.s8 %v981
        %v983 = vlaneseq
        %v984 = vshrl.u32 %v983, 7
        %v985 = vsub.s32 %v982, %v984
        %v986 = vrot.slane %v978, %v985
        %v988 = vunpack.c.l.s4 1934713408
        %v989 = vunpack.c.0.s8 %v988
        %v990 = vlaneseq
        %v991 = vshrl.u32 %v990, 7
        %v992 = vsub.s32 %v989, %v991
        %v993 = vrot.slane %v979, %v992
        %v994 = vcombine.low %v961, %v977
        %v995 = vcombine.high %v961, %v977
        %v997 = vunpack.c.l.s4 1934713408
        %v998 = vunpack.c.0.s8 %v997
        %v999 = vlaneseq
        %v1000 = vshrl.u32 %v999, 7
        %v1001 = vsub.s32 %v998, %v1000
        %v1002 = vrot.slane %v994, %v1001
        %v1004 = vunpack.c.l.s4 1934713408
        %v1005 = vunpack.c.0.s8 %v1004
        %v1006 = vlaneseq
        %v1007 = vshrl.u32 %v1006, 7
        %v1008 = vsub.s32 %v1005, %v1007
        %v1009 = vrot.slane %v995, %v1008
        %v1010 = vcombine.high %v986, 0.0
        %v1011 = vcombine.high %v993, 0.0
        %v1012 = vcombine.high %v1002, 0.0
        %v1013 = vcombine.high %v1009, 0.0
        %v1014 = vpack.c.bf16 %v918, %v918
        %v1015 = vpack.c.bf16 %v942, %v942
        %v1016 = vpack.c.bf16 %v925, %v925
        %v1017 = vpack.c.bf16 %v943, %v943
        %v1018 = vpack.c.bf16 %v934, %v934
        %v1019 = vpack.c.bf16 %v944, %v944
        %v1020 = vpack.c.bf16 %v941, %v941
        %v1021 = vpack.c.bf16 %v945, %v945
        %v1022 = vpack.c.bf16 %v986, %v986
        %v1023 = vpack.c.bf16 %v1010, %v1010
        %v1024 = vpack.c.bf16 %v993, %v993
        %v1025 = vpack.c.bf16 %v1011, %v1011
        %v1026 = vpack.c.bf16 %v1002, %v1002
        %v1027 = vpack.c.bf16 %v1012, %v1012
        %v1028 = vpack.c.bf16 %v1009, %v1009
        %v1029 = vpack.c.bf16 %v1013, %v1013
        %1032 = vrot.lane.b32.xlu0 %v765, 120
        %v1033 = vpop.permute.xlu0 %1032
        %1034 = vrot.lane.b32.xlu0 %v768, 120
        %v1035 = vpop.permute.xlu0 %1034
        %1038 = vrot.lane.b32.xlu0 %v765, 112
        %v1039 = vpop.permute.xlu0 %1038
        %1040 = vrot.lane.b32.xlu0 %v768, 112
        %v1041 = vpop.permute.xlu0 %1040
        %1044 = vrot.lane.b32.xlu0 %v765, 104
        %v1045 = vpop.permute.xlu0 %1044
        %1046 = vrot.lane.b32.xlu0 %v768, 104
        %v1047 = vpop.permute.xlu0 %1046
        %v1050 = vcombine.low %v765, %v1039
        %v1051 = vcombine.high %v765, %v1039
        %v1053 = vunpack.c.l.s4 1983009808
        %v1054 = vunpack.c.0.s8 %v1053
        %v1055 = vlaneseq
        %v1056 = vshrl.u32 %v1055, 7
        %v1057 = vsub.s32 %v1054, %v1056
        %v1058 = vrot.slane %v1050, %v1057
        %v1060 = vunpack.c.l.s4 1983009808
        %v1061 = vunpack.c.0.s8 %v1060
        %v1062 = vlaneseq
        %v1063 = vshrl.u32 %v1062, 7
        %v1064 = vsub.s32 %v1061, %v1063
        %v1065 = vrot.slane %v1051, %v1064
        %v1066 = vcombine.low %v1033, %v1045
        %v1067 = vcombine.high %v1033, %v1045
        %v1069 = vunpack.c.l.s4 1983009808
        %v1070 = vunpack.c.0.s8 %v1069
        %v1071 = vlaneseq
        %v1072 = vshrl.u32 %v1071, 7
        %v1073 = vsub.s32 %v1070, %v1072
        %v1074 = vrot.slane %v1066, %v1073
        %v1076 = vunpack.c.l.s4 1983009808
        %v1077 = vunpack.c.0.s8 %v1076
        %v1078 = vlaneseq
        %v1079 = vshrl.u32 %v1078, 7
        %v1080 = vsub.s32 %v1077, %v1079
        %v1081 = vrot.slane %v1067, %v1080
        %v1082 = vcombine.low %v1058, %v1074
        %v1083 = vcombine.high %v1058, %v1074
        %v1085 = vunpack.c.l.s4 1934713408
        %v1086 = vunpack.c.0.s8 %v1085
        %v1087 = vlaneseq
        %v1088 = vshrl.u32 %v1087, 7
        %v1089 = vsub.s32 %v1086, %v1088
        %v1090 = vrot.slane %v1082, %v1089
        %v1092 = vunpack.c.l.s4 1934713408
        %v1093 = vunpack.c.0.s8 %v1092
        %v1094 = vlaneseq
        %v1095 = vshrl.u32 %v1094, 7
        %v1096 = vsub.s32 %v1093, %v1095
        %v1097 = vrot.slane %v1083, %v1096
        %v1098 = vcombine.low %v1065, %v1081
        %v1099 = vcombine.high %v1065, %v1081
        %v1101 = vunpack.c.l.s4 1934713408
        %v1102 = vunpack.c.0.s8 %v1101
        %v1103 = vlaneseq
        %v1104 = vshrl.u32 %v1103, 7
        %v1105 = vsub.s32 %v1102, %v1104
        %v1106 = vrot.slane %v1098, %v1105
        %v1108 = vunpack.c.l.s4 1934713408
        %v1109 = vunpack.c.0.s8 %v1108
        %v1110 = vlaneseq
        %v1111 = vshrl.u32 %v1110, 7
        %v1112 = vsub.s32 %v1109, %v1111
        %v1113 = vrot.slane %v1099, %v1112
        %v1114 = vcombine.high %v1090, 0.0
        %v1115 = vcombine.high %v1097, 0.0
        %v1116 = vcombine.high %v1106, 0.0
        %v1117 = vcombine.high %v1113, 0.0
        %v1118 = vcombine.low %v768, %v1041
        %v1119 = vcombine.high %v768, %v1041
        %v1121 = vunpack.c.l.s4 1983009808
        %v1122 = vunpack.c.0.s8 %v1121
        %v1123 = vlaneseq
        %v1124 = vshrl.u32 %v1123, 7
        %v1125 = vsub.s32 %v1122, %v1124
        %v1126 = vrot.slane %v1118, %v1125
        %v1128 = vunpack.c.l.s4 1983009808
        %v1129 = vunpack.c.0.s8 %v1128
        %v1130 = vlaneseq
        %v1131 = vshrl.u32 %v1130, 7
        %v1132 = vsub.s32 %v1129, %v1131
        %v1133 = vrot.slane %v1119, %v1132
        %v1134 = vcombine.low %v1035, %v1047
        %v1135 = vcombine.high %v1035, %v1047
        %v1137 = vunpack.c.l.s4 1983009808
        %v1138 = vunpack.c.0.s8 %v1137
        %v1139 = vlaneseq
        %v1140 = vshrl.u32 %v1139, 7
        %v1141 = vsub.s32 %v1138, %v1140
        %v1142 = vrot.slane %v1134, %v1141
        %v1144 = vunpack.c.l.s4 1983009808
        %v1145 = vunpack.c.0.s8 %v1144
        %v1146 = vlaneseq
        %v1147 = vshrl.u32 %v1146, 7
        %v1148 = vsub.s32 %v1145, %v1147
        %v1149 = vrot.slane %v1135, %v1148
        %v1150 = vcombine.low %v1126, %v1142
        %v1151 = vcombine.high %v1126, %v1142
        %v1153 = vunpack.c.l.s4 1934713408
        %v1154 = vunpack.c.0.s8 %v1153
        %v1155 = vlaneseq
        %v1156 = vshrl.u32 %v1155, 7
        %v1157 = vsub.s32 %v1154, %v1156
        %v1158 = vrot.slane %v1150, %v1157
        %v1160 = vunpack.c.l.s4 1934713408
        %v1161 = vunpack.c.0.s8 %v1160
        %v1162 = vlaneseq
        %v1163 = vshrl.u32 %v1162, 7
        %v1164 = vsub.s32 %v1161, %v1163
        %v1165 = vrot.slane %v1151, %v1164
        %v1166 = vcombine.low %v1133, %v1149
        %v1167 = vcombine.high %v1133, %v1149
        %v1169 = vunpack.c.l.s4 1934713408
        %v1170 = vunpack.c.0.s8 %v1169
        %v1171 = vlaneseq
        %v1172 = vshrl.u32 %v1171, 7
        %v1173 = vsub.s32 %v1170, %v1172
        %v1174 = vrot.slane %v1166, %v1173
        %v1176 = vunpack.c.l.s4 1934713408
        %v1177 = vunpack.c.0.s8 %v1176
        %v1178 = vlaneseq
        %v1179 = vshrl.u32 %v1178, 7
        %v1180 = vsub.s32 %v1177, %v1179
        %v1181 = vrot.slane %v1167, %v1180
        %v1182 = vcombine.high %v1158, 0.0
        %v1183 = vcombine.high %v1165, 0.0
        %v1184 = vcombine.high %v1174, 0.0
        %v1185 = vcombine.high %v1181, 0.0
        %v1186 = vpack.c.bf16 %v1090, %v1090
        %v1187 = vpack.c.bf16 %v1114, %v1114
        %v1188 = vpack.c.bf16 %v1097, %v1097
        %v1189 = vpack.c.bf16 %v1115, %v1115
        %v1190 = vpack.c.bf16 %v1106, %v1106
        %v1191 = vpack.c.bf16 %v1116, %v1116
        %v1192 = vpack.c.bf16 %v1113, %v1113
        %v1193 = vpack.c.bf16 %v1117, %v1117
        %v1194 = vpack.c.bf16 %v1158, %v1158
        %v1195 = vpack.c.bf16 %v1182, %v1182
        %v1196 = vpack.c.bf16 %v1165, %v1165
        %v1197 = vpack.c.bf16 %v1183, %v1183
        %v1198 = vpack.c.bf16 %v1174, %v1174
        %v1199 = vpack.c.bf16 %v1184, %v1184
        %v1200 = vpack.c.bf16 %v1181, %v1181
        %v1201 = vpack.c.bf16 %v1185, %v1185
        %v1202 = vcombine.low %v850, %v854
        %v1204 = vunpack.c.l.s4 1983009808
        %v1205 = vunpack.c.0.s8 %v1204
        %v1206 = vlaneseq
        %v1207 = vshrl.u32 %v1206, 7
        %v1208 = vsub.s32 %v1205, %v1207
        %v1209 = vrot.slane %v1202, %v1208
        %v1210 = vcombine.low %v852, %v856
        %v1212 = vunpack.c.l.s4 1983009808
        %v1213 = vunpack.c.0.s8 %v1212
        %v1214 = vlaneseq
        %v1215 = vshrl.u32 %v1214, 7
        %v1216 = vsub.s32 %v1213, %v1215
        %v1217 = vrot.slane %v1210, %v1216
        %v1218 = vcombine.low %v1209, %v1217
        %v1220 = vunpack.c.l.s4 1934713408
        %v1221 = vunpack.c.0.s8 %v1220
        %v1222 = vlaneseq
        %v1223 = vshrl.u32 %v1222, 7
        %v1224 = vsub.s32 %v1221, %v1223
        %v1225 = vrot.slane %v1218, %v1224
        %v1226 = vcombine.high %v1225, 0
        %v1227 = vcombine.low %v851, %v855
        %v1229 = vunpack.c.l.s4 1983009808
        %v1230 = vunpack.c.0.s8 %v1229
        %v1231 = vlaneseq
        %v1232 = vshrl.u32 %v1231, 7
        %v1233 = vsub.s32 %v1230, %v1232
        %v1234 = vrot.slane %v1227, %v1233
        %v1235 = vcombine.low %v853, %v857
        %v1237 = vunpack.c.l.s4 1983009808
        %v1238 = vunpack.c.0.s8 %v1237
        %v1239 = vlaneseq
        %v1240 = vshrl.u32 %v1239, 7
        %v1241 = vsub.s32 %v1238, %v1240
        %v1242 = vrot.slane %v1235, %v1241
        %v1243 = vcombine.low %v1234, %v1242
        %v1245 = vunpack.c.l.s4 1934713408
        %v1246 = vunpack.c.0.s8 %v1245
        %v1247 = vlaneseq
        %v1248 = vshrl.u32 %v1247, 7
        %v1249 = vsub.s32 %v1246, %v1248
        %v1250 = vrot.slane %v1243, %v1249
        %v1251 = vcombine.high %v1250, 0
        %v1254 = vpack.i.b16 %v1250, %v1225
        %v1255 = vshrl.u32 %v1225, 16
        %v1256 = vshrl.u32 %v1250, 16
        %v1257 = vpack.i.b16 %v1256, %v1255
        %v1260 = vpack.i.b16 %v1251, %v1226
        %v1261 = vshrl.u32 %v1226, 16
        %v1262 = vshrl.u32 %v1251, 16
        %v1263 = vpack.i.b16 %v1262, %v1261
        %1264 = vxpose.xlu0.c.b16.start [1/8] %v1014, 128
        %1265 = vxpose.xlu0.c.b16.cont [2/8] 0, 128
        %1266 = vxpose.xlu0.c.b16.cont [3/8] 0, 128
        %1267 = vxpose.xlu0.c.b16.cont [4/8] 0, 128
        %1268 = vxpose.xlu0.c.b16.cont [5/8] 0, 128
        %1269 = vxpose.xlu0.c.b16.cont [6/8] 0, 128
        %1270 = vxpose.xlu0.c.b16.cont [7/8] 0, 128
        %1271 = vxpose.xlu0.c.b16.end [8/8] 0, 128
        %v1272 = vpop.trf.xlu0
        %v1273 = vpop.trf.xlu0
        %v1274 = vpop.trf.xlu0
        %v1275 = vpop.trf.xlu0
        %v1276 = vpop.trf.xlu0
        %v1277 = vpop.trf.xlu0
        %v1278 = vpop.trf.xlu0
        %v1279 = vpop.trf.xlu0
        %1280 = vxpose.xlu0.c.b16.start [1/8] %v1015, 128
        %1281 = vxpose.xlu0.c.b16.cont [2/8] 0, 128
        %1282 = vxpose.xlu0.c.b16.cont [3/8] 0, 128
        %1283 = vxpose.xlu0.c.b16.cont [4/8] 0, 128
        %1284 = vxpose.xlu0.c.b16.cont [5/8] 0, 128
        %1285 = vxpose.xlu0.c.b16.cont [6/8] 0, 128
        %1286 = vxpose.xlu0.c.b16.cont [7/8] 0, 128
        %1287 = vxpose.xlu0.c.b16.end [8/8] 0, 128
        %v1288 = vpop.trf.xlu0
        %v1289 = vpop.trf.xlu0
        %v1290 = vpop.trf.xlu0
        %v1291 = vpop.trf.xlu0
        %v1292 = vpop.trf.xlu0
        %v1293 = vpop.trf.xlu0
        %v1294 = vpop.trf.xlu0
        %v1295 = vpop.trf.xlu0
        %1296 = vxpose.xlu0.c.b16.start [1/8] %v1016, 128
        %1297 = vxpose.xlu0.c.b16.cont [2/8] 0, 128
        %1298 = vxpose.xlu0.c.b16.cont [3/8] 0, 128
        %1299 = vxpose.xlu0.c.b16.cont [4/8] 0, 128
        %1300 = vxpose.xlu0.c.b16.cont [5/8] 0, 128
        %1301 = vxpose.xlu0.c.b16.cont [6/8] 0, 128
        %1302 = vxpose.xlu0.c.b16.cont [7/8] 0, 128
        %1303 = vxpose.xlu0.c.b16.end [8/8] 0, 128
        %v1304 = vpop.trf.xlu0
        %v1305 = vpop.trf.xlu0
        %v1306 = vpop.trf.xlu0
        %v1307 = vpop.trf.xlu0
        %v1308 = vpop.trf.xlu0
        %v1309 = vpop.trf.xlu0
        %v1310 = vpop.trf.xlu0
        %v1311 = vpop.trf.xlu0
        %1312 = vxpose.xlu0.c.b16.start [1/8] %v1017, 128
        %1313 = vxpose.xlu0.c.b16.cont [2/8] 0, 128
        %1314 = vxpose.xlu0.c.b16.cont [3/8] 0, 128
        %1315 = vxpose.xlu0.c.b16.cont [4/8] 0, 128
        %1316 = vxpose.xlu0.c.b16.cont [5/8] 0, 128
        %1317 = vxpose.xlu0.c.b16.cont [6/8] 0, 128
        %1318 = vxpose.xlu0.c.b16.cont [7/8] 0, 128
        %1319 = vxpose.xlu0.c.b16.end [8/8] 0, 128
        %v1320 = vpop.trf.xlu0
        %v1321 = vpop.trf.xlu0
        %v1322 = vpop.trf.xlu0
        %v1323 = vpop.trf.xlu0
        %v1324 = vpop.trf.xlu0
        %v1325 = vpop.trf.xlu0
        %v1326 = vpop.trf.xlu0
        %v1327 = vpop.trf.xlu0
        %1328 = vxpose.xlu0.c.b16.start [1/8] %v1018, 128
        %1329 = vxpose.xlu0.c.b16.cont [2/8] 0, 128
        %1330 = vxpose.xlu0.c.b16.cont [3/8] 0, 128
        %1331 = vxpose.xlu0.c.b16.cont [4/8] 0, 128
        %1332 = vxpose.xlu0.c.b16.cont [5/8] 0, 128
        %1333 = vxpose.xlu0.c.b16.cont [6/8] 0, 128
        %1334 = vxpose.xlu0.c.b16.cont [7/8] 0, 128
        %1335 = vxpose.xlu0.c.b16.end [8/8] 0, 128
        %v1336 = vpop.trf.xlu0
        %v1337 = vpop.trf.xlu0
        %v1338 = vpop.trf.xlu0
        %v1339 = vpop.trf.xlu0
        %v1340 = vpop.trf.xlu0
        %v1341 = vpop.trf.xlu0
        %v1342 = vpop.trf.xlu0
        %v1343 = vpop.trf.xlu0
        %1344 = vxpose.xlu0.c.b16.start [1/8] %v1019, 128
        %1345 = vxpose.xlu0.c.b16.cont [2/8] 0, 128
        %1346 = vxpose.xlu0.c.b16.cont [3/8] 0, 128
        %1347 = vxpose.xlu0.c.b16.cont [4/8] 0, 128
        %1348 = vxpose.xlu0.c.b16.cont [5/8] 0, 128
        %1349 = vxpose.xlu0.c.b16.cont [6/8] 0, 128
        %1350 = vxpose.xlu0.c.b16.cont [7/8] 0, 128
        %1351 = vxpose.xlu0.c.b16.end [8/8] 0, 128
        %v1352 = vpop.trf.xlu0
        %v1353 = vpop.trf.xlu0
        %v1354 = vpop.trf.xlu0
        %v1355 = vpop.trf.xlu0
        %v1356 = vpop.trf.xlu0
        %v1357 = vpop.trf.xlu0
        %v1358 = vpop.trf.xlu0
        %v1359 = vpop.trf.xlu0
        %1360 = vxpose.xlu0.c.b16.start [1/8] %v1020, 128
        %1361 = vxpose.xlu0.c.b16.cont [2/8] 0, 128
        %1362 = vxpose.xlu0.c.b16.cont [3/8] 0, 128
        %1363 = vxpose.xlu0.c.b16.cont [4/8] 0, 128
        %1364 = vxpose.xlu0.c.b16.cont [5/8] 0, 128
        %1365 = vxpose.xlu0.c.b16.cont [6/8] 0, 128
        %1366 = vxpose.xlu0.c.b16.cont [7/8] 0, 128
        %1367 = vxpose.xlu0.c.b16.end [8/8] 0, 128
        %v1368 = vpop.trf.xlu0
        %v1369 = vpop.trf.xlu0
        %v1370 = vpop.trf.xlu0
        %v1371 = vpop.trf.xlu0
        %v1372 = vpop.trf.xlu0
        %v1373 = vpop.trf.xlu0
        %v1374 = vpop.trf.xlu0
        %v1375 = vpop.trf.xlu0
        %1376 = vxpose.xlu0.c.b16.start [1/8] %v1021, 128
        %1377 = vxpose.xlu0.c.b16.cont [2/8] 0, 128
        %1378 = vxpose.xlu0.c.b16.cont [3/8] 0, 128
        %1379 = vxpose.xlu0.c.b16.cont [4/8] 0, 128
        %1380 = vxpose.xlu0.c.b16.cont [5/8] 0, 128
        %1381 = vxpose.xlu0.c.b16.cont [6/8] 0, 128
        %1382 = vxpose.xlu0.c.b16.cont [7/8] 0, 128
        %1383 = vxpose.xlu0.c.b16.end [8/8] 0, 128
        %v1384 = vpop.trf.xlu0
        %v1385 = vpop.trf.xlu0
        %v1386 = vpop.trf.xlu0
        %v1387 = vpop.trf.xlu0
        %v1388 = vpop.trf.xlu0
        %v1389 = vpop.trf.xlu0
        %v1390 = vpop.trf.xlu0
        %v1391 = vpop.trf.xlu0
        %1392 = vxpose.xlu0.c.b16.start [1/8] %v1022, 128
        %1393 = vxpose.xlu0.c.b16.cont [2/8] 0, 128
        %1394 = vxpose.xlu0.c.b16.cont [3/8] 0, 128
        %1395 = vxpose.xlu0.c.b16.cont [4/8] 0, 128
        %1396 = vxpose.xlu0.c.b16.cont [5/8] 0, 128
        %1397 = vxpose.xlu0.c.b16.cont [6/8] 0, 128
        %1398 = vxpose.xlu0.c.b16.cont [7/8] 0, 128
        %1399 = vxpose.xlu0.c.b16.end [8/8] 0, 128
        %v1400 = vpop.trf.xlu0
        %v1401 = vpop.trf.xlu0
        %v1402 = vpop.trf.xlu0
        %v1403 = vpop.trf.xlu0
        %v1404 = vpop.trf.xlu0
        %v1405 = vpop.trf.xlu0
        %v1406 = vpop.trf.xlu0
        %v1407 = vpop.trf.xlu0
        %1408 = vxpose.xlu0.c.b16.start [1/8] %v1023, 128
        %1409 = vxpose.xlu0.c.b16.cont [2/8] 0, 128
        %1410 = vxpose.xlu0.c.b16.cont [3/8] 0, 128
        %1411 = vxpose.xlu0.c.b16.cont [4/8] 0, 128
        %1412 = vxpose.xlu0.c.b16.cont [5/8] 0, 128
        %1413 = vxpose.xlu0.c.b16.cont [6/8] 0, 128
        %1414 = vxpose.xlu0.c.b16.cont [7/8] 0, 128
        %1415 = vxpose.xlu0.c.b16.end [8/8] 0, 128
        %v1416 = vpop.trf.xlu0
        %v1417 = vpop.trf.xlu0
        %v1418 = vpop.trf.xlu0
        %v1419 = vpop.trf.xlu0
        %v1420 = vpop.trf.xlu0
        %v1421 = vpop.trf.xlu0
        %v1422 = vpop.trf.xlu0
        %v1423 = vpop.trf.xlu0
        %1424 = vxpose.xlu0.c.b16.start [1/8] %v1024, 128
        %1425 = vxpose.xlu0.c.b16.cont [2/8] 0, 128
        %1426 = vxpose.xlu0.c.b16.cont [3/8] 0, 128
        %1427 = vxpose.xlu0.c.b16.cont [4/8] 0, 128
        %1428 = vxpose.xlu0.c.b16.cont [5/8] 0, 128
        %1429 = vxpose.xlu0.c.b16.cont [6/8] 0, 128
        %1430 = vxpose.xlu0.c.b16.cont [7/8] 0, 128
        %1431 = vxpose.xlu0.c.b16.end [8/8] 0, 128
        %v1432 = vpop.trf.xlu0
        %v1433 = vpop.trf.xlu0
        %v1434 = vpop.trf.xlu0
        %v1435 = vpop.trf.xlu0
        %v1436 = vpop.trf.xlu0
        %v1437 = vpop.trf.xlu0
        %v1438 = vpop.trf.xlu0
        %v1439 = vpop.trf.xlu0
        %1440 = vxpose.xlu0.c.b16.start [1/8] %v1025, 128
        %1441 = vxpose.xlu0.c.b16.cont [2/8] 0, 128
        %1442 = vxpose.xlu0.c.b16.cont [3/8] 0, 128
        %1443 = vxpose.xlu0.c.b16.cont [4/8] 0, 128
        %1444 = vxpose.xlu0.c.b16.cont [5/8] 0, 128
        %1445 = vxpose.xlu0.c.b16.cont [6/8] 0, 128
        %1446 = vxpose.xlu0.c.b16.cont [7/8] 0, 128
        %1447 = vxpose.xlu0.c.b16.end [8/8] 0, 128
        %v1448 = vpop.trf.xlu0
        %v1449 = vpop.trf.xlu0
        %v1450 = vpop.trf.xlu0
        %v1451 = vpop.trf.xlu0
        %v1452 = vpop.trf.xlu0
        %v1453 = vpop.trf.xlu0
        %v1454 = vpop.trf.xlu0
        %v1455 = vpop.trf.xlu0
        %1456 = vxpose.xlu0.c.b16.start [1/8] %v1026, 128
        %1457 = vxpose.xlu0.c.b16.cont [2/8] 0, 128
        %1458 = vxpose.xlu0.c.b16.cont [3/8] 0, 128
        %1459 = vxpose.xlu0.c.b16.cont [4/8] 0, 128
        %1460 = vxpose.xlu0.c.b16.cont [5/8] 0, 128
        %1461 = vxpose.xlu0.c.b16.cont [6/8] 0, 128
        %1462 = vxpose.xlu0.c.b16.cont [7/8] 0, 128
        %1463 = vxpose.xlu0.c.b16.end [8/8] 0, 128
        %v1464 = vpop.trf.xlu0
        %v1465 = vpop.trf.xlu0
        %v1466 = vpop.trf.xlu0
        %v1467 = vpop.trf.xlu0
        %v1468 = vpop.trf.xlu0
        %v1469 = vpop.trf.xlu0
        %v1470 = vpop.trf.xlu0
        %v1471 = vpop.trf.xlu0
        %1472 = vxpose.xlu0.c.b16.start [1/8] %v1027, 128
        %1473 = vxpose.xlu0.c.b16.cont [2/8] 0, 128
        %1474 = vxpose.xlu0.c.b16.cont [3/8] 0, 128
        %1475 = vxpose.xlu0.c.b16.cont [4/8] 0, 128
        %1476 = vxpose.xlu0.c.b16.cont [5/8] 0, 128
        %1477 = vxpose.xlu0.c.b16.cont [6/8] 0, 128
        %1478 = vxpose.xlu0.c.b16.cont [7/8] 0, 128
        %1479 = vxpose.xlu0.c.b16.end [8/8] 0, 128
        %v1480 = vpop.trf.xlu0
        %v1481 = vpop.trf.xlu0
        %v1482 = vpop.trf.xlu0
        %v1483 = vpop.trf.xlu0
        %v1484 = vpop.trf.xlu0
        %v1485 = vpop.trf.xlu0
        %v1486 = vpop.trf.xlu0
        %v1487 = vpop.trf.xlu0
        %1488 = vxpose.xlu0.c.b16.start [1/8] %v1028, 128
        %1489 = vxpose.xlu0.c.b16.cont [2/8] 0, 128
        %1490 = vxpose.xlu0.c.b16.cont [3/8] 0, 128
        %1491 = vxpose.xlu0.c.b16.cont [4/8] 0, 128
        %1492 = vxpose.xlu0.c.b16.cont [5/8] 0, 128
        %1493 = vxpose.xlu0.c.b16.cont [6/8] 0, 128
        %1494 = vxpose.xlu0.c.b16.cont [7/8] 0, 128
        %1495 = vxpose.xlu0.c.b16.end [8/8] 0, 128
        %v1496 = vpop.trf.xlu0
        %v1497 = vpop.trf.xlu0
        %v1498 = vpop.trf.xlu0
        %v1499 = vpop.trf.xlu0
        %v1500 = vpop.trf.xlu0
        %v1501 = vpop.trf.xlu0
        %v1502 = vpop.trf.xlu0
        %v1503 = vpop.trf.xlu0
        %1504 = vxpose.xlu0.c.b16.start [1/8] %v1029, 128
        %1505 = vxpose.xlu0.c.b16.cont [2/8] 0, 128
        %1506 = vxpose.xlu0.c.b16.cont [3/8] 0, 128
        %1507 = vxpose.xlu0.c.b16.cont [4/8] 0, 128
        %1508 = vxpose.xlu0.c.b16.cont [5/8] 0, 128
        %1509 = vxpose.xlu0.c.b16.cont [6/8] 0, 128
        %1510 = vxpose.xlu0.c.b16.cont [7/8] 0, 128
        %1511 = vxpose.xlu0.c.b16.end [8/8] 0, 128
        %v1512 = vpop.trf.xlu0
        %v1513 = vpop.trf.xlu0
        %v1514 = vpop.trf.xlu0
        %v1515 = vpop.trf.xlu0
        %v1516 = vpop.trf.xlu0
        %v1517 = vpop.trf.xlu0
        %v1518 = vpop.trf.xlu0
        %v1519 = vpop.trf.xlu0
        %v1520 = vcombine.low %v1272, %v1336
        %v1522 = vunpack.c.l.s4 1983009808
        %v1523 = vunpack.c.0.s8 %v1522
        %v1524 = vlaneseq
        %v1525 = vshrl.u32 %v1524, 7
        %v1526 = vsub.s32 %v1523, %v1525
        %v1527 = vrot.slane %v1520, %v1526
        %v1528 = vcombine.low %v1304, %v1368
        %v1530 = vunpack.c.l.s4 1983009808
        %v1531 = vunpack.c.0.s8 %v1530
        %v1532 = vlaneseq
        %v1533 = vshrl.u32 %v1532, 7
        %v1534 = vsub.s32 %v1531, %v1533
        %v1535 = vrot.slane %v1528, %v1534
        %v1536 = vcombine.low %v1400, %v1464
        %v1538 = vunpack.c.l.s4 1983009808
        %v1539 = vunpack.c.0.s8 %v1538
        %v1540 = vlaneseq
        %v1541 = vshrl.u32 %v1540, 7
        %v1542 = vsub.s32 %v1539, %v1541
        %v1543 = vrot.slane %v1536, %v1542
        %v1544 = vcombine.low %v1432, %v1496
        %v1546 = vunpack.c.l.s4 1983009808
        %v1547 = vunpack.c.0.s8 %v1546
        %v1548 = vlaneseq
        %v1549 = vshrl.u32 %v1548, 7
        %v1550 = vsub.s32 %v1547, %v1549
        %v1551 = vrot.slane %v1544, %v1550
        %v1552 = vcombine.low %v1527, %v1535
        %v1553 = vcombine.high %v1527, %v1535
        %v1555 = vunpack.c.l.s4 1934713408
        %v1556 = vunpack.c.0.s8 %v1555
        %v1557 = vlaneseq
        %v1558 = vshrl.u32 %v1557, 7
        %v1559 = vsub.s32 %v1556, %v1558
        %v1560 = vrot.slane %v1552, %v1559
        %v1562 = vunpack.c.l.s4 1934713408
        %v1563 = vunpack.c.0.s8 %v1562
        %v1564 = vlaneseq
        %v1565 = vshrl.u32 %v1564, 7
        %v1566 = vsub.s32 %v1563, %v1565
        %v1567 = vrot.slane %v1553, %v1566
        %v1568 = vcombine.low %v1543, %v1551
        %v1569 = vcombine.high %v1543, %v1551
        %v1571 = vunpack.c.l.s4 1934713408
        %v1572 = vunpack.c.0.s8 %v1571
        %v1573 = vlaneseq
        %v1574 = vshrl.u32 %v1573, 7
        %v1575 = vsub.s32 %v1572, %v1574
        %v1576 = vrot.slane %v1568, %v1575
        %v1578 = vunpack.c.l.s4 1934713408
        %v1579 = vunpack.c.0.s8 %v1578
        %v1580 = vlaneseq
        %v1581 = vshrl.u32 %v1580, 7
        %v1582 = vsub.s32 %v1579, %v1581
        %v1583 = vrot.slane %v1569, %v1582
        %v1584 = vcombine.low %v1560, %v1576
        %v1585 = vcombine.high %v1560, %v1576
        %v1586 = vcombine.low %v1567, %v1583
        %v1587 = vcombine.high %v1567, %v1583
        %v1588 = vcombine.low %v1288, %v1352
        %v1590 = vunpack.c.l.s4 1983009808
        %v1591 = vunpack.c.0.s8 %v1590
        %v1592 = vlaneseq
        %v1593 = vshrl.u32 %v1592, 7
        %v1594 = vsub.s32 %v1591, %v1593
        %v1595 = vrot.slane %v1588, %v1594
        %v1596 = vcombine.low %v1320, %v1384
        %v1598 = vunpack.c.l.s4 1983009808
        %v1599 = vunpack.c.0.s8 %v1598
        %v1600 = vlaneseq
        %v1601 = vshrl.u32 %v1600, 7
        %v1602 = vsub.s32 %v1599, %v1601
        %v1603 = vrot.slane %v1596, %v1602
        %v1604 = vcombine.low %v1416, %v1480
        %v1606 = vunpack.c.l.s4 1983009808
        %v1607 = vunpack.c.0.s8 %v1606
        %v1608 = vlaneseq
        %v1609 = vshrl.u32 %v1608, 7
        %v1610 = vsub.s32 %v1607, %v1609
        %v1611 = vrot.slane %v1604, %v1610
        %v1612 = vcombine.low %v1448, %v1512
        %v1614 = vunpack.c.l.s4 1983009808
        %v1615 = vunpack.c.0.s8 %v1614
        %v1616 = vlaneseq
        %v1617 = vshrl.u32 %v1616, 7
        %v1618 = vsub.s32 %v1615, %v1617
        %v1619 = vrot.slane %v1612, %v1618
        %v1620 = vcombine.low %v1595, %v1603
        %v1621 = vcombine.high %v1595, %v1603
        %v1623 = vunpack.c.l.s4 1934713408
        %v1624 = vunpack.c.0.s8 %v1623
        %v1625 = vlaneseq
        %v1626 = vshrl.u32 %v1625, 7
        %v1627 = vsub.s32 %v1624, %v1626
        %v1628 = vrot.slane %v1620, %v1627
        %v1630 = vunpack.c.l.s4 1934713408
        %v1631 = vunpack.c.0.s8 %v1630
        %v1632 = vlaneseq
        %v1633 = vshrl.u32 %v1632, 7
        %v1634 = vsub.s32 %v1631, %v1633
        %v1635 = vrot.slane %v1621, %v1634
        %v1636 = vcombine.low %v1611, %v1619
        %v1637 = vcombine.high %v1611, %v1619
        %v1639 = vunpack.c.l.s4 1934713408
        %v1640 = vunpack.c.0.s8 %v1639
        %v1641 = vlaneseq
        %v1642 = vshrl.u32 %v1641, 7
        %v1643 = vsub.s32 %v1640, %v1642
        %v1644 = vrot.slane %v1636, %v1643
        %v1646 = vunpack.c.l.s4 1934713408
        %v1647 = vunpack.c.0.s8 %v1646
        %v1648 = vlaneseq
        %v1649 = vshrl.u32 %v1648, 7
        %v1650 = vsub.s32 %v1647, %v1649
        %v1651 = vrot.slane %v1637, %v1650
        %v1652 = vcombine.low %v1628, %v1644
        %v1653 = vcombine.high %v1628, %v1644
        %v1654 = vcombine.low %v1635, %v1651
        %v1655 = vcombine.high %v1635, %v1651
        %v1658 = vpack.i.b16 %v1652, %v1584
        %v1660 = vshrl.u32 %v1584, 16
        %v1661 = vshrl.u32 %v1652, 16
        %v1662 = vpack.i.b16 %v1661, %v1660
        %v1666 = vpack.i.b16 %v1653, %v1585
        %v1668 = vshrl.u32 %v1585, 16
        %v1669 = vshrl.u32 %v1653, 16
        %v1670 = vpack.i.b16 %v1669, %v1668
        %v1674 = vpack.i.b16 %v1654, %v1586
        %v1676 = vshrl.u32 %v1586, 16
        %v1677 = vshrl.u32 %v1654, 16
        %v1678 = vpack.i.b16 %v1677, %v1676
        %v1682 = vpack.i.b16 %v1655, %v1587
        %v1684 = vshrl.u32 %v1587, 16
        %v1685 = vshrl.u32 %v1655, 16
        %v1686 = vpack.i.b16 %v1685, %v1684
        %1688 = vxpose.xlu0.c.b16.start [1/8] %v1658, 128
        %1689 = vxpose.xlu0.c.b16.cont [2/8] 0, 128
        %1690 = vxpose.xlu0.c.b16.cont [3/8] 0, 128
        %1691 = vxpose.xlu0.c.b16.cont [4/8] 0, 128
        %1692 = vxpose.xlu0.c.b16.cont [5/8] 0, 128
        %1693 = vxpose.xlu0.c.b16.cont [6/8] 0, 128
        %1694 = vxpose.xlu0.c.b16.cont [7/8] 0, 128
        %1695 = vxpose.xlu0.c.b16.end [8/8] 0, 128
        %v1696 = vpop.trf.xlu0
        %v1697 = vpop.trf.xlu0
        %v1698 = vpop.trf.xlu0
        %v1699 = vpop.trf.xlu0
        %v1700 = vpop.trf.xlu0
        %v1701 = vpop.trf.xlu0
        %v1702 = vpop.trf.xlu0
        %v1703 = vpop.trf.xlu0
        %1704 = vxpose.xlu0.c.b16.start [1/8] %v1662, 128
        %1705 = vxpose.xlu0.c.b16.cont [2/8] 0, 128
        %1706 = vxpose.xlu0.c.b16.cont [3/8] 0, 128
        %1707 = vxpose.xlu0.c.b16.cont [4/8] 0, 128
        %1708 = vxpose.xlu0.c.b16.cont [5/8] 0, 128
        %1709 = vxpose.xlu0.c.b16.cont [6/8] 0, 128
        %1710 = vxpose.xlu0.c.b16.cont [7/8] 0, 128
        %1711 = vxpose.xlu0.c.b16.end [8/8] 0, 128
        %v1712 = vpop.trf.xlu0
        %v1713 = vpop.trf.xlu0
        %v1714 = vpop.trf.xlu0
        %v1715 = vpop.trf.xlu0
        %v1716 = vpop.trf.xlu0
        %v1717 = vpop.trf.xlu0
        %v1718 = vpop.trf.xlu0
        %v1719 = vpop.trf.xlu0
        %1720 = vxpose.xlu0.c.b16.start [1/8] %v1666, 128
        %1721 = vxpose.xlu0.c.b16.cont [2/8] 0, 128
        %1722 = vxpose.xlu0.c.b16.cont [3/8] 0, 128
        %1723 = vxpose.xlu0.c.b16.cont [4/8] 0, 128
        %1724 = vxpose.xlu0.c.b16.cont [5/8] 0, 128
        %1725 = vxpose.xlu0.c.b16.cont [6/8] 0, 128
        %1726 = vxpose.xlu0.c.b16.cont [7/8] 0, 128
        %1727 = vxpose.xlu0.c.b16.end [8/8] 0, 128
        %v1728 = vpop.trf.xlu0
        %v1729 = vpop.trf.xlu0
        %v1730 = vpop.trf.xlu0
        %v1731 = vpop.trf.xlu0
        %v1732 = vpop.trf.xlu0
        %v1733 = vpop.trf.xlu0
        %v1734 = vpop.trf.xlu0
        %v1735 = vpop.trf.xlu0
        %1736 = vxpose.xlu0.c.b16.start [1/8] %v1670, 128
        %1737 = vxpose.xlu0.c.b16.cont [2/8] 0, 128
        %1738 = vxpose.xlu0.c.b16.cont [3/8] 0, 128
        %1739 = vxpose.xlu0.c.b16.cont [4/8] 0, 128
        %1740 = vxpose.xlu0.c.b16.cont [5/8] 0, 128
        %1741 = vxpose.xlu0.c.b16.cont [6/8] 0, 128
        %1742 = vxpose.xlu0.c.b16.cont [7/8] 0, 128
        %1743 = vxpose.xlu0.c.b16.end [8/8] 0, 128
        %v1744 = vpop.trf.xlu0
        %v1745 = vpop.trf.xlu0
        %v1746 = vpop.trf.xlu0
        %v1747 = vpop.trf.xlu0
        %v1748 = vpop.trf.xlu0
        %v1749 = vpop.trf.xlu0
        %v1750 = vpop.trf.xlu0
        %v1751 = vpop.trf.xlu0
        %1752 = vxpose.xlu0.c.b16.start [1/8] %v1674, 128
        %1753 = vxpose.xlu0.c.b16.cont [2/8] 0, 128
        %1754 = vxpose.xlu0.c.b16.cont [3/8] 0, 128
        %1755 = vxpose.xlu0.c.b16.cont [4/8] 0, 128
        %1756 = vxpose.xlu0.c.b16.cont [5/8] 0, 128
        %1757 = vxpose.xlu0.c.b16.cont [6/8] 0, 128
        %1758 = vxpose.xlu0.c.b16.cont [7/8] 0, 128
        %1759 = vxpose.xlu0.c.b16.end [8/8] 0, 128
        %v1760 = vpop.trf.xlu0
        %v1761 = vpop.trf.xlu0
        %v1762 = vpop.trf.xlu0
        %v1763 = vpop.trf.xlu0
        %v1764 = vpop.trf.xlu0
        %v1765 = vpop.trf.xlu0
        %v1766 = vpop.trf.xlu0
        %v1767 = vpop.trf.xlu0
        %1768 = vxpose.xlu0.c.b16.start [1/8] %v1678, 128
        %1769 = vxpose.xlu0.c.b16.cont [2/8] 0, 128
        %1770 = vxpose.xlu0.c.b16.cont [3/8] 0, 128
        %1771 = vxpose.xlu0.c.b16.cont [4/8] 0, 128
        %1772 = vxpose.xlu0.c.b16.cont [5/8] 0, 128
        %1773 = vxpose.xlu0.c.b16.cont [6/8] 0, 128
        %1774 = vxpose.xlu0.c.b16.cont [7/8] 0, 128
        %1775 = vxpose.xlu0.c.b16.end [8/8] 0, 128
        %v1776 = vpop.trf.xlu0
        %v1777 = vpop.trf.xlu0
        %v1778 = vpop.trf.xlu0
        %v1779 = vpop.trf.xlu0
        %v1780 = vpop.trf.xlu0
        %v1781 = vpop.trf.xlu0
        %v1782 = vpop.trf.xlu0
        %v1783 = vpop.trf.xlu0
        %1784 = vxpose.xlu0.c.b16.start [1/8] %v1682, 128
        %1785 = vxpose.xlu0.c.b16.cont [2/8] 0, 128
        %1786 = vxpose.xlu0.c.b16.cont [3/8] 0, 128
        %1787 = vxpose.xlu0.c.b16.cont [4/8] 0, 128
        %1788 = vxpose.xlu0.c.b16.cont [5/8] 0, 128
        %1789 = vxpose.xlu0.c.b16.cont [6/8] 0, 128
        %1790 = vxpose.xlu0.c.b16.cont [7/8] 0, 128
        %1791 = vxpose.xlu0.c.b16.end [8/8] 0, 128
        %v1792 = vpop.trf.xlu0
        %v1793 = vpop.trf.xlu0
        %v1794 = vpop.trf.xlu0
        %v1795 = vpop.trf.xlu0
        %v1796 = vpop.trf.xlu0
        %v1797 = vpop.trf.xlu0
        %v1798 = vpop.trf.xlu0
        %v1799 = vpop.trf.xlu0
        %1800 = vxpose.xlu0.c.b16.start [1/8] %v1686, 128
        %1801 = vxpose.xlu0.c.b16.cont [2/8] 0, 128
        %1802 = vxpose.xlu0.c.b16.cont [3/8] 0, 128
        %1803 = vxpose.xlu0.c.b16.cont [4/8] 0, 128
        %1804 = vxpose.xlu0.c.b16.cont [5/8] 0, 128
        %1805 = vxpose.xlu0.c.b16.cont [6/8] 0, 128
        %1806 = vxpose.xlu0.c.b16.cont [7/8] 0, 128
        %1807 = vxpose.xlu0.c.b16.end [8/8] 0, 128
        %v1808 = vpop.trf.xlu0
        %v1809 = vpop.trf.xlu0
        %v1810 = vpop.trf.xlu0
        %v1811 = vpop.trf.xlu0
        %v1812 = vpop.trf.xlu0
        %v1813 = vpop.trf.xlu0
        %v1814 = vpop.trf.xlu0
        %v1815 = vpop.trf.xlu0
        %v1816 = vcombine.low %v1696, %v1760
        %v1818 = vunpack.c.l.s4 1983009808
        %v1819 = vunpack.c.0.s8 %v1818
        %v1820 = vlaneseq
        %v1821 = vshrl.u32 %v1820, 7
        %v1822 = vsub.s32 %v1819, %v1821
        %v1823 = vrot.slane %v1816, %v1822
        %v1824 = vcombine.low %v1728, %v1792
        %v1826 = vunpack.c.l.s4 1983009808
        %v1827 = vunpack.c.0.s8 %v1826
        %v1828 = vlaneseq
        %v1829 = vshrl.u32 %v1828, 7
        %v1830 = vsub.s32 %v1827, %v1829
        %v1831 = vrot.slane %v1824, %v1830
        %v1832 = vcombine.low %v1823, %v1831
        %v1834 = vunpack.c.l.s4 1934713408
        %v1835 = vunpack.c.0.s8 %v1834
        %v1836 = vlaneseq
        %v1837 = vshrl.u32 %v1836, 7
        %v1838 = vsub.s32 %v1835, %v1837
        %v1839 = vrot.slane %v1832, %v1838
        %v1840 = vcombine.high %v1839, 0
        %v1841 = vcombine.low %v1712, %v1776
        %v1843 = vunpack.c.l.s4 1983009808
        %v1844 = vunpack.c.0.s8 %v1843
        %v1845 = vlaneseq
        %v1846 = vshrl.u32 %v1845, 7
        %v1847 = vsub.s32 %v1844, %v1846
        %v1848 = vrot.slane %v1841, %v1847
        %v1849 = vcombine.low %v1744, %v1808
        %v1851 = vunpack.c.l.s4 1983009808
        %v1852 = vunpack.c.0.s8 %v1851
        %v1853 = vlaneseq
        %v1854 = vshrl.u32 %v1853, 7
        %v1855 = vsub.s32 %v1852, %v1854
        %v1856 = vrot.slane %v1849, %v1855
        %v1857 = vcombine.low %v1848, %v1856
        %v1859 = vunpack.c.l.s4 1934713408
        %v1860 = vunpack.c.0.s8 %v1859
        %v1861 = vlaneseq
        %v1862 = vshrl.u32 %v1861, 7
        %v1863 = vsub.s32 %v1860, %v1862
        %v1864 = vrot.slane %v1857, %v1863
        %v1865 = vcombine.high %v1864, 0
        %v1868 = vpack.i.b16 %v1864, %v1839
        %v1869 = vshrl.u32 %v1839, 16
        %v1870 = vshrl.u32 %v1864, 16
        %v1871 = vpack.i.b16 %v1870, %v1869
        %v1874 = vpack.i.b16 %v1865, %v1840
        %v1875 = vshrl.u32 %v1840, 16
        %v1876 = vshrl.u32 %v1865, 16
        %v1877 = vpack.i.b16 %v1876, %v1875
        %vm1878 = vcmask 64512
        %v1880 = vsel %vm1878, %v1254, 0
        %vm1882 = vcmask 1043456
        %v1884 = vsel %vm1882, %v1868, 0
        %1886 = vmatprep.subr.bf16.mxu0 0
        %1887 = vmatpush1.bf16.msra.mxu0 %v1884
        %1888 = vmatprep.subr.bf16.mxu0 0
        %1889 = vmatpush1.bf16.msra.mxu0 0
        %1890 = vmatprep.subr.bf16.mxu0 0
        %1891 = vmatpush1.bf16.msra.mxu0 0
        %1892 = vmatprep.subr.bf16.mxu0 0
        %1893 = vmatpush1.bf16.msra.mxu0 0
        %1894 = vmatprep.subr.bf16.mxu0 0
        %1895 = vmatpush1.bf16.msra.mxu0 0
        %1896 = vmatprep.subr.bf16.mxu0 0
        %1897 = vmatpush1.bf16.msra.mxu0 0
        %1898 = vmatprep.subr.bf16.mxu0 0
        %1899 = vmatpush1.bf16.msra.mxu0 0
        %1900 = vmatprep.subr.bf16.mxu0 0
        %1901 = vmatpush1.bf16.msra.mxu0 0
        %1902 = vmatprep.subr.bf16.mxu0 0
        %1903 = vmatpush1.bf16.msra.mxu0 0
        %1904 = vmatprep.subr.bf16.mxu0 0
        %1905 = vmatpush1.bf16.msra.mxu0 0
        %1906 = vmatprep.subr.bf16.mxu0 0
        %1907 = vmatpush1.bf16.msra.mxu0 0
        %1908 = vmatprep.subr.bf16.mxu0 0
        %1909 = vmatpush1.bf16.msra.mxu0 0
        %1910 = vmatprep.subr.bf16.mxu0 0
        %1911 = vmatpush1.bf16.msra.mxu0 0
        %1912 = vmatprep.subr.bf16.mxu0 0
        %1913 = vmatpush1.bf16.msra.mxu0 0
        %1914 = vmatprep.subr.bf16.mxu0 0
        %1915 = vmatpush1.bf16.msra.mxu0 0
        %1916 = vmatprep.subr.bf16.mxu0 0
        %1917 = vmatpush1.bf16.msra.mxu0 0
        %1918 = vmatprep.mubr.bf16.mxu0 0
        %1919 = vmatmul.mubr.bf16.gmra.mrb[0].mxu0 %v1880
        %v1920 = vpop.f32.mrb[0].mxu0
        %v1921 = vadd.f32 0.0, %v1920
        %v1922 = vpop.f32.mrb[0].mxu0
        %v1923 = vpop.f32.mrb[0].mxu0
        %v1924 = vpop.f32.mrb[0].mxu0
        %1925 = vdwg.mxu0
        %v1927 = vsel %vm1878, %v1257, 0
        %v1930 = vsel %vm1882, %v1871, 0
        %1932 = vmatprep.subr.bf16.mxu0 0
        %1933 = vmatpush1.bf16.msra.mxu0 %v1930
        %1934 = vmatprep.subr.bf16.mxu0 0
        %1935 = vmatpush1.bf16.msra.mxu0 0
        %1936 = vmatprep.subr.bf16.mxu0 0
        %1937 = vmatpush1.bf16.msra.mxu0 0
        %1938 = vmatprep.subr.bf16.mxu0 0
        %1939 = vmatpush1.bf16.msra.mxu0 0
        %1940 = vmatprep.subr.bf16.mxu0 0
        %1941 = vmatpush1.bf16.msra.mxu0 0
        %1942 = vmatprep.subr.bf16.mxu0 0
        %1943 = vmatpush1.bf16.msra.mxu0 0
        %1944 = vmatprep.subr.bf16.mxu0 0
        %1945 = vmatpush1.bf16.msra.mxu0 0
        %1946 = vmatprep.subr.bf16.mxu0 0
        %1947 = vmatpush1.bf16.msra.mxu0 0
        %1948 = vmatprep.subr.bf16.mxu0 0
        %1949 = vmatpush1.bf16.msra.mxu0 0
        %1950 = vmatprep.subr.bf16.mxu0 0
        %1951 = vmatpush1.bf16.msra.mxu0 0
        %1952 = vmatprep.subr.bf16.mxu0 0
        %1953 = vmatpush1.bf16.msra.mxu0 0
        %1954 = vmatprep.subr.bf16.mxu0 0
        %1955 = vmatpush1.bf16.msra.mxu0 0
        %1956 = vmatprep.subr.bf16.mxu0 0
        %1957 = vmatpush1.bf16.msra.mxu0 0
        %1958 = vmatprep.subr.bf16.mxu0 0
        %1959 = vmatpush1.bf16.msra.mxu0 0
        %1960 = vmatprep.subr.bf16.mxu0 0
        %1961 = vmatpush1.bf16.msra.mxu0 0
        %1962 = vmatprep.subr.bf16.mxu0 0
        %1963 = vmatpush1.bf16.msra.mxu0 0
        %1964 = vmatprep.mubr.bf16.mxu0 0
        %1965 = vmatmul.mubr.bf16.gmra.mrb[0].mxu0 %v1927
        %v1966 = vpop.f32.mrb[0].mxu0
        %v1967 = vadd.f32 0.0, %v1966
        %v1968 = vpop.f32.mrb[0].mxu0
        %v1969 = vpop.f32.mrb[0].mxu0
        %v1970 = vpop.f32.mrb[0].mxu0
        %1971 = vdwg.mxu0
        %v1973 = vsel %vm1878, %v1260, 0
        %v1976 = vsel %vm1882, %v1874, 0
        %1978 = vmatprep.subr.bf16.mxu0 0
        %1979 = vmatpush1.bf16.msra.mxu0 %v1976
        %1980 = vmatprep.subr.bf16.mxu0 0
        %1981 = vmatpush1.bf16.msra.mxu0 0
        %1982 = vmatprep.subr.bf16.mxu0 0
        %1983 = vmatpush1.bf16.msra.mxu0 0
        %1984 = vmatprep.subr.bf16.mxu0 0
        %1985 = vmatpush1.bf16.msra.mxu0 0
        %1986 = vmatprep.subr.bf16.mxu0 0
        %1987 = vmatpush1.bf16.msra.mxu0 0
        %1988 = vmatprep.subr.bf16.mxu0 0
        %1989 = vmatpush1.bf16.msra.mxu0 0
        %1990 = vmatprep.subr.bf16.mxu0 0
        %1991 = vmatpush1.bf16.msra.mxu0 0
        %1992 = vmatprep.subr.bf16.mxu0 0
        %1993 = vmatpush1.bf16.msra.mxu0 0
        %1994 = vmatprep.subr.bf16.mxu0 0
        %1995 = vmatpush1.bf16.msra.mxu0 0
        %1996 = vmatprep.subr.bf16.mxu0 0
        %1997 = vmatpush1.bf16.msra.mxu0 0
        %1998 = vmatprep.subr.bf16.mxu0 0
        %1999 = vmatpush1.bf16.msra.mxu0 0
        %2000 = vmatprep.subr.bf16.mxu0 0
        %2001 = vmatpush1.bf16.msra.mxu0 0
        %2002 = vmatprep.subr.bf16.mxu0 0
        %2003 = vmatpush1.bf16.msra.mxu0 0
        %2004 = vmatprep.subr.bf16.mxu0 0
        %2005 = vmatpush1.bf16.msra.mxu0 0
        %2006 = vmatprep.subr.bf16.mxu0 0
        %2007 = vmatpush1.bf16.msra.mxu0 0
        %2008 = vmatprep.subr.bf16.mxu0 0
        %2009 = vmatpush1.bf16.msra.mxu0 0
        %2010 = vmatprep.mubr.bf16.mxu0 0
        %2011 = vmatmul.mubr.bf16.gmra.mrb[0].mxu0 %v1973
        %v2012 = vpop.f32.mrb[0].mxu0
        %v2013 = vadd.f32 0.0, %v2012
        %v2014 = vpop.f32.mrb[0].mxu0
        %v2015 = vpop.f32.mrb[0].mxu0
        %v2016 = vpop.f32.mrb[0].mxu0
        %2017 = vdwg.mxu0
        %v2019 = vsel %vm1878, %v1263, 0
        %v2022 = vsel %vm1882, %v1877, 0
        %2024 = vmatprep.subr.bf16.mxu0 0
        %2025 = vmatpush1.bf16.msra.mxu0 %v2022
        %2026 = vmatprep.subr.bf16.mxu0 0
        %2027 = vmatpush1.bf16.msra.mxu0 0
        %2028 = vmatprep.subr.bf16.mxu0 0
        %2029 = vmatpush1.bf16.msra.mxu0 0
        %2030 = vmatprep.subr.bf16.mxu0 0
        %2031 = vmatpush1.bf16.msra.mxu0 0
        %2032 = vmatprep.subr.bf16.mxu0 0
        %2033 = vmatpush1.bf16.msra.mxu0 0
        %2034 = vmatprep.subr.bf16.mxu0 0
        %2035 = vmatpush1.bf16.msra.mxu0 0
        %2036 = vmatprep.subr.bf16.mxu0 0
        %2037 = vmatpush1.bf16.msra.mxu0 0
        %2038 = vmatprep.subr.bf16.mxu0 0
        %2039 = vmatpush1.bf16.msra.mxu0 0
        %2040 = vmatprep.subr.bf16.mxu0 0
        %2041 = vmatpush1.bf16.msra.mxu0 0
        %2042 = vmatprep.subr.bf16.mxu0 0
        %2043 = vmatpush1.bf16.msra.mxu0 0
        %2044 = vmatprep.subr.bf16.mxu0 0
        %2045 = vmatpush1.bf16.msra.mxu0 0
        %2046 = vmatprep.subr.bf16.mxu0 0
        %2047 = vmatpush1.bf16.msra.mxu0 0
        %2048 = vmatprep.subr.bf16.mxu0 0
        %2049 = vmatpush1.bf16.msra.mxu0 0
        %2050 = vmatprep.subr.bf16.mxu0 0
        %2051 = vmatpush1.bf16.msra.mxu0 0
        %2052 = vmatprep.subr.bf16.mxu0 0
        %2053 = vmatpush1.bf16.msra.mxu0 0
        %2054 = vmatprep.subr.bf16.mxu0 0
        %2055 = vmatpush1.bf16.msra.mxu0 0
        %2056 = vmatprep.mubr.bf16.mxu0 0
        %2057 = vmatmul.mubr.bf16.gmra.mrb[0].mxu0 %v2019
        %v2058 = vpop.f32.mrb[0].mxu0
        %v2059 = vadd.f32 0.0, %v2058
        %v2060 = vpop.f32.mrb[0].mxu0
        %v2061 = vpop.f32.mrb[0].mxu0
        %v2062 = vpop.f32.mrb[0].mxu0
        %2063 = vdwg.mxu0
        %vm2064 = vcmask 130048
        %v2065 = vsel %vm2064, %v1921, -inf
        %2066 = vmax.xlane.f32.xlu0 %v2065
        %v2067 = vpop.xlane.xlu0 %2066
        %v2068 = vsel %vm2064, %v1967, -inf
        %2069 = vmax.xlane.f32.xlu0 %v2068
        %v2070 = vpop.xlane.xlu0 %2069
        %v2071 = vsel %vm2064, %v2013, -inf
        %2072 = vmax.xlane.f32.xlu0 %v2071
        %v2073 = vpop.xlane.xlu0 %2072
        %v2074 = vsel %vm2064, %v2059, -inf
        %2075 = vmax.xlane.f32.xlu0 %v2074
        %v2076 = vpop.xlane.xlu0 %2075
        %v2077 = vsub.f32 %v1921, %v2067
        %v2078 = vsub.f32 %v1967, %v2070
        %v2079 = vsub.f32 %v2013, %v2073
        %v2080 = vsub.f32 %v2059, %v2076
        %v2081 = vmul.f32 %v2077, 1.442695
        %v2082 = vpow.pop %v2081
        %v2083 = vmul.f32 %v2078, 1.442695
        %v2084 = vpow.pop %v2083
        %v2085 = vmul.f32 %v2079, 1.442695
        %v2086 = vpow.pop %v2085
        %v2087 = vmul.f32 %v2080, 1.442695
        %v2088 = vpow.pop %v2087
        %v2089 = vsel %vm2064, %v2082, 0.0
        %2090 = vadd.xlane.f32.xlu0 %v2089
        %v2091 = vpop.xlane.xlu0 %2090
        %v2092 = vsel %vm2064, %v2084, 0.0
        %2093 = vadd.xlane.f32.xlu0 %v2092
        %v2094 = vpop.xlane.xlu0 %2093
        %v2095 = vsel %vm2064, %v2086, 0.0
        %2096 = vadd.xlane.f32.xlu0 %v2095
        %v2097 = vpop.xlane.xlu0 %2096
        %v2098 = vsel %vm2064, %v2088, 0.0
        %2099 = vadd.xlane.f32.xlu0 %v2098
        %v2100 = vpop.xlane.xlu0 %2099
        %v2101 = vrcp.pop %v2091
        %v2102 = vrcp.pop %v2094
        %v2103 = vrcp.pop %v2097
        %v2104 = vrcp.pop %v2100
        %v2105 = vmul.f32 %v2082, %v2101
        %v2106 = vmul.f32 %v2084, %v2102
        %v2107 = vmul.f32 %v2086, %v2103
        %v2108 = vmul.f32 %v2088, %v2104
        %v2109 = vpack.c.bf16 %v2105, %v2105
        %v2110 = vpack.c.bf16 %v2106, %v2106
        %v2111 = vpack.c.bf16 %v2107, %v2107
        %v2112 = vpack.c.bf16 %v2108, %v2108
        %2113 = vxpose.xlu0.c.b16.start [1/8] %v1186, 128
        %2114 = vxpose.xlu0.c.b16.cont [2/8] 0, 128
        %2115 = vxpose.xlu0.c.b16.cont [3/8] 0, 128
        %2116 = vxpose.xlu0.c.b16.cont [4/8] 0, 128
        %2117 = vxpose.xlu0.c.b16.cont [5/8] 0, 128
        %2118 = vxpose.xlu0.c.b16.cont [6/8] 0, 128
        %2119 = vxpose.xlu0.c.b16.cont [7/8] 0, 128
        %2120 = vxpose.xlu0.c.b16.end [8/8] 0, 128
        %v2121 = vpop.trf.xlu0
        %v2122 = vpop.trf.xlu0
        %v2123 = vpop.trf.xlu0
        %v2124 = vpop.trf.xlu0
        %v2125 = vpop.trf.xlu0
        %v2126 = vpop.trf.xlu0
        %v2127 = vpop.trf.xlu0
        %v2128 = vpop.trf.xlu0
        %2129 = vxpose.xlu0.c.b16.start [1/8] %v1187, 128
        %2130 = vxpose.xlu0.c.b16.cont [2/8] 0, 128
        %2131 = vxpose.xlu0.c.b16.cont [3/8] 0, 128
        %2132 = vxpose.xlu0.c.b16.cont [4/8] 0, 128
        %2133 = vxpose.xlu0.c.b16.cont [5/8] 0, 128
        %2134 = vxpose.xlu0.c.b16.cont [6/8] 0, 128
        %2135 = vxpose.xlu0.c.b16.cont [7/8] 0, 128
        %2136 = vxpose.xlu0.c.b16.end [8/8] 0, 128
        %v2137 = vpop.trf.xlu0
        %v2138 = vpop.trf.xlu0
        %v2139 = vpop.trf.xlu0
        %v2140 = vpop.trf.xlu0
        %v2141 = vpop.trf.xlu0
        %v2142 = vpop.trf.xlu0
        %v2143 = vpop.trf.xlu0
        %v2144 = vpop.trf.xlu0
        %2145 = vxpose.xlu0.c.b16.start [1/8] %v1188, 128
        %2146 = vxpose.xlu0.c.b16.cont [2/8] 0, 128
        %2147 = vxpose.xlu0.c.b16.cont [3/8] 0, 128
        %2148 = vxpose.xlu0.c.b16.cont [4/8] 0, 128
        %2149 = vxpose.xlu0.c.b16.cont [5/8] 0, 128
        %2150 = vxpose.xlu0.c.b16.cont [6/8] 0, 128
        %2151 = vxpose.xlu0.c.b16.cont [7/8] 0, 128
        %2152 = vxpose.xlu0.c.b16.end [8/8] 0, 128
        %v2153 = vpop.trf.xlu0
        %v2154 = vpop.trf.xlu0
        %v2155 = vpop.trf.xlu0
        %v2156 = vpop.trf.xlu0
        %v2157 = vpop.trf.xlu0
        %v2158 = vpop.trf.xlu0
        %v2159 = vpop.trf.xlu0
        %v2160 = vpop.trf.xlu0
        %2161 = vxpose.xlu0.c.b16.start [1/8] %v1189, 128
        %2162 = vxpose.xlu0.c.b16.cont [2/8] 0, 128
        %2163 = vxpose.xlu0.c.b16.cont [3/8] 0, 128
        %2164 = vxpose.xlu0.c.b16.cont [4/8] 0, 128
        %2165 = vxpose.xlu0.c.b16.cont [5/8] 0, 128
        %2166 = vxpose.xlu0.c.b16.cont [6/8] 0, 128
        %2167 = vxpose.xlu0.c.b16.cont [7/8] 0, 128
        %2168 = vxpose.xlu0.c.b16.end [8/8] 0, 128
        %v2169 = vpop.trf.xlu0
        %v2170 = vpop.trf.xlu0
        %v2171 = vpop.trf.xlu0
        %v2172 = vpop.trf.xlu0
        %v2173 = vpop.trf.xlu0
        %v2174 = vpop.trf.xlu0
        %v2175 = vpop.trf.xlu0
        %v2176 = vpop.trf.xlu0
        %2177 = vxpose.xlu0.c.b16.start [1/8] %v1190, 128
        %2178 = vxpose.xlu0.c.b16.cont [2/8] 0, 128
        %2179 = vxpose.xlu0.c.b16.cont [3/8] 0, 128
        %2180 = vxpose.xlu0.c.b16.cont [4/8] 0, 128
        %2181 = vxpose.xlu0.c.b16.cont [5/8] 0, 128
        %2182 = vxpose.xlu0.c.b16.cont [6/8] 0, 128
        %2183 = vxpose.xlu0.c.b16.cont [7/8] 0, 128
        %2184 = vxpose.xlu0.c.b16.end [8/8] 0, 128
        %v2185 = vpop.trf.xlu0
        %v2186 = vpop.trf.xlu0
        %v2187 = vpop.trf.xlu0
        %v2188 = vpop.trf.xlu0
        %v2189 = vpop.trf.xlu0
        %v2190 = vpop.trf.xlu0
        %v2191 = vpop.trf.xlu0
        %v2192 = vpop.trf.xlu0
        %2193 = vxpose.xlu0.c.b16.start [1/8] %v1191, 128
        %2194 = vxpose.xlu0.c.b16.cont [2/8] 0, 128
        %2195 = vxpose.xlu0.c.b16.cont [3/8] 0, 128
        %2196 = vxpose.xlu0.c.b16.cont [4/8] 0, 128
        %2197 = vxpose.xlu0.c.b16.cont [5/8] 0, 128
        %2198 = vxpose.xlu0.c.b16.cont [6/8] 0, 128
        %2199 = vxpose.xlu0.c.b16.cont [7/8] 0, 128
        %2200 = vxpose.xlu0.c.b16.end [8/8] 0, 128
        %v2201 = vpop.trf.xlu0
        %v2202 = vpop.trf.xlu0
        %v2203 = vpop.trf.xlu0
        %v2204 = vpop.trf.xlu0
        %v2205 = vpop.trf.xlu0
        %v2206 = vpop.trf.xlu0
        %v2207 = vpop.trf.xlu0
        %v2208 = vpop.trf.xlu0
        %2209 = vxpose.xlu0.c.b16.start [1/8] %v1192, 128
        %2210 = vxpose.xlu0.c.b16.cont [2/8] 0, 128
        %2211 = vxpose.xlu0.c.b16.cont [3/8] 0, 128
        %2212 = vxpose.xlu0.c.b16.cont [4/8] 0, 128
        %2213 = vxpose.xlu0.c.b16.cont [5/8] 0, 128
        %2214 = vxpose.xlu0.c.b16.cont [6/8] 0, 128
        %2215 = vxpose.xlu0.c.b16.cont [7/8] 0, 128
        %2216 = vxpose.xlu0.c.b16.end [8/8] 0, 128
        %v2217 = vpop.trf.xlu0
        %v2218 = vpop.trf.xlu0
        %v2219 = vpop.trf.xlu0
        %v2220 = vpop.trf.xlu0
        %v2221 = vpop.trf.xlu0
        %v2222 = vpop.trf.xlu0
        %v2223 = vpop.trf.xlu0
        %v2224 = vpop.trf.xlu0
        %2225 = vxpose.xlu0.c.b16.start [1/8] %v1193, 128
        %2226 = vxpose.xlu0.c.b16.cont [2/8] 0, 128
        %2227 = vxpose.xlu0.c.b16.cont [3/8] 0, 128
        %2228 = vxpose.xlu0.c.b16.cont [4/8] 0, 128
        %2229 = vxpose.xlu0.c.b16.cont [5/8] 0, 128
        %2230 = vxpose.xlu0.c.b16.cont [6/8] 0, 128
        %2231 = vxpose.xlu0.c.b16.cont [7/8] 0, 128
        %2232 = vxpose.xlu0.c.b16.end [8/8] 0, 128
        %v2233 = vpop.trf.xlu0
        %v2234 = vpop.trf.xlu0
        %v2235 = vpop.trf.xlu0
        %v2236 = vpop.trf.xlu0
        %v2237 = vpop.trf.xlu0
        %v2238 = vpop.trf.xlu0
        %v2239 = vpop.trf.xlu0
        %v2240 = vpop.trf.xlu0
        %2241 = vxpose.xlu0.c.b16.start [1/8] %v1194, 128
        %2242 = vxpose.xlu0.c.b16.cont [2/8] 0, 128
        %2243 = vxpose.xlu0.c.b16.cont [3/8] 0, 128
        %2244 = vxpose.xlu0.c.b16.cont [4/8] 0, 128
        %2245 = vxpose.xlu0.c.b16.cont [5/8] 0, 128
        %2246 = vxpose.xlu0.c.b16.cont [6/8] 0, 128
        %2247 = vxpose.xlu0.c.b16.cont [7/8] 0, 128
        %2248 = vxpose.xlu0.c.b16.end [8/8] 0, 128
        %v2249 = vpop.trf.xlu0
        %v2250 = vpop.trf.xlu0
        %v2251 = vpop.trf.xlu0
        %v2252 = vpop.trf.xlu0
        %v2253 = vpop.trf.xlu0
        %v2254 = vpop.trf.xlu0
        %v2255 = vpop.trf.xlu0
        %v2256 = vpop.trf.xlu0
        %2257 = vxpose.xlu0.c.b16.start [1/8] %v1195, 128
        %2258 = vxpose.xlu0.c.b16.cont [2/8] 0, 128
        %2259 = vxpose.xlu0.c.b16.cont [3/8] 0, 128
        %2260 = vxpose.xlu0.c.b16.cont [4/8] 0, 128
        %2261 = vxpose.xlu0.c.b16.cont [5/8] 0, 128
        %2262 = vxpose.xlu0.c.b16.cont [6/8] 0, 128
        %2263 = vxpose.xlu0.c.b16.cont [7/8] 0, 128
        %2264 = vxpose.xlu0.c.b16.end [8/8] 0, 128
        %v2265 = vpop.trf.xlu0
        %v2266 = vpop.trf.xlu0
        %v2267 = vpop.trf.xlu0
        %v2268 = vpop.trf.xlu0
        %v2269 = vpop.trf.xlu0
        %v2270 = vpop.trf.xlu0
        %v2271 = vpop.trf.xlu0
        %v2272 = vpop.trf.xlu0
        %2273 = vxpose.xlu0.c.b16.start [1/8] %v1196, 128
        %2274 = vxpose.xlu0.c.b16.cont [2/8] 0, 128
        %2275 = vxpose.xlu0.c.b16.cont [3/8] 0, 128
        %2276 = vxpose.xlu0.c.b16.cont [4/8] 0, 128
        %2277 = vxpose.xlu0.c.b16.cont [5/8] 0, 128
        %2278 = vxpose.xlu0.c.b16.cont [6/8] 0, 128
        %2279 = vxpose.xlu0.c.b16.cont [7/8] 0, 128
        %2280 = vxpose.xlu0.c.b16.end [8/8] 0, 128
        %v2281 = vpop.trf.xlu0
        %v2282 = vpop.trf.xlu0
        %v2283 = vpop.trf.xlu0
        %v2284 = vpop.trf.xlu0
        %v2285 = vpop.trf.xlu0
        %v2286 = vpop.trf.xlu0
        %v2287 = vpop.trf.xlu0
        %v2288 = vpop.trf.xlu0
        %2289 = vxpose.xlu0.c.b16.start [1/8] %v1197, 128
        %2290 = vxpose.xlu0.c.b16.cont [2/8] 0, 128
        %2291 = vxpose.xlu0.c.b16.cont [3/8] 0, 128
        %2292 = vxpose.xlu0.c.b16.cont [4/8] 0, 128
        %2293 = vxpose.xlu0.c.b16.cont [5/8] 0, 128
        %2294 = vxpose.xlu0.c.b16.cont [6/8] 0, 128
        %2295 = vxpose.xlu0.c.b16.cont [7/8] 0, 128
        %2296 = vxpose.xlu0.c.b16.end [8/8] 0, 128
        %v2297 = vpop.trf.xlu0
        %v2298 = vpop.trf.xlu0
        %v2299 = vpop.trf.xlu0
        %v2300 = vpop.trf.xlu0
        %v2301 = vpop.trf.xlu0
        %v2302 = vpop.trf.xlu0
        %v2303 = vpop.trf.xlu0
        %v2304 = vpop.trf.xlu0
        %2305 = vxpose.xlu0.c.b16.start [1/8] %v1198, 128
        %2306 = vxpose.xlu0.c.b16.cont [2/8] 0, 128
        %2307 = vxpose.xlu0.c.b16.cont [3/8] 0, 128
        %2308 = vxpose.xlu0.c.b16.cont [4/8] 0, 128
        %2309 = vxpose.xlu0.c.b16.cont [5/8] 0, 128
        %2310 = vxpose.xlu0.c.b16.cont [6/8] 0, 128
        %2311 = vxpose.xlu0.c.b16.cont [7/8] 0, 128
        %2312 = vxpose.xlu0.c.b16.end [8/8] 0, 128
        %v2313 = vpop.trf.xlu0
        %v2314 = vpop.trf.xlu0
        %v2315 = vpop.trf.xlu0
        %v2316 = vpop.trf.xlu0
        %v2317 = vpop.trf.xlu0
        %v2318 = vpop.trf.xlu0
        %v2319 = vpop.trf.xlu0
        %v2320 = vpop.trf.xlu0
        %2321 = vxpose.xlu0.c.b16.start [1/8] %v1199, 128
        %2322 = vxpose.xlu0.c.b16.cont [2/8] 0, 128
        %2323 = vxpose.xlu0.c.b16.cont [3/8] 0, 128
        %2324 = vxpose.xlu0.c.b16.cont [4/8] 0, 128
        %2325 = vxpose.xlu0.c.b16.cont [5/8] 0, 128
        %2326 = vxpose.xlu0.c.b16.cont [6/8] 0, 128
        %2327 = vxpose.xlu0.c.b16.cont [7/8] 0, 128
        %2328 = vxpose.xlu0.c.b16.end [8/8] 0, 128
        %v2329 = vpop.trf.xlu0
        %v2330 = vpop.trf.xlu0
        %v2331 = vpop.trf.xlu0
        %v2332 = vpop.trf.xlu0
        %v2333 = vpop.trf.xlu0
        %v2334 = vpop.trf.xlu0
        %v2335 = vpop.trf.xlu0
        %v2336 = vpop.trf.xlu0
        %2337 = vxpose.xlu0.c.b16.start [1/8] %v1200, 128
        %2338 = vxpose.xlu0.c.b16.cont [2/8] 0, 128
        %2339 = vxpose.xlu0.c.b16.cont [3/8] 0, 128
        %2340 = vxpose.xlu0.c.b16.cont [4/8] 0, 128
        %2341 = vxpose.xlu0.c.b16.cont [5/8] 0, 128
        %2342 = vxpose.xlu0.c.b16.cont [6/8] 0, 128
        %2343 = vxpose.xlu0.c.b16.cont [7/8] 0, 128
        %2344 = vxpose.xlu0.c.b16.end [8/8] 0, 128
        %v2345 = vpop.trf.xlu0
        %v2346 = vpop.trf.xlu0
        %v2347 = vpop.trf.xlu0
        %v2348 = vpop.trf.xlu0
        %v2349 = vpop.trf.xlu0
        %v2350 = vpop.trf.xlu0
        %v2351 = vpop.trf.xlu0
        %v2352 = vpop.trf.xlu0
        %2353 = vxpose.xlu0.c.b16.start [1/8] %v1201, 128
        %2354 = vxpose.xlu0.c.b16.cont [2/8] 0, 128
        %2355 = vxpose.xlu0.c.b16.cont [3/8] 0, 128
        %2356 = vxpose.xlu0.c.b16.cont [4/8] 0, 128
        %2357 = vxpose.xlu0.c.b16.cont [5/8] 0, 128
        %2358 = vxpose.xlu0.c.b16.cont [6/8] 0, 128
        %2359 = vxpose.xlu0.c.b16.cont [7/8] 0, 128
        %2360 = vxpose.xlu0.c.b16.end [8/8] 0, 128
        %v2361 = vpop.trf.xlu0
        %v2362 = vpop.trf.xlu0
        %v2363 = vpop.trf.xlu0
        %v2364 = vpop.trf.xlu0
        %v2365 = vpop.trf.xlu0
        %v2366 = vpop.trf.xlu0
        %v2367 = vpop.trf.xlu0
        %v2368 = vpop.trf.xlu0
        %v2369 = vcombine.low %v2121, %v2185
        %v2371 = vunpack.c.l.s4 1983009808
        %v2372 = vunpack.c.0.s8 %v2371
        %v2373 = vlaneseq
        %v2374 = vshrl.u32 %v2373, 7
        %v2375 = vsub.s32 %v2372, %v2374
        %v2376 = vrot.slane %v2369, %v2375
        %v2377 = vcombine.low %v2153, %v2217
        %v2379 = vunpack.c.l.s4 1983009808
        %v2380 = vunpack.c.0.s8 %v2379
        %v2381 = vlaneseq
        %v2382 = vshrl.u32 %v2381, 7
        %v2383 = vsub.s32 %v2380, %v2382
        %v2384 = vrot.slane %v2377, %v2383
        %v2385 = vcombine.low %v2249, %v2313
        %v2387 = vunpack.c.l.s4 1983009808
        %v2388 = vunpack.c.0.s8 %v2387
        %v2389 = vlaneseq
        %v2390 = vshrl.u32 %v2389, 7
        %v2391 = vsub.s32 %v2388, %v2390
        %v2392 = vrot.slane %v2385, %v2391
        %v2393 = vcombine.low %v2281, %v2345
        %v2395 = vunpack.c.l.s4 1983009808
        %v2396 = vunpack.c.0.s8 %v2395
        %v2397 = vlaneseq
        %v2398 = vshrl.u32 %v2397, 7
        %v2399 = vsub.s32 %v2396, %v2398
        %v2400 = vrot.slane %v2393, %v2399
        %v2401 = vcombine.low %v2376, %v2384
        %v2402 = vcombine.high %v2376, %v2384
        %v2404 = vunpack.c.l.s4 1934713408
        %v2405 = vunpack.c.0.s8 %v2404
        %v2406 = vlaneseq
        %v2407 = vshrl.u32 %v2406, 7
        %v2408 = vsub.s32 %v2405, %v2407
        %v2409 = vrot.slane %v2401, %v2408
        %v2411 = vunpack.c.l.s4 1934713408
        %v2412 = vunpack.c.0.s8 %v2411
        %v2413 = vlaneseq
        %v2414 = vshrl.u32 %v2413, 7
        %v2415 = vsub.s32 %v2412, %v2414
        %v2416 = vrot.slane %v2402, %v2415
        %v2417 = vcombine.low %v2392, %v2400
        %v2418 = vcombine.high %v2392, %v2400
        %v2420 = vunpack.c.l.s4 1934713408
        %v2421 = vunpack.c.0.s8 %v2420
        %v2422 = vlaneseq
        %v2423 = vshrl.u32 %v2422, 7
        %v2424 = vsub.s32 %v2421, %v2423
        %v2425 = vrot.slane %v2417, %v2424
        %v2427 = vunpack.c.l.s4 1934713408
        %v2428 = vunpack.c.0.s8 %v2427
        %v2429 = vlaneseq
        %v2430 = vshrl.u32 %v2429, 7
        %v2431 = vsub.s32 %v2428, %v2430
        %v2432 = vrot.slane %v2418, %v2431
        %v2433 = vcombine.low %v2409, %v2425
        %v2434 = vcombine.high %v2409, %v2425
        %v2435 = vcombine.low %v2416, %v2432
        %v2436 = vcombine.high %v2416, %v2432
        %v2437 = vcombine.low %v2137, %v2201
        %v2439 = vunpack.c.l.s4 1983009808
        %v2440 = vunpack.c.0.s8 %v2439
        %v2441 = vlaneseq
        %v2442 = vshrl.u32 %v2441, 7
        %v2443 = vsub.s32 %v2440, %v2442
        %v2444 = vrot.slane %v2437, %v2443
        %v2445 = vcombine.low %v2169, %v2233
        %v2447 = vunpack.c.l.s4 1983009808
        %v2448 = vunpack.c.0.s8 %v2447
        %v2449 = vlaneseq
        %v2450 = vshrl.u32 %v2449, 7
        %v2451 = vsub.s32 %v2448, %v2450
        %v2452 = vrot.slane %v2445, %v2451
        %v2453 = vcombine.low %v2265, %v2329
        %v2455 = vunpack.c.l.s4 1983009808
        %v2456 = vunpack.c.0.s8 %v2455
        %v2457 = vlaneseq
        %v2458 = vshrl.u32 %v2457, 7
        %v2459 = vsub.s32 %v2456, %v2458
        %v2460 = vrot.slane %v2453, %v2459
        %v2461 = vcombine.low %v2297, %v2361
        %v2463 = vunpack.c.l.s4 1983009808
        %v2464 = vunpack.c.0.s8 %v2463
        %v2465 = vlaneseq
        %v2466 = vshrl.u32 %v2465, 7
        %v2467 = vsub.s32 %v2464, %v2466
        %v2468 = vrot.slane %v2461, %v2467
        %v2469 = vcombine.low %v2444, %v2452
        %v2470 = vcombine.high %v2444, %v2452
        %v2472 = vunpack.c.l.s4 1934713408
        %v2473 = vunpack.c.0.s8 %v2472
        %v2474 = vlaneseq
        %v2475 = vshrl.u32 %v2474, 7
        %v2476 = vsub.s32 %v2473, %v2475
        %v2477 = vrot.slane %v2469, %v2476
        %v2479 = vunpack.c.l.s4 1934713408
        %v2480 = vunpack.c.0.s8 %v2479
        %v2481 = vlaneseq
        %v2482 = vshrl.u32 %v2481, 7
        %v2483 = vsub.s32 %v2480, %v2482
        %v2484 = vrot.slane %v2470, %v2483
        %v2485 = vcombine.low %v2460, %v2468
        %v2486 = vcombine.high %v2460, %v2468
        %v2488 = vunpack.c.l.s4 1934713408
        %v2489 = vunpack.c.0.s8 %v2488
        %v2490 = vlaneseq
        %v2491 = vshrl.u32 %v2490, 7
        %v2492 = vsub.s32 %v2489, %v2491
        %v2493 = vrot.slane %v2485, %v2492
        %v2495 = vunpack.c.l.s4 1934713408
        %v2496 = vunpack.c.0.s8 %v2495
        %v2497 = vlaneseq
        %v2498 = vshrl.u32 %v2497, 7
        %v2499 = vsub.s32 %v2496, %v2498
        %v2500 = vrot.slane %v2486, %v2499
        %v2501 = vcombine.low %v2477, %v2493
        %v2502 = vcombine.high %v2477, %v2493
        %v2503 = vcombine.low %v2484, %v2500
        %v2504 = vcombine.high %v2484, %v2500
        %v2507 = vpack.i.b16 %v2501, %v2433
        %v2509 = vshrl.u32 %v2433, 16
        %v2510 = vshrl.u32 %v2501, 16
        %v2511 = vpack.i.b16 %v2510, %v2509
        %v2515 = vpack.i.b16 %v2502, %v2434
        %v2517 = vshrl.u32 %v2434, 16
        %v2518 = vshrl.u32 %v2502, 16
        %v2519 = vpack.i.b16 %v2518, %v2517
        %v2523 = vpack.i.b16 %v2503, %v2435
        %v2525 = vshrl.u32 %v2435, 16
        %v2526 = vshrl.u32 %v2503, 16
        %v2527 = vpack.i.b16 %v2526, %v2525
        %v2531 = vpack.i.b16 %v2504, %v2436
        %v2533 = vshrl.u32 %v2436, 16
        %v2534 = vshrl.u32 %v2504, 16
        %v2535 = vpack.i.b16 %v2534, %v2533
        %2537 = vxpose.xlu0.c.b16.start [1/8] %v2507, 128
        %2538 = vxpose.xlu0.c.b16.cont [2/8] 0, 128
        %2539 = vxpose.xlu0.c.b16.cont [3/8] 0, 128
        %2540 = vxpose.xlu0.c.b16.cont [4/8] 0, 128
        %2541 = vxpose.xlu0.c.b16.cont [5/8] 0, 128
        %2542 = vxpose.xlu0.c.b16.cont [6/8] 0, 128
        %2543 = vxpose.xlu0.c.b16.cont [7/8] 0, 128
        %2544 = vxpose.xlu0.c.b16.end [8/8] 0, 128
        %v2545 = vpop.trf.xlu0
        %v2546 = vpop.trf.xlu0
        %v2547 = vpop.trf.xlu0
        %v2548 = vpop.trf.xlu0
        %v2549 = vpop.trf.xlu0
        %v2550 = vpop.trf.xlu0
        %v2551 = vpop.trf.xlu0
        %v2552 = vpop.trf.xlu0
        %2553 = vxpose.xlu0.c.b16.start [1/8] %v2511, 128
        %2554 = vxpose.xlu0.c.b16.cont [2/8] 0, 128
        %2555 = vxpose.xlu0.c.b16.cont [3/8] 0, 128
        %2556 = vxpose.xlu0.c.b16.cont [4/8] 0, 128
        %2557 = vxpose.xlu0.c.b16.cont [5/8] 0, 128
        %2558 = vxpose.xlu0.c.b16.cont [6/8] 0, 128
        %2559 = vxpose.xlu0.c.b16.cont [7/8] 0, 128
        %2560 = vxpose.xlu0.c.b16.end [8/8] 0, 128
        %v2561 = vpop.trf.xlu0
        %v2562 = vpop.trf.xlu0
        %v2563 = vpop.trf.xlu0
        %v2564 = vpop.trf.xlu0
        %v2565 = vpop.trf.xlu0
        %v2566 = vpop.trf.xlu0
        %v2567 = vpop.trf.xlu0
        %v2568 = vpop.trf.xlu0
        %2569 = vxpose.xlu0.c.b16.start [1/8] %v2515, 128
        %2570 = vxpose.xlu0.c.b16.cont [2/8] 0, 128
        %2571 = vxpose.xlu0.c.b16.cont [3/8] 0, 128
        %2572 = vxpose.xlu0.c.b16.cont [4/8] 0, 128
        %2573 = vxpose.xlu0.c.b16.cont [5/8] 0, 128
        %2574 = vxpose.xlu0.c.b16.cont [6/8] 0, 128
        %2575 = vxpose.xlu0.c.b16.cont [7/8] 0, 128
        %2576 = vxpose.xlu0.c.b16.end [8/8] 0, 128
        %v2577 = vpop.trf.xlu0
        %v2578 = vpop.trf.xlu0
        %v2579 = vpop.trf.xlu0
        %v2580 = vpop.trf.xlu0
        %v2581 = vpop.trf.xlu0
        %v2582 = vpop.trf.xlu0
        %v2583 = vpop.trf.xlu0
        %v2584 = vpop.trf.xlu0
        %2585 = vxpose.xlu0.c.b16.start [1/8] %v2519, 128
        %2586 = vxpose.xlu0.c.b16.cont [2/8] 0, 128
        %2587 = vxpose.xlu0.c.b16.cont [3/8] 0, 128
        %2588 = vxpose.xlu0.c.b16.cont [4/8] 0, 128
        %2589 = vxpose.xlu0.c.b16.cont [5/8] 0, 128
        %2590 = vxpose.xlu0.c.b16.cont [6/8] 0, 128
        %2591 = vxpose.xlu0.c.b16.cont [7/8] 0, 128
        %2592 = vxpose.xlu0.c.b16.end [8/8] 0, 128
        %v2593 = vpop.trf.xlu0
        %v2594 = vpop.trf.xlu0
        %v2595 = vpop.trf.xlu0
        %v2596 = vpop.trf.xlu0
        %v2597 = vpop.trf.xlu0
        %v2598 = vpop.trf.xlu0
        %v2599 = vpop.trf.xlu0
        %v2600 = vpop.trf.xlu0
        %2601 = vxpose.xlu0.c.b16.start [1/8] %v2523, 128
        %2602 = vxpose.xlu0.c.b16.cont [2/8] 0, 128
        %2603 = vxpose.xlu0.c.b16.cont [3/8] 0, 128
        %2604 = vxpose.xlu0.c.b16.cont [4/8] 0, 128
        %2605 = vxpose.xlu0.c.b16.cont [5/8] 0, 128
        %2606 = vxpose.xlu0.c.b16.cont [6/8] 0, 128
        %2607 = vxpose.xlu0.c.b16.cont [7/8] 0, 128
        %2608 = vxpose.xlu0.c.b16.end [8/8] 0, 128
        %v2609 = vpop.trf.xlu0
        %v2610 = vpop.trf.xlu0
        %v2611 = vpop.trf.xlu0
        %v2612 = vpop.trf.xlu0
        %v2613 = vpop.trf.xlu0
        %v2614 = vpop.trf.xlu0
        %v2615 = vpop.trf.xlu0
        %v2616 = vpop.trf.xlu0
        %2617 = vxpose.xlu0.c.b16.start [1/8] %v2527, 128
        %2618 = vxpose.xlu0.c.b16.cont [2/8] 0, 128
        %2619 = vxpose.xlu0.c.b16.cont [3/8] 0, 128
        %2620 = vxpose.xlu0.c.b16.cont [4/8] 0, 128
        %2621 = vxpose.xlu0.c.b16.cont [5/8] 0, 128
        %2622 = vxpose.xlu0.c.b16.cont [6/8] 0, 128
        %2623 = vxpose.xlu0.c.b16.cont [7/8] 0, 128
        %2624 = vxpose.xlu0.c.b16.end [8/8] 0, 128
        %v2625 = vpop.trf.xlu0
        %v2626 = vpop.trf.xlu0
        %v2627 = vpop.trf.xlu0
        %v2628 = vpop.trf.xlu0
        %v2629 = vpop.trf.xlu0
        %v2630 = vpop.trf.xlu0
        %v2631 = vpop.trf.xlu0
        %v2632 = vpop.trf.xlu0
        %2633 = vxpose.xlu0.c.b16.start [1/8] %v2531, 128
        %2634 = vxpose.xlu0.c.b16.cont [2/8] 0, 128
        %2635 = vxpose.xlu0.c.b16.cont [3/8] 0, 128
        %2636 = vxpose.xlu0.c.b16.cont [4/8] 0, 128
        %2637 = vxpose.xlu0.c.b16.cont [5/8] 0, 128
        %2638 = vxpose.xlu0.c.b16.cont [6/8] 0, 128
        %2639 = vxpose.xlu0.c.b16.cont [7/8] 0, 128
        %2640 = vxpose.xlu0.c.b16.end [8/8] 0, 128
        %v2641 = vpop.trf.xlu0
        %v2642 = vpop.trf.xlu0
        %v2643 = vpop.trf.xlu0
        %v2644 = vpop.trf.xlu0
        %v2645 = vpop.trf.xlu0
        %v2646 = vpop.trf.xlu0
        %v2647 = vpop.trf.xlu0
        %v2648 = vpop.trf.xlu0
        %2649 = vxpose.xlu0.c.b16.start [1/8] %v2535, 128
        %2650 = vxpose.xlu0.c.b16.cont [2/8] 0, 128
        %2651 = vxpose.xlu0.c.b16.cont [3/8] 0, 128
        %2652 = vxpose.xlu0.c.b16.cont [4/8] 0, 128
        %2653 = vxpose.xlu0.c.b16.cont [5/8] 0, 128
        %2654 = vxpose.xlu0.c.b16.cont [6/8] 0, 128
        %2655 = vxpose.xlu0.c.b16.cont [7/8] 0, 128
        %2656 = vxpose.xlu0.c.b16.end [8/8] 0, 128
        %v2657 = vpop.trf.xlu0
        %v2658 = vpop.trf.xlu0
        %v2659 = vpop.trf.xlu0
        %v2660 = vpop.trf.xlu0
        %v2661 = vpop.trf.xlu0
        %v2662 = vpop.trf.xlu0
        %v2663 = vpop.trf.xlu0
        %v2664 = vpop.trf.xlu0
        %v2665 = vcombine.low %v2545, %v2609
        %v2667 = vunpack.c.l.s4 1983009808
        %v2668 = vunpack.c.0.s8 %v2667
        %v2669 = vlaneseq
        %v2670 = vshrl.u32 %v2669, 7
        %v2671 = vsub.s32 %v2668, %v2670
        %v2672 = vrot.slane %v2665, %v2671
        %v2673 = vcombine.low %v2577, %v2641
        %v2675 = vunpack.c.l.s4 1983009808
        %v2676 = vunpack.c.0.s8 %v2675
        %v2677 = vlaneseq
        %v2678 = vshrl.u32 %v2677, 7
        %v2679 = vsub.s32 %v2676, %v2678
        %v2680 = vrot.slane %v2673, %v2679
        %v2681 = vcombine.low %v2672, %v2680
        %v2683 = vunpack.c.l.s4 1934713408
        %v2684 = vunpack.c.0.s8 %v2683
        %v2685 = vlaneseq
        %v2686 = vshrl.u32 %v2685, 7
        %v2687 = vsub.s32 %v2684, %v2686
        %v2688 = vrot.slane %v2681, %v2687
        %v2689 = vcombine.high %v2688, 0
        %v2690 = vcombine.low %v2561, %v2625
        %v2692 = vunpack.c.l.s4 1983009808
        %v2693 = vunpack.c.0.s8 %v2692
        %v2694 = vlaneseq
        %v2695 = vshrl.u32 %v2694, 7
        %v2696 = vsub.s32 %v2693, %v2695
        %v2697 = vrot.slane %v2690, %v2696
        %v2698 = vcombine.low %v2593, %v2657
        %v2700 = vunpack.c.l.s4 1983009808
        %v2701 = vunpack.c.0.s8 %v2700
        %v2702 = vlaneseq
        %v2703 = vshrl.u32 %v2702, 7
        %v2704 = vsub.s32 %v2701, %v2703
        %v2705 = vrot.slane %v2698, %v2704
        %v2706 = vcombine.low %v2697, %v2705
        %v2708 = vunpack.c.l.s4 1934713408
        %v2709 = vunpack.c.0.s8 %v2708
        %v2710 = vlaneseq
        %v2711 = vshrl.u32 %v2710, 7
        %v2712 = vsub.s32 %v2709, %v2711
        %v2713 = vrot.slane %v2706, %v2712
        %v2714 = vcombine.high %v2713, 0
        %v2717 = vpack.i.b16 %v2713, %v2688
        %v2718 = vshrl.u32 %v2688, 16
        %v2719 = vshrl.u32 %v2713, 16
        %v2720 = vpack.i.b16 %v2719, %v2718
        %v2723 = vpack.i.b16 %v2714, %v2689
        %v2724 = vshrl.u32 %v2689, 16
        %v2725 = vshrl.u32 %v2714, 16
        %v2726 = vpack.i.b16 %v2725, %v2724
        %v2728 = vsel %vm2064, %v2717, 0
        %v2731 = vsel %vm2064, %v2109, 0
        %2733 = vmatprep.subr.bf16.mxu0 0
        %2734 = vmatpush1.bf16.xpose.msra.mxu0 %v2731
        %2735 = vmatprep.subr.bf16.mxu0 0
        %2736 = vmatpush1.bf16.xpose.msra.mxu0 0
        %2737 = vmatprep.subr.bf16.mxu0 0
        %2738 = vmatpush1.bf16.xpose.msra.mxu0 0
        %2739 = vmatprep.subr.bf16.mxu0 0
        %2740 = vmatpush1.bf16.xpose.msra.mxu0 0
        %2741 = vmatprep.subr.bf16.mxu0 0
        %2742 = vmatpush1.bf16.xpose.msra.mxu0 0
        %2743 = vmatprep.subr.bf16.mxu0 0
        %2744 = vmatpush1.bf16.xpose.msra.mxu0 0
        %2745 = vmatprep.subr.bf16.mxu0 0
        %2746 = vmatpush1.bf16.xpose.msra.mxu0 0
        %2747 = vmatprep.subr.bf16.mxu0 0
        %2748 = vmatpush1.bf16.xpose.msra.mxu0 0
        %2749 = vmatprep.subr.bf16.mxu0 0
        %2750 = vmatpush1.bf16.xpose.msra.mxu0 0
        %2751 = vmatprep.subr.bf16.mxu0 0
        %2752 = vmatpush1.bf16.xpose.msra.mxu0 0
        %2753 = vmatprep.subr.bf16.mxu0 0
        %2754 = vmatpush1.bf16.xpose.msra.mxu0 0
        %2755 = vmatprep.subr.bf16.mxu0 0
        %2756 = vmatpush1.bf16.xpose.msra.mxu0 0
        %2757 = vmatprep.subr.bf16.mxu0 0
        %2758 = vmatpush1.bf16.xpose.msra.mxu0 0
        %2759 = vmatprep.subr.bf16.mxu0 0
        %2760 = vmatpush1.bf16.xpose.msra.mxu0 0
        %2761 = vmatprep.subr.bf16.mxu0 0
        %2762 = vmatpush1.bf16.xpose.msra.mxu0 0
        %2763 = vmatprep.subr.bf16.mxu0 0
        %2764 = vmatpush1.bf16.xpose.msra.mxu0 0
        %2765 = vmatprep.mubr.bf16.mxu0 0
        %2766 = vmatmul.mubr.bf16.gmra.mrb[0].mxu0 %v2728
        %v2767 = vpop.f32.mrb[0].mxu0
        %v2768 = vadd.f32 0.0, %v2767
        %v2769 = vpop.f32.mrb[0].mxu0
        %v2770 = vpop.f32.mrb[0].mxu0
        %v2771 = vpop.f32.mrb[0].mxu0
        %2772 = vdwg.mxu0
        %v2774 = vsel %vm2064, %v2720, 0
        %v2777 = vsel %vm2064, %v2110, 0
        %2779 = vmatprep.subr.bf16.mxu0 0
        %2780 = vmatpush1.bf16.xpose.msra.mxu0 %v2777
        %2781 = vmatprep.subr.bf16.mxu0 0
        %2782 = vmatpush1.bf16.xpose.msra.mxu0 0
        %2783 = vmatprep.subr.bf16.mxu0 0
        %2784 = vmatpush1.bf16.xpose.msra.mxu0 0
        %2785 = vmatprep.subr.bf16.mxu0 0
        %2786 = vmatpush1.bf16.xpose.msra.mxu0 0
        %2787 = vmatprep.subr.bf16.mxu0 0
        %2788 = vmatpush1.bf16.xpose.msra.mxu0 0
        %2789 = vmatprep.subr.bf16.mxu0 0
        %2790 = vmatpush1.bf16.xpose.msra.mxu0 0
        %2791 = vmatprep.subr.bf16.mxu0 0
        %2792 = vmatpush1.bf16.xpose.msra.mxu0 0
        %2793 = vmatprep.subr.bf16.mxu0 0
        %2794 = vmatpush1.bf16.xpose.msra.mxu0 0
        %2795 = vmatprep.subr.bf16.mxu0 0
        %2796 = vmatpush1.bf16.xpose.msra.mxu0 0
        %2797 = vmatprep.subr.bf16.mxu0 0
        %2798 = vmatpush1.bf16.xpose.msra.mxu0 0
        %2799 = vmatprep.subr.bf16.mxu0 0
        %2800 = vmatpush1.bf16.xpose.msra.mxu0 0
        %2801 = vmatprep.subr.bf16.mxu0 0
        %2802 = vmatpush1.bf16.xpose.msra.mxu0 0
        %2803 = vmatprep.subr.bf16.mxu0 0
        %2804 = vmatpush1.bf16.xpose.msra.mxu0 0
        %2805 = vmatprep.subr.bf16.mxu0 0
        %2806 = vmatpush1.bf16.xpose.msra.mxu0 0
        %2807 = vmatprep.subr.bf16.mxu0 0
        %2808 = vmatpush1.bf16.xpose.msra.mxu0 0
        %2809 = vmatprep.subr.bf16.mxu0 0
        %2810 = vmatpush1.bf16.xpose.msra.mxu0 0
        %2811 = vmatprep.mubr.bf16.mxu0 0
        %2812 = vmatmul.mubr.bf16.gmra.mrb[0].mxu0 %v2774
        %v2813 = vpop.f32.mrb[0].mxu0
        %v2814 = vadd.f32 0.0, %v2813
        %v2815 = vpop.f32.mrb[0].mxu0
        %v2816 = vpop.f32.mrb[0].mxu0
        %v2817 = vpop.f32.mrb[0].mxu0
        %2818 = vdwg.mxu0
        %v2820 = vsel %vm2064, %v2723, 0
        %v2823 = vsel %vm2064, %v2111, 0
        %2825 = vmatprep.subr.bf16.mxu0 0
        %2826 = vmatpush1.bf16.xpose.msra.mxu0 %v2823
        %2827 = vmatprep.subr.bf16.mxu0 0
        %2828 = vmatpush1.bf16.xpose.msra.mxu0 0
        %2829 = vmatprep.subr.bf16.mxu0 0
        %2830 = vmatpush1.bf16.xpose.msra.mxu0 0
        %2831 = vmatprep.subr.bf16.mxu0 0
        %2832 = vmatpush1.bf16.xpose.msra.mxu0 0
        %2833 = vmatprep.subr.bf16.mxu0 0
        %2834 = vmatpush1.bf16.xpose.msra.mxu0 0
        %2835 = vmatprep.subr.bf16.mxu0 0
        %2836 = vmatpush1.bf16.xpose.msra.mxu0 0
        %2837 = vmatprep.subr.bf16.mxu0 0
        %2838 = vmatpush1.bf16.xpose.msra.mxu0 0
        %2839 = vmatprep.subr.bf16.mxu0 0
        %2840 = vmatpush1.bf16.xpose.msra.mxu0 0
        %2841 = vmatprep.subr.bf16.mxu0 0
        %2842 = vmatpush1.bf16.xpose.msra.mxu0 0
        %2843 = vmatprep.subr.bf16.mxu0 0
        %2844 = vmatpush1.bf16.xpose.msra.mxu0 0
        %2845 = vmatprep.subr.bf16.mxu0 0
        %2846 = vmatpush1.bf16.xpose.msra.mxu0 0
        %2847 = vmatprep.subr.bf16.mxu0 0
        %2848 = vmatpush1.bf16.xpose.msra.mxu0 0
        %2849 = vmatprep.subr.bf16.mxu0 0
        %2850 = vmatpush1.bf16.xpose.msra.mxu0 0
        %2851 = vmatprep.subr.bf16.mxu0 0
        %2852 = vmatpush1.bf16.xpose.msra.mxu0 0
        %2853 = vmatprep.subr.bf16.mxu0 0
        %2854 = vmatpush1.bf16.xpose.msra.mxu0 0
        %2855 = vmatprep.subr.bf16.mxu0 0
        %2856 = vmatpush1.bf16.xpose.msra.mxu0 0
        %2857 = vmatprep.mubr.bf16.mxu0 0
        %2858 = vmatmul.mubr.bf16.gmra.mrb[0].mxu0 %v2820
        %v2859 = vpop.f32.mrb[0].mxu0
        %v2860 = vadd.f32 0.0, %v2859
        %v2861 = vpop.f32.mrb[0].mxu0
        %v2862 = vpop.f32.mrb[0].mxu0
        %v2863 = vpop.f32.mrb[0].mxu0
        %2864 = vdwg.mxu0
        %v2866 = vsel %vm2064, %v2726, 0
        %v2869 = vsel %vm2064, %v2112, 0
        %2871 = vmatprep.subr.bf16.mxu0 0
        %2872 = vmatpush1.bf16.xpose.msra.mxu0 %v2869
        %2873 = vmatprep.subr.bf16.mxu0 0
        %2874 = vmatpush1.bf16.xpose.msra.mxu0 0
        %2875 = vmatprep.subr.bf16.mxu0 0
        %2876 = vmatpush1.bf16.xpose.msra.mxu0 0
        %2877 = vmatprep.subr.bf16.mxu0 0
        %2878 = vmatpush1.bf16.xpose.msra.mxu0 0
        %2879 = vmatprep.subr.bf16.mxu0 0
        %2880 = vmatpush1.bf16.xpose.msra.mxu0 0
        %2881 = vmatprep.subr.bf16.mxu0 0
        %2882 = vmatpush1.bf16.xpose.msra.mxu0 0
        %2883 = vmatprep.subr.bf16.mxu0 0
        %2884 = vmatpush1.bf16.xpose.msra.mxu0 0
        %2885 = vmatprep.subr.bf16.mxu0 0
        %2886 = vmatpush1.bf16.xpose.msra.mxu0 0
        %2887 = vmatprep.subr.bf16.mxu0 0
        %2888 = vmatpush1.bf16.xpose.msra.mxu0 0
        %2889 = vmatprep.subr.bf16.mxu0 0
        %2890 = vmatpush1.bf16.xpose.msra.mxu0 0
        %2891 = vmatprep.subr.bf16.mxu0 0
        %2892 = vmatpush1.bf16.xpose.msra.mxu0 0
        %2893 = vmatprep.subr.bf16.mxu0 0
        %2894 = vmatpush1.bf16.xpose.msra.mxu0 0
        %2895 = vmatprep.subr.bf16.mxu0 0
        %2896 = vmatpush1.bf16.xpose.msra.mxu0 0
        %2897 = vmatprep.subr.bf16.mxu0 0
        %2898 = vmatpush1.bf16.xpose.msra.mxu0 0
        %2899 = vmatprep.subr.bf16.mxu0 0
        %2900 = vmatpush1.bf16.xpose.msra.mxu0 0
        %2901 = vmatprep.subr.bf16.mxu0 0
        %2902 = vmatpush1.bf16.xpose.msra.mxu0 0
        %2903 = vmatprep.mubr.bf16.mxu0 0
        %2904 = vmatmul.mubr.bf16.gmra.mrb[0].mxu0 %v2866
        %v2905 = vpop.f32.mrb[0].mxu0
        %v2906 = vadd.f32 0.0, %v2905
        %v2907 = vpop.f32.mrb[0].mxu0
        %v2908 = vpop.f32.mrb[0].mxu0
        %v2909 = vpop.f32.mrb[0].mxu0
        %2910 = vdwg.mxu0
        %2911 = vxpose.xlu0.b32.start [1/16] %v2768, 128
        %2912 = vxpose.xlu0.b32.cont [2/16] 0.0, 128
        %2913 = vxpose.xlu0.b32.cont [3/16] 0.0, 128
        %2914 = vxpose.xlu0.b32.cont [4/16] 0.0, 128
        %2915 = vxpose.xlu0.b32.cont [5/16] 0.0, 128
        %2916 = vxpose.xlu0.b32.cont [6/16] 0.0, 128
        %2917 = vxpose.xlu0.b32.cont [7/16] 0.0, 128
        %2918 = vxpose.xlu0.b32.cont [8/16] 0.0, 128
        %2919 = vxpose.xlu0.b32.cont [9/16] 0.0, 128
        %2920 = vxpose.xlu0.b32.cont [10/16] 0.0, 128
        %2921 = vxpose.xlu0.b32.cont [11/16] 0.0, 128
        %2922 = vxpose.xlu0.b32.cont [12/16] 0.0, 128
        %2923 = vxpose.xlu0.b32.cont [13/16] 0.0, 128
        %2924 = vxpose.xlu0.b32.cont [14/16] 0.0, 128
        %2925 = vxpose.xlu0.b32.cont [15/16] 0.0, 128
        %2926 = vxpose.xlu0.b32.end [16/16] 0.0, 128
        %v2927 = vpop.trf.xlu0
        %v2928 = vpop.trf.xlu0
        %v2929 = vpop.trf.xlu0
        %v2930 = vpop.trf.xlu0
        %v2931 = vpop.trf.xlu0
        %v2932 = vpop.trf.xlu0
        %v2933 = vpop.trf.xlu0
        %v2934 = vpop.trf.xlu0
        %v2935 = vpop.trf.xlu0
        %v2936 = vpop.trf.xlu0
        %v2937 = vpop.trf.xlu0
        %v2938 = vpop.trf.xlu0
        %v2939 = vpop.trf.xlu0
        %v2940 = vpop.trf.xlu0
        %v2941 = vpop.trf.xlu0
        %v2942 = vpop.trf.xlu0
        %2943 = vxpose.xlu0.b32.start [1/16] %v2814, 128
        %2944 = vxpose.xlu0.b32.cont [2/16] 0.0, 128
        %2945 = vxpose.xlu0.b32.cont [3/16] 0.0, 128
        %2946 = vxpose.xlu0.b32.cont [4/16] 0.0, 128
        %2947 = vxpose.xlu0.b32.cont [5/16] 0.0, 128
        %2948 = vxpose.xlu0.b32.cont [6/16] 0.0, 128
        %2949 = vxpose.xlu0.b32.cont [7/16] 0.0, 128
        %2950 = vxpose.xlu0.b32.cont [8/16] 0.0, 128
        %2951 = vxpose.xlu0.b32.cont [9/16] 0.0, 128
        %2952 = vxpose.xlu0.b32.cont [10/16] 0.0, 128
        %2953 = vxpose.xlu0.b32.cont [11/16] 0.0, 128
        %2954 = vxpose.xlu0.b32.cont [12/16] 0.0, 128
        %2955 = vxpose.xlu0.b32.cont [13/16] 0.0, 128
        %2956 = vxpose.xlu0.b32.cont [14/16] 0.0, 128
        %2957 = vxpose.xlu0.b32.cont [15/16] 0.0, 128
        %2958 = vxpose.xlu0.b32.end [16/16] 0.0, 128
        %v2959 = vpop.trf.xlu0
        %v2960 = vpop.trf.xlu0
        %v2961 = vpop.trf.xlu0
        %v2962 = vpop.trf.xlu0
        %v2963 = vpop.trf.xlu0
        %v2964 = vpop.trf.xlu0
        %v2965 = vpop.trf.xlu0
        %v2966 = vpop.trf.xlu0
        %v2967 = vpop.trf.xlu0
        %v2968 = vpop.trf.xlu0
        %v2969 = vpop.trf.xlu0
        %v2970 = vpop.trf.xlu0
        %v2971 = vpop.trf.xlu0
        %v2972 = vpop.trf.xlu0
        %v2973 = vpop.trf.xlu0
        %v2974 = vpop.trf.xlu0
        %2975 = vxpose.xlu0.b32.start [1/16] %v2860, 128
        %2976 = vxpose.xlu0.b32.cont [2/16] 0.0, 128
        %2977 = vxpose.xlu0.b32.cont [3/16] 0.0, 128
        %2978 = vxpose.xlu0.b32.cont [4/16] 0.0, 128
        %2979 = vxpose.xlu0.b32.cont [5/16] 0.0, 128
        %2980 = vxpose.xlu0.b32.cont [6/16] 0.0, 128
        %2981 = vxpose.xlu0.b32.cont [7/16] 0.0, 128
        %2982 = vxpose.xlu0.b32.cont [8/16] 0.0, 128
        %2983 = vxpose.xlu0.b32.cont [9/16] 0.0, 128
        %2984 = vxpose.xlu0.b32.cont [10/16] 0.0, 128
        %2985 = vxpose.xlu0.b32.cont [11/16] 0.0, 128
        %2986 = vxpose.xlu0.b32.cont [12/16] 0.0, 128
        %2987 = vxpose.xlu0.b32.cont [13/16] 0.0, 128
        %2988 = vxpose.xlu0.b32.cont [14/16] 0.0, 128
        %2989 = vxpose.xlu0.b32.cont [15/16] 0.0, 128
        %2990 = vxpose.xlu0.b32.end [16/16] 0.0, 128
        %v2991 = vpop.trf.xlu0
        %v2992 = vpop.trf.xlu0
        %v2993 = vpop.trf.xlu0
        %v2994 = vpop.trf.xlu0
        %v2995 = vpop.trf.xlu0
        %v2996 = vpop.trf.xlu0
        %v2997 = vpop.trf.xlu0
        %v2998 = vpop.trf.xlu0
        %v2999 = vpop.trf.xlu0
        %v3000 = vpop.trf.xlu0
        %v3001 = vpop.trf.xlu0
        %v3002 = vpop.trf.xlu0
        %v3003 = vpop.trf.xlu0
        %v3004 = vpop.trf.xlu0
        %v3005 = vpop.trf.xlu0
        %v3006 = vpop.trf.xlu0
        %3007 = vxpose.xlu0.b32.start [1/16] %v2906, 128
        %3008 = vxpose.xlu0.b32.cont [2/16] 0.0, 128
        %3009 = vxpose.xlu0.b32.cont [3/16] 0.0, 128
        %3010 = vxpose.xlu0.b32.cont [4/16] 0.0, 128
        %3011 = vxpose.xlu0.b32.cont [5/16] 0.0, 128
        %3012 = vxpose.xlu0.b32.cont [6/16] 0.0, 128
        %3013 = vxpose.xlu0.b32.cont [7/16] 0.0, 128
        %3014 = vxpose.xlu0.b32.cont [8/16] 0.0, 128
        %3015 = vxpose.xlu0.b32.cont [9/16] 0.0, 128
        %3016 = vxpose.xlu0.b32.cont [10/16] 0.0, 128
        %3017 = vxpose.xlu0.b32.cont [11/16] 0.0, 128
        %3018 = vxpose.xlu0.b32.cont [12/16] 0.0, 128
        %3019 = vxpose.xlu0.b32.cont [13/16] 0.0, 128
        %3020 = vxpose.xlu0.b32.cont [14/16] 0.0, 128
        %3021 = vxpose.xlu0.b32.cont [15/16] 0.0, 128
        %3022 = vxpose.xlu0.b32.end [16/16] 0.0, 128
        %v3023 = vpop.trf.xlu0
        %v3024 = vpop.trf.xlu0
        %v3025 = vpop.trf.xlu0
        %v3026 = vpop.trf.xlu0
        %v3027 = vpop.trf.xlu0
        %v3028 = vpop.trf.xlu0
        %v3029 = vpop.trf.xlu0
        %v3030 = vpop.trf.xlu0
        %v3031 = vpop.trf.xlu0
        %v3032 = vpop.trf.xlu0
        %v3033 = vpop.trf.xlu0
        %v3034 = vpop.trf.xlu0
        %v3035 = vpop.trf.xlu0
        %v3036 = vpop.trf.xlu0
        %v3037 = vpop.trf.xlu0
        %v3038 = vpop.trf.xlu0
        %v3039 = vcombine.low %v2927, %v2991
        %v3040 = vcombine.high %v2927, %v2991
        %v3042 = vunpack.c.l.s4 1983009808
        %v3043 = vunpack.c.0.s8 %v3042
        %v3044 = vlaneseq
        %v3045 = vshrl.u32 %v3044, 7
        %v3046 = vsub.s32 %v3043, %v3045
        %v3047 = vrot.slane %v3039, %v3046
        %v3049 = vunpack.c.l.s4 1983009808
        %v3050 = vunpack.c.0.s8 %v3049
        %v3051 = vlaneseq
        %v3052 = vshrl.u32 %v3051, 7
        %v3053 = vsub.s32 %v3050, %v3052
        %v3054 = vrot.slane %v3040, %v3053
        %v3055 = vcombine.low %v2959, %v3023
        %v3056 = vcombine.high %v2959, %v3023
        %v3058 = vunpack.c.l.s4 1983009808
        %v3059 = vunpack.c.0.s8 %v3058
        %v3060 = vlaneseq
        %v3061 = vshrl.u32 %v3060, 7
        %v3062 = vsub.s32 %v3059, %v3061
        %v3063 = vrot.slane %v3055, %v3062
        %v3065 = vunpack.c.l.s4 1983009808
        %v3066 = vunpack.c.0.s8 %v3065
        %v3067 = vlaneseq
        %v3068 = vshrl.u32 %v3067, 7
        %v3069 = vsub.s32 %v3066, %v3068
        %v3070 = vrot.slane %v3056, %v3069
        %v3071 = vcombine.low %v3047, %v3063
        %v3072 = vcombine.high %v3047, %v3063
        %v3074 = vunpack.c.l.s4 1934713408
        %v3075 = vunpack.c.0.s8 %v3074
        %v3076 = vlaneseq
        %v3077 = vshrl.u32 %v3076, 7
        %v3078 = vsub.s32 %v3075, %v3077
        %v3079 = vrot.slane %v3071, %v3078
        %v3081 = vunpack.c.l.s4 1934713408
        %v3082 = vunpack.c.0.s8 %v3081
        %v3083 = vlaneseq
        %v3084 = vshrl.u32 %v3083, 7
        %v3085 = vsub.s32 %v3082, %v3084
        %v3086 = vrot.slane %v3072, %v3085
        %v3087 = vcombine.low %v3054, %v3070
        %v3088 = vcombine.high %v3054, %v3070
        %v3090 = vunpack.c.l.s4 1934713408
        %v3091 = vunpack.c.0.s8 %v3090
        %v3092 = vlaneseq
        %v3093 = vshrl.u32 %v3092, 7
        %v3094 = vsub.s32 %v3091, %v3093
        %v3095 = vrot.slane %v3087, %v3094
        %v3097 = vunpack.c.l.s4 1934713408
        %v3098 = vunpack.c.0.s8 %v3097
        %v3099 = vlaneseq
        %v3100 = vshrl.u32 %v3099, 7
        %v3101 = vsub.s32 %v3098, %v3100
        %v3102 = vrot.slane %v3088, %v3101
        %v3103 = vcombine.high %v3079, 0.0
        %v3104 = vcombine.high %v3086, 0.0
        %v3105 = vcombine.high %v3095, 0.0
        %v3106 = vcombine.high %v3102, 0.0
        %v3107 = vcombine.low %v3079, %v3086
        %v3109 = vunpack.c.l.s4 1983009808
        %v3110 = vunpack.c.0.s8 %v3109
        %v3111 = vlaneseq
        %v3112 = vshrl.u32 %v3111, 7
        %v3113 = vsub.s32 %v3110, %v3112
        %v3114 = vrot.slane %v3107, %v3113
        %v3115 = vcombine.low %v3103, %v3104
        %v3117 = vunpack.c.l.s4 1983009808
        %v3118 = vunpack.c.0.s8 %v3117
        %v3119 = vlaneseq
        %v3120 = vshrl.u32 %v3119, 7
        %v3121 = vsub.s32 %v3118, %v3120
        %v3122 = vrot.slane %v3115, %v3121
        %v3123 = vcombine.low %v3095, %v3102
        %v3125 = vunpack.c.l.s4 1983009808
        %v3126 = vunpack.c.0.s8 %v3125
        %v3127 = vlaneseq
        %v3128 = vshrl.u32 %v3127, 7
        %v3129 = vsub.s32 %v3126, %v3128
        %v3130 = vrot.slane %v3123, %v3129
        %v3131 = vcombine.low %v3105, %v3106
        %v3133 = vunpack.c.l.s4 1983009808
        %v3134 = vunpack.c.0.s8 %v3133
        %v3135 = vlaneseq
        %v3136 = vshrl.u32 %v3135, 7
        %v3137 = vsub.s32 %v3134, %v3136
        %v3138 = vrot.slane %v3131, %v3137
        %v3139 = vcombine.low %v3114, %v3122
        %v3140 = vcombine.high %v3114, %v3122
        %v3142 = vunpack.c.l.s4 1934713408
        %v3143 = vunpack.c.0.s8 %v3142
        %v3144 = vlaneseq
        %v3145 = vshrl.u32 %v3144, 7
        %v3146 = vsub.s32 %v3143, %v3145
        %v3147 = vrot.slane %v3139, %v3146
        %v3149 = vunpack.c.l.s4 1934713408
        %v3150 = vunpack.c.0.s8 %v3149
        %v3151 = vlaneseq
        %v3152 = vshrl.u32 %v3151, 7
        %v3153 = vsub.s32 %v3150, %v3152
        %v3154 = vrot.slane %v3140, %v3153
        %v3155 = vcombine.low %v3130, %v3138
        %v3156 = vcombine.high %v3130, %v3138
        %v3158 = vunpack.c.l.s4 1934713408
        %v3159 = vunpack.c.0.s8 %v3158
        %v3160 = vlaneseq
        %v3161 = vshrl.u32 %v3160, 7
        %v3162 = vsub.s32 %v3159, %v3161
        %v3163 = vrot.slane %v3155, %v3162
        %v3165 = vunpack.c.l.s4 1934713408
        %v3166 = vunpack.c.0.s8 %v3165
        %v3167 = vlaneseq
        %v3168 = vshrl.u32 %v3167, 7
        %v3169 = vsub.s32 %v3166, %v3168
        %v3170 = vrot.slane %v3156, %v3169
        %v3171 = vcombine.low %v3147, %v3163
        %v3172 = vcombine.high %v3147, %v3163
        %v3173 = vcombine.low %v3154, %v3170
        %v3174 = vcombine.high %v3154, %v3170
        %3176 = vrot.lane.b32.xlu0 %v3172, 8
        %v3177 = vpop.permute.xlu0 %3176
        %3180 = vrot.lane.b32.xlu0 %v3173, 16
        %v3181 = vpop.permute.xlu0 %3180
        %3184 = vrot.lane.b32.xlu0 %v3174, 24
        %v3185 = vpop.permute.xlu0 %3184
        %v3187 = vsel %vm1878, %v3171, %v3177
        %v3188 = vsel %vm2064, %v3187, %v3181
        %vm3189 = vcmask 195584
        %v3190 = vsel %vm3189, %v3188, %v3185
        %v3191 = vpack.c.bf16 %v3190, %v3190
        %v3192 = vld [vmem:[%s9] sm:$0xf]
        %v3193 = vld [vmem:[%s9 + $0x4] sm:$0xf]
        %v3194 = vld [vmem:[%s9 + $0x8] sm:$0xf]
        %v3195 = vld [vmem:[%s9 + $0xc] sm:$0xf]
        %v3196 = vld [vmem:[%s10] sm:$0x1]
        %v3198 = vlaneseq
        %v3199 = vshrl.u32 %v3198, 7
        %v3200 = vsub.s32 0, %v3199
        %v3201 = vrot.slane %v3196, %v3200
        %v3207 = vunpack.c.l.b16 %v3192
        %v3208 = vunpack.c.l.b16 %v3193
        %v3209 = vunpack.c.l.b16 %v3194
        %v3210 = vunpack.c.l.b16 %v3195
        %v3211 = vpack.c.b16 %v3208, %v3207
        %v3212 = vpack.c.b16 %v3210, %v3209
        %v3216 = vsel %vm520, %v3191, 0
        %3218 = vmatprep.subr.bf16.mxu0 0
        %3219 = vmatpush1.bf16.msra.mxu0 %v3211
        %3220 = vmatprep.subr.bf16.mxu0 0
        %3221 = vmatpush1.bf16.msra.mxu0 %v3212
        %3222 = vmatprep.subr.bf16.mxu0 0
        %3223 = vmatpush1.bf16.msra.mxu0 0
        %3224 = vmatprep.subr.bf16.mxu0 0
        %3225 = vmatpush1.bf16.msra.mxu0 0
        %3226 = vmatprep.subr.bf16.mxu0 0
        %3227 = vmatpush1.bf16.msra.mxu0 0
        %3228 = vmatprep.subr.bf16.mxu0 0
        %3229 = vmatpush1.bf16.msra.mxu0 0
        %3230 = vmatprep.subr.bf16.mxu0 0
        %3231 = vmatpush1.bf16.msra.mxu0 0
        %3232 = vmatprep.subr.bf16.mxu0 0
        %3233 = vmatpush1.bf16.msra.mxu0 0
        %3234 = vmatprep.subr.bf16.mxu0 0
        %3235 = vmatpush1.bf16.msra.mxu0 0
        %3236 = vmatprep.subr.bf16.mxu0 0
        %3237 = vmatpush1.bf16.msra.mxu0 0
        %3238 = vmatprep.subr.bf16.mxu0 0
        %3239 = vmatpush1.bf16.msra.mxu0 0
        %3240 = vmatprep.subr.bf16.mxu0 0
        %3241 = vmatpush1.bf16.msra.mxu0 0
        %3242 = vmatprep.subr.bf16.mxu0 0
        %3243 = vmatpush1.bf16.msra.mxu0 0
        %3244 = vmatprep.subr.bf16.mxu0 0
        %3245 = vmatpush1.bf16.msra.mxu0 0
        %3246 = vmatprep.subr.bf16.mxu0 0
        %3247 = vmatpush1.bf16.msra.mxu0 0
        %3248 = vmatprep.subr.bf16.mxu0 0
        %3249 = vmatpush1.bf16.msra.mxu0 0
        %3250 = vmatprep.mubr.bf16.mxu0 0
        %3251 = vmatmul.mubr.bf16.gmra.mrb[0].mxu0 %v3216
        %v3252 = vpop.f32.mrb[0].mxu0
        %v3253 = vadd.f32 %v3201, %v3252
        %v3254 = vpop.f32.mrb[0].mxu0
        %v3255 = vpop.f32.mrb[0].mxu0
        %v3256 = vpop.f32.mrb[0].mxu0
        %3257 = vdwg.mxu0
        %v3258 = vadd.f32 %v517, %v3253
        %3259 = vst.msk [vmem:[%s513] sm:$0xff] %vm520, %v3258
        %s3260 = sand.u32 %s298, 1
        %s3261 = scalar_lea.sflag [#allocation4], %s3260
        %s3262 = sand.u32 %s298, 1
        %s3263 = smul.addr %s3262, 8
        %s3264 = scalar_lea.vmem [#allocation13], %s3263
        // Predicated region
        $region89: #{tpu_custom_call.1} parent=63 // pred_check
          %p3265 = pneg %p308
        $region90: #{tpu_custom_call.1} parent=63 // pred_check_branch
          %3267 = sbr.rel (%p3265) target = $region92
        $region91: #{tpu_custom_call.1} parent=63 // pred_region
          %s3269 = ssub.s32 128, 128
          %3270 = vsyncadd %s3261, %s3269
          %s3271 = smul.addr %s37, 2
          %s3272 = sadd.s32 %s38, %s3271
          %s3273 = smul.addr %s3272, 128
          %s3274 = scalar_lea.hbm %s11, %s3273
          %s3276 = sshll.u32 %s3264, 4
          %s3277 = int_to_ptr.vmem [resolvable:$true] %s3276
          %3279 = dma.vmem_to_hbm [thread:$0]  %s3277, 128, %s3274, %s3261
        $region92: #{tpu_custom_call.1} parent=63 // pred_fallthru
          _
      $region64: #{tpu_custom_call.1} parent=5 // pred_fallthru
        _
      %p3280 = scmp.le.s32.totalorder 2, %s28
      // Predicated region
      $region93: #{tpu_custom_call.1} parent=5 // pred_check
        %p3281 = pneg %p3280
      $region94: #{tpu_custom_call.1} parent=5 // pred_check_branch
        %3283 = sbr.rel (%p3281) target = $region96
      $region95: #{tpu_custom_call.1} parent=5 // pred_region
        %s3284 = ssub.s32 %s28, 2
        // Predicated region
        $region97: #{tpu_custom_call.1} parent=95 // pred_check
          %p3285 = pneg %p314
        $region98: #{tpu_custom_call.1} parent=95 // pred_check_branch
          %3287 = sbr.rel (%p3285) target = $region100
        $region99: #{tpu_custom_call.1} parent=95 // pred_region
          %s3288 = sand.u32 %s299, 1
          %s3289 = scalar_lea.sflag [#allocation4], %s3288
          %s3290 = sand.u32 %s299, 1
          %s3291 = smul.addr %s3290, 8
          %s3292 = scalar_lea.vmem [#allocation13], %s3291
          %3293 = dma.done %s3289, 128
        $region100: #{tpu_custom_call.1} parent=95 // pred_fallthru
          _
      $region96: #{tpu_custom_call.1} parent=5 // pred_fallthru
        _
    $region6: #{tpu_custom_call.1} parent=1 // loop_footer
      %s32 = sadd.s32 1, %s28
    $region7: #{tpu_custom_call.1} parent=1 // loop_footer_branch
      %27 = sbr.rel target = $region3
    $region8: #{tpu_custom_call.1} parent=1 // loop_exit
      _
    %3294 = vsyncpa [#allocation3], 1
    %s3295 = scalar_lea.sflag [#allocation3], 1
    %3296 = vsyncpa %s3295, 1
    %3297 = vsyncpa [#allocation6], 1
    %s3298 = scalar_lea.sflag [#allocation6], 1
    %3299 = vsyncpa %s3298, 1
    %3300 = vsyncpa [#allocation9], 1
    %3301 = vsyncpa [#allocation12], 1
    %3302 = vsyncpa [#allocation4], 1
    %s3303 = scalar_lea.sflag [#allocation4], 1
    %3304 = vsyncpa %s3303, 1

</llo_original>
